<compile_context>
chip_gen: v7x
topology: tpu7x:2x2x1
jax: 0.10.0
libtpu: 0.0.40
codegen_flags: <defaults>
</compile_context>

<pallas_src>
import math
import functools

import jax
import jax.numpy as jnp
from jax.experimental import pallas as pl
from jax.experimental.pallas import tpu as pltpu

# ----------------------------- model hyper-params ---------------------------
DIM_IN = 2
DIM_OUT = 1
NUM_RESNET_BLOCKS = 3
NUM_LAYERS_PER_BLOCK = 2
NUM_NEURONS = 50           # hidden width (matches the module default)
NUM_HIDDEN_LAYERS = NUM_RESNET_BLOCKS * NUM_LAYERS_PER_BLOCK


def _sigmoid(x):
    # Mathematically identical to 1/(1+exp(-x)); single EUP tanh, no VALU divide.
    return 0.5 * (jnp.tanh(0.5 * x) + 1.0)


# ------------------------------- Pallas kernel ------------------------------
def dense_resnet_kernel(x_ref, w1_ref, b1_ref, wh_ref, bh_ref, wlt_ref, bl_ref,
                        out_ref, *, num_resnet_blocks, num_layers_per_block):
    """One batch tile of the full DenseResNet forward pass.

    x_ref   : (TB, DIM_IN)        f32   VMEM
    w1_ref  : (DIM_IN, H)  f32,  b1_ref: (1, H) f32
    wh_ref  : (L, H, H)    bf16 (stacked resblock weights)
    bh_ref  : (L, 1, H)    f32
    wlt_ref : (DIM_OUT, H) f32 (last-layer weight, transposed -> lane-dense rows)
    bl_ref  : (1, DIM_OUT) f32
    out_ref : (TB, DIM_OUT)
    """
    x = x_ref[...]                                   # (TB, DIM_IN) f32
    dim_in = x_ref.shape[1]
    dim_out = out_ref.shape[1]

    # ---- first layer on the VPU (K = dim_in = 2; an MXU pass would be wasted) ----
    pre = b1_ref[...]                                # (1, H) -> broadcasts to (TB, H)
    for d in range(dim_in):                          # static unroll: 2 FMAs
        pre = pre + x[:, d:d + 1] * w1_ref[d:d + 1, :]
    h = _sigmoid(pre)                                # (TB, H) f32

    # ---- resnet blocks: H x H matmuls on the MXU (bf16 operands, f32 accum) ----
    for blk in range(num_resnet_blocks):
        z = h
        for layer in range(num_layers_per_block):
            k = blk * num_layers_per_block + layer
            acc = jnp.dot(z.astype(wh_ref.dtype), wh_ref[k],
                          preferred_element_type=jnp.float32)   # (TB, H) f32
            z = _sigmoid(acc + bh_ref[k])
        h = z + h                                    # residual, f32

    # ---- last layer on VPU + XLU lane reduction (N = dim_out = 1) ----
    wlt = wlt_ref[...]                               # (DIM_OUT, H) f32
    cols = [jnp.sum(h * wlt[o:o + 1, :], axis=-1, keepdims=True)
            for o in range(dim_out)]                 # each (TB, 1)
    out = (cols[0] if dim_out == 1 else jnp.concatenate(cols, axis=-1)) + bl_ref[...]
    out_ref[...] = out.astype(out_ref.dtype)


def dense_resnet_forward(x, params, *, tile_batch=1024,
                         hidden_matmul_dtype=jnp.bfloat16,
                         num_resnet_blocks=NUM_RESNET_BLOCKS,
                         num_layers_per_block=NUM_LAYERS_PER_BLOCK):
    """Tiles the batch dimension over a 1-D 'parallel' grid; weights broadcast."""
    w1, b1, wh, bh, wl, bl = params
    n, dim_in = x.shape
    hdim = w1.shape[1]
    dim_out = wl.shape[1]
    n_layers = wh.shape[0]
    assert n_layers == num_resnet_blocks * num_layers_per_block

    # Pad the batch to a tile multiple (arbitrary batch sizes supported).
    n_pad = pl.cdiv(n, tile_batch) * tile_batch
    if n_pad != n:
        x = jnp.pad(x, ((0, n_pad - n), (0, 0)))

    wh_mm = wh.astype(hidden_matmul_dtype)   # bf16 MXU operands, f32 accumulate
    wl_t = wl.T                              # (DIM_OUT, H): lane-dense epilogue row

    grid = (n_pad // tile_batch,)            # keep >= 2 steps so both v7x TCs work

    kernel = functools.partial(dense_resnet_kernel,
                               num_resnet_blocks=num_resnet_blocks,
                               num_layers_per_block=num_layers_per_block)

    out = pl.pallas_call(
        kernel,
        out_shape=jax.ShapeDtypeStruct((n_pad, dim_out), x.dtype),
        grid_spec=pltpu.PrefetchScalarGridSpec(
            num_scalar_prefetch=0,
            grid=grid,
            in_specs=[
                pl.BlockSpec((tile_batch, dim_in), lambda i: (i, 0)),        # x tile
                pl.BlockSpec((dim_in, hdim), lambda i: (0, 0)),              # W_first
                pl.BlockSpec((1, hdim), lambda i: (0, 0)),                   # b_first
                pl.BlockSpec((n_layers, hdim, hdim), lambda i: (0, 0, 0)),   # W_hidden (bf16)
                pl.BlockSpec((n_layers, 1, hdim), lambda i: (0, 0, 0)),      # b_hidden
                pl.BlockSpec((dim_out, hdim), lambda i: (0, 0)),             # W_last^T
                pl.BlockSpec((1, dim_out), lambda i: (0, 0)),                # b_last
            ],
            out_specs=pl.BlockSpec((tile_batch, dim_out), lambda i: (i, 0)),
        ),
        compiler_params=pltpu.CompilerParams(
            dimension_semantics=("parallel",),
            vmem_limit_bytes=32 * 1024 * 1024,
        ),
    )(x, w1, b1, wh_mm, bh, wl_t, bl)

    return out[:n] if n_pad != n else out


# --------------------------- parameter initialization -----------------------
def init_params(key):
    """Deterministic init mimicking nn.Linear's U(-1/sqrt(fan_in), 1/sqrt(fan_in))."""
    def linear(key, fan_in, fan_out):
        kw, kb = jax.random.split(key)
        bound = 1.0 / math.sqrt(fan_in)
        w = jax.random.uniform(kw, (fan_in, fan_out), jnp.float32, -bound, bound)
        b = jax.random.uniform(kb, (1, fan_out), jnp.float32, -bound, bound)
        return w, b

    keys = jax.random.split(key, 2 + NUM_HIDDEN_LAYERS)
    w1, b1 = linear(keys[0], DIM_IN, NUM_NEURONS)

    wh_list, bh_list = [], []
    for k in range(NUM_HIDDEN_LAYERS):
        w, b = linear(keys[1 + k], NUM_NEURONS, NUM_NEURONS)
        wh_list.append(w[None])          # (1, H, H)
        bh_list.append(b[None])          # (1, 1, H)
    wh = jnp.concatenate(wh_list, axis=0)   # (L, H, H)
    bh = jnp.concatenate(bh_list, axis=0)   # (L, 1, H)

    wl, bl = linear(keys[-1], NUM_NEURONS, DIM_OUT)
    return w1, b1, wh, bh, wl, bl


# ------------------------------ pure-JAX reference ---------------------------
def dense_resnet_ref(x, params):
    """Full-f32 reference with the exact PyTorch-module semantics."""
    w1, b1, wh, bh, wl, bl = params
    h = jax.nn.sigmoid(x @ w1 + b1)
    for blk in range(NUM_RESNET_BLOCKS):
        z = h
        for layer in range(NUM_LAYERS_PER_BLOCK):
            k = blk * NUM_LAYERS_PER_BLOCK + layer
            z = jax.nn.sigmoid(z @ wh[k] + bh[k])
        h = z + h
    return h @ wl + bl


# ------------------------------------ main -----------------------------------
if __name__ == "__main__":
    key = jax.random.PRNGKey(0)
    k_params, k_x = jax.random.split(key)

    params = init_params(k_params)

    # 2 grid steps at tile_batch=1024 -> both v7x TensorCores get work.
    batch = 2048
    x = jax.random.normal(k_x, (batch, DIM_IN), dtype=jnp.float32)

    out = dense_resnet_forward(x, params, tile_batch=1024)
    out = jax.block_until_ready(out)

    ref = dense_resnet_ref(x, params)
    assert out.shape == (batch, DIM_OUT)
    # Tolerance sized for bf16 hidden-layer matmul operands (f32 accumulation);
    # observed error is ~1e-3 against the full-f32 reference.
    assert jnp.allclose(out, ref, atol=2e-2, rtol=2e-2), "Pallas output mismatch vs reference"

    print("KERNEL_OK")
</pallas_src>

<mosaic_0001>
module attributes {stable_mosaic.version = 11 : i64} {
  func.func @dense_resnet_kernel(%arg0: i32, %arg1: memref<1024x2xf32, #tpu.memory_space<vmem>>, %arg2: memref<2x50xf32, #tpu.memory_space<vmem>>, %arg3: memref<1x50xf32, #tpu.memory_space<vmem>>, %arg4: memref<6x50x50xbf16, #tpu.memory_space<vmem>>, %arg5: memref<6x1x50xf32, #tpu.memory_space<vmem>>, %arg6: memref<1x50xf32, #tpu.memory_space<vmem>>, %arg7: memref<1x1xf32, #tpu.memory_space<vmem>>, %arg8: memref<1024x1xf32, #tpu.memory_space<vmem>>) attributes {dimension_semantics = [#tpu.dimension_semantics<parallel>], iteration_bounds = array<i64: 2>, scalar_prefetch = 0 : i64, scratch_operands = 0 : i64, tpu.core_type = #tpu.core_type<tc>, window_params = [{transform_indices = @transform_0, window_bounds = array<i64: 1024, 2>}, {pipeline_mode = #tpu.pipeline_mode<synchronous>, transform_indices = @transform_1, window_bounds = array<i64: 2, 50>}, {pipeline_mode = #tpu.pipeline_mode<synchronous>, transform_indices = @transform_2, window_bounds = array<i64: 1, 50>}, {pipeline_mode = #tpu.pipeline_mode<synchronous>, transform_indices = @transform_3, window_bounds = array<i64: 6, 50, 50>}, {pipeline_mode = #tpu.pipeline_mode<synchronous>, transform_indices = @transform_4, window_bounds = array<i64: 6, 1, 50>}, {pipeline_mode = #tpu.pipeline_mode<synchronous>, transform_indices = @transform_5, window_bounds = array<i64: 1, 50>}, {pipeline_mode = #tpu.pipeline_mode<synchronous>, transform_indices = @transform_6, window_bounds = array<i64: 1, 1>}, {transform_indices = @transform_7, window_bounds = array<i64: 1024, 1>}]} {
    %c0 = arith.constant 0 : index
    %c0_0 = arith.constant 0 : index
    %0 = vector.load %arg1[%c0, %c0_0] : memref<1024x2xf32, #tpu.memory_space<vmem>>, vector<1024x2xf32>
    %c0_1 = arith.constant 0 : index
    %c0_2 = arith.constant 0 : index
    %1 = vector.load %arg3[%c0_1, %c0_2] : memref<1x50xf32, #tpu.memory_space<vmem>>, vector<1x50xf32>
    %2 = vector.extract_strided_slice %0 {offsets = [0, 0], sizes = [1024, 1], strides = [1, 1]} : vector<1024x2xf32> to vector<1024x1xf32>
    %c0_3 = arith.constant 0 : index
    %c0_4 = arith.constant 0 : index
    %3 = vector.load %arg2[%c0_3, %c0_4] : memref<2x50xf32, #tpu.memory_space<vmem>>, vector<1x50xf32>
    %4 = vector.broadcast %2 : vector<1024x1xf32> to vector<1024x50xf32>
    %5 = vector.broadcast %3 : vector<1x50xf32> to vector<1024x50xf32>
    %6 = arith.mulf %4, %5 : vector<1024x50xf32>
    %7 = vector.broadcast %1 : vector<1x50xf32> to vector<1024x50xf32>
    %8 = arith.addf %7, %6 : vector<1024x50xf32>
    %9 = vector.extract_strided_slice %0 {offsets = [0, 1], sizes = [1024, 1], strides = [1, 1]} : vector<1024x2xf32> to vector<1024x1xf32>
    %c1 = arith.constant 1 : index
    %c0_5 = arith.constant 0 : index
    %10 = vector.load %arg2[%c1, %c0_5] : memref<2x50xf32, #tpu.memory_space<vmem>>, vector<1x50xf32>
    %11 = vector.broadcast %9 : vector<1024x1xf32> to vector<1024x50xf32>
    %12 = vector.broadcast %10 : vector<1x50xf32> to vector<1024x50xf32>
    %13 = arith.mulf %11, %12 : vector<1024x50xf32>
    %14 = arith.addf %8, %13 : vector<1024x50xf32>
    %cst = arith.constant 5.000000e-01 : f32
    %15 = vector.broadcast %cst : f32 to vector<1024x50xf32>
    %16 = arith.mulf %15, %14 : vector<1024x50xf32>
    %17 = math.tanh %16 : vector<1024x50xf32>
    %cst_6 = arith.constant 1.000000e+00 : f32
    %18 = vector.broadcast %cst_6 : f32 to vector<1024x50xf32>
    %19 = arith.addf %17, %18 : vector<1024x50xf32>
    %cst_7 = arith.constant 5.000000e-01 : f32
    %20 = vector.broadcast %cst_7 : f32 to vector<1024x50xf32>
    %21 = arith.mulf %20, %19 : vector<1024x50xf32>
    %22 = arith.truncf %21 : vector<1024x50xf32> to vector<1024x50xbf16>
    %c0_8 = arith.constant 0 : index
    %c0_9 = arith.constant 0 : index
    %c0_10 = arith.constant 0 : index
    %23 = vector.load %arg4[%c0_8, %c0_9, %c0_10] : memref<6x50x50xbf16, #tpu.memory_space<vmem>>, vector<1x50x50xbf16>
    %24 = vector.shape_cast %23 : vector<1x50x50xbf16> to vector<50x50xbf16>
    %cst_11 = arith.constant dense<0.000000e+00> : vector<1024x50xf32>
    %25 = tpu.matmul %22, %24, %cst_11 {dimension_numbers = #tpu.dot_dimension_numbers<[1], [0], [0], [1], [0, 0, 1, 1], [], []>} : vector<1024x50xbf16>, vector<50x50xbf16>, vector<1024x50xf32> -> vector<1024x50xf32>
    %c0_12 = arith.constant 0 : index
    %c0_13 = arith.constant 0 : index
    %c0_14 = arith.constant 0 : index
    %26 = vector.load %arg5[%c0_12, %c0_13, %c0_14] : memref<6x1x50xf32, #tpu.memory_space<vmem>>, vector<1x1x50xf32>
    %27 = vector.shape_cast %26 : vector<1x1x50xf32> to vector<1x50xf32>
    %28 = vector.broadcast %27 : vector<1x50xf32> to vector<1024x50xf32>
    %29 = arith.addf %25, %28 : vector<1024x50xf32>
    %cst_15 = arith.constant 5.000000e-01 : f32
    %30 = vector.broadcast %cst_15 : f32 to vector<1024x50xf32>
    %31 = arith.mulf %30, %29 : vector<1024x50xf32>
    %32 = math.tanh %31 : vector<1024x50xf32>
    %cst_16 = arith.constant 1.000000e+00 : f32
    %33 = vector.broadcast %cst_16 : f32 to vector<1024x50xf32>
    %34 = arith.addf %32, %33 : vector<1024x50xf32>
    %cst_17 = arith.constant 5.000000e-01 : f32
    %35 = vector.broadcast %cst_17 : f32 to vector<1024x50xf32>
    %36 = arith.mulf %35, %34 : vector<1024x50xf32>
    %37 = arith.truncf %36 : vector<1024x50xf32> to vector<1024x50xbf16>
    %c1_18 = arith.constant 1 : index
    %c0_19 = arith.constant 0 : index
    %c0_20 = arith.constant 0 : index
    %38 = vector.load %arg4[%c1_18, %c0_19, %c0_20] : memref<6x50x50xbf16, #tpu.memory_space<vmem>>, vector<1x50x50xbf16>
    %39 = vector.shape_cast %38 : vector<1x50x50xbf16> to vector<50x50xbf16>
    %cst_21 = arith.constant dense<0.000000e+00> : vector<1024x50xf32>
    %40 = tpu.matmul %37, %39, %cst_21 {dimension_numbers = #tpu.dot_dimension_numbers<[1], [0], [0], [1], [0, 0, 1, 1], [], []>} : vector<1024x50xbf16>, vector<50x50xbf16>, vector<1024x50xf32> -> vector<1024x50xf32>
    %c1_22 = arith.constant 1 : index
    %c0_23 = arith.constant 0 : index
    %c0_24 = arith.constant 0 : index
    %41 = vector.load %arg5[%c1_22, %c0_23, %c0_24] : memref<6x1x50xf32, #tpu.memory_space<vmem>>, vector<1x1x50xf32>
    %42 = vector.shape_cast %41 : vector<1x1x50xf32> to vector<1x50xf32>
    %43 = vector.broadcast %42 : vector<1x50xf32> to vector<1024x50xf32>
    %44 = arith.addf %40, %43 : vector<1024x50xf32>
    %cst_25 = arith.constant 5.000000e-01 : f32
    %45 = vector.broadcast %cst_25 : f32 to vector<1024x50xf32>
    %46 = arith.mulf %45, %44 : vector<1024x50xf32>
    %47 = math.tanh %46 : vector<1024x50xf32>
    %cst_26 = arith.constant 1.000000e+00 : f32
    %48 = vector.broadcast %cst_26 : f32 to vector<1024x50xf32>
    %49 = arith.addf %47, %48 : vector<1024x50xf32>
    %cst_27 = arith.constant 5.000000e-01 : f32
    %50 = vector.broadcast %cst_27 : f32 to vector<1024x50xf32>
    %51 = arith.mulf %50, %49 : vector<1024x50xf32>
    %52 = arith.addf %51, %21 : vector<1024x50xf32>
    %53 = arith.truncf %52 : vector<1024x50xf32> to vector<1024x50xbf16>
    %c2 = arith.constant 2 : index
    %c0_28 = arith.constant 0 : index
    %c0_29 = arith.constant 0 : index
    %54 = vector.load %arg4[%c2, %c0_28, %c0_29] : memref<6x50x50xbf16, #tpu.memory_space<vmem>>, vector<1x50x50xbf16>
    %55 = vector.shape_cast %54 : vector<1x50x50xbf16> to vector<50x50xbf16>
    %cst_30 = arith.constant dense<0.000000e+00> : vector<1024x50xf32>
    %56 = tpu.matmul %53, %55, %cst_30 {dimension_numbers = #tpu.dot_dimension_numbers<[1], [0], [0], [1], [0, 0, 1, 1], [], []>} : vector<1024x50xbf16>, vector<50x50xbf16>, vector<1024x50xf32> -> vector<1024x50xf32>
    %c2_31 = arith.constant 2 : index
    %c0_32 = arith.constant 0 : index
    %c0_33 = arith.constant 0 : index
    %57 = vector.load %arg5[%c2_31, %c0_32, %c0_33] : memref<6x1x50xf32, #tpu.memory_space<vmem>>, vector<1x1x50xf32>
    %58 = vector.shape_cast %57 : vector<1x1x50xf32> to vector<1x50xf32>
    %59 = vector.broadcast %58 : vector<1x50xf32> to vector<1024x50xf32>
    %60 = arith.addf %56, %59 : vector<1024x50xf32>
    %cst_34 = arith.constant 5.000000e-01 : f32
    %61 = vector.broadcast %cst_34 : f32 to vector<1024x50xf32>
    %62 = arith.mulf %61, %60 : vector<1024x50xf32>
    %63 = math.tanh %62 : vector<1024x50xf32>
    %cst_35 = arith.constant 1.000000e+00 : f32
    %64 = vector.broadcast %cst_35 : f32 to vector<1024x50xf32>
    %65 = arith.addf %63, %64 : vector<1024x50xf32>
    %cst_36 = arith.constant 5.000000e-01 : f32
    %66 = vector.broadcast %cst_36 : f32 to vector<1024x50xf32>
    %67 = arith.mulf %66, %65 : vector<1024x50xf32>
    %68 = arith.truncf %67 : vector<1024x50xf32> to vector<1024x50xbf16>
    %c3 = arith.constant 3 : index
    %c0_37 = arith.constant 0 : index
    %c0_38 = arith.constant 0 : index
    %69 = vector.load %arg4[%c3, %c0_37, %c0_38] : memref<6x50x50xbf16, #tpu.memory_space<vmem>>, vector<1x50x50xbf16>
    %70 = vector.shape_cast %69 : vector<1x50x50xbf16> to vector<50x50xbf16>
    %cst_39 = arith.constant dense<0.000000e+00> : vector<1024x50xf32>
    %71 = tpu.matmul %68, %70, %cst_39 {dimension_numbers = #tpu.dot_dimension_numbers<[1], [0], [0], [1], [0, 0, 1, 1], [], []>} : vector<1024x50xbf16>, vector<50x50xbf16>, vector<1024x50xf32> -> vector<1024x50xf32>
    %c3_40 = arith.constant 3 : index
    %c0_41 = arith.constant 0 : index
    %c0_42 = arith.constant 0 : index
    %72 = vector.load %arg5[%c3_40, %c0_41, %c0_42] : memref<6x1x50xf32, #tpu.memory_space<vmem>>, vector<1x1x50xf32>
    %73 = vector.shape_cast %72 : vector<1x1x50xf32> to vector<1x50xf32>
    %74 = vector.broadcast %73 : vector<1x50xf32> to vector<1024x50xf32>
    %75 = arith.addf %71, %74 : vector<1024x50xf32>
    %cst_43 = arith.constant 5.000000e-01 : f32
    %76 = vector.broadcast %cst_43 : f32 to vector<1024x50xf32>
    %77 = arith.mulf %76, %75 : vector<1024x50xf32>
    %78 = math.tanh %77 : vector<1024x50xf32>
    %cst_44 = arith.constant 1.000000e+00 : f32
    %79 = vector.broadcast %cst_44 : f32 to vector<1024x50xf32>
    %80 = arith.addf %78, %79 : vector<1024x50xf32>
    %cst_45 = arith.constant 5.000000e-01 : f32
    %81 = vector.broadcast %cst_45 : f32 to vector<1024x50xf32>
    %82 = arith.mulf %81, %80 : vector<1024x50xf32>
    %83 = arith.addf %82, %52 : vector<1024x50xf32>
    %84 = arith.truncf %83 : vector<1024x50xf32> to vector<1024x50xbf16>
    %c4 = arith.constant 4 : index
    %c0_46 = arith.constant 0 : index
    %c0_47 = arith.constant 0 : index
    %85 = vector.load %arg4[%c4, %c0_46, %c0_47] : memref<6x50x50xbf16, #tpu.memory_space<vmem>>, vector<1x50x50xbf16>
    %86 = vector.shape_cast %85 : vector<1x50x50xbf16> to vector<50x50xbf16>
    %cst_48 = arith.constant dense<0.000000e+00> : vector<1024x50xf32>
    %87 = tpu.matmul %84, %86, %cst_48 {dimension_numbers = #tpu.dot_dimension_numbers<[1], [0], [0], [1], [0, 0, 1, 1], [], []>} : vector<1024x50xbf16>, vector<50x50xbf16>, vector<1024x50xf32> -> vector<1024x50xf32>
    %c4_49 = arith.constant 4 : index
    %c0_50 = arith.constant 0 : index
    %c0_51 = arith.constant 0 : index
    %88 = vector.load %arg5[%c4_49, %c0_50, %c0_51] : memref<6x1x50xf32, #tpu.memory_space<vmem>>, vector<1x1x50xf32>
    %89 = vector.shape_cast %88 : vector<1x1x50xf32> to vector<1x50xf32>
    %90 = vector.broadcast %89 : vector<1x50xf32> to vector<1024x50xf32>
    %91 = arith.addf %87, %90 : vector<1024x50xf32>
    %cst_52 = arith.constant 5.000000e-01 : f32
    %92 = vector.broadcast %cst_52 : f32 to vector<1024x50xf32>
    %93 = arith.mulf %92, %91 : vector<1024x50xf32>
    %94 = math.tanh %93 : vector<1024x50xf32>
    %cst_53 = arith.constant 1.000000e+00 : f32
    %95 = vector.broadcast %cst_53 : f32 to vector<1024x50xf32>
    %96 = arith.addf %94, %95 : vector<1024x50xf32>
    %cst_54 = arith.constant 5.000000e-01 : f32
    %97 = vector.broadcast %cst_54 : f32 to vector<1024x50xf32>
    %98 = arith.mulf %97, %96 : vector<1024x50xf32>
    %99 = arith.truncf %98 : vector<1024x50xf32> to vector<1024x50xbf16>
    %c5 = arith.constant 5 : index
    %c0_55 = arith.constant 0 : index
    %c0_56 = arith.constant 0 : index
    %100 = vector.load %arg4[%c5, %c0_55, %c0_56] : memref<6x50x50xbf16, #tpu.memory_space<vmem>>, vector<1x50x50xbf16>
    %101 = vector.shape_cast %100 : vector<1x50x50xbf16> to vector<50x50xbf16>
    %cst_57 = arith.constant dense<0.000000e+00> : vector<1024x50xf32>
    %102 = tpu.matmul %99, %101, %cst_57 {dimension_numbers = #tpu.dot_dimension_numbers<[1], [0], [0], [1], [0, 0, 1, 1], [], []>} : vector<1024x50xbf16>, vector<50x50xbf16>, vector<1024x50xf32> -> vector<1024x50xf32>
    %c5_58 = arith.constant 5 : index
    %c0_59 = arith.constant 0 : index
    %c0_60 = arith.constant 0 : index
    %103 = vector.load %arg5[%c5_58, %c0_59, %c0_60] : memref<6x1x50xf32, #tpu.memory_space<vmem>>, vector<1x1x50xf32>
    %104 = vector.shape_cast %103 : vector<1x1x50xf32> to vector<1x50xf32>
    %105 = vector.broadcast %104 : vector<1x50xf32> to vector<1024x50xf32>
    %106 = arith.addf %102, %105 : vector<1024x50xf32>
    %cst_61 = arith.constant 5.000000e-01 : f32
    %107 = vector.broadcast %cst_61 : f32 to vector<1024x50xf32>
    %108 = arith.mulf %107, %106 : vector<1024x50xf32>
    %109 = math.tanh %108 : vector<1024x50xf32>
    %cst_62 = arith.constant 1.000000e+00 : f32
    %110 = vector.broadcast %cst_62 : f32 to vector<1024x50xf32>
    %111 = arith.addf %109, %110 : vector<1024x50xf32>
    %cst_63 = arith.constant 5.000000e-01 : f32
    %112 = vector.broadcast %cst_63 : f32 to vector<1024x50xf32>
    %113 = arith.mulf %112, %111 : vector<1024x50xf32>
    %114 = arith.addf %113, %83 : vector<1024x50xf32>
    %c0_64 = arith.constant 0 : index
    %c0_65 = arith.constant 0 : index
    %115 = vector.load %arg6[%c0_64, %c0_65] : memref<1x50xf32, #tpu.memory_space<vmem>>, vector<1x50xf32>
    %116 = vector.broadcast %115 : vector<1x50xf32> to vector<1024x50xf32>
    %117 = arith.mulf %114, %116 : vector<1024x50xf32>
    %cst_66 = arith.constant dense<0.000000e+00> : vector<1024xf32>
    %118 = vector.multi_reduction <add>, %117, %cst_66 [1] : vector<1024x50xf32> to vector<1024xf32>
    %119 = vector.shape_cast %118 : vector<1024xf32> to vector<1024x1xf32>
    %c0_67 = arith.constant 0 : index
    %c0_68 = arith.constant 0 : index
    %120 = vector.load %arg7[%c0_67, %c0_68] : memref<1x1xf32, #tpu.memory_space<vmem>>, vector<1x1xf32>
    %121 = vector.broadcast %120 : vector<1x1xf32> to vector<1024x1xf32>
    %122 = arith.addf %119, %121 : vector<1024x1xf32>
    %c0_69 = arith.constant 0 : index
    %c0_70 = arith.constant 0 : index
    %123 = vector.load %arg8[%c0_69, %c0_70] : memref<1024x1xf32, #tpu.memory_space<vmem>>, vector<1024x1xf32>
    tpu.vector_store %arg8[%c0_69, %c0_70], %122 {strides = array<i32>} : memref<1024x1xf32, #tpu.memory_space<vmem>>, vector<1024x1xf32>,
    return
  }
  func.func @transform_0(%arg0: i32) -> (i32, i32) {
    %c0_i32 = arith.constant 0 : i32
    %c0_i32_0 = arith.constant 0 : i32
    return %arg0, %c0_i32 : i32, i32
  }
  func.func @transform_1(%arg0: i32) -> (i32, i32) {
    %c0_i32 = arith.constant 0 : i32
    %c0_i32_0 = arith.constant 0 : i32
    %c0_i32_1 = arith.constant 0 : i32
    return %c0_i32, %c0_i32_0 : i32, i32
  }
  func.func @transform_2(%arg0: i32) -> (i32, i32) {
    %c0_i32 = arith.constant 0 : i32
    %c0_i32_0 = arith.constant 0 : i32
    %c0_i32_1 = arith.constant 0 : i32
    return %c0_i32, %c0_i32_0 : i32, i32
  }
  func.func @transform_3(%arg0: i32) -> (i32, i32, i32) {
    %c0_i32 = arith.constant 0 : i32
    %c0_i32_0 = arith.constant 0 : i32
    %c0_i32_1 = arith.constant 0 : i32
    %c0_i32_2 = arith.constant 0 : i32
    return %c0_i32, %c0_i32_0, %c0_i32_1 : i32, i32, i32
  }
  func.func @transform_4(%arg0: i32) -> (i32, i32, i32) {
    %c0_i32 = arith.constant 0 : i32
    %c0_i32_0 = arith.constant 0 : i32
    %c0_i32_1 = arith.constant 0 : i32
    %c0_i32_2 = arith.constant 0 : i32
    return %c0_i32, %c0_i32_0, %c0_i32_1 : i32, i32, i32
  }
  func.func @transform_5(%arg0: i32) -> (i32, i32) {
    %c0_i32 = arith.constant 0 : i32
    %c0_i32_0 = arith.constant 0 : i32
    %c0_i32_1 = arith.constant 0 : i32
    return %c0_i32, %c0_i32_0 : i32, i32
  }
  func.func @transform_6(%arg0: i32) -> (i32, i32) {
    %c0_i32 = arith.constant 0 : i32
    %c0_i32_0 = arith.constant 0 : i32
    %c0_i32_1 = arith.constant 0 : i32
    return %c0_i32, %c0_i32_0 : i32, i32
  }
  func.func @transform_7(%arg0: i32) -> (i32, i32) {
    %c0_i32 = arith.constant 0 : i32
    %c0_i32_0 = arith.constant 0 : i32
    return %arg0, %c0_i32 : i32, i32
  }
}

</mosaic_0001>

<llo_original>
// kernel: tpu_custom_call.1
$region0: #{tpu_custom_call.1}
  #allocation0 [shape = 'u32[]', space=smem, size = 0x4, offset = 0x4, fixed_abs, tag = 'smem constant byte address 0x4 - core index']
  #allocation1 [shape = 'u32[144,128]{1,0:T(1,128)}', space=vmem, size = 0x12000, scoped, tag = 'internal scratch']
  #allocation2 [shape = 'f32[1,1]{1,0:T(1,128)S(1)}', space=vmem, size = 0x200, scoped, tag = 'scoped memory for tpu_custom_call.1']
  %s0 = inlined_call_operand.vmem [shape: f32[2048,2], index: 0, kind: input, shape index: {}]
  %s1 = inlined_call_operand.vmem [shape: f32[2,50], index: 1, kind: input, shape index: {}]
  %s2 = inlined_call_operand.vmem [shape: f32[1,50], index: 2, kind: input, shape index: {}]
  %s3 = inlined_call_operand.vmem [shape: bf16[6,50,50], index: 3, kind: input, shape index: {}]
  %s4 = inlined_call_operand.vmem [shape: f32[6,1,50], index: 4, kind: input, shape index: {}]
  %s5 = inlined_call_operand.vmem [shape: f32[1,50], index: 5, kind: input, shape index: {}]
  %s6 = inlined_call_operand.<no memory space> [shape: f32[1,1], index: 6, kind: input, shape index: {}]
  %s7 = inlined_call_operand.vmem [shape: f32[2048,1], index: 7, kind: output, shape index: {}]
  %s8 = sld [smem:[#allocation0]]
  $region61: #{tpu_custom_call.1} parent=0
    _
  %s10 = ssub.s32 1, %s8
  %s11 = scalar_select 0, %s10, %s8
  %v12 = vstv %s6
  %13 = vst [vmem:[#allocation2] sm:$0x1] %v12
  loop: start=0, step=1, limit=4
  $region2: #{tpu_custom_call.1} parent=0 // loop_pre_header
    _
  $region3: #{tpu_custom_call.1} parent=0 // loop_header
    %s15 = sphi 0, %s19
    %p16 = scmp.ge.s32.totalorder %s15, 4
    %s25 = sphi 0, %s27
    %s28 = sphi 0, %s25
    %s29 = sphi 0, %s28
    %s45 = sphi 0, %s29
    %s49 = sphi 0, %s49
    %s51 = sphi 0, %s49
    %s52 = sphi 0, %s51
    %s66 = sphi 0, %s52
    %s70 = sphi 0, %s70
    %s72 = sphi 0, %s70
    %s73 = sphi 0, %s72
    %s87 = sphi 0, %s73
    %s91 = sphi 0, %s91
    %s93 = sphi 0, %s91
    %s94 = sphi 0, %s93
    %s108 = sphi 0, %s94
    %s112 = sphi 0, %s112
    %s114 = sphi 0, %s112
    %s115 = sphi 0, %s114
    %s129 = sphi 0, %s115
    %s133 = sphi 0, %s133
    %s135 = sphi 0, %s133
    %s136 = sphi 0, %s135
    %s150 = sphi 0, %s136
    %s154 = sphi 0, %s154
    %s156 = sphi 0, %s154
    %s157 = sphi 0, %s156
    %s171 = sphi 0, %s157
    %s177 = sphi 0, %s179
    %s180 = sphi 0, %s177
    %s181 = sphi 0, %s180
    %s197 = sphi 0, %s181
  $region4: #{tpu_custom_call.1} parent=0 // loop_header_branch
    %18 = sbr.rel (%p16) target = $region8
  $region5: #{tpu_custom_call.1} parent=0 // loop_body
    %s20 = ssub.s32 %s15, 1
    %s21 = ssub.s32 %s15, 2
    %s22 = sadd.s32 %s15, 1
    %s23 = ssub.s32 %s15, %s22
    %p24 = scmp.eq.s32.totalorder %s23, 0
    %s26 = sadd.s32 %s25, 1
    %s27 = scalar_select %p24, %s25, %s26
    %p30 = pneg %p24
    %p31 = scmp.eq.s32.totalorder %s15, 1
    %p32 = por %p30, %p31
    %p33 = scmp.ne.s32.totalorder %s25, %s28
    %p34 = scmp.eq.s32.totalorder %s15, 0
    %p35 = por %p33, %p34
    %p36 = scmp.ne.s32.totalorder %s25, %s28
    %p37 = scmp.eq.s32.totalorder %s20, 1
    %p38 = por %p36, %p37
    %p39 = scmp.ne.s32.totalorder %s28, %s29
    %p40 = scmp.eq.s32.totalorder %s20, 0
    %p41 = por %p39, %p40
    %p42 = scmp.ne.s32.totalorder %s28, %s29
    %p43 = scmp.eq.s32.totalorder %s21, 1
    %p44 = por %p42, %p43
    %p46 = scmp.ne.s32.totalorder %s29, %s45
    %p47 = scmp.eq.s32.totalorder %s21, 0
    %p48 = por %p46, %p47
    %s50 = sadd.s32 %s49, 1
    %p53 = scmp.eq.s32.totalorder %s15, 1
    %p54 = scmp.ne.s32.totalorder %s49, %s51
    %p55 = scmp.eq.s32.totalorder %s15, 0
    %p56 = por %p54, %p55
    %p57 = scmp.ne.s32.totalorder %s49, %s51
    %p58 = scmp.eq.s32.totalorder %s20, 1
    %p59 = por %p57, %p58
    %p60 = scmp.ne.s32.totalorder %s51, %s52
    %p61 = scmp.eq.s32.totalorder %s20, 0
    %p62 = por %p60, %p61
    %p63 = scmp.ne.s32.totalorder %s51, %s52
    %p64 = scmp.eq.s32.totalorder %s21, 1
    %p65 = por %p63, %p64
    %p67 = scmp.ne.s32.totalorder %s52, %s66
    %p68 = scmp.eq.s32.totalorder %s21, 0
    %p69 = por %p67, %p68
    %s71 = sadd.s32 %s70, 1
    %p74 = scmp.eq.s32.totalorder %s15, 1
    %p75 = scmp.ne.s32.totalorder %s70, %s72
    %p76 = scmp.eq.s32.totalorder %s15, 0
    %p77 = por %p75, %p76
    %p78 = scmp.ne.s32.totalorder %s70, %s72
    %p79 = scmp.eq.s32.totalorder %s20, 1
    %p80 = por %p78, %p79
    %p81 = scmp.ne.s32.totalorder %s72, %s73
    %p82 = scmp.eq.s32.totalorder %s20, 0
    %p83 = por %p81, %p82
    %p84 = scmp.ne.s32.totalorder %s72, %s73
    %p85 = scmp.eq.s32.totalorder %s21, 1
    %p86 = por %p84, %p85
    %p88 = scmp.ne.s32.totalorder %s73, %s87
    %p89 = scmp.eq.s32.totalorder %s21, 0
    %p90 = por %p88, %p89
    %s92 = sadd.s32 %s91, 1
    %p95 = scmp.eq.s32.totalorder %s15, 1
    %p96 = scmp.ne.s32.totalorder %s91, %s93
    %p97 = scmp.eq.s32.totalorder %s15, 0
    %p98 = por %p96, %p97
    %p99 = scmp.ne.s32.totalorder %s91, %s93
    %p100 = scmp.eq.s32.totalorder %s20, 1
    %p101 = por %p99, %p100
    %p102 = scmp.ne.s32.totalorder %s93, %s94
    %p103 = scmp.eq.s32.totalorder %s20, 0
    %p104 = por %p102, %p103
    %p105 = scmp.ne.s32.totalorder %s93, %s94
    %p106 = scmp.eq.s32.totalorder %s21, 1
    %p107 = por %p105, %p106
    %p109 = scmp.ne.s32.totalorder %s94, %s108
    %p110 = scmp.eq.s32.totalorder %s21, 0
    %p111 = por %p109, %p110
    %s113 = sadd.s32 %s112, 1
    %p116 = scmp.eq.s32.totalorder %s15, 1
    %p117 = scmp.ne.s32.totalorder %s112, %s114
    %p118 = scmp.eq.s32.totalorder %s15, 0
    %p119 = por %p117, %p118
    %p120 = scmp.ne.s32.totalorder %s112, %s114
    %p121 = scmp.eq.s32.totalorder %s20, 1
    %p122 = por %p120, %p121
    %p123 = scmp.ne.s32.totalorder %s114, %s115
    %p124 = scmp.eq.s32.totalorder %s20, 0
    %p125 = por %p123, %p124
    %p126 = scmp.ne.s32.totalorder %s114, %s115
    %p127 = scmp.eq.s32.totalorder %s21, 1
    %p128 = por %p126, %p127
    %p130 = scmp.ne.s32.totalorder %s115, %s129
    %p131 = scmp.eq.s32.totalorder %s21, 0
    %p132 = por %p130, %p131
    %s134 = sadd.s32 %s133, 1
    %p137 = scmp.eq.s32.totalorder %s15, 1
    %p138 = scmp.ne.s32.totalorder %s133, %s135
    %p139 = scmp.eq.s32.totalorder %s15, 0
    %p140 = por %p138, %p139
    %p141 = scmp.ne.s32.totalorder %s133, %s135
    %p142 = scmp.eq.s32.totalorder %s20, 1
    %p143 = por %p141, %p142
    %p144 = scmp.ne.s32.totalorder %s135, %s136
    %p145 = scmp.eq.s32.totalorder %s20, 0
    %p146 = por %p144, %p145
    %p147 = scmp.ne.s32.totalorder %s135, %s136
    %p148 = scmp.eq.s32.totalorder %s21, 1
    %p149 = por %p147, %p148
    %p151 = scmp.ne.s32.totalorder %s136, %s150
    %p152 = scmp.eq.s32.totalorder %s21, 0
    %p153 = por %p151, %p152
    %s155 = sadd.s32 %s154, 1
    %p158 = scmp.eq.s32.totalorder %s15, 1
    %p159 = scmp.ne.s32.totalorder %s154, %s156
    %p160 = scmp.eq.s32.totalorder %s15, 0
    %p161 = por %p159, %p160
    %p162 = scmp.ne.s32.totalorder %s154, %s156
    %p163 = scmp.eq.s32.totalorder %s20, 1
    %p164 = por %p162, %p163
    %p165 = scmp.ne.s32.totalorder %s156, %s157
    %p166 = scmp.eq.s32.totalorder %s20, 0
    %p167 = por %p165, %p166
    %p168 = scmp.ne.s32.totalorder %s156, %s157
    %p169 = scmp.eq.s32.totalorder %s21, 1
    %p170 = por %p168, %p169
    %p172 = scmp.ne.s32.totalorder %s157, %s171
    %p173 = scmp.eq.s32.totalorder %s21, 0
    %p174 = por %p172, %p173
    %s175 = ssub.s32 %s15, %s22
    %p176 = scmp.eq.s32.totalorder %s175, 0
    %s178 = sadd.s32 %s177, 1
    %s179 = scalar_select %p176, %s177, %s178
    %p182 = pneg %p176
    %p183 = scmp.eq.s32.totalorder %s15, 1
    %p184 = por %p182, %p183
    %p185 = scmp.ne.s32.totalorder %s177, %s180
    %p186 = scmp.eq.s32.totalorder %s15, 0
    %p187 = por %p185, %p186
    %p188 = scmp.ne.s32.totalorder %s177, %s180
    %p189 = scmp.eq.s32.totalorder %s20, 1
    %p190 = por %p188, %p189
    %p191 = scmp.ne.s32.totalorder %s180, %s181
    %p192 = scmp.eq.s32.totalorder %s20, 0
    %p193 = por %p191, %p192
    %p194 = scmp.ne.s32.totalorder %s180, %s181
    %p195 = scmp.eq.s32.totalorder %s21, 1
    %p196 = por %p194, %p195
    %p198 = scmp.ne.s32.totalorder %s181, %s197
    %p199 = scmp.eq.s32.totalorder %s21, 0
    %p200 = por %p198, %p199
    %p201 = scmp.le.s32.totalorder 1, %s15
    %p202 = scmp.lt.s32.totalorder %s15, 3
    %p203 = pnand %p201, %p202
    %p204 = pneg %p203
    // Predicated region
    $region9: #{tpu_custom_call.1} parent=5 // pred_check
      _
    $region10: #{tpu_custom_call.1} parent=5 // pred_check_branch
      %206 = sbr.rel (%p203) target = $region12
    $region11: #{tpu_custom_call.1} parent=5 // pred_region
      %s207 = ssub.s32 %s15, 1
      // Predicated region
      $region13: #{tpu_custom_call.1} parent=11 // pred_check
        %p208 = pneg %p62
      $region14: #{tpu_custom_call.1} parent=11 // pred_check_branch
        %210 = sbr.rel (%p208) target = $region16
      $region15: #{tpu_custom_call.1} parent=11 // pred_region
        _
      $region16: #{tpu_custom_call.1} parent=11 // pred_fallthru
        _
      // Predicated region
      $region17: #{tpu_custom_call.1} parent=11 // pred_check
        %p211 = pneg %p83
      $region18: #{tpu_custom_call.1} parent=11 // pred_check_branch
        %213 = sbr.rel (%p211) target = $region20
      $region19: #{tpu_custom_call.1} parent=11 // pred_region
        _
      $region20: #{tpu_custom_call.1} parent=11 // pred_fallthru
        _
      // Predicated region
      $region21: #{tpu_custom_call.1} parent=11 // pred_check
        %p214 = pneg %p104
      $region22: #{tpu_custom_call.1} parent=11 // pred_check_branch
        %216 = sbr.rel (%p214) target = $region24
      $region23: #{tpu_custom_call.1} parent=11 // pred_region
        _
      $region24: #{tpu_custom_call.1} parent=11 // pred_fallthru
        _
      // Predicated region
      $region25: #{tpu_custom_call.1} parent=11 // pred_check
        %p217 = pneg %p125
      $region26: #{tpu_custom_call.1} parent=11 // pred_check_branch
        %219 = sbr.rel (%p217) target = $region28
      $region27: #{tpu_custom_call.1} parent=11 // pred_region
        _
      $region28: #{tpu_custom_call.1} parent=11 // pred_fallthru
        _
      // Predicated region
      $region29: #{tpu_custom_call.1} parent=11 // pred_check
        %p220 = pneg %p146
      $region30: #{tpu_custom_call.1} parent=11 // pred_check_branch
        %222 = sbr.rel (%p220) target = $region32
      $region31: #{tpu_custom_call.1} parent=11 // pred_region
        _
      $region32: #{tpu_custom_call.1} parent=11 // pred_fallthru
        _
      // Predicated region
      $region33: #{tpu_custom_call.1} parent=11 // pred_check
        %p223 = pneg %p167
      $region34: #{tpu_custom_call.1} parent=11 // pred_check_branch
        %225 = sbr.rel (%p223) target = $region36
      $region35: #{tpu_custom_call.1} parent=11 // pred_region
        _
      $region36: #{tpu_custom_call.1} parent=11 // pred_fallthru
        _
    $region12: #{tpu_custom_call.1} parent=5 // pred_fallthru
      _
    %p226 = scmp.lt.s32.totalorder %s15, 2
    // Predicated region
    $region37: #{tpu_custom_call.1} parent=5 // pred_check
      %p227 = pneg %p226
    $region38: #{tpu_custom_call.1} parent=5 // pred_check_branch
      %229 = sbr.rel (%p227) target = $region40
    $region39: #{tpu_custom_call.1} parent=5 // pred_region
      // Predicated region
      $region41: #{tpu_custom_call.1} parent=39 // pred_check
        %p230 = pneg %p35
      $region42: #{tpu_custom_call.1} parent=39 // pred_check_branch
        %232 = sbr.rel (%p230) target = $region44
      $region43: #{tpu_custom_call.1} parent=39 // pred_region
        %s233 = smul.u32 128, %s15
        %p234 = scmp.lt.s32.totalorder %s233, 255
        %s235 = scalar_select %p234, %s233, 255
        %s236 = smul.addr %s235, 8
        %s237 = scalar_lea.vmem %s0, %s236
        %s238 = smul.u32 128, %s15
      $region44: #{tpu_custom_call.1} parent=39 // pred_fallthru
        _
    $region40: #{tpu_custom_call.1} parent=5 // pred_fallthru
      _
    %p239 = scmp.le.s32.totalorder 1, %s15
    %p240 = scmp.lt.s32.totalorder %s15, 3
    %p241 = pnand %p239, %p240
    %p242 = pneg %p241
    // Predicated region
    $region45: #{tpu_custom_call.1} parent=5 // pred_check
      _
    $region46: #{tpu_custom_call.1} parent=5 // pred_check_branch
      %244 = sbr.rel (%p241) target = $region48
    $region47: #{tpu_custom_call.1} parent=5 // pred_region
      %s245 = ssub.s32 %s15, 1
      %s246 = smul.u32 128, %s20
      %p247 = scmp.lt.s32.totalorder %s246, 255
      %s248 = scalar_select %p247, %s246, 255
      %s249 = smul.addr %s248, 8
      %s250 = scalar_lea.vmem %s0, %s249
      %p251 = pneg %p41
      %p252 = pneg %p38
      %p253 = pneg %p62
      %p254 = pneg %p59
      %p255 = pneg %p83
      %p256 = pneg %p80
      %p257 = pneg %p104
      %p258 = pneg %p101
      %p259 = pneg %p125
      %p260 = pneg %p122
      %p261 = pneg %p146
      %p262 = pneg %p143
      %p263 = pneg %p167
      %p264 = pneg %p164
      %p265 = pneg %p193
      %p266 = pneg %p190
      %s267 = smul.u32 128, %s20
      %p268 = scmp.lt.s32.totalorder %s267, 255
      %s269 = scalar_select %p268, %s267, 255
      %s270 = smul.addr %s269, 8
      %s271 = scalar_lea.vmem %s7, %s270
      %s272 = smul.u32 128, %s20
      %p273 = scmp.lt.s32.totalorder %s272, 255
      %s274 = scalar_select %p273, %s272, 255
      %s275 = smul.addr %s274, 8
      %s276 = scalar_lea.vmem %s0, %s275
      %s277 = smul.u32 128, %s20
      %s278 = smul.u32 128, %s20
      %p279 = scmp.lt.s32.totalorder %s278, 255
      %s280 = scalar_select %p279, %s278, 255
      %s281 = smul.addr %s280, 8
      %s282 = scalar_lea.vmem %s7, %s281
      %s283 = smul.u32 128, %s20
      %v285 = vld [vmem:[%s276] sm:$0xff]
      %v286 = vld [vmem:[%s276 + $0x8] sm:$0xff]
      %v287 = vld [vmem:[%s276 + $0x10] sm:$0xff]
      %v288 = vld [vmem:[%s276 + $0x18] sm:$0xff]
      %v289 = vld [vmem:[%s276 + $0x20] sm:$0xff]
      %v290 = vld [vmem:[%s276 + $0x28] sm:$0xff]
      %v291 = vld [vmem:[%s276 + $0x30] sm:$0xff]
      %v292 = vld [vmem:[%s276 + $0x38] sm:$0xff]
      %v293 = vld [vmem:[%s276 + $0x40] sm:$0xff]
      %v294 = vld [vmem:[%s276 + $0x48] sm:$0xff]
      %v295 = vld [vmem:[%s276 + $0x50] sm:$0xff]
      %v296 = vld [vmem:[%s276 + $0x58] sm:$0xff]
      %v297 = vld [vmem:[%s276 + $0x60] sm:$0xff]
      %v298 = vld [vmem:[%s276 + $0x68] sm:$0xff]
      %v299 = vld [vmem:[%s276 + $0x70] sm:$0xff]
      %v300 = vld [vmem:[%s276 + $0x78] sm:$0xff]
      %v301 = vld [vmem:[%s276 + $0x80] sm:$0xff]
      %v302 = vld [vmem:[%s276 + $0x88] sm:$0xff]
      %v303 = vld [vmem:[%s276 + $0x90] sm:$0xff]
      %v304 = vld [vmem:[%s276 + $0x98] sm:$0xff]
      %v305 = vld [vmem:[%s276 + $0xa0] sm:$0xff]
      %v306 = vld [vmem:[%s276 + $0xa8] sm:$0xff]
      %v307 = vld [vmem:[%s276 + $0xb0] sm:$0xff]
      %v308 = vld [vmem:[%s276 + $0xb8] sm:$0xff]
      %v309 = vld [vmem:[%s276 + $0xc0] sm:$0xff]
      %v310 = vld [vmem:[%s276 + $0xc8] sm:$0xff]
      %v311 = vld [vmem:[%s276 + $0xd0] sm:$0xff]
      %v312 = vld [vmem:[%s276 + $0xd8] sm:$0xff]
      %v313 = vld [vmem:[%s276 + $0xe0] sm:$0xff]
      %v314 = vld [vmem:[%s276 + $0xe8] sm:$0xff]
      %v315 = vld [vmem:[%s276 + $0xf0] sm:$0xff]
      %v316 = vld [vmem:[%s276 + $0xf8] sm:$0xff]
      %v317 = vld [vmem:[%s276 + $0x100] sm:$0xff]
      %v318 = vld [vmem:[%s276 + $0x108] sm:$0xff]
      %v319 = vld [vmem:[%s276 + $0x110] sm:$0xff]
      %v320 = vld [vmem:[%s276 + $0x118] sm:$0xff]
      %v321 = vld [vmem:[%s276 + $0x120] sm:$0xff]
      %v322 = vld [vmem:[%s276 + $0x128] sm:$0xff]
      %v323 = vld [vmem:[%s276 + $0x130] sm:$0xff]
      %v324 = vld [vmem:[%s276 + $0x138] sm:$0xff]
      %v325 = vld [vmem:[%s276 + $0x140] sm:$0xff]
      %v326 = vld [vmem:[%s276 + $0x148] sm:$0xff]
      %v327 = vld [vmem:[%s276 + $0x150] sm:$0xff]
      %v328 = vld [vmem:[%s276 + $0x158] sm:$0xff]
      %v329 = vld [vmem:[%s276 + $0x160] sm:$0xff]
      %v330 = vld [vmem:[%s276 + $0x168] sm:$0xff]
      %v331 = vld [vmem:[%s276 + $0x170] sm:$0xff]
      %v332 = vld [vmem:[%s276 + $0x178] sm:$0xff]
      %v333 = vld [vmem:[%s276 + $0x180] sm:$0xff]
      %v334 = vld [vmem:[%s276 + $0x188] sm:$0xff]
      %v335 = vld [vmem:[%s276 + $0x190] sm:$0xff]
      %v336 = vld [vmem:[%s276 + $0x198] sm:$0xff]
      %v337 = vld [vmem:[%s276 + $0x1a0] sm:$0xff]
      %v338 = vld [vmem:[%s276 + $0x1a8] sm:$0xff]
      %v339 = vld [vmem:[%s276 + $0x1b0] sm:$0xff]
      %v340 = vld [vmem:[%s276 + $0x1b8] sm:$0xff]
      %v341 = vld [vmem:[%s276 + $0x1c0] sm:$0xff]
      %v342 = vld [vmem:[%s276 + $0x1c8] sm:$0xff]
      %v343 = vld [vmem:[%s276 + $0x1d0] sm:$0xff]
      %v344 = vld [vmem:[%s276 + $0x1d8] sm:$0xff]
      %v345 = vld [vmem:[%s276 + $0x1e0] sm:$0xff]
      %v346 = vld [vmem:[%s276 + $0x1e8] sm:$0xff]
      %v347 = vld [vmem:[%s276 + $0x1f0] sm:$0xff]
      %v348 = vld [vmem:[%s276 + $0x1f8] sm:$0xff]
      %v349 = vld [vmem:[%s276 + $0x200] sm:$0xff]
      %v350 = vld [vmem:[%s276 + $0x208] sm:$0xff]
      %v351 = vld [vmem:[%s276 + $0x210] sm:$0xff]
      %v352 = vld [vmem:[%s276 + $0x218] sm:$0xff]
      %v353 = vld [vmem:[%s276 + $0x220] sm:$0xff]
      %v354 = vld [vmem:[%s276 + $0x228] sm:$0xff]
      %v355 = vld [vmem:[%s276 + $0x230] sm:$0xff]
      %v356 = vld [vmem:[%s276 + $0x238] sm:$0xff]
      %v357 = vld [vmem:[%s276 + $0x240] sm:$0xff]
      %v358 = vld [vmem:[%s276 + $0x248] sm:$0xff]
      %v359 = vld [vmem:[%s276 + $0x250] sm:$0xff]
      %v360 = vld [vmem:[%s276 + $0x258] sm:$0xff]
      %v361 = vld [vmem:[%s276 + $0x260] sm:$0xff]
      %v362 = vld [vmem:[%s276 + $0x268] sm:$0xff]
      %v363 = vld [vmem:[%s276 + $0x270] sm:$0xff]
      %v364 = vld [vmem:[%s276 + $0x278] sm:$0xff]
      %v365 = vld [vmem:[%s276 + $0x280] sm:$0xff]
      %v366 = vld [vmem:[%s276 + $0x288] sm:$0xff]
      %v367 = vld [vmem:[%s276 + $0x290] sm:$0xff]
      %v368 = vld [vmem:[%s276 + $0x298] sm:$0xff]
      %v369 = vld [vmem:[%s276 + $0x2a0] sm:$0xff]
      %v370 = vld [vmem:[%s276 + $0x2a8] sm:$0xff]
      %v371 = vld [vmem:[%s276 + $0x2b0] sm:$0xff]
      %v372 = vld [vmem:[%s276 + $0x2b8] sm:$0xff]
      %v373 = vld [vmem:[%s276 + $0x2c0] sm:$0xff]
      %v374 = vld [vmem:[%s276 + $0x2c8] sm:$0xff]
      %v375 = vld [vmem:[%s276 + $0x2d0] sm:$0xff]
      %v376 = vld [vmem:[%s276 + $0x2d8] sm:$0xff]
      %v377 = vld [vmem:[%s276 + $0x2e0] sm:$0xff]
      %v378 = vld [vmem:[%s276 + $0x2e8] sm:$0xff]
      %v379 = vld [vmem:[%s276 + $0x2f0] sm:$0xff]
      %v380 = vld [vmem:[%s276 + $0x2f8] sm:$0xff]
      %v381 = vld [vmem:[%s276 + $0x300] sm:$0xff]
      %v382 = vld [vmem:[%s276 + $0x308] sm:$0xff]
      %v383 = vld [vmem:[%s276 + $0x310] sm:$0xff]
      %v384 = vld [vmem:[%s276 + $0x318] sm:$0xff]
      %v385 = vld [vmem:[%s276 + $0x320] sm:$0xff]
      %v386 = vld [vmem:[%s276 + $0x328] sm:$0xff]
      %v387 = vld [vmem:[%s276 + $0x330] sm:$0xff]
      %v388 = vld [vmem:[%s276 + $0x338] sm:$0xff]
      %v389 = vld [vmem:[%s276 + $0x340] sm:$0xff]
      %v390 = vld [vmem:[%s276 + $0x348] sm:$0xff]
      %v391 = vld [vmem:[%s276 + $0x350] sm:$0xff]
      %v392 = vld [vmem:[%s276 + $0x358] sm:$0xff]
      %v393 = vld [vmem:[%s276 + $0x360] sm:$0xff]
      %v394 = vld [vmem:[%s276 + $0x368] sm:$0xff]
      %v395 = vld [vmem:[%s276 + $0x370] sm:$0xff]
      %v396 = vld [vmem:[%s276 + $0x378] sm:$0xff]
      %v397 = vld [vmem:[%s276 + $0x380] sm:$0xff]
      %v398 = vld [vmem:[%s276 + $0x388] sm:$0xff]
      %v399 = vld [vmem:[%s276 + $0x390] sm:$0xff]
      %v400 = vld [vmem:[%s276 + $0x398] sm:$0xff]
      %v401 = vld [vmem:[%s276 + $0x3a0] sm:$0xff]
      %v402 = vld [vmem:[%s276 + $0x3a8] sm:$0xff]
      %v403 = vld [vmem:[%s276 + $0x3b0] sm:$0xff]
      %v404 = vld [vmem:[%s276 + $0x3b8] sm:$0xff]
      %v405 = vld [vmem:[%s276 + $0x3c0] sm:$0xff]
      %v406 = vld [vmem:[%s276 + $0x3c8] sm:$0xff]
      %v407 = vld [vmem:[%s276 + $0x3d0] sm:$0xff]
      %v408 = vld [vmem:[%s276 + $0x3d8] sm:$0xff]
      %v409 = vld [vmem:[%s276 + $0x3e0] sm:$0xff]
      %v410 = vld [vmem:[%s276 + $0x3e8] sm:$0xff]
      %v411 = vld [vmem:[%s276 + $0x3f0] sm:$0xff]
      %v412 = vld [vmem:[%s276 + $0x3f8] sm:$0xff]
      %v413 = vld [vmem:[%s2] sm:$0x1]
      %v414 = vld [vmem:[%s1] sm:$0x1]
      %416 = vset.pattern.permute.xlu0 0
      %417 = vperm.xlu0 %416, %v285
      %v418 = vpop.permute.xlu0 %417
      %421 = vset.pattern.permute.xlu0 0
      %422 = vperm.xlu0 %421, %v286
      %v423 = vpop.permute.xlu0 %422
      %426 = vset.pattern.permute.xlu0 0
      %427 = vperm.xlu0 %426, %v287
      %v428 = vpop.permute.xlu0 %427
      %431 = vset.pattern.permute.xlu0 0
      %432 = vperm.xlu0 %431, %v288
      %v433 = vpop.permute.xlu0 %432
      %436 = vset.pattern.permute.xlu0 0
      %437 = vperm.xlu0 %436, %v289
      %v438 = vpop.permute.xlu0 %437
      %441 = vset.pattern.permute.xlu0 0
      %442 = vperm.xlu0 %441, %v290
      %v443 = vpop.permute.xlu0 %442
      %446 = vset.pattern.permute.xlu0 0
      %447 = vperm.xlu0 %446, %v291
      %v448 = vpop.permute.xlu0 %447
      %451 = vset.pattern.permute.xlu0 0
      %452 = vperm.xlu0 %451, %v292
      %v453 = vpop.permute.xlu0 %452
      %456 = vset.pattern.permute.xlu0 0
      %457 = vperm.xlu0 %456, %v293
      %v458 = vpop.permute.xlu0 %457
      %461 = vset.pattern.permute.xlu0 0
      %462 = vperm.xlu0 %461, %v294
      %v463 = vpop.permute.xlu0 %462
      %466 = vset.pattern.permute.xlu0 0
      %467 = vperm.xlu0 %466, %v295
      %v468 = vpop.permute.xlu0 %467
      %471 = vset.pattern.permute.xlu0 0
      %472 = vperm.xlu0 %471, %v296
      %v473 = vpop.permute.xlu0 %472
      %476 = vset.pattern.permute.xlu0 0
      %477 = vperm.xlu0 %476, %v297
      %v478 = vpop.permute.xlu0 %477
      %481 = vset.pattern.permute.xlu0 0
      %482 = vperm.xlu0 %481, %v298
      %v483 = vpop.permute.xlu0 %482
      %486 = vset.pattern.permute.xlu0 0
      %487 = vperm.xlu0 %486, %v299
      %v488 = vpop.permute.xlu0 %487
      %491 = vset.pattern.permute.xlu0 0
      %492 = vperm.xlu0 %491, %v300
      %v493 = vpop.permute.xlu0 %492
      %496 = vset.pattern.permute.xlu0 0
      %497 = vperm.xlu0 %496, %v301
      %v498 = vpop.permute.xlu0 %497
      %501 = vset.pattern.permute.xlu0 0
      %502 = vperm.xlu0 %501, %v302
      %v503 = vpop.permute.xlu0 %502
      %506 = vset.pattern.permute.xlu0 0
      %507 = vperm.xlu0 %506, %v303
      %v508 = vpop.permute.xlu0 %507
      %511 = vset.pattern.permute.xlu0 0
      %512 = vperm.xlu0 %511, %v304
      %v513 = vpop.permute.xlu0 %512
      %516 = vset.pattern.permute.xlu0 0
      %517 = vperm.xlu0 %516, %v305
      %v518 = vpop.permute.xlu0 %517
      %521 = vset.pattern.permute.xlu0 0
      %522 = vperm.xlu0 %521, %v306
      %v523 = vpop.permute.xlu0 %522
      %526 = vset.pattern.permute.xlu0 0
      %527 = vperm.xlu0 %526, %v307
      %v528 = vpop.permute.xlu0 %527
      %531 = vset.pattern.permute.xlu0 0
      %532 = vperm.xlu0 %531, %v308
      %v533 = vpop.permute.xlu0 %532
      %536 = vset.pattern.permute.xlu0 0
      %537 = vperm.xlu0 %536, %v309
      %v538 = vpop.permute.xlu0 %537
      %541 = vset.pattern.permute.xlu0 0
      %542 = vperm.xlu0 %541, %v310
      %v543 = vpop.permute.xlu0 %542
      %546 = vset.pattern.permute.xlu0 0
      %547 = vperm.xlu0 %546, %v311
      %v548 = vpop.permute.xlu0 %547
      %551 = vset.pattern.permute.xlu0 0
      %552 = vperm.xlu0 %551, %v312
      %v553 = vpop.permute.xlu0 %552
      %556 = vset.pattern.permute.xlu0 0
      %557 = vperm.xlu0 %556, %v313
      %v558 = vpop.permute.xlu0 %557
      %561 = vset.pattern.permute.xlu0 0
      %562 = vperm.xlu0 %561, %v314
      %v563 = vpop.permute.xlu0 %562
      %566 = vset.pattern.permute.xlu0 0
      %567 = vperm.xlu0 %566, %v315
      %v568 = vpop.permute.xlu0 %567
      %571 = vset.pattern.permute.xlu0 0
      %572 = vperm.xlu0 %571, %v316
      %v573 = vpop.permute.xlu0 %572
      %576 = vset.pattern.permute.xlu0 0
      %577 = vperm.xlu0 %576, %v317
      %v578 = vpop.permute.xlu0 %577
      %581 = vset.pattern.permute.xlu0 0
      %582 = vperm.xlu0 %581, %v318
      %v583 = vpop.permute.xlu0 %582
      %586 = vset.pattern.permute.xlu0 0
      %587 = vperm.xlu0 %586, %v319
      %v588 = vpop.permute.xlu0 %587
      %591 = vset.pattern.permute.xlu0 0
      %592 = vperm.xlu0 %591, %v320
      %v593 = vpop.permute.xlu0 %592
      %596 = vset.pattern.permute.xlu0 0
      %597 = vperm.xlu0 %596, %v321
      %v598 = vpop.permute.xlu0 %597
      %601 = vset.pattern.permute.xlu0 0
      %602 = vperm.xlu0 %601, %v322
      %v603 = vpop.permute.xlu0 %602
      %606 = vset.pattern.permute.xlu0 0
      %607 = vperm.xlu0 %606, %v323
      %v608 = vpop.permute.xlu0 %607
      %611 = vset.pattern.permute.xlu0 0
      %612 = vperm.xlu0 %611, %v324
      %v613 = vpop.permute.xlu0 %612
      %616 = vset.pattern.permute.xlu0 0
      %617 = vperm.xlu0 %616, %v325
      %v618 = vpop.permute.xlu0 %617
      %621 = vset.pattern.permute.xlu0 0
      %622 = vperm.xlu0 %621, %v326
      %v623 = vpop.permute.xlu0 %622
      %626 = vset.pattern.permute.xlu0 0
      %627 = vperm.xlu0 %626, %v327
      %v628 = vpop.permute.xlu0 %627
      %631 = vset.pattern.permute.xlu0 0
      %632 = vperm.xlu0 %631, %v328
      %v633 = vpop.permute.xlu0 %632
      %636 = vset.pattern.permute.xlu0 0
      %637 = vperm.xlu0 %636, %v329
      %v638 = vpop.permute.xlu0 %637
      %641 = vset.pattern.permute.xlu0 0
      %642 = vperm.xlu0 %641, %v330
      %v643 = vpop.permute.xlu0 %642
      %646 = vset.pattern.permute.xlu0 0
      %647 = vperm.xlu0 %646, %v331
      %v648 = vpop.permute.xlu0 %647
      %651 = vset.pattern.permute.xlu0 0
      %652 = vperm.xlu0 %651, %v332
      %v653 = vpop.permute.xlu0 %652
      %656 = vset.pattern.permute.xlu0 0
      %657 = vperm.xlu0 %656, %v333
      %v658 = vpop.permute.xlu0 %657
      %661 = vset.pattern.permute.xlu0 0
      %662 = vperm.xlu0 %661, %v334
      %v663 = vpop.permute.xlu0 %662
      %666 = vset.pattern.permute.xlu0 0
      %667 = vperm.xlu0 %666, %v335
      %v668 = vpop.permute.xlu0 %667
      %671 = vset.pattern.permute.xlu0 0
      %672 = vperm.xlu0 %671, %v336
      %v673 = vpop.permute.xlu0 %672
      %676 = vset.pattern.permute.xlu0 0
      %677 = vperm.xlu0 %676, %v337
      %v678 = vpop.permute.xlu0 %677
      %681 = vset.pattern.permute.xlu0 0
      %682 = vperm.xlu0 %681, %v338
      %v683 = vpop.permute.xlu0 %682
      %686 = vset.pattern.permute.xlu0 0
      %687 = vperm.xlu0 %686, %v339
      %v688 = vpop.permute.xlu0 %687
      %691 = vset.pattern.permute.xlu0 0
      %692 = vperm.xlu0 %691, %v340
      %v693 = vpop.permute.xlu0 %692
      %696 = vset.pattern.permute.xlu0 0
      %697 = vperm.xlu0 %696, %v341
      %v698 = vpop.permute.xlu0 %697
      %701 = vset.pattern.permute.xlu0 0
      %702 = vperm.xlu0 %701, %v342
      %v703 = vpop.permute.xlu0 %702
      %706 = vset.pattern.permute.xlu0 0
      %707 = vperm.xlu0 %706, %v343
      %v708 = vpop.permute.xlu0 %707
      %711 = vset.pattern.permute.xlu0 0
      %712 = vperm.xlu0 %711, %v344
      %v713 = vpop.permute.xlu0 %712
      %716 = vset.pattern.permute.xlu0 0
      %717 = vperm.xlu0 %716, %v345
      %v718 = vpop.permute.xlu0 %717
      %721 = vset.pattern.permute.xlu0 0
      %722 = vperm.xlu0 %721, %v346
      %v723 = vpop.permute.xlu0 %722
      %726 = vset.pattern.permute.xlu0 0
      %727 = vperm.xlu0 %726, %v347
      %v728 = vpop.permute.xlu0 %727
      %731 = vset.pattern.permute.xlu0 0
      %732 = vperm.xlu0 %731, %v348
      %v733 = vpop.permute.xlu0 %732
      %736 = vset.pattern.permute.xlu0 0
      %737 = vperm.xlu0 %736, %v349
      %v738 = vpop.permute.xlu0 %737
      %741 = vset.pattern.permute.xlu0 0
      %742 = vperm.xlu0 %741, %v350
      %v743 = vpop.permute.xlu0 %742
      %746 = vset.pattern.permute.xlu0 0
      %747 = vperm.xlu0 %746, %v351
      %v748 = vpop.permute.xlu0 %747
      %751 = vset.pattern.permute.xlu0 0
      %752 = vperm.xlu0 %751, %v352
      %v753 = vpop.permute.xlu0 %752
      %756 = vset.pattern.permute.xlu0 0
      %757 = vperm.xlu0 %756, %v353
      %v758 = vpop.permute.xlu0 %757
      %761 = vset.pattern.permute.xlu0 0
      %762 = vperm.xlu0 %761, %v354
      %v763 = vpop.permute.xlu0 %762
      %766 = vset.pattern.permute.xlu0 0
      %767 = vperm.xlu0 %766, %v355
      %v768 = vpop.permute.xlu0 %767
      %771 = vset.pattern.permute.xlu0 0
      %772 = vperm.xlu0 %771, %v356
      %v773 = vpop.permute.xlu0 %772
      %776 = vset.pattern.permute.xlu0 0
      %777 = vperm.xlu0 %776, %v357
      %v778 = vpop.permute.xlu0 %777
      %781 = vset.pattern.permute.xlu0 0
      %782 = vperm.xlu0 %781, %v358
      %v783 = vpop.permute.xlu0 %782
      %786 = vset.pattern.permute.xlu0 0
      %787 = vperm.xlu0 %786, %v359
      %v788 = vpop.permute.xlu0 %787
      %791 = vset.pattern.permute.xlu0 0
      %792 = vperm.xlu0 %791, %v360
      %v793 = vpop.permute.xlu0 %792
      %796 = vset.pattern.permute.xlu0 0
      %797 = vperm.xlu0 %796, %v361
      %v798 = vpop.permute.xlu0 %797
      %801 = vset.pattern.permute.xlu0 0
      %802 = vperm.xlu0 %801, %v362
      %v803 = vpop.permute.xlu0 %802
      %806 = vset.pattern.permute.xlu0 0
      %807 = vperm.xlu0 %806, %v363
      %v808 = vpop.permute.xlu0 %807
      %811 = vset.pattern.permute.xlu0 0
      %812 = vperm.xlu0 %811, %v364
      %v813 = vpop.permute.xlu0 %812
      %816 = vset.pattern.permute.xlu0 0
      %817 = vperm.xlu0 %816, %v365
      %v818 = vpop.permute.xlu0 %817
      %821 = vset.pattern.permute.xlu0 0
      %822 = vperm.xlu0 %821, %v366
      %v823 = vpop.permute.xlu0 %822
      %826 = vset.pattern.permute.xlu0 0
      %827 = vperm.xlu0 %826, %v367
      %v828 = vpop.permute.xlu0 %827
      %831 = vset.pattern.permute.xlu0 0
      %832 = vperm.xlu0 %831, %v368
      %v833 = vpop.permute.xlu0 %832
      %836 = vset.pattern.permute.xlu0 0
      %837 = vperm.xlu0 %836, %v369
      %v838 = vpop.permute.xlu0 %837
      %841 = vset.pattern.permute.xlu0 0
      %842 = vperm.xlu0 %841, %v370
      %v843 = vpop.permute.xlu0 %842
      %846 = vset.pattern.permute.xlu0 0
      %847 = vperm.xlu0 %846, %v371
      %v848 = vpop.permute.xlu0 %847
      %851 = vset.pattern.permute.xlu0 0
      %852 = vperm.xlu0 %851, %v372
      %v853 = vpop.permute.xlu0 %852
      %856 = vset.pattern.permute.xlu0 0
      %857 = vperm.xlu0 %856, %v373
      %v858 = vpop.permute.xlu0 %857
      %861 = vset.pattern.permute.xlu0 0
      %862 = vperm.xlu0 %861, %v374
      %v863 = vpop.permute.xlu0 %862
      %866 = vset.pattern.permute.xlu0 0
      %867 = vperm.xlu0 %866, %v375
      %v868 = vpop.permute.xlu0 %867
      %871 = vset.pattern.permute.xlu0 0
      %872 = vperm.xlu0 %871, %v376
      %v873 = vpop.permute.xlu0 %872
      %876 = vset.pattern.permute.xlu0 0
      %877 = vperm.xlu0 %876, %v377
      %v878 = vpop.permute.xlu0 %877
      %881 = vset.pattern.permute.xlu0 0
      %882 = vperm.xlu0 %881, %v378
      %v883 = vpop.permute.xlu0 %882
      %886 = vset.pattern.permute.xlu0 0
      %887 = vperm.xlu0 %886, %v379
      %v888 = vpop.permute.xlu0 %887
      %891 = vset.pattern.permute.xlu0 0
      %892 = vperm.xlu0 %891, %v380
      %v893 = vpop.permute.xlu0 %892
      %896 = vset.pattern.permute.xlu0 0
      %897 = vperm.xlu0 %896, %v381
      %v898 = vpop.permute.xlu0 %897
      %901 = vset.pattern.permute.xlu0 0
      %902 = vperm.xlu0 %901, %v382
      %v903 = vpop.permute.xlu0 %902
      %906 = vset.pattern.permute.xlu0 0
      %907 = vperm.xlu0 %906, %v383
      %v908 = vpop.permute.xlu0 %907
      %911 = vset.pattern.permute.xlu0 0
      %912 = vperm.xlu0 %911, %v384
      %v913 = vpop.permute.xlu0 %912
      %916 = vset.pattern.permute.xlu0 0
      %917 = vperm.xlu0 %916, %v385
      %v918 = vpop.permute.xlu0 %917
      %921 = vset.pattern.permute.xlu0 0
      %922 = vperm.xlu0 %921, %v386
      %v923 = vpop.permute.xlu0 %922
      %926 = vset.pattern.permute.xlu0 0
      %927 = vperm.xlu0 %926, %v387
      %v928 = vpop.permute.xlu0 %927
      %931 = vset.pattern.permute.xlu0 0
      %932 = vperm.xlu0 %931, %v388
      %v933 = vpop.permute.xlu0 %932
      %936 = vset.pattern.permute.xlu0 0
      %937 = vperm.xlu0 %936, %v389
      %v938 = vpop.permute.xlu0 %937
      %941 = vset.pattern.permute.xlu0 0
      %942 = vperm.xlu0 %941, %v390
      %v943 = vpop.permute.xlu0 %942
      %946 = vset.pattern.permute.xlu0 0
      %947 = vperm.xlu0 %946, %v391
      %v948 = vpop.permute.xlu0 %947
      %951 = vset.pattern.permute.xlu0 0
      %952 = vperm.xlu0 %951, %v392
      %v953 = vpop.permute.xlu0 %952
      %956 = vset.pattern.permute.xlu0 0
      %957 = vperm.xlu0 %956, %v393
      %v958 = vpop.permute.xlu0 %957
      %961 = vset.pattern.permute.xlu0 0
      %962 = vperm.xlu0 %961, %v394
      %v963 = vpop.permute.xlu0 %962
      %966 = vset.pattern.permute.xlu0 0
      %967 = vperm.xlu0 %966, %v395
      %v968 = vpop.permute.xlu0 %967
      %971 = vset.pattern.permute.xlu0 0
      %972 = vperm.xlu0 %971, %v396
      %v973 = vpop.permute.xlu0 %972
      %976 = vset.pattern.permute.xlu0 0
      %977 = vperm.xlu0 %976, %v397
      %v978 = vpop.permute.xlu0 %977
      %981 = vset.pattern.permute.xlu0 0
      %982 = vperm.xlu0 %981, %v398
      %v983 = vpop.permute.xlu0 %982
      %986 = vset.pattern.permute.xlu0 0
      %987 = vperm.xlu0 %986, %v399
      %v988 = vpop.permute.xlu0 %987
      %991 = vset.pattern.permute.xlu0 0
      %992 = vperm.xlu0 %991, %v400
      %v993 = vpop.permute.xlu0 %992
      %996 = vset.pattern.permute.xlu0 0
      %997 = vperm.xlu0 %996, %v401
      %v998 = vpop.permute.xlu0 %997
      %1001 = vset.pattern.permute.xlu0 0
      %1002 = vperm.xlu0 %1001, %v402
      %v1003 = vpop.permute.xlu0 %1002
      %1006 = vset.pattern.permute.xlu0 0
      %1007 = vperm.xlu0 %1006, %v403
      %v1008 = vpop.permute.xlu0 %1007
      %1011 = vset.pattern.permute.xlu0 0
      %1012 = vperm.xlu0 %1011, %v404
      %v1013 = vpop.permute.xlu0 %1012
      %1016 = vset.pattern.permute.xlu0 0
      %1017 = vperm.xlu0 %1016, %v405
      %v1018 = vpop.permute.xlu0 %1017
      %1021 = vset.pattern.permute.xlu0 0
      %1022 = vperm.xlu0 %1021, %v406
      %v1023 = vpop.permute.xlu0 %1022
      %1026 = vset.pattern.permute.xlu0 0
      %1027 = vperm.xlu0 %1026, %v407
      %v1028 = vpop.permute.xlu0 %1027
      %1031 = vset.pattern.permute.xlu0 0
      %1032 = vperm.xlu0 %1031, %v408
      %v1033 = vpop.permute.xlu0 %1032
      %1036 = vset.pattern.permute.xlu0 0
      %1037 = vperm.xlu0 %1036, %v409
      %v1038 = vpop.permute.xlu0 %1037
      %1041 = vset.pattern.permute.xlu0 0
      %1042 = vperm.xlu0 %1041, %v410
      %v1043 = vpop.permute.xlu0 %1042
      %1046 = vset.pattern.permute.xlu0 0
      %1047 = vperm.xlu0 %1046, %v411
      %v1048 = vpop.permute.xlu0 %1047
      %1051 = vset.pattern.permute.xlu0 0
      %1052 = vperm.xlu0 %1051, %v412
      %v1053 = vpop.permute.xlu0 %1052
      %v1055 = vlaneseq
      %v1056 = vshrl.u32 %v1055, 7
      %v1057 = vsub.s32 0, %v1056
      %v1058 = vrot.slane %v414, %v1057
      %v1059 = vmul.f32 %v418, %v1058
      %v1060 = vmul.f32 %v423, %v1058
      %v1061 = vmul.f32 %v428, %v1058
      %v1062 = vmul.f32 %v433, %v1058
      %v1063 = vmul.f32 %v438, %v1058
      %v1064 = vmul.f32 %v443, %v1058
      %v1065 = vmul.f32 %v448, %v1058
      %v1066 = vmul.f32 %v453, %v1058
      %v1067 = vmul.f32 %v458, %v1058
      %v1068 = vmul.f32 %v463, %v1058
      %v1069 = vmul.f32 %v468, %v1058
      %v1070 = vmul.f32 %v473, %v1058
      %v1071 = vmul.f32 %v478, %v1058
      %v1072 = vmul.f32 %v483, %v1058
      %v1073 = vmul.f32 %v488, %v1058
      %v1074 = vmul.f32 %v493, %v1058
      %v1075 = vmul.f32 %v498, %v1058
      %v1076 = vmul.f32 %v503, %v1058
      %v1077 = vmul.f32 %v508, %v1058
      %v1078 = vmul.f32 %v513, %v1058
      %v1079 = vmul.f32 %v518, %v1058
      %v1080 = vmul.f32 %v523, %v1058
      %v1081 = vmul.f32 %v528, %v1058
      %v1082 = vmul.f32 %v533, %v1058
      %v1083 = vmul.f32 %v538, %v1058
      %v1084 = vmul.f32 %v543, %v1058
      %v1085 = vmul.f32 %v548, %v1058
      %v1086 = vmul.f32 %v553, %v1058
      %v1087 = vmul.f32 %v558, %v1058
      %v1088 = vmul.f32 %v563, %v1058
      %v1089 = vmul.f32 %v568, %v1058
      %v1090 = vmul.f32 %v573, %v1058
      %v1091 = vmul.f32 %v578, %v1058
      %v1092 = vmul.f32 %v583, %v1058
      %v1093 = vmul.f32 %v588, %v1058
      %v1094 = vmul.f32 %v593, %v1058
      %v1095 = vmul.f32 %v598, %v1058
      %v1096 = vmul.f32 %v603, %v1058
      %v1097 = vmul.f32 %v608, %v1058
      %v1098 = vmul.f32 %v613, %v1058
      %v1099 = vmul.f32 %v618, %v1058
      %v1100 = vmul.f32 %v623, %v1058
      %v1101 = vmul.f32 %v628, %v1058
      %v1102 = vmul.f32 %v633, %v1058
      %v1103 = vmul.f32 %v638, %v1058
      %v1104 = vmul.f32 %v643, %v1058
      %v1105 = vmul.f32 %v648, %v1058
      %v1106 = vmul.f32 %v653, %v1058
      %v1107 = vmul.f32 %v658, %v1058
      %v1108 = vmul.f32 %v663, %v1058
      %v1109 = vmul.f32 %v668, %v1058
      %v1110 = vmul.f32 %v673, %v1058
      %v1111 = vmul.f32 %v678, %v1058
      %v1112 = vmul.f32 %v683, %v1058
      %v1113 = vmul.f32 %v688, %v1058
      %v1114 = vmul.f32 %v693, %v1058
      %v1115 = vmul.f32 %v698, %v1058
      %v1116 = vmul.f32 %v703, %v1058
      %v1117 = vmul.f32 %v708, %v1058
      %v1118 = vmul.f32 %v713, %v1058
      %v1119 = vmul.f32 %v718, %v1058
      %v1120 = vmul.f32 %v723, %v1058
      %v1121 = vmul.f32 %v728, %v1058
      %v1122 = vmul.f32 %v733, %v1058
      %v1123 = vmul.f32 %v738, %v1058
      %v1124 = vmul.f32 %v743, %v1058
      %v1125 = vmul.f32 %v748, %v1058
      %v1126 = vmul.f32 %v753, %v1058
      %v1127 = vmul.f32 %v758, %v1058
      %v1128 = vmul.f32 %v763, %v1058
      %v1129 = vmul.f32 %v768, %v1058
      %v1130 = vmul.f32 %v773, %v1058
      %v1131 = vmul.f32 %v778, %v1058
      %v1132 = vmul.f32 %v783, %v1058
      %v1133 = vmul.f32 %v788, %v1058
      %v1134 = vmul.f32 %v793, %v1058
      %v1135 = vmul.f32 %v798, %v1058
      %v1136 = vmul.f32 %v803, %v1058
      %v1137 = vmul.f32 %v808, %v1058
      %v1138 = vmul.f32 %v813, %v1058
      %v1139 = vmul.f32 %v818, %v1058
      %v1140 = vmul.f32 %v823, %v1058
      %v1141 = vmul.f32 %v828, %v1058
      %v1142 = vmul.f32 %v833, %v1058
      %v1143 = vmul.f32 %v838, %v1058
      %v1144 = vmul.f32 %v843, %v1058
      %v1145 = vmul.f32 %v848, %v1058
      %v1146 = vmul.f32 %v853, %v1058
      %v1147 = vmul.f32 %v858, %v1058
      %v1148 = vmul.f32 %v863, %v1058
      %v1149 = vmul.f32 %v868, %v1058
      %v1150 = vmul.f32 %v873, %v1058
      %v1151 = vmul.f32 %v878, %v1058
      %v1152 = vmul.f32 %v883, %v1058
      %v1153 = vmul.f32 %v888, %v1058
      %v1154 = vmul.f32 %v893, %v1058
      %v1155 = vmul.f32 %v898, %v1058
      %v1156 = vmul.f32 %v903, %v1058
      %v1157 = vmul.f32 %v908, %v1058
      %v1158 = vmul.f32 %v913, %v1058
      %v1159 = vmul.f32 %v918, %v1058
      %v1160 = vmul.f32 %v923, %v1058
      %v1161 = vmul.f32 %v928, %v1058
      %v1162 = vmul.f32 %v933, %v1058
      %v1163 = vmul.f32 %v938, %v1058
      %v1164 = vmul.f32 %v943, %v1058
      %v1165 = vmul.f32 %v948, %v1058
      %v1166 = vmul.f32 %v953, %v1058
      %v1167 = vmul.f32 %v958, %v1058
      %v1168 = vmul.f32 %v963, %v1058
      %v1169 = vmul.f32 %v968, %v1058
      %v1170 = vmul.f32 %v973, %v1058
      %v1171 = vmul.f32 %v978, %v1058
      %v1172 = vmul.f32 %v983, %v1058
      %v1173 = vmul.f32 %v988, %v1058
      %v1174 = vmul.f32 %v993, %v1058
      %v1175 = vmul.f32 %v998, %v1058
      %v1176 = vmul.f32 %v1003, %v1058
      %v1177 = vmul.f32 %v1008, %v1058
      %v1178 = vmul.f32 %v1013, %v1058
      %v1179 = vmul.f32 %v1018, %v1058
      %v1180 = vmul.f32 %v1023, %v1058
      %v1181 = vmul.f32 %v1028, %v1058
      %v1182 = vmul.f32 %v1033, %v1058
      %v1183 = vmul.f32 %v1038, %v1058
      %v1184 = vmul.f32 %v1043, %v1058
      %v1185 = vmul.f32 %v1048, %v1058
      %v1186 = vmul.f32 %v1053, %v1058
      %v1188 = vlaneseq
      %v1189 = vshrl.u32 %v1188, 7
      %v1190 = vsub.s32 0, %v1189
      %v1191 = vrot.slane %v413, %v1190
      %v1193 = vadd.f32 %v1191, %v1059
      %v1194 = vadd.f32 %v1191, %v1060
      %v1195 = vadd.f32 %v1191, %v1061
      %v1196 = vadd.f32 %v1191, %v1062
      %v1197 = vadd.f32 %v1191, %v1063
      %v1198 = vadd.f32 %v1191, %v1064
      %v1199 = vadd.f32 %v1191, %v1065
      %v1200 = vadd.f32 %v1191, %v1066
      %v1201 = vadd.f32 %v1191, %v1067
      %v1202 = vadd.f32 %v1191, %v1068
      %v1203 = vadd.f32 %v1191, %v1069
      %v1204 = vadd.f32 %v1191, %v1070
      %v1205 = vadd.f32 %v1191, %v1071
      %v1206 = vadd.f32 %v1191, %v1072
      %v1207 = vadd.f32 %v1191, %v1073
      %v1208 = vadd.f32 %v1191, %v1074
      %v1209 = vadd.f32 %v1191, %v1075
      %v1210 = vadd.f32 %v1191, %v1076
      %v1211 = vadd.f32 %v1191, %v1077
      %v1212 = vadd.f32 %v1191, %v1078
      %v1213 = vadd.f32 %v1191, %v1079
      %v1214 = vadd.f32 %v1191, %v1080
      %v1215 = vadd.f32 %v1191, %v1081
      %v1216 = vadd.f32 %v1191, %v1082
      %v1217 = vadd.f32 %v1191, %v1083
      %v1218 = vadd.f32 %v1191, %v1084
      %v1219 = vadd.f32 %v1191, %v1085
      %v1220 = vadd.f32 %v1191, %v1086
      %v1221 = vadd.f32 %v1191, %v1087
      %v1222 = vadd.f32 %v1191, %v1088
      %v1223 = vadd.f32 %v1191, %v1089
      %v1224 = vadd.f32 %v1191, %v1090
      %v1225 = vadd.f32 %v1191, %v1091
      %v1226 = vadd.f32 %v1191, %v1092
      %v1227 = vadd.f32 %v1191, %v1093
      %v1228 = vadd.f32 %v1191, %v1094
      %v1229 = vadd.f32 %v1191, %v1095
      %v1230 = vadd.f32 %v1191, %v1096
      %v1231 = vadd.f32 %v1191, %v1097
      %v1232 = vadd.f32 %v1191, %v1098
      %v1233 = vadd.f32 %v1191, %v1099
      %v1234 = vadd.f32 %v1191, %v1100
      %v1235 = vadd.f32 %v1191, %v1101
      %v1236 = vadd.f32 %v1191, %v1102
      %v1237 = vadd.f32 %v1191, %v1103
      %v1238 = vadd.f32 %v1191, %v1104
      %v1239 = vadd.f32 %v1191, %v1105
      %v1240 = vadd.f32 %v1191, %v1106
      %v1241 = vadd.f32 %v1191, %v1107
      %v1242 = vadd.f32 %v1191, %v1108
      %v1243 = vadd.f32 %v1191, %v1109
      %v1244 = vadd.f32 %v1191, %v1110
      %v1245 = vadd.f32 %v1191, %v1111
      %v1246 = vadd.f32 %v1191, %v1112
      %v1247 = vadd.f32 %v1191, %v1113
      %v1248 = vadd.f32 %v1191, %v1114
      %v1249 = vadd.f32 %v1191, %v1115
      %v1250 = vadd.f32 %v1191, %v1116
      %v1251 = vadd.f32 %v1191, %v1117
      %v1252 = vadd.f32 %v1191, %v1118
      %v1253 = vadd.f32 %v1191, %v1119
      %v1254 = vadd.f32 %v1191, %v1120
      %v1255 = vadd.f32 %v1191, %v1121
      %v1256 = vadd.f32 %v1191, %v1122
      %v1257 = vadd.f32 %v1191, %v1123
      %v1258 = vadd.f32 %v1191, %v1124
      %v1259 = vadd.f32 %v1191, %v1125
      %v1260 = vadd.f32 %v1191, %v1126
      %v1261 = vadd.f32 %v1191, %v1127
      %v1262 = vadd.f32 %v1191, %v1128
      %v1263 = vadd.f32 %v1191, %v1129
      %v1264 = vadd.f32 %v1191, %v1130
      %v1265 = vadd.f32 %v1191, %v1131
      %v1266 = vadd.f32 %v1191, %v1132
      %v1267 = vadd.f32 %v1191, %v1133
      %v1268 = vadd.f32 %v1191, %v1134
      %v1269 = vadd.f32 %v1191, %v1135
      %v1270 = vadd.f32 %v1191, %v1136
      %v1271 = vadd.f32 %v1191, %v1137
      %v1272 = vadd.f32 %v1191, %v1138
      %v1273 = vadd.f32 %v1191, %v1139
      %v1274 = vadd.f32 %v1191, %v1140
      %v1275 = vadd.f32 %v1191, %v1141
      %v1276 = vadd.f32 %v1191, %v1142
      %v1277 = vadd.f32 %v1191, %v1143
      %v1278 = vadd.f32 %v1191, %v1144
      %v1279 = vadd.f32 %v1191, %v1145
      %v1280 = vadd.f32 %v1191, %v1146
      %v1281 = vadd.f32 %v1191, %v1147
      %v1282 = vadd.f32 %v1191, %v1148
      %v1283 = vadd.f32 %v1191, %v1149
      %v1284 = vadd.f32 %v1191, %v1150
      %v1285 = vadd.f32 %v1191, %v1151
      %v1286 = vadd.f32 %v1191, %v1152
      %v1287 = vadd.f32 %v1191, %v1153
      %v1288 = vadd.f32 %v1191, %v1154
      %v1289 = vadd.f32 %v1191, %v1155
      %v1290 = vadd.f32 %v1191, %v1156
      %v1291 = vadd.f32 %v1191, %v1157
      %v1292 = vadd.f32 %v1191, %v1158
      %v1293 = vadd.f32 %v1191, %v1159
      %v1294 = vadd.f32 %v1191, %v1160
      %v1295 = vadd.f32 %v1191, %v1161
      %v1296 = vadd.f32 %v1191, %v1162
      %v1297 = vadd.f32 %v1191, %v1163
      %v1298 = vadd.f32 %v1191, %v1164
      %v1299 = vadd.f32 %v1191, %v1165
      %v1300 = vadd.f32 %v1191, %v1166
      %v1301 = vadd.f32 %v1191, %v1167
      %v1302 = vadd.f32 %v1191, %v1168
      %v1303 = vadd.f32 %v1191, %v1169
      %v1304 = vadd.f32 %v1191, %v1170
      %v1305 = vadd.f32 %v1191, %v1171
      %v1306 = vadd.f32 %v1191, %v1172
      %v1307 = vadd.f32 %v1191, %v1173
      %v1308 = vadd.f32 %v1191, %v1174
      %v1309 = vadd.f32 %v1191, %v1175
      %v1310 = vadd.f32 %v1191, %v1176
      %v1311 = vadd.f32 %v1191, %v1177
      %v1312 = vadd.f32 %v1191, %v1178
      %v1313 = vadd.f32 %v1191, %v1179
      %v1314 = vadd.f32 %v1191, %v1180
      %v1315 = vadd.f32 %v1191, %v1181
      %v1316 = vadd.f32 %v1191, %v1182
      %v1317 = vadd.f32 %v1191, %v1183
      %v1318 = vadd.f32 %v1191, %v1184
      %v1319 = vadd.f32 %v1191, %v1185
      %v1320 = vadd.f32 %v1191, %v1186
      %v1321 = vld [vmem:[%s1 + $0x1] sm:$0x1]
      %1322 = vset.pattern.permute.xlu0 1
      %1323 = vperm.xlu0 %1322, %v285
      %v1324 = vpop.permute.xlu0 %1323
      %1326 = vset.pattern.permute.xlu0 1
      %1327 = vperm.xlu0 %1326, %v286
      %v1328 = vpop.permute.xlu0 %1327
      %1330 = vset.pattern.permute.xlu0 1
      %1331 = vperm.xlu0 %1330, %v287
      %v1332 = vpop.permute.xlu0 %1331
      %1334 = vset.pattern.permute.xlu0 1
      %1335 = vperm.xlu0 %1334, %v288
      %v1336 = vpop.permute.xlu0 %1335
      %1338 = vset.pattern.permute.xlu0 1
      %1339 = vperm.xlu0 %1338, %v289
      %v1340 = vpop.permute.xlu0 %1339
      %1342 = vset.pattern.permute.xlu0 1
      %1343 = vperm.xlu0 %1342, %v290
      %v1344 = vpop.permute.xlu0 %1343
      %1346 = vset.pattern.permute.xlu0 1
      %1347 = vperm.xlu0 %1346, %v291
      %v1348 = vpop.permute.xlu0 %1347
      %1350 = vset.pattern.permute.xlu0 1
      %1351 = vperm.xlu0 %1350, %v292
      %v1352 = vpop.permute.xlu0 %1351
      %1354 = vset.pattern.permute.xlu0 1
      %1355 = vperm.xlu0 %1354, %v293
      %v1356 = vpop.permute.xlu0 %1355
      %1358 = vset.pattern.permute.xlu0 1
      %1359 = vperm.xlu0 %1358, %v294
      %v1360 = vpop.permute.xlu0 %1359
      %1362 = vset.pattern.permute.xlu0 1
      %1363 = vperm.xlu0 %1362, %v295
      %v1364 = vpop.permute.xlu0 %1363
      %1366 = vset.pattern.permute.xlu0 1
      %1367 = vperm.xlu0 %1366, %v296
      %v1368 = vpop.permute.xlu0 %1367
      %1370 = vset.pattern.permute.xlu0 1
      %1371 = vperm.xlu0 %1370, %v297
      %v1372 = vpop.permute.xlu0 %1371
      %1374 = vset.pattern.permute.xlu0 1
      %1375 = vperm.xlu0 %1374, %v298
      %v1376 = vpop.permute.xlu0 %1375
      %1378 = vset.pattern.permute.xlu0 1
      %1379 = vperm.xlu0 %1378, %v299
      %v1380 = vpop.permute.xlu0 %1379
      %1382 = vset.pattern.permute.xlu0 1
      %1383 = vperm.xlu0 %1382, %v300
      %v1384 = vpop.permute.xlu0 %1383
      %1386 = vset.pattern.permute.xlu0 1
      %1387 = vperm.xlu0 %1386, %v301
      %v1388 = vpop.permute.xlu0 %1387
      %1390 = vset.pattern.permute.xlu0 1
      %1391 = vperm.xlu0 %1390, %v302
      %v1392 = vpop.permute.xlu0 %1391
      %1394 = vset.pattern.permute.xlu0 1
      %1395 = vperm.xlu0 %1394, %v303
      %v1396 = vpop.permute.xlu0 %1395
      %1398 = vset.pattern.permute.xlu0 1
      %1399 = vperm.xlu0 %1398, %v304
      %v1400 = vpop.permute.xlu0 %1399
      %1402 = vset.pattern.permute.xlu0 1
      %1403 = vperm.xlu0 %1402, %v305
      %v1404 = vpop.permute.xlu0 %1403
      %1406 = vset.pattern.permute.xlu0 1
      %1407 = vperm.xlu0 %1406, %v306
      %v1408 = vpop.permute.xlu0 %1407
      %1410 = vset.pattern.permute.xlu0 1
      %1411 = vperm.xlu0 %1410, %v307
      %v1412 = vpop.permute.xlu0 %1411
      %1414 = vset.pattern.permute.xlu0 1
      %1415 = vperm.xlu0 %1414, %v308
      %v1416 = vpop.permute.xlu0 %1415
      %1418 = vset.pattern.permute.xlu0 1
      %1419 = vperm.xlu0 %1418, %v309
      %v1420 = vpop.permute.xlu0 %1419
      %1422 = vset.pattern.permute.xlu0 1
      %1423 = vperm.xlu0 %1422, %v310
      %v1424 = vpop.permute.xlu0 %1423
      %1426 = vset.pattern.permute.xlu0 1
      %1427 = vperm.xlu0 %1426, %v311
      %v1428 = vpop.permute.xlu0 %1427
      %1430 = vset.pattern.permute.xlu0 1
      %1431 = vperm.xlu0 %1430, %v312
      %v1432 = vpop.permute.xlu0 %1431
      %1434 = vset.pattern.permute.xlu0 1
      %1435 = vperm.xlu0 %1434, %v313
      %v1436 = vpop.permute.xlu0 %1435
      %1438 = vset.pattern.permute.xlu0 1
      %1439 = vperm.xlu0 %1438, %v314
      %v1440 = vpop.permute.xlu0 %1439
      %1442 = vset.pattern.permute.xlu0 1
      %1443 = vperm.xlu0 %1442, %v315
      %v1444 = vpop.permute.xlu0 %1443
      %1446 = vset.pattern.permute.xlu0 1
      %1447 = vperm.xlu0 %1446, %v316
      %v1448 = vpop.permute.xlu0 %1447
      %1450 = vset.pattern.permute.xlu0 1
      %1451 = vperm.xlu0 %1450, %v317
      %v1452 = vpop.permute.xlu0 %1451
      %1454 = vset.pattern.permute.xlu0 1
      %1455 = vperm.xlu0 %1454, %v318
      %v1456 = vpop.permute.xlu0 %1455
      %1458 = vset.pattern.permute.xlu0 1
      %1459 = vperm.xlu0 %1458, %v319
      %v1460 = vpop.permute.xlu0 %1459
      %1462 = vset.pattern.permute.xlu0 1
      %1463 = vperm.xlu0 %1462, %v320
      %v1464 = vpop.permute.xlu0 %1463
      %1466 = vset.pattern.permute.xlu0 1
      %1467 = vperm.xlu0 %1466, %v321
      %v1468 = vpop.permute.xlu0 %1467
      %1470 = vset.pattern.permute.xlu0 1
      %1471 = vperm.xlu0 %1470, %v322
      %v1472 = vpop.permute.xlu0 %1471
      %1474 = vset.pattern.permute.xlu0 1
      %1475 = vperm.xlu0 %1474, %v323
      %v1476 = vpop.permute.xlu0 %1475
      %1478 = vset.pattern.permute.xlu0 1
      %1479 = vperm.xlu0 %1478, %v324
      %v1480 = vpop.permute.xlu0 %1479
      %1482 = vset.pattern.permute.xlu0 1
      %1483 = vperm.xlu0 %1482, %v325
      %v1484 = vpop.permute.xlu0 %1483
      %1486 = vset.pattern.permute.xlu0 1
      %1487 = vperm.xlu0 %1486, %v326
      %v1488 = vpop.permute.xlu0 %1487
      %1490 = vset.pattern.permute.xlu0 1
      %1491 = vperm.xlu0 %1490, %v327
      %v1492 = vpop.permute.xlu0 %1491
      %1494 = vset.pattern.permute.xlu0 1
      %1495 = vperm.xlu0 %1494, %v328
      %v1496 = vpop.permute.xlu0 %1495
      %1498 = vset.pattern.permute.xlu0 1
      %1499 = vperm.xlu0 %1498, %v329
      %v1500 = vpop.permute.xlu0 %1499
      %1502 = vset.pattern.permute.xlu0 1
      %1503 = vperm.xlu0 %1502, %v330
      %v1504 = vpop.permute.xlu0 %1503
      %1506 = vset.pattern.permute.xlu0 1
      %1507 = vperm.xlu0 %1506, %v331
      %v1508 = vpop.permute.xlu0 %1507
      %1510 = vset.pattern.permute.xlu0 1
      %1511 = vperm.xlu0 %1510, %v332
      %v1512 = vpop.permute.xlu0 %1511
      %1514 = vset.pattern.permute.xlu0 1
      %1515 = vperm.xlu0 %1514, %v333
      %v1516 = vpop.permute.xlu0 %1515
      %1518 = vset.pattern.permute.xlu0 1
      %1519 = vperm.xlu0 %1518, %v334
      %v1520 = vpop.permute.xlu0 %1519
      %1522 = vset.pattern.permute.xlu0 1
      %1523 = vperm.xlu0 %1522, %v335
      %v1524 = vpop.permute.xlu0 %1523
      %1526 = vset.pattern.permute.xlu0 1
      %1527 = vperm.xlu0 %1526, %v336
      %v1528 = vpop.permute.xlu0 %1527
      %1530 = vset.pattern.permute.xlu0 1
      %1531 = vperm.xlu0 %1530, %v337
      %v1532 = vpop.permute.xlu0 %1531
      %1534 = vset.pattern.permute.xlu0 1
      %1535 = vperm.xlu0 %1534, %v338
      %v1536 = vpop.permute.xlu0 %1535
      %1538 = vset.pattern.permute.xlu0 1
      %1539 = vperm.xlu0 %1538, %v339
      %v1540 = vpop.permute.xlu0 %1539
      %1542 = vset.pattern.permute.xlu0 1
      %1543 = vperm.xlu0 %1542, %v340
      %v1544 = vpop.permute.xlu0 %1543
      %1546 = vset.pattern.permute.xlu0 1
      %1547 = vperm.xlu0 %1546, %v341
      %v1548 = vpop.permute.xlu0 %1547
      %1550 = vset.pattern.permute.xlu0 1
      %1551 = vperm.xlu0 %1550, %v342
      %v1552 = vpop.permute.xlu0 %1551
      %1554 = vset.pattern.permute.xlu0 1
      %1555 = vperm.xlu0 %1554, %v343
      %v1556 = vpop.permute.xlu0 %1555
      %1558 = vset.pattern.permute.xlu0 1
      %1559 = vperm.xlu0 %1558, %v344
      %v1560 = vpop.permute.xlu0 %1559
      %1562 = vset.pattern.permute.xlu0 1
      %1563 = vperm.xlu0 %1562, %v345
      %v1564 = vpop.permute.xlu0 %1563
      %1566 = vset.pattern.permute.xlu0 1
      %1567 = vperm.xlu0 %1566, %v346
      %v1568 = vpop.permute.xlu0 %1567
      %1570 = vset.pattern.permute.xlu0 1
      %1571 = vperm.xlu0 %1570, %v347
      %v1572 = vpop.permute.xlu0 %1571
      %1574 = vset.pattern.permute.xlu0 1
      %1575 = vperm.xlu0 %1574, %v348
      %v1576 = vpop.permute.xlu0 %1575
      %1578 = vset.pattern.permute.xlu0 1
      %1579 = vperm.xlu0 %1578, %v349
      %v1580 = vpop.permute.xlu0 %1579
      %1582 = vset.pattern.permute.xlu0 1
      %1583 = vperm.xlu0 %1582, %v350
      %v1584 = vpop.permute.xlu0 %1583
      %1586 = vset.pattern.permute.xlu0 1
      %1587 = vperm.xlu0 %1586, %v351
      %v1588 = vpop.permute.xlu0 %1587
      %1590 = vset.pattern.permute.xlu0 1
      %1591 = vperm.xlu0 %1590, %v352
      %v1592 = vpop.permute.xlu0 %1591
      %1594 = vset.pattern.permute.xlu0 1
      %1595 = vperm.xlu0 %1594, %v353
      %v1596 = vpop.permute.xlu0 %1595
      %1598 = vset.pattern.permute.xlu0 1
      %1599 = vperm.xlu0 %1598, %v354
      %v1600 = vpop.permute.xlu0 %1599
      %1602 = vset.pattern.permute.xlu0 1
      %1603 = vperm.xlu0 %1602, %v355
      %v1604 = vpop.permute.xlu0 %1603
      %1606 = vset.pattern.permute.xlu0 1
      %1607 = vperm.xlu0 %1606, %v356
      %v1608 = vpop.permute.xlu0 %1607
      %1610 = vset.pattern.permute.xlu0 1
      %1611 = vperm.xlu0 %1610, %v357
      %v1612 = vpop.permute.xlu0 %1611
      %1614 = vset.pattern.permute.xlu0 1
      %1615 = vperm.xlu0 %1614, %v358
      %v1616 = vpop.permute.xlu0 %1615
      %1618 = vset.pattern.permute.xlu0 1
      %1619 = vperm.xlu0 %1618, %v359
      %v1620 = vpop.permute.xlu0 %1619
      %1622 = vset.pattern.permute.xlu0 1
      %1623 = vperm.xlu0 %1622, %v360
      %v1624 = vpop.permute.xlu0 %1623
      %1626 = vset.pattern.permute.xlu0 1
      %1627 = vperm.xlu0 %1626, %v361
      %v1628 = vpop.permute.xlu0 %1627
      %1630 = vset.pattern.permute.xlu0 1
      %1631 = vperm.xlu0 %1630, %v362
      %v1632 = vpop.permute.xlu0 %1631
      %1634 = vset.pattern.permute.xlu0 1
      %1635 = vperm.xlu0 %1634, %v363
      %v1636 = vpop.permute.xlu0 %1635
      %1638 = vset.pattern.permute.xlu0 1
      %1639 = vperm.xlu0 %1638, %v364
      %v1640 = vpop.permute.xlu0 %1639
      %1642 = vset.pattern.permute.xlu0 1
      %1643 = vperm.xlu0 %1642, %v365
      %v1644 = vpop.permute.xlu0 %1643
      %1646 = vset.pattern.permute.xlu0 1
      %1647 = vperm.xlu0 %1646, %v366
      %v1648 = vpop.permute.xlu0 %1647
      %1650 = vset.pattern.permute.xlu0 1
      %1651 = vperm.xlu0 %1650, %v367
      %v1652 = vpop.permute.xlu0 %1651
      %1654 = vset.pattern.permute.xlu0 1
      %1655 = vperm.xlu0 %1654, %v368
      %v1656 = vpop.permute.xlu0 %1655
      %1658 = vset.pattern.permute.xlu0 1
      %1659 = vperm.xlu0 %1658, %v369
      %v1660 = vpop.permute.xlu0 %1659
      %1662 = vset.pattern.permute.xlu0 1
      %1663 = vperm.xlu0 %1662, %v370
      %v1664 = vpop.permute.xlu0 %1663
      %1666 = vset.pattern.permute.xlu0 1
      %1667 = vperm.xlu0 %1666, %v371
      %v1668 = vpop.permute.xlu0 %1667
      %1670 = vset.pattern.permute.xlu0 1
      %1671 = vperm.xlu0 %1670, %v372
      %v1672 = vpop.permute.xlu0 %1671
      %1674 = vset.pattern.permute.xlu0 1
      %1675 = vperm.xlu0 %1674, %v373
      %v1676 = vpop.permute.xlu0 %1675
      %1678 = vset.pattern.permute.xlu0 1
      %1679 = vperm.xlu0 %1678, %v374
      %v1680 = vpop.permute.xlu0 %1679
      %1682 = vset.pattern.permute.xlu0 1
      %1683 = vperm.xlu0 %1682, %v375
      %v1684 = vpop.permute.xlu0 %1683
      %1686 = vset.pattern.permute.xlu0 1
      %1687 = vperm.xlu0 %1686, %v376
      %v1688 = vpop.permute.xlu0 %1687
      %1690 = vset.pattern.permute.xlu0 1
      %1691 = vperm.xlu0 %1690, %v377
      %v1692 = vpop.permute.xlu0 %1691
      %1694 = vset.pattern.permute.xlu0 1
      %1695 = vperm.xlu0 %1694, %v378
      %v1696 = vpop.permute.xlu0 %1695
      %1698 = vset.pattern.permute.xlu0 1
      %1699 = vperm.xlu0 %1698, %v379
      %v1700 = vpop.permute.xlu0 %1699
      %1702 = vset.pattern.permute.xlu0 1
      %1703 = vperm.xlu0 %1702, %v380
      %v1704 = vpop.permute.xlu0 %1703
      %1706 = vset.pattern.permute.xlu0 1
      %1707 = vperm.xlu0 %1706, %v381
      %v1708 = vpop.permute.xlu0 %1707
      %1710 = vset.pattern.permute.xlu0 1
      %1711 = vperm.xlu0 %1710, %v382
      %v1712 = vpop.permute.xlu0 %1711
      %1714 = vset.pattern.permute.xlu0 1
      %1715 = vperm.xlu0 %1714, %v383
      %v1716 = vpop.permute.xlu0 %1715
      %1718 = vset.pattern.permute.xlu0 1
      %1719 = vperm.xlu0 %1718, %v384
      %v1720 = vpop.permute.xlu0 %1719
      %1722 = vset.pattern.permute.xlu0 1
      %1723 = vperm.xlu0 %1722, %v385
      %v1724 = vpop.permute.xlu0 %1723
      %1726 = vset.pattern.permute.xlu0 1
      %1727 = vperm.xlu0 %1726, %v386
      %v1728 = vpop.permute.xlu0 %1727
      %1730 = vset.pattern.permute.xlu0 1
      %1731 = vperm.xlu0 %1730, %v387
      %v1732 = vpop.permute.xlu0 %1731
      %1734 = vset.pattern.permute.xlu0 1
      %1735 = vperm.xlu0 %1734, %v388
      %v1736 = vpop.permute.xlu0 %1735
      %1738 = vset.pattern.permute.xlu0 1
      %1739 = vperm.xlu0 %1738, %v389
      %v1740 = vpop.permute.xlu0 %1739
      %1742 = vset.pattern.permute.xlu0 1
      %1743 = vperm.xlu0 %1742, %v390
      %v1744 = vpop.permute.xlu0 %1743
      %1746 = vset.pattern.permute.xlu0 1
      %1747 = vperm.xlu0 %1746, %v391
      %v1748 = vpop.permute.xlu0 %1747
      %1750 = vset.pattern.permute.xlu0 1
      %1751 = vperm.xlu0 %1750, %v392
      %v1752 = vpop.permute.xlu0 %1751
      %1754 = vset.pattern.permute.xlu0 1
      %1755 = vperm.xlu0 %1754, %v393
      %v1756 = vpop.permute.xlu0 %1755
      %1758 = vset.pattern.permute.xlu0 1
      %1759 = vperm.xlu0 %1758, %v394
      %v1760 = vpop.permute.xlu0 %1759
      %1762 = vset.pattern.permute.xlu0 1
      %1763 = vperm.xlu0 %1762, %v395
      %v1764 = vpop.permute.xlu0 %1763
      %1766 = vset.pattern.permute.xlu0 1
      %1767 = vperm.xlu0 %1766, %v396
      %v1768 = vpop.permute.xlu0 %1767
      %1770 = vset.pattern.permute.xlu0 1
      %1771 = vperm.xlu0 %1770, %v397
      %v1772 = vpop.permute.xlu0 %1771
      %1774 = vset.pattern.permute.xlu0 1
      %1775 = vperm.xlu0 %1774, %v398
      %v1776 = vpop.permute.xlu0 %1775
      %1778 = vset.pattern.permute.xlu0 1
      %1779 = vperm.xlu0 %1778, %v399
      %v1780 = vpop.permute.xlu0 %1779
      %1782 = vset.pattern.permute.xlu0 1
      %1783 = vperm.xlu0 %1782, %v400
      %v1784 = vpop.permute.xlu0 %1783
      %1786 = vset.pattern.permute.xlu0 1
      %1787 = vperm.xlu0 %1786, %v401
      %v1788 = vpop.permute.xlu0 %1787
      %1790 = vset.pattern.permute.xlu0 1
      %1791 = vperm.xlu0 %1790, %v402
      %v1792 = vpop.permute.xlu0 %1791
      %1794 = vset.pattern.permute.xlu0 1
      %1795 = vperm.xlu0 %1794, %v403
      %v1796 = vpop.permute.xlu0 %1795
      %1798 = vset.pattern.permute.xlu0 1
      %1799 = vperm.xlu0 %1798, %v404
      %v1800 = vpop.permute.xlu0 %1799
      %1802 = vset.pattern.permute.xlu0 1
      %1803 = vperm.xlu0 %1802, %v405
      %v1804 = vpop.permute.xlu0 %1803
      %1806 = vset.pattern.permute.xlu0 1
      %1807 = vperm.xlu0 %1806, %v406
      %v1808 = vpop.permute.xlu0 %1807
      %1810 = vset.pattern.permute.xlu0 1
      %1811 = vperm.xlu0 %1810, %v407
      %v1812 = vpop.permute.xlu0 %1811
      %1814 = vset.pattern.permute.xlu0 1
      %1815 = vperm.xlu0 %1814, %v408
      %v1816 = vpop.permute.xlu0 %1815
      %1818 = vset.pattern.permute.xlu0 1
      %1819 = vperm.xlu0 %1818, %v409
      %v1820 = vpop.permute.xlu0 %1819
      %1822 = vset.pattern.permute.xlu0 1
      %1823 = vperm.xlu0 %1822, %v410
      %v1824 = vpop.permute.xlu0 %1823
      %1826 = vset.pattern.permute.xlu0 1
      %1827 = vperm.xlu0 %1826, %v411
      %v1828 = vpop.permute.xlu0 %1827
      %1830 = vset.pattern.permute.xlu0 1
      %1831 = vperm.xlu0 %1830, %v412
      %v1832 = vpop.permute.xlu0 %1831
      %v1834 = vlaneseq
      %v1835 = vshrl.u32 %v1834, 7
      %v1836 = vsub.s32 0, %v1835
      %v1837 = vrot.slane %v1321, %v1836
      %v1838 = vmul.f32 %v1324, %v1837
      %v1839 = vmul.f32 %v1328, %v1837
      %v1840 = vmul.f32 %v1332, %v1837
      %v1841 = vmul.f32 %v1336, %v1837
      %v1842 = vmul.f32 %v1340, %v1837
      %v1843 = vmul.f32 %v1344, %v1837
      %v1844 = vmul.f32 %v1348, %v1837
      %v1845 = vmul.f32 %v1352, %v1837
      %v1846 = vmul.f32 %v1356, %v1837
      %v1847 = vmul.f32 %v1360, %v1837
      %v1848 = vmul.f32 %v1364, %v1837
      %v1849 = vmul.f32 %v1368, %v1837
      %v1850 = vmul.f32 %v1372, %v1837
      %v1851 = vmul.f32 %v1376, %v1837
      %v1852 = vmul.f32 %v1380, %v1837
      %v1853 = vmul.f32 %v1384, %v1837
      %v1854 = vmul.f32 %v1388, %v1837
      %v1855 = vmul.f32 %v1392, %v1837
      %v1856 = vmul.f32 %v1396, %v1837
      %v1857 = vmul.f32 %v1400, %v1837
      %v1858 = vmul.f32 %v1404, %v1837
      %v1859 = vmul.f32 %v1408, %v1837
      %v1860 = vmul.f32 %v1412, %v1837
      %v1861 = vmul.f32 %v1416, %v1837
      %v1862 = vmul.f32 %v1420, %v1837
      %v1863 = vmul.f32 %v1424, %v1837
      %v1864 = vmul.f32 %v1428, %v1837
      %v1865 = vmul.f32 %v1432, %v1837
      %v1866 = vmul.f32 %v1436, %v1837
      %v1867 = vmul.f32 %v1440, %v1837
      %v1868 = vmul.f32 %v1444, %v1837
      %v1869 = vmul.f32 %v1448, %v1837
      %v1870 = vmul.f32 %v1452, %v1837
      %v1871 = vmul.f32 %v1456, %v1837
      %v1872 = vmul.f32 %v1460, %v1837
      %v1873 = vmul.f32 %v1464, %v1837
      %v1874 = vmul.f32 %v1468, %v1837
      %v1875 = vmul.f32 %v1472, %v1837
      %v1876 = vmul.f32 %v1476, %v1837
      %v1877 = vmul.f32 %v1480, %v1837
      %v1878 = vmul.f32 %v1484, %v1837
      %v1879 = vmul.f32 %v1488, %v1837
      %v1880 = vmul.f32 %v1492, %v1837
      %v1881 = vmul.f32 %v1496, %v1837
      %v1882 = vmul.f32 %v1500, %v1837
      %v1883 = vmul.f32 %v1504, %v1837
      %v1884 = vmul.f32 %v1508, %v1837
      %v1885 = vmul.f32 %v1512, %v1837
      %v1886 = vmul.f32 %v1516, %v1837
      %v1887 = vmul.f32 %v1520, %v1837
      %v1888 = vmul.f32 %v1524, %v1837
      %v1889 = vmul.f32 %v1528, %v1837
      %v1890 = vmul.f32 %v1532, %v1837
      %v1891 = vmul.f32 %v1536, %v1837
      %v1892 = vmul.f32 %v1540, %v1837
      %v1893 = vmul.f32 %v1544, %v1837
      %v1894 = vmul.f32 %v1548, %v1837
      %v1895 = vmul.f32 %v1552, %v1837
      %v1896 = vmul.f32 %v1556, %v1837
      %v1897 = vmul.f32 %v1560, %v1837
      %v1898 = vmul.f32 %v1564, %v1837
      %v1899 = vmul.f32 %v1568, %v1837
      %v1900 = vmul.f32 %v1572, %v1837
      %v1901 = vmul.f32 %v1576, %v1837
      %v1902 = vmul.f32 %v1580, %v1837
      %v1903 = vmul.f32 %v1584, %v1837
      %v1904 = vmul.f32 %v1588, %v1837
      %v1905 = vmul.f32 %v1592, %v1837
      %v1906 = vmul.f32 %v1596, %v1837
      %v1907 = vmul.f32 %v1600, %v1837
      %v1908 = vmul.f32 %v1604, %v1837
      %v1909 = vmul.f32 %v1608, %v1837
      %v1910 = vmul.f32 %v1612, %v1837
      %v1911 = vmul.f32 %v1616, %v1837
      %v1912 = vmul.f32 %v1620, %v1837
      %v1913 = vmul.f32 %v1624, %v1837
      %v1914 = vmul.f32 %v1628, %v1837
      %v1915 = vmul.f32 %v1632, %v1837
      %v1916 = vmul.f32 %v1636, %v1837
      %v1917 = vmul.f32 %v1640, %v1837
      %v1918 = vmul.f32 %v1644, %v1837
      %v1919 = vmul.f32 %v1648, %v1837
      %v1920 = vmul.f32 %v1652, %v1837
      %v1921 = vmul.f32 %v1656, %v1837
      %v1922 = vmul.f32 %v1660, %v1837
      %v1923 = vmul.f32 %v1664, %v1837
      %v1924 = vmul.f32 %v1668, %v1837
      %v1925 = vmul.f32 %v1672, %v1837
      %v1926 = vmul.f32 %v1676, %v1837
      %v1927 = vmul.f32 %v1680, %v1837
      %v1928 = vmul.f32 %v1684, %v1837
      %v1929 = vmul.f32 %v1688, %v1837
      %v1930 = vmul.f32 %v1692, %v1837
      %v1931 = vmul.f32 %v1696, %v1837
      %v1932 = vmul.f32 %v1700, %v1837
      %v1933 = vmul.f32 %v1704, %v1837
      %v1934 = vmul.f32 %v1708, %v1837
      %v1935 = vmul.f32 %v1712, %v1837
      %v1936 = vmul.f32 %v1716, %v1837
      %v1937 = vmul.f32 %v1720, %v1837
      %v1938 = vmul.f32 %v1724, %v1837
      %v1939 = vmul.f32 %v1728, %v1837
      %v1940 = vmul.f32 %v1732, %v1837
      %v1941 = vmul.f32 %v1736, %v1837
      %v1942 = vmul.f32 %v1740, %v1837
      %v1943 = vmul.f32 %v1744, %v1837
      %v1944 = vmul.f32 %v1748, %v1837
      %v1945 = vmul.f32 %v1752, %v1837
      %v1946 = vmul.f32 %v1756, %v1837
      %v1947 = vmul.f32 %v1760, %v1837
      %v1948 = vmul.f32 %v1764, %v1837
      %v1949 = vmul.f32 %v1768, %v1837
      %v1950 = vmul.f32 %v1772, %v1837
      %v1951 = vmul.f32 %v1776, %v1837
      %v1952 = vmul.f32 %v1780, %v1837
      %v1953 = vmul.f32 %v1784, %v1837
      %v1954 = vmul.f32 %v1788, %v1837
      %v1955 = vmul.f32 %v1792, %v1837
      %v1956 = vmul.f32 %v1796, %v1837
      %v1957 = vmul.f32 %v1800, %v1837
      %v1958 = vmul.f32 %v1804, %v1837
      %v1959 = vmul.f32 %v1808, %v1837
      %v1960 = vmul.f32 %v1812, %v1837
      %v1961 = vmul.f32 %v1816, %v1837
      %v1962 = vmul.f32 %v1820, %v1837
      %v1963 = vmul.f32 %v1824, %v1837
      %v1964 = vmul.f32 %v1828, %v1837
      %v1965 = vmul.f32 %v1832, %v1837
      %v1966 = vadd.f32 %v1193, %v1838
      %v1967 = vadd.f32 %v1194, %v1839
      %v1968 = vadd.f32 %v1195, %v1840
      %v1969 = vadd.f32 %v1196, %v1841
      %v1970 = vadd.f32 %v1197, %v1842
      %v1971 = vadd.f32 %v1198, %v1843
      %v1972 = vadd.f32 %v1199, %v1844
      %v1973 = vadd.f32 %v1200, %v1845
      %v1974 = vadd.f32 %v1201, %v1846
      %v1975 = vadd.f32 %v1202, %v1847
      %v1976 = vadd.f32 %v1203, %v1848
      %v1977 = vadd.f32 %v1204, %v1849
      %v1978 = vadd.f32 %v1205, %v1850
      %v1979 = vadd.f32 %v1206, %v1851
      %v1980 = vadd.f32 %v1207, %v1852
      %v1981 = vadd.f32 %v1208, %v1853
      %v1982 = vadd.f32 %v1209, %v1854
      %v1983 = vadd.f32 %v1210, %v1855
      %v1984 = vadd.f32 %v1211, %v1856
      %v1985 = vadd.f32 %v1212, %v1857
      %v1986 = vadd.f32 %v1213, %v1858
      %v1987 = vadd.f32 %v1214, %v1859
      %v1988 = vadd.f32 %v1215, %v1860
      %v1989 = vadd.f32 %v1216, %v1861
      %v1990 = vadd.f32 %v1217, %v1862
      %v1991 = vadd.f32 %v1218, %v1863
      %v1992 = vadd.f32 %v1219, %v1864
      %v1993 = vadd.f32 %v1220, %v1865
      %v1994 = vadd.f32 %v1221, %v1866
      %v1995 = vadd.f32 %v1222, %v1867
      %v1996 = vadd.f32 %v1223, %v1868
      %v1997 = vadd.f32 %v1224, %v1869
      %v1998 = vadd.f32 %v1225, %v1870
      %v1999 = vadd.f32 %v1226, %v1871
      %v2000 = vadd.f32 %v1227, %v1872
      %v2001 = vadd.f32 %v1228, %v1873
      %v2002 = vadd.f32 %v1229, %v1874
      %v2003 = vadd.f32 %v1230, %v1875
      %v2004 = vadd.f32 %v1231, %v1876
      %v2005 = vadd.f32 %v1232, %v1877
      %v2006 = vadd.f32 %v1233, %v1878
      %v2007 = vadd.f32 %v1234, %v1879
      %v2008 = vadd.f32 %v1235, %v1880
      %v2009 = vadd.f32 %v1236, %v1881
      %v2010 = vadd.f32 %v1237, %v1882
      %v2011 = vadd.f32 %v1238, %v1883
      %v2012 = vadd.f32 %v1239, %v1884
      %v2013 = vadd.f32 %v1240, %v1885
      %v2014 = vadd.f32 %v1241, %v1886
      %v2015 = vadd.f32 %v1242, %v1887
      %v2016 = vadd.f32 %v1243, %v1888
      %v2017 = vadd.f32 %v1244, %v1889
      %v2018 = vadd.f32 %v1245, %v1890
      %v2019 = vadd.f32 %v1246, %v1891
      %v2020 = vadd.f32 %v1247, %v1892
      %v2021 = vadd.f32 %v1248, %v1893
      %v2022 = vadd.f32 %v1249, %v1894
      %v2023 = vadd.f32 %v1250, %v1895
      %v2024 = vadd.f32 %v1251, %v1896
      %v2025 = vadd.f32 %v1252, %v1897
      %v2026 = vadd.f32 %v1253, %v1898
      %v2027 = vadd.f32 %v1254, %v1899
      %v2028 = vadd.f32 %v1255, %v1900
      %v2029 = vadd.f32 %v1256, %v1901
      %v2030 = vadd.f32 %v1257, %v1902
      %v2031 = vadd.f32 %v1258, %v1903
      %v2032 = vadd.f32 %v1259, %v1904
      %v2033 = vadd.f32 %v1260, %v1905
      %v2034 = vadd.f32 %v1261, %v1906
      %v2035 = vadd.f32 %v1262, %v1907
      %v2036 = vadd.f32 %v1263, %v1908
      %v2037 = vadd.f32 %v1264, %v1909
      %v2038 = vadd.f32 %v1265, %v1910
      %v2039 = vadd.f32 %v1266, %v1911
      %v2040 = vadd.f32 %v1267, %v1912
      %v2041 = vadd.f32 %v1268, %v1913
      %v2042 = vadd.f32 %v1269, %v1914
      %v2043 = vadd.f32 %v1270, %v1915
      %v2044 = vadd.f32 %v1271, %v1916
      %v2045 = vadd.f32 %v1272, %v1917
      %v2046 = vadd.f32 %v1273, %v1918
      %v2047 = vadd.f32 %v1274, %v1919
      %v2048 = vadd.f32 %v1275, %v1920
      %v2049 = vadd.f32 %v1276, %v1921
      %v2050 = vadd.f32 %v1277, %v1922
      %v2051 = vadd.f32 %v1278, %v1923
      %v2052 = vadd.f32 %v1279, %v1924
      %v2053 = vadd.f32 %v1280, %v1925
      %v2054 = vadd.f32 %v1281, %v1926
      %v2055 = vadd.f32 %v1282, %v1927
      %v2056 = vadd.f32 %v1283, %v1928
      %v2057 = vadd.f32 %v1284, %v1929
      %v2058 = vadd.f32 %v1285, %v1930
      %v2059 = vadd.f32 %v1286, %v1931
      %v2060 = vadd.f32 %v1287, %v1932
      %v2061 = vadd.f32 %v1288, %v1933
      %v2062 = vadd.f32 %v1289, %v1934
      %v2063 = vadd.f32 %v1290, %v1935
      %v2064 = vadd.f32 %v1291, %v1936
      %v2065 = vadd.f32 %v1292, %v1937
      %v2066 = vadd.f32 %v1293, %v1938
      %v2067 = vadd.f32 %v1294, %v1939
      %v2068 = vadd.f32 %v1295, %v1940
      %v2069 = vadd.f32 %v1296, %v1941
      %v2070 = vadd.f32 %v1297, %v1942
      %v2071 = vadd.f32 %v1298, %v1943
      %v2072 = vadd.f32 %v1299, %v1944
      %v2073 = vadd.f32 %v1300, %v1945
      %v2074 = vadd.f32 %v1301, %v1946
      %v2075 = vadd.f32 %v1302, %v1947
      %v2076 = vadd.f32 %v1303, %v1948
      %v2077 = vadd.f32 %v1304, %v1949
      %v2078 = vadd.f32 %v1305, %v1950
      %v2079 = vadd.f32 %v1306, %v1951
      %v2080 = vadd.f32 %v1307, %v1952
      %v2081 = vadd.f32 %v1308, %v1953
      %v2082 = vadd.f32 %v1309, %v1954
      %v2083 = vadd.f32 %v1310, %v1955
      %v2084 = vadd.f32 %v1311, %v1956
      %v2085 = vadd.f32 %v1312, %v1957
      %v2086 = vadd.f32 %v1313, %v1958
      %v2087 = vadd.f32 %v1314, %v1959
      %v2088 = vadd.f32 %v1315, %v1960
      %v2089 = vadd.f32 %v1316, %v1961
      %v2090 = vadd.f32 %v1317, %v1962
      %v2091 = vadd.f32 %v1318, %v1963
      %v2092 = vadd.f32 %v1319, %v1964
      %v2093 = vadd.f32 %v1320, %v1965
      %v2094 = vmul.f32 %v1966, 0.5
      %v2095 = vmul.f32 %v1967, 0.5
      %v2096 = vmul.f32 %v1968, 0.5
      %v2097 = vmul.f32 %v1969, 0.5
      %v2098 = vmul.f32 %v1970, 0.5
      %v2099 = vmul.f32 %v1971, 0.5
      %v2100 = vmul.f32 %v1972, 0.5
      %v2101 = vmul.f32 %v1973, 0.5
      %v2102 = vmul.f32 %v1974, 0.5
      %v2103 = vmul.f32 %v1975, 0.5
      %v2104 = vmul.f32 %v1976, 0.5
      %v2105 = vmul.f32 %v1977, 0.5
      %v2106 = vmul.f32 %v1978, 0.5
      %v2107 = vmul.f32 %v1979, 0.5
      %v2108 = vmul.f32 %v1980, 0.5
      %v2109 = vmul.f32 %v1981, 0.5
      %v2110 = vmul.f32 %v1982, 0.5
      %v2111 = vmul.f32 %v1983, 0.5
      %v2112 = vmul.f32 %v1984, 0.5
      %v2113 = vmul.f32 %v1985, 0.5
      %v2114 = vmul.f32 %v1986, 0.5
      %v2115 = vmul.f32 %v1987, 0.5
      %v2116 = vmul.f32 %v1988, 0.5
      %v2117 = vmul.f32 %v1989, 0.5
      %v2118 = vmul.f32 %v1990, 0.5
      %v2119 = vmul.f32 %v1991, 0.5
      %v2120 = vmul.f32 %v1992, 0.5
      %v2121 = vmul.f32 %v1993, 0.5
      %v2122 = vmul.f32 %v1994, 0.5
      %v2123 = vmul.f32 %v1995, 0.5
      %v2124 = vmul.f32 %v1996, 0.5
      %v2125 = vmul.f32 %v1997, 0.5
      %v2126 = vmul.f32 %v1998, 0.5
      %v2127 = vmul.f32 %v1999, 0.5
      %v2128 = vmul.f32 %v2000, 0.5
      %v2129 = vmul.f32 %v2001, 0.5
      %v2130 = vmul.f32 %v2002, 0.5
      %v2131 = vmul.f32 %v2003, 0.5
      %v2132 = vmul.f32 %v2004, 0.5
      %v2133 = vmul.f32 %v2005, 0.5
      %v2134 = vmul.f32 %v2006, 0.5
      %v2135 = vmul.f32 %v2007, 0.5
      %v2136 = vmul.f32 %v2008, 0.5
      %v2137 = vmul.f32 %v2009, 0.5
      %v2138 = vmul.f32 %v2010, 0.5
      %v2139 = vmul.f32 %v2011, 0.5
      %v2140 = vmul.f32 %v2012, 0.5
      %v2141 = vmul.f32 %v2013, 0.5
      %v2142 = vmul.f32 %v2014, 0.5
      %v2143 = vmul.f32 %v2015, 0.5
      %v2144 = vmul.f32 %v2016, 0.5
      %v2145 = vmul.f32 %v2017, 0.5
      %v2146 = vmul.f32 %v2018, 0.5
      %v2147 = vmul.f32 %v2019, 0.5
      %v2148 = vmul.f32 %v2020, 0.5
      %v2149 = vmul.f32 %v2021, 0.5
      %v2150 = vmul.f32 %v2022, 0.5
      %v2151 = vmul.f32 %v2023, 0.5
      %v2152 = vmul.f32 %v2024, 0.5
      %v2153 = vmul.f32 %v2025, 0.5
      %v2154 = vmul.f32 %v2026, 0.5
      %v2155 = vmul.f32 %v2027, 0.5
      %v2156 = vmul.f32 %v2028, 0.5
      %v2157 = vmul.f32 %v2029, 0.5
      %v2158 = vmul.f32 %v2030, 0.5
      %v2159 = vmul.f32 %v2031, 0.5
      %v2160 = vmul.f32 %v2032, 0.5
      %v2161 = vmul.f32 %v2033, 0.5
      %v2162 = vmul.f32 %v2034, 0.5
      %v2163 = vmul.f32 %v2035, 0.5
      %v2164 = vmul.f32 %v2036, 0.5
      %v2165 = vmul.f32 %v2037, 0.5
      %v2166 = vmul.f32 %v2038, 0.5
      %v2167 = vmul.f32 %v2039, 0.5
      %v2168 = vmul.f32 %v2040, 0.5
      %v2169 = vmul.f32 %v2041, 0.5
      %v2170 = vmul.f32 %v2042, 0.5
      %v2171 = vmul.f32 %v2043, 0.5
      %v2172 = vmul.f32 %v2044, 0.5
      %v2173 = vmul.f32 %v2045, 0.5
      %v2174 = vmul.f32 %v2046, 0.5
      %v2175 = vmul.f32 %v2047, 0.5
      %v2176 = vmul.f32 %v2048, 0.5
      %v2177 = vmul.f32 %v2049, 0.5
      %v2178 = vmul.f32 %v2050, 0.5
      %v2179 = vmul.f32 %v2051, 0.5
      %v2180 = vmul.f32 %v2052, 0.5
      %v2181 = vmul.f32 %v2053, 0.5
      %v2182 = vmul.f32 %v2054, 0.5
      %v2183 = vmul.f32 %v2055, 0.5
      %v2184 = vmul.f32 %v2056, 0.5
      %v2185 = vmul.f32 %v2057, 0.5
      %v2186 = vmul.f32 %v2058, 0.5
      %v2187 = vmul.f32 %v2059, 0.5
      %v2188 = vmul.f32 %v2060, 0.5
      %v2189 = vmul.f32 %v2061, 0.5
      %v2190 = vmul.f32 %v2062, 0.5
      %v2191 = vmul.f32 %v2063, 0.5
      %v2192 = vmul.f32 %v2064, 0.5
      %v2193 = vmul.f32 %v2065, 0.5
      %v2194 = vmul.f32 %v2066, 0.5
      %v2195 = vmul.f32 %v2067, 0.5
      %v2196 = vmul.f32 %v2068, 0.5
      %v2197 = vmul.f32 %v2069, 0.5
      %v2198 = vmul.f32 %v2070, 0.5
      %v2199 = vmul.f32 %v2071, 0.5
      %v2200 = vmul.f32 %v2072, 0.5
      %v2201 = vmul.f32 %v2073, 0.5
      %v2202 = vmul.f32 %v2074, 0.5
      %v2203 = vmul.f32 %v2075, 0.5
      %v2204 = vmul.f32 %v2076, 0.5
      %v2205 = vmul.f32 %v2077, 0.5
      %v2206 = vmul.f32 %v2078, 0.5
      %v2207 = vmul.f32 %v2079, 0.5
      %v2208 = vmul.f32 %v2080, 0.5
      %v2209 = vmul.f32 %v2081, 0.5
      %v2210 = vmul.f32 %v2082, 0.5
      %v2211 = vmul.f32 %v2083, 0.5
      %v2212 = vmul.f32 %v2084, 0.5
      %v2213 = vmul.f32 %v2085, 0.5
      %v2214 = vmul.f32 %v2086, 0.5
      %v2215 = vmul.f32 %v2087, 0.5
      %v2216 = vmul.f32 %v2088, 0.5
      %v2217 = vmul.f32 %v2089, 0.5
      %v2218 = vmul.f32 %v2090, 0.5
      %v2219 = vmul.f32 %v2091, 0.5
      %v2220 = vmul.f32 %v2092, 0.5
      %v2221 = vmul.f32 %v2093, 0.5
      %v2222 = vtanh.pop %v2094
      %v2223 = vtanh.pop %v2095
      %v2224 = vtanh.pop %v2096
      %v2225 = vtanh.pop %v2097
      %v2226 = vtanh.pop %v2098
      %v2227 = vtanh.pop %v2099
      %v2228 = vtanh.pop %v2100
      %v2229 = vtanh.pop %v2101
      %v2230 = vtanh.pop %v2102
      %v2231 = vtanh.pop %v2103
      %v2232 = vtanh.pop %v2104
      %v2233 = vtanh.pop %v2105
      %v2234 = vtanh.pop %v2106
      %v2235 = vtanh.pop %v2107
      %v2236 = vtanh.pop %v2108
      %v2237 = vtanh.pop %v2109
      %v2238 = vtanh.pop %v2110
      %v2239 = vtanh.pop %v2111
      %v2240 = vtanh.pop %v2112
      %v2241 = vtanh.pop %v2113
      %v2242 = vtanh.pop %v2114
      %v2243 = vtanh.pop %v2115
      %v2244 = vtanh.pop %v2116
      %v2245 = vtanh.pop %v2117
      %v2246 = vtanh.pop %v2118
      %v2247 = vtanh.pop %v2119
      %v2248 = vtanh.pop %v2120
      %v2249 = vtanh.pop %v2121
      %v2250 = vtanh.pop %v2122
      %v2251 = vtanh.pop %v2123
      %v2252 = vtanh.pop %v2124
      %v2253 = vtanh.pop %v2125
      %v2254 = vtanh.pop %v2126
      %v2255 = vtanh.pop %v2127
      %v2256 = vtanh.pop %v2128
      %v2257 = vtanh.pop %v2129
      %v2258 = vtanh.pop %v2130
      %v2259 = vtanh.pop %v2131
      %v2260 = vtanh.pop %v2132
      %v2261 = vtanh.pop %v2133
      %v2262 = vtanh.pop %v2134
      %v2263 = vtanh.pop %v2135
      %v2264 = vtanh.pop %v2136
      %v2265 = vtanh.pop %v2137
      %v2266 = vtanh.pop %v2138
      %v2267 = vtanh.pop %v2139
      %v2268 = vtanh.pop %v2140
      %v2269 = vtanh.pop %v2141
      %v2270 = vtanh.pop %v2142
      %v2271 = vtanh.pop %v2143
      %v2272 = vtanh.pop %v2144
      %v2273 = vtanh.pop %v2145
      %v2274 = vtanh.pop %v2146
      %v2275 = vtanh.pop %v2147
      %v2276 = vtanh.pop %v2148
      %v2277 = vtanh.pop %v2149
      %v2278 = vtanh.pop %v2150
      %v2279 = vtanh.pop %v2151
      %v2280 = vtanh.pop %v2152
      %v2281 = vtanh.pop %v2153
      %v2282 = vtanh.pop %v2154
      %v2283 = vtanh.pop %v2155
      %v2284 = vtanh.pop %v2156
      %v2285 = vtanh.pop %v2157
      %v2286 = vtanh.pop %v2158
      %v2287 = vtanh.pop %v2159
      %v2288 = vtanh.pop %v2160
      %v2289 = vtanh.pop %v2161
      %v2290 = vtanh.pop %v2162
      %v2291 = vtanh.pop %v2163
      %v2292 = vtanh.pop %v2164
      %v2293 = vtanh.pop %v2165
      %v2294 = vtanh.pop %v2166
      %v2295 = vtanh.pop %v2167
      %v2296 = vtanh.pop %v2168
      %v2297 = vtanh.pop %v2169
      %v2298 = vtanh.pop %v2170
      %v2299 = vtanh.pop %v2171
      %v2300 = vtanh.pop %v2172
      %v2301 = vtanh.pop %v2173
      %v2302 = vtanh.pop %v2174
      %v2303 = vtanh.pop %v2175
      %v2304 = vtanh.pop %v2176
      %v2305 = vtanh.pop %v2177
      %v2306 = vtanh.pop %v2178
      %v2307 = vtanh.pop %v2179
      %v2308 = vtanh.pop %v2180
      %v2309 = vtanh.pop %v2181
      %v2310 = vtanh.pop %v2182
      %v2311 = vtanh.pop %v2183
      %v2312 = vtanh.pop %v2184
      %v2313 = vtanh.pop %v2185
      %v2314 = vtanh.pop %v2186
      %v2315 = vtanh.pop %v2187
      %v2316 = vtanh.pop %v2188
      %v2317 = vtanh.pop %v2189
      %v2318 = vtanh.pop %v2190
      %v2319 = vtanh.pop %v2191
      %v2320 = vtanh.pop %v2192
      %v2321 = vtanh.pop %v2193
      %v2322 = vtanh.pop %v2194
      %v2323 = vtanh.pop %v2195
      %v2324 = vtanh.pop %v2196
      %v2325 = vtanh.pop %v2197
      %v2326 = vtanh.pop %v2198
      %v2327 = vtanh.pop %v2199
      %v2328 = vtanh.pop %v2200
      %v2329 = vtanh.pop %v2201
      %v2330 = vtanh.pop %v2202
      %v2331 = vtanh.pop %v2203
      %v2332 = vtanh.pop %v2204
      %v2333 = vtanh.pop %v2205
      %v2334 = vtanh.pop %v2206
      %v2335 = vtanh.pop %v2207
      %v2336 = vtanh.pop %v2208
      %v2337 = vtanh.pop %v2209
      %v2338 = vtanh.pop %v2210
      %v2339 = vtanh.pop %v2211
      %v2340 = vtanh.pop %v2212
      %v2341 = vtanh.pop %v2213
      %v2342 = vtanh.pop %v2214
      %v2343 = vtanh.pop %v2215
      %v2344 = vtanh.pop %v2216
      %v2345 = vtanh.pop %v2217
      %v2346 = vtanh.pop %v2218
      %v2347 = vtanh.pop %v2219
      %v2348 = vtanh.pop %v2220
      %v2349 = vtanh.pop %v2221
      %v2350 = vadd.f32 %v2222, 1.0
      %v2351 = vadd.f32 %v2223, 1.0
      %v2352 = vadd.f32 %v2224, 1.0
      %v2353 = vadd.f32 %v2225, 1.0
      %v2354 = vadd.f32 %v2226, 1.0
      %v2355 = vadd.f32 %v2227, 1.0
      %v2356 = vadd.f32 %v2228, 1.0
      %v2357 = vadd.f32 %v2229, 1.0
      %v2358 = vadd.f32 %v2230, 1.0
      %v2359 = vadd.f32 %v2231, 1.0
      %v2360 = vadd.f32 %v2232, 1.0
      %v2361 = vadd.f32 %v2233, 1.0
      %v2362 = vadd.f32 %v2234, 1.0
      %v2363 = vadd.f32 %v2235, 1.0
      %v2364 = vadd.f32 %v2236, 1.0
      %v2365 = vadd.f32 %v2237, 1.0
      %v2366 = vadd.f32 %v2238, 1.0
      %v2367 = vadd.f32 %v2239, 1.0
      %v2368 = vadd.f32 %v2240, 1.0
      %v2369 = vadd.f32 %v2241, 1.0
      %v2370 = vadd.f32 %v2242, 1.0
      %v2371 = vadd.f32 %v2243, 1.0
      %v2372 = vadd.f32 %v2244, 1.0
      %v2373 = vadd.f32 %v2245, 1.0
      %v2374 = vadd.f32 %v2246, 1.0
      %v2375 = vadd.f32 %v2247, 1.0
      %v2376 = vadd.f32 %v2248, 1.0
      %v2377 = vadd.f32 %v2249, 1.0
      %v2378 = vadd.f32 %v2250, 1.0
      %v2379 = vadd.f32 %v2251, 1.0
      %v2380 = vadd.f32 %v2252, 1.0
      %v2381 = vadd.f32 %v2253, 1.0
      %v2382 = vadd.f32 %v2254, 1.0
      %v2383 = vadd.f32 %v2255, 1.0
      %v2384 = vadd.f32 %v2256, 1.0
      %v2385 = vadd.f32 %v2257, 1.0
      %v2386 = vadd.f32 %v2258, 1.0
      %v2387 = vadd.f32 %v2259, 1.0
      %v2388 = vadd.f32 %v2260, 1.0
      %v2389 = vadd.f32 %v2261, 1.0
      %v2390 = vadd.f32 %v2262, 1.0
      %v2391 = vadd.f32 %v2263, 1.0
      %v2392 = vadd.f32 %v2264, 1.0
      %v2393 = vadd.f32 %v2265, 1.0
      %v2394 = vadd.f32 %v2266, 1.0
      %v2395 = vadd.f32 %v2267, 1.0
      %v2396 = vadd.f32 %v2268, 1.0
      %v2397 = vadd.f32 %v2269, 1.0
      %v2398 = vadd.f32 %v2270, 1.0
      %v2399 = vadd.f32 %v2271, 1.0
      %v2400 = vadd.f32 %v2272, 1.0
      %v2401 = vadd.f32 %v2273, 1.0
      %v2402 = vadd.f32 %v2274, 1.0
      %v2403 = vadd.f32 %v2275, 1.0
      %v2404 = vadd.f32 %v2276, 1.0
      %v2405 = vadd.f32 %v2277, 1.0
      %v2406 = vadd.f32 %v2278, 1.0
      %v2407 = vadd.f32 %v2279, 1.0
      %v2408 = vadd.f32 %v2280, 1.0
      %v2409 = vadd.f32 %v2281, 1.0
      %v2410 = vadd.f32 %v2282, 1.0
      %v2411 = vadd.f32 %v2283, 1.0
      %v2412 = vadd.f32 %v2284, 1.0
      %v2413 = vadd.f32 %v2285, 1.0
      %v2414 = vadd.f32 %v2286, 1.0
      %v2415 = vadd.f32 %v2287, 1.0
      %v2416 = vadd.f32 %v2288, 1.0
      %v2417 = vadd.f32 %v2289, 1.0
      %v2418 = vadd.f32 %v2290, 1.0
      %v2419 = vadd.f32 %v2291, 1.0
      %v2420 = vadd.f32 %v2292, 1.0
      %v2421 = vadd.f32 %v2293, 1.0
      %v2422 = vadd.f32 %v2294, 1.0
      %v2423 = vadd.f32 %v2295, 1.0
      %v2424 = vadd.f32 %v2296, 1.0
      %v2425 = vadd.f32 %v2297, 1.0
      %v2426 = vadd.f32 %v2298, 1.0
      %v2427 = vadd.f32 %v2299, 1.0
      %v2428 = vadd.f32 %v2300, 1.0
      %v2429 = vadd.f32 %v2301, 1.0
      %v2430 = vadd.f32 %v2302, 1.0
      %v2431 = vadd.f32 %v2303, 1.0
      %v2432 = vadd.f32 %v2304, 1.0
      %v2433 = vadd.f32 %v2305, 1.0
      %v2434 = vadd.f32 %v2306, 1.0
      %v2435 = vadd.f32 %v2307, 1.0
      %v2436 = vadd.f32 %v2308, 1.0
      %v2437 = vadd.f32 %v2309, 1.0
      %v2438 = vadd.f32 %v2310, 1.0
      %v2439 = vadd.f32 %v2311, 1.0
      %v2440 = vadd.f32 %v2312, 1.0
      %v2441 = vadd.f32 %v2313, 1.0
      %v2442 = vadd.f32 %v2314, 1.0
      %v2443 = vadd.f32 %v2315, 1.0
      %v2444 = vadd.f32 %v2316, 1.0
      %v2445 = vadd.f32 %v2317, 1.0
      %v2446 = vadd.f32 %v2318, 1.0
      %v2447 = vadd.f32 %v2319, 1.0
      %v2448 = vadd.f32 %v2320, 1.0
      %v2449 = vadd.f32 %v2321, 1.0
      %v2450 = vadd.f32 %v2322, 1.0
      %v2451 = vadd.f32 %v2323, 1.0
      %v2452 = vadd.f32 %v2324, 1.0
      %v2453 = vadd.f32 %v2325, 1.0
      %v2454 = vadd.f32 %v2326, 1.0
      %v2455 = vadd.f32 %v2327, 1.0
      %v2456 = vadd.f32 %v2328, 1.0
      %v2457 = vadd.f32 %v2329, 1.0
      %v2458 = vadd.f32 %v2330, 1.0
      %v2459 = vadd.f32 %v2331, 1.0
      %v2460 = vadd.f32 %v2332, 1.0
      %v2461 = vadd.f32 %v2333, 1.0
      %v2462 = vadd.f32 %v2334, 1.0
      %v2463 = vadd.f32 %v2335, 1.0
      %v2464 = vadd.f32 %v2336, 1.0
      %v2465 = vadd.f32 %v2337, 1.0
      %v2466 = vadd.f32 %v2338, 1.0
      %v2467 = vadd.f32 %v2339, 1.0
      %v2468 = vadd.f32 %v2340, 1.0
      %v2469 = vadd.f32 %v2341, 1.0
      %v2470 = vadd.f32 %v2342, 1.0
      %v2471 = vadd.f32 %v2343, 1.0
      %v2472 = vadd.f32 %v2344, 1.0
      %v2473 = vadd.f32 %v2345, 1.0
      %v2474 = vadd.f32 %v2346, 1.0
      %v2475 = vadd.f32 %v2347, 1.0
      %v2476 = vadd.f32 %v2348, 1.0
      %v2477 = vadd.f32 %v2349, 1.0
      %v2478 = vmul.f32 %v2350, 0.5
      %v2479 = vmul.f32 %v2351, 0.5
      %v2480 = vmul.f32 %v2352, 0.5
      %v2481 = vmul.f32 %v2353, 0.5
      %v2482 = vmul.f32 %v2354, 0.5
      %v2483 = vmul.f32 %v2355, 0.5
      %v2484 = vmul.f32 %v2356, 0.5
      %v2485 = vmul.f32 %v2357, 0.5
      %v2486 = vmul.f32 %v2358, 0.5
      %v2487 = vmul.f32 %v2359, 0.5
      %v2488 = vmul.f32 %v2360, 0.5
      %v2489 = vmul.f32 %v2361, 0.5
      %v2490 = vmul.f32 %v2362, 0.5
      %v2491 = vmul.f32 %v2363, 0.5
      %v2492 = vmul.f32 %v2364, 0.5
      %v2493 = vmul.f32 %v2365, 0.5
      %v2494 = vmul.f32 %v2366, 0.5
      %v2495 = vmul.f32 %v2367, 0.5
      %v2496 = vmul.f32 %v2368, 0.5
      %v2497 = vmul.f32 %v2369, 0.5
      %v2498 = vmul.f32 %v2370, 0.5
      %v2499 = vmul.f32 %v2371, 0.5
      %v2500 = vmul.f32 %v2372, 0.5
      %v2501 = vmul.f32 %v2373, 0.5
      %v2502 = vmul.f32 %v2374, 0.5
      %v2503 = vmul.f32 %v2375, 0.5
      %v2504 = vmul.f32 %v2376, 0.5
      %v2505 = vmul.f32 %v2377, 0.5
      %v2506 = vmul.f32 %v2378, 0.5
      %v2507 = vmul.f32 %v2379, 0.5
      %v2508 = vmul.f32 %v2380, 0.5
      %v2509 = vmul.f32 %v2381, 0.5
      %v2510 = vmul.f32 %v2382, 0.5
      %v2511 = vmul.f32 %v2383, 0.5
      %v2512 = vmul.f32 %v2384, 0.5
      %v2513 = vmul.f32 %v2385, 0.5
      %v2514 = vmul.f32 %v2386, 0.5
      %v2515 = vmul.f32 %v2387, 0.5
      %v2516 = vmul.f32 %v2388, 0.5
      %v2517 = vmul.f32 %v2389, 0.5
      %v2518 = vmul.f32 %v2390, 0.5
      %v2519 = vmul.f32 %v2391, 0.5
      %v2520 = vmul.f32 %v2392, 0.5
      %v2521 = vmul.f32 %v2393, 0.5
      %v2522 = vmul.f32 %v2394, 0.5
      %v2523 = vmul.f32 %v2395, 0.5
      %v2524 = vmul.f32 %v2396, 0.5
      %v2525 = vmul.f32 %v2397, 0.5
      %v2526 = vmul.f32 %v2398, 0.5
      %v2527 = vmul.f32 %v2399, 0.5
      %v2528 = vmul.f32 %v2400, 0.5
      %v2529 = vmul.f32 %v2401, 0.5
      %v2530 = vmul.f32 %v2402, 0.5
      %v2531 = vmul.f32 %v2403, 0.5
      %v2532 = vmul.f32 %v2404, 0.5
      %v2533 = vmul.f32 %v2405, 0.5
      %v2534 = vmul.f32 %v2406, 0.5
      %v2535 = vmul.f32 %v2407, 0.5
      %v2536 = vmul.f32 %v2408, 0.5
      %v2537 = vmul.f32 %v2409, 0.5
      %v2538 = vmul.f32 %v2410, 0.5
      %v2539 = vmul.f32 %v2411, 0.5
      %v2540 = vmul.f32 %v2412, 0.5
      %v2541 = vmul.f32 %v2413, 0.5
      %v2542 = vmul.f32 %v2414, 0.5
      %v2543 = vmul.f32 %v2415, 0.5
      %v2544 = vmul.f32 %v2416, 0.5
      %v2545 = vmul.f32 %v2417, 0.5
      %v2546 = vmul.f32 %v2418, 0.5
      %v2547 = vmul.f32 %v2419, 0.5
      %v2548 = vmul.f32 %v2420, 0.5
      %v2549 = vmul.f32 %v2421, 0.5
      %v2550 = vmul.f32 %v2422, 0.5
      %v2551 = vmul.f32 %v2423, 0.5
      %v2552 = vmul.f32 %v2424, 0.5
      %v2553 = vmul.f32 %v2425, 0.5
      %v2554 = vmul.f32 %v2426, 0.5
      %v2555 = vmul.f32 %v2427, 0.5
      %v2556 = vmul.f32 %v2428, 0.5
      %v2557 = vmul.f32 %v2429, 0.5
      %v2558 = vmul.f32 %v2430, 0.5
      %v2559 = vmul.f32 %v2431, 0.5
      %v2560 = vmul.f32 %v2432, 0.5
      %v2561 = vmul.f32 %v2433, 0.5
      %v2562 = vmul.f32 %v2434, 0.5
      %v2563 = vmul.f32 %v2435, 0.5
      %v2564 = vmul.f32 %v2436, 0.5
      %v2565 = vmul.f32 %v2437, 0.5
      %v2566 = vmul.f32 %v2438, 0.5
      %v2567 = vmul.f32 %v2439, 0.5
      %v2568 = vmul.f32 %v2440, 0.5
      %v2569 = vmul.f32 %v2441, 0.5
      %v2570 = vmul.f32 %v2442, 0.5
      %v2571 = vmul.f32 %v2443, 0.5
      %v2572 = vmul.f32 %v2444, 0.5
      %v2573 = vmul.f32 %v2445, 0.5
      %v2574 = vmul.f32 %v2446, 0.5
      %v2575 = vmul.f32 %v2447, 0.5
      %v2576 = vmul.f32 %v2448, 0.5
      %v2577 = vmul.f32 %v2449, 0.5
      %v2578 = vmul.f32 %v2450, 0.5
      %v2579 = vmul.f32 %v2451, 0.5
      %v2580 = vmul.f32 %v2452, 0.5
      %v2581 = vmul.f32 %v2453, 0.5
      %v2582 = vmul.f32 %v2454, 0.5
      %v2583 = vmul.f32 %v2455, 0.5
      %v2584 = vmul.f32 %v2456, 0.5
      %v2585 = vmul.f32 %v2457, 0.5
      %v2586 = vmul.f32 %v2458, 0.5
      %v2587 = vmul.f32 %v2459, 0.5
      %v2588 = vmul.f32 %v2460, 0.5
      %v2589 = vmul.f32 %v2461, 0.5
      %v2590 = vmul.f32 %v2462, 0.5
      %v2591 = vmul.f32 %v2463, 0.5
      %v2592 = vmul.f32 %v2464, 0.5
      %v2593 = vmul.f32 %v2465, 0.5
      %v2594 = vmul.f32 %v2466, 0.5
      %v2595 = vmul.f32 %v2467, 0.5
      %v2596 = vmul.f32 %v2468, 0.5
      %v2597 = vmul.f32 %v2469, 0.5
      %v2598 = vmul.f32 %v2470, 0.5
      %v2599 = vmul.f32 %v2471, 0.5
      %v2600 = vmul.f32 %v2472, 0.5
      %v2601 = vmul.f32 %v2473, 0.5
      %v2602 = vmul.f32 %v2474, 0.5
      %v2603 = vmul.f32 %v2475, 0.5
      %v2604 = vmul.f32 %v2476, 0.5
      %v2605 = vmul.f32 %v2477, 0.5
      %v2606 = vpack.c.bf16 %v2479, %v2478
      %v2607 = vpack.c.bf16 %v2481, %v2480
      %v2608 = vpack.c.bf16 %v2483, %v2482
      %v2609 = vpack.c.bf16 %v2485, %v2484
      %v2610 = vpack.c.bf16 %v2487, %v2486
      %v2611 = vpack.c.bf16 %v2489, %v2488
      %v2612 = vpack.c.bf16 %v2491, %v2490
      %v2613 = vpack.c.bf16 %v2493, %v2492
      %v2614 = vpack.c.bf16 %v2495, %v2494
      %v2615 = vpack.c.bf16 %v2497, %v2496
      %v2616 = vpack.c.bf16 %v2499, %v2498
      %v2617 = vpack.c.bf16 %v2501, %v2500
      %v2618 = vpack.c.bf16 %v2503, %v2502
      %v2619 = vpack.c.bf16 %v2505, %v2504
      %v2620 = vpack.c.bf16 %v2507, %v2506
      %v2621 = vpack.c.bf16 %v2509, %v2508
      %v2622 = vpack.c.bf16 %v2511, %v2510
      %v2623 = vpack.c.bf16 %v2513, %v2512
      %v2624 = vpack.c.bf16 %v2515, %v2514
      %v2625 = vpack.c.bf16 %v2517, %v2516
      %v2626 = vpack.c.bf16 %v2519, %v2518
      %v2627 = vpack.c.bf16 %v2521, %v2520
      %v2628 = vpack.c.bf16 %v2523, %v2522
      %v2629 = vpack.c.bf16 %v2525, %v2524
      %v2630 = vpack.c.bf16 %v2527, %v2526
      %v2631 = vpack.c.bf16 %v2529, %v2528
      %v2632 = vpack.c.bf16 %v2531, %v2530
      %v2633 = vpack.c.bf16 %v2533, %v2532
      %v2634 = vpack.c.bf16 %v2535, %v2534
      %v2635 = vpack.c.bf16 %v2537, %v2536
      %v2636 = vpack.c.bf16 %v2539, %v2538
      %v2637 = vpack.c.bf16 %v2541, %v2540
      %v2638 = vpack.c.bf16 %v2543, %v2542
      %v2639 = vpack.c.bf16 %v2545, %v2544
      %v2640 = vpack.c.bf16 %v2547, %v2546
      %v2641 = vpack.c.bf16 %v2549, %v2548
      %v2642 = vpack.c.bf16 %v2551, %v2550
      %v2643 = vpack.c.bf16 %v2553, %v2552
      %v2644 = vpack.c.bf16 %v2555, %v2554
      %v2645 = vpack.c.bf16 %v2557, %v2556
      %v2646 = vpack.c.bf16 %v2559, %v2558
      %v2647 = vpack.c.bf16 %v2561, %v2560
      %v2648 = vpack.c.bf16 %v2563, %v2562
      %v2649 = vpack.c.bf16 %v2565, %v2564
      %v2650 = vpack.c.bf16 %v2567, %v2566
      %v2651 = vpack.c.bf16 %v2569, %v2568
      %v2652 = vpack.c.bf16 %v2571, %v2570
      %v2653 = vpack.c.bf16 %v2573, %v2572
      %v2654 = vpack.c.bf16 %v2575, %v2574
      %v2655 = vpack.c.bf16 %v2577, %v2576
      %v2656 = vpack.c.bf16 %v2579, %v2578
      %v2657 = vpack.c.bf16 %v2581, %v2580
      %v2658 = vpack.c.bf16 %v2583, %v2582
      %v2659 = vpack.c.bf16 %v2585, %v2584
      %v2660 = vpack.c.bf16 %v2587, %v2586
      %v2661 = vpack.c.bf16 %v2589, %v2588
      %v2662 = vpack.c.bf16 %v2591, %v2590
      %v2663 = vpack.c.bf16 %v2593, %v2592
      %v2664 = vpack.c.bf16 %v2595, %v2594
      %v2665 = vpack.c.bf16 %v2597, %v2596
      %v2666 = vpack.c.bf16 %v2599, %v2598
      %v2667 = vpack.c.bf16 %v2601, %v2600
      %v2668 = vpack.c.bf16 %v2603, %v2602
      %v2669 = vpack.c.bf16 %v2605, %v2604
      %v2670 = vld [vmem:[%s3] sm:$0xf]
      %v2671 = vld [vmem:[%s3 + $0x4] sm:$0xf]
      %v2672 = vld [vmem:[%s3 + $0x8] sm:$0xf]
      %v2673 = vld [vmem:[%s3 + $0xc] sm:$0xf]
      %v2674 = vld [vmem:[%s3 + $0x10] sm:$0xf]
      %v2675 = vld [vmem:[%s3 + $0x14] sm:$0xf]
      %v2676 = vld [vmem:[%s3 + $0x18] sm:$0x1]
      %v2677 = vld [vmem:[%s4] sm:$0x1]
      %v2679 = vlaneseq
      %v2680 = vshrl.u32 %v2679, 7
      %v2681 = vsub.s32 0, %v2680
      %v2682 = vrot.slane %v2677, %v2681
      %v2691 = vunpack.c.l.b16 %v2670
      %v2692 = vunpack.c.l.b16 %v2671
      %v2693 = vunpack.c.l.b16 %v2672
      %v2694 = vunpack.c.l.b16 %v2673
      %v2695 = vunpack.c.l.b16 %v2674
      %v2696 = vunpack.c.l.b16 %v2675
      %v2697 = vunpack.c.l.b16 %v2676
      %v2698 = vpack.c.b16 %v2692, %v2691
      %v2699 = vpack.c.b16 %v2694, %v2693
      %v2700 = vpack.c.b16 %v2696, %v2695
      %v2701 = vpack.c.b16 %v2697, %v2697
      %vm2705 = vcmask 408576
      %v2707 = vsel %vm2705, %v2606, 0
      %v2710 = vsel %vm2705, %v2607, 0
      %v2713 = vsel %vm2705, %v2608, 0
      %v2716 = vsel %vm2705, %v2609, 0
      %v2719 = vsel %vm2705, %v2610, 0
      %v2722 = vsel %vm2705, %v2611, 0
      %v2725 = vsel %vm2705, %v2612, 0
      %v2728 = vsel %vm2705, %v2613, 0
      %v2731 = vsel %vm2705, %v2614, 0
      %v2734 = vsel %vm2705, %v2615, 0
      %v2737 = vsel %vm2705, %v2616, 0
      %v2740 = vsel %vm2705, %v2617, 0
      %v2743 = vsel %vm2705, %v2618, 0
      %v2746 = vsel %vm2705, %v2619, 0
      %v2749 = vsel %vm2705, %v2620, 0
      %v2752 = vsel %vm2705, %v2621, 0
      %v2755 = vsel %vm2705, %v2622, 0
      %v2758 = vsel %vm2705, %v2623, 0
      %v2761 = vsel %vm2705, %v2624, 0
      %v2764 = vsel %vm2705, %v2625, 0
      %v2767 = vsel %vm2705, %v2626, 0
      %v2770 = vsel %vm2705, %v2627, 0
      %v2773 = vsel %vm2705, %v2628, 0
      %v2776 = vsel %vm2705, %v2629, 0
      %v2779 = vsel %vm2705, %v2630, 0
      %v2782 = vsel %vm2705, %v2631, 0
      %v2785 = vsel %vm2705, %v2632, 0
      %v2788 = vsel %vm2705, %v2633, 0
      %v2791 = vsel %vm2705, %v2634, 0
      %v2794 = vsel %vm2705, %v2635, 0
      %v2797 = vsel %vm2705, %v2636, 0
      %v2800 = vsel %vm2705, %v2637, 0
      %v2803 = vsel %vm2705, %v2638, 0
      %v2806 = vsel %vm2705, %v2639, 0
      %v2809 = vsel %vm2705, %v2640, 0
      %v2812 = vsel %vm2705, %v2641, 0
      %v2815 = vsel %vm2705, %v2642, 0
      %v2818 = vsel %vm2705, %v2643, 0
      %v2821 = vsel %vm2705, %v2644, 0
      %v2824 = vsel %vm2705, %v2645, 0
      %v2827 = vsel %vm2705, %v2646, 0
      %v2830 = vsel %vm2705, %v2647, 0
      %v2833 = vsel %vm2705, %v2648, 0
      %v2836 = vsel %vm2705, %v2649, 0
      %v2839 = vsel %vm2705, %v2650, 0
      %v2842 = vsel %vm2705, %v2651, 0
      %v2845 = vsel %vm2705, %v2652, 0
      %v2848 = vsel %vm2705, %v2653, 0
      %v2851 = vsel %vm2705, %v2654, 0
      %v2854 = vsel %vm2705, %v2655, 0
      %v2857 = vsel %vm2705, %v2656, 0
      %v2860 = vsel %vm2705, %v2657, 0
      %v2863 = vsel %vm2705, %v2658, 0
      %v2866 = vsel %vm2705, %v2659, 0
      %v2869 = vsel %vm2705, %v2660, 0
      %v2872 = vsel %vm2705, %v2661, 0
      %v2875 = vsel %vm2705, %v2662, 0
      %v2878 = vsel %vm2705, %v2663, 0
      %v2881 = vsel %vm2705, %v2664, 0
      %v2884 = vsel %vm2705, %v2665, 0
      %v2887 = vsel %vm2705, %v2666, 0
      %v2890 = vsel %vm2705, %v2667, 0
      %v2893 = vsel %vm2705, %v2668, 0
      %v2896 = vsel %vm2705, %v2669, 0
      %vm2898 = vcmask 1040384
      %v2900 = vsel %vm2898, %v2701, 0
      %2902 = vmatprep.subr.bf16.mxu0 0
      %2903 = vmatpush1.bf16.msra.mxu0 %v2698
      %2904 = vmatprep.subr.bf16.mxu0 0
      %2905 = vmatpush1.bf16.msra.mxu0 %v2699
      %2906 = vmatprep.subr.bf16.mxu0 0
      %2907 = vmatpush1.bf16.msra.mxu0 %v2700
      %2908 = vmatprep.subr.bf16.mxu0 0
      %2909 = vmatpush1.bf16.msra.mxu0 %v2900
      %2910 = vmatprep.subr.bf16.mxu0 0
      %2911 = vmatpush1.bf16.msra.mxu0 0
      %2912 = vmatprep.subr.bf16.mxu0 0
      %2913 = vmatpush1.bf16.msra.mxu0 0
      %2914 = vmatprep.subr.bf16.mxu0 0
      %2915 = vmatpush1.bf16.msra.mxu0 0
      %2916 = vmatprep.subr.bf16.mxu0 0
      %2917 = vmatpush1.bf16.msra.mxu0 0
      %2918 = vmatprep.subr.bf16.mxu0 0
      %2919 = vmatpush1.bf16.msra.mxu0 0
      %2920 = vmatprep.subr.bf16.mxu0 0
      %2921 = vmatpush1.bf16.msra.mxu0 0
      %2922 = vmatprep.subr.bf16.mxu0 0
      %2923 = vmatpush1.bf16.msra.mxu0 0
      %2924 = vmatprep.subr.bf16.mxu0 0
      %2925 = vmatpush1.bf16.msra.mxu0 0
      %2926 = vmatprep.subr.bf16.mxu0 0
      %2927 = vmatpush1.bf16.msra.mxu0 0
      %2928 = vmatprep.subr.bf16.mxu0 0
      %2929 = vmatpush1.bf16.msra.mxu0 0
      %2930 = vmatprep.subr.bf16.mxu0 0
      %2931 = vmatpush1.bf16.msra.mxu0 0
      %2932 = vmatprep.subr.bf16.mxu0 0
      %2933 = vmatpush1.bf16.msra.mxu0 0
      %2934 = vmatprep.mubr.bf16.mxu0 0
      %2935 = vmatmul.mubr.bf16.gmra.mrb[0].mxu0 %v2707
      %v2936 = vpop.f32.mrb[0].mxu0
      %v2937 = vadd.f32 %v2682, %v2936
      %v2938 = vpop.f32.mrb[0].mxu0
      %v2939 = vpop.f32.mrb[0].mxu0
      %v2940 = vadd.f32 %v2682, %v2939
      %v2941 = vpop.f32.mrb[0].mxu0
      %2942 = vmatprep.mubr.bf16.mxu0 0
      %2943 = vmatmul.mubr.bf16.gmra.mrb[0].mxu0 %v2710
      %v2944 = vpop.f32.mrb[0].mxu0
      %v2945 = vadd.f32 %v2682, %v2944
      %v2946 = vpop.f32.mrb[0].mxu0
      %v2947 = vpop.f32.mrb[0].mxu0
      %v2948 = vadd.f32 %v2682, %v2947
      %v2949 = vpop.f32.mrb[0].mxu0
      %2950 = vmatprep.mubr.bf16.mxu0 0
      %2951 = vmatmul.mubr.bf16.gmra.mrb[0].mxu0 %v2713
      %v2952 = vpop.f32.mrb[0].mxu0
      %v2953 = vadd.f32 %v2682, %v2952
      %v2954 = vpop.f32.mrb[0].mxu0
      %v2955 = vpop.f32.mrb[0].mxu0
      %v2956 = vadd.f32 %v2682, %v2955
      %v2957 = vpop.f32.mrb[0].mxu0
      %2958 = vmatprep.mubr.bf16.mxu0 0
      %2959 = vmatmul.mubr.bf16.gmra.mrb[0].mxu0 %v2716
      %v2960 = vpop.f32.mrb[0].mxu0
      %v2961 = vadd.f32 %v2682, %v2960
      %v2962 = vpop.f32.mrb[0].mxu0
      %v2963 = vpop.f32.mrb[0].mxu0
      %v2964 = vadd.f32 %v2682, %v2963
      %v2965 = vpop.f32.mrb[0].mxu0
      %2966 = vmatprep.mubr.bf16.mxu0 0
      %2967 = vmatmul.mubr.bf16.gmra.mrb[0].mxu0 %v2719
      %v2968 = vpop.f32.mrb[0].mxu0
      %v2969 = vadd.f32 %v2682, %v2968
      %v2970 = vpop.f32.mrb[0].mxu0
      %v2971 = vpop.f32.mrb[0].mxu0
      %v2972 = vadd.f32 %v2682, %v2971
      %v2973 = vpop.f32.mrb[0].mxu0
      %2974 = vmatprep.mubr.bf16.mxu0 0
      %2975 = vmatmul.mubr.bf16.gmra.mrb[0].mxu0 %v2722
      %v2976 = vpop.f32.mrb[0].mxu0
      %v2977 = vadd.f32 %v2682, %v2976
      %v2978 = vpop.f32.mrb[0].mxu0
      %v2979 = vpop.f32.mrb[0].mxu0
      %v2980 = vadd.f32 %v2682, %v2979
      %v2981 = vpop.f32.mrb[0].mxu0
      %2982 = vmatprep.mubr.bf16.mxu0 0
      %2983 = vmatmul.mubr.bf16.gmra.mrb[0].mxu0 %v2725
      %v2984 = vpop.f32.mrb[0].mxu0
      %v2985 = vadd.f32 %v2682, %v2984
      %v2986 = vpop.f32.mrb[0].mxu0
      %v2987 = vpop.f32.mrb[0].mxu0
      %v2988 = vadd.f32 %v2682, %v2987
      %v2989 = vpop.f32.mrb[0].mxu0
      %2990 = vmatprep.mubr.bf16.mxu0 0
      %2991 = vmatmul.mubr.bf16.gmra.mrb[0].mxu0 %v2728
      %v2992 = vpop.f32.mrb[0].mxu0
      %v2993 = vadd.f32 %v2682, %v2992
      %v2994 = vpop.f32.mrb[0].mxu0
      %v2995 = vpop.f32.mrb[0].mxu0
      %v2996 = vadd.f32 %v2682, %v2995
      %v2997 = vpop.f32.mrb[0].mxu0
      %2998 = vmatprep.mubr.bf16.mxu0 0
      %2999 = vmatmul.mubr.bf16.gmra.mrb[0].mxu0 %v2731
      %v3000 = vpop.f32.mrb[0].mxu0
      %v3001 = vadd.f32 %v2682, %v3000
      %v3002 = vpop.f32.mrb[0].mxu0
      %v3003 = vpop.f32.mrb[0].mxu0
      %v3004 = vadd.f32 %v2682, %v3003
      %v3005 = vpop.f32.mrb[0].mxu0
      %3006 = vmatprep.mubr.bf16.mxu0 0
      %3007 = vmatmul.mubr.bf16.gmra.mrb[0].mxu0 %v2734
      %v3008 = vpop.f32.mrb[0].mxu0
      %v3009 = vadd.f32 %v2682, %v3008
      %v3010 = vpop.f32.mrb[0].mxu0
      %v3011 = vpop.f32.mrb[0].mxu0
      %v3012 = vadd.f32 %v2682, %v3011
      %v3013 = vpop.f32.mrb[0].mxu0
      %3014 = vmatprep.mubr.bf16.mxu0 0
      %3015 = vmatmul.mubr.bf16.gmra.mrb[0].mxu0 %v2737
      %v3016 = vpop.f32.mrb[0].mxu0
      %v3017 = vadd.f32 %v2682, %v3016
      %v3018 = vpop.f32.mrb[0].mxu0
      %v3019 = vpop.f32.mrb[0].mxu0
      %v3020 = vadd.f32 %v2682, %v3019
      %v3021 = vpop.f32.mrb[0].mxu0
      %3022 = vmatprep.mubr.bf16.mxu0 0
      %3023 = vmatmul.mubr.bf16.gmra.mrb[0].mxu0 %v2740
      %v3024 = vpop.f32.mrb[0].mxu0
      %v3025 = vadd.f32 %v2682, %v3024
      %v3026 = vpop.f32.mrb[0].mxu0
      %v3027 = vpop.f32.mrb[0].mxu0
      %v3028 = vadd.f32 %v2682, %v3027
      %v3029 = vpop.f32.mrb[0].mxu0
      %3030 = vmatprep.mubr.bf16.mxu0 0
      %3031 = vmatmul.mubr.bf16.gmra.mrb[0].mxu0 %v2743
      %v3032 = vpop.f32.mrb[0].mxu0
      %v3033 = vadd.f32 %v2682, %v3032
      %v3034 = vpop.f32.mrb[0].mxu0
      %v3035 = vpop.f32.mrb[0].mxu0
      %v3036 = vadd.f32 %v2682, %v3035
      %v3037 = vpop.f32.mrb[0].mxu0
      %3038 = vmatprep.mubr.bf16.mxu0 0
      %3039 = vmatmul.mubr.bf16.gmra.mrb[0].mxu0 %v2746
      %v3040 = vpop.f32.mrb[0].mxu0
      %v3041 = vadd.f32 %v2682, %v3040
      %v3042 = vpop.f32.mrb[0].mxu0
      %v3043 = vpop.f32.mrb[0].mxu0
      %v3044 = vadd.f32 %v2682, %v3043
      %v3045 = vpop.f32.mrb[0].mxu0
      %3046 = vmatprep.mubr.bf16.mxu0 0
      %3047 = vmatmul.mubr.bf16.gmra.mrb[0].mxu0 %v2749
      %v3048 = vpop.f32.mrb[0].mxu0
      %v3049 = vadd.f32 %v2682, %v3048
      %v3050 = vpop.f32.mrb[0].mxu0
      %v3051 = vpop.f32.mrb[0].mxu0
      %v3052 = vadd.f32 %v2682, %v3051
      %v3053 = vpop.f32.mrb[0].mxu0
      %3054 = vmatprep.mubr.bf16.mxu0 0
      %3055 = vmatmul.mubr.bf16.gmra.mrb[0].mxu0 %v2752
      %v3056 = vpop.f32.mrb[0].mxu0
      %v3057 = vadd.f32 %v2682, %v3056
      %v3058 = vpop.f32.mrb[0].mxu0
      %v3059 = vpop.f32.mrb[0].mxu0
      %v3060 = vadd.f32 %v2682, %v3059
      %v3061 = vpop.f32.mrb[0].mxu0
      %3062 = vmatprep.mubr.bf16.mxu0 0
      %3063 = vmatmul.mubr.bf16.gmra.mrb[0].mxu0 %v2755
      %v3064 = vpop.f32.mrb[0].mxu0
      %v3065 = vadd.f32 %v2682, %v3064
      %v3066 = vpop.f32.mrb[0].mxu0
      %v3067 = vpop.f32.mrb[0].mxu0
      %v3068 = vadd.f32 %v2682, %v3067
      %v3069 = vpop.f32.mrb[0].mxu0
      %3070 = vmatprep.mubr.bf16.mxu0 0
      %3071 = vmatmul.mubr.bf16.gmra.mrb[0].mxu0 %v2758
      %v3072 = vpop.f32.mrb[0].mxu0
      %v3073 = vadd.f32 %v2682, %v3072
      %v3074 = vpop.f32.mrb[0].mxu0
      %v3075 = vpop.f32.mrb[0].mxu0
      %v3076 = vadd.f32 %v2682, %v3075
      %v3077 = vpop.f32.mrb[0].mxu0
      %3078 = vmatprep.mubr.bf16.mxu0 0
      %3079 = vmatmul.mubr.bf16.gmra.mrb[0].mxu0 %v2761
      %v3080 = vpop.f32.mrb[0].mxu0
      %v3081 = vadd.f32 %v2682, %v3080
      %v3082 = vpop.f32.mrb[0].mxu0
      %v3083 = vpop.f32.mrb[0].mxu0
      %v3084 = vadd.f32 %v2682, %v3083
      %v3085 = vpop.f32.mrb[0].mxu0
      %3086 = vmatprep.mubr.bf16.mxu0 0
      %3087 = vmatmul.mubr.bf16.gmra.mrb[0].mxu0 %v2764
      %v3088 = vpop.f32.mrb[0].mxu0
      %v3089 = vadd.f32 %v2682, %v3088
      %v3090 = vpop.f32.mrb[0].mxu0
      %v3091 = vpop.f32.mrb[0].mxu0
      %v3092 = vadd.f32 %v2682, %v3091
      %v3093 = vpop.f32.mrb[0].mxu0
      %3094 = vmatprep.mubr.bf16.mxu0 0
      %3095 = vmatmul.mubr.bf16.gmra.mrb[0].mxu0 %v2767
      %v3096 = vpop.f32.mrb[0].mxu0
      %v3097 = vadd.f32 %v2682, %v3096
      %v3098 = vpop.f32.mrb[0].mxu0
      %v3099 = vpop.f32.mrb[0].mxu0
      %v3100 = vadd.f32 %v2682, %v3099
      %v3101 = vpop.f32.mrb[0].mxu0
      %3102 = vmatprep.mubr.bf16.mxu0 0
      %3103 = vmatmul.mubr.bf16.gmra.mrb[0].mxu0 %v2770
      %v3104 = vpop.f32.mrb[0].mxu0
      %v3105 = vadd.f32 %v2682, %v3104
      %v3106 = vpop.f32.mrb[0].mxu0
      %v3107 = vpop.f32.mrb[0].mxu0
      %v3108 = vadd.f32 %v2682, %v3107
      %v3109 = vpop.f32.mrb[0].mxu0
      %3110 = vmatprep.mubr.bf16.mxu0 0
      %3111 = vmatmul.mubr.bf16.gmra.mrb[0].mxu0 %v2773
      %v3112 = vpop.f32.mrb[0].mxu0
      %v3113 = vadd.f32 %v2682, %v3112
      %v3114 = vpop.f32.mrb[0].mxu0
      %v3115 = vpop.f32.mrb[0].mxu0
      %v3116 = vadd.f32 %v2682, %v3115
      %v3117 = vpop.f32.mrb[0].mxu0
      %3118 = vmatprep.mubr.bf16.mxu0 0
      %3119 = vmatmul.mubr.bf16.gmra.mrb[0].mxu0 %v2776
      %v3120 = vpop.f32.mrb[0].mxu0
      %v3121 = vadd.f32 %v2682, %v3120
      %v3122 = vpop.f32.mrb[0].mxu0
      %v3123 = vpop.f32.mrb[0].mxu0
      %v3124 = vadd.f32 %v2682, %v3123
      %v3125 = vpop.f32.mrb[0].mxu0
      %3126 = vmatprep.mubr.bf16.mxu0 0
      %3127 = vmatmul.mubr.bf16.gmra.mrb[0].mxu0 %v2779
      %v3128 = vpop.f32.mrb[0].mxu0
      %v3129 = vadd.f32 %v2682, %v3128
      %v3130 = vpop.f32.mrb[0].mxu0
      %v3131 = vpop.f32.mrb[0].mxu0
      %v3132 = vadd.f32 %v2682, %v3131
      %v3133 = vpop.f32.mrb[0].mxu0
      %3134 = vmatprep.mubr.bf16.mxu0 0
      %3135 = vmatmul.mubr.bf16.gmra.mrb[0].mxu0 %v2782
      %v3136 = vpop.f32.mrb[0].mxu0
      %v3137 = vadd.f32 %v2682, %v3136
      %v3138 = vpop.f32.mrb[0].mxu0
      %v3139 = vpop.f32.mrb[0].mxu0
      %v3140 = vadd.f32 %v2682, %v3139
      %v3141 = vpop.f32.mrb[0].mxu0
      %3142 = vmatprep.mubr.bf16.mxu0 0
      %3143 = vmatmul.mubr.bf16.gmra.mrb[0].mxu0 %v2785
      %v3144 = vpop.f32.mrb[0].mxu0
      %v3145 = vadd.f32 %v2682, %v3144
      %v3146 = vpop.f32.mrb[0].mxu0
      %v3147 = vpop.f32.mrb[0].mxu0
      %v3148 = vadd.f32 %v2682, %v3147
      %v3149 = vpop.f32.mrb[0].mxu0
      %3150 = vmatprep.mubr.bf16.mxu0 0
      %3151 = vmatmul.mubr.bf16.gmra.mrb[0].mxu0 %v2788
      %v3152 = vpop.f32.mrb[0].mxu0
      %v3153 = vadd.f32 %v2682, %v3152
      %v3154 = vpop.f32.mrb[0].mxu0
      %v3155 = vpop.f32.mrb[0].mxu0
      %v3156 = vadd.f32 %v2682, %v3155
      %v3157 = vpop.f32.mrb[0].mxu0
      %3158 = vmatprep.mubr.bf16.mxu0 0
      %3159 = vmatmul.mubr.bf16.gmra.mrb[0].mxu0 %v2791
      %v3160 = vpop.f32.mrb[0].mxu0
      %v3161 = vadd.f32 %v2682, %v3160
      %v3162 = vpop.f32.mrb[0].mxu0
      %v3163 = vpop.f32.mrb[0].mxu0
      %v3164 = vadd.f32 %v2682, %v3163
      %v3165 = vpop.f32.mrb[0].mxu0
      %3166 = vmatprep.mubr.bf16.mxu0 0
      %3167 = vmatmul.mubr.bf16.gmra.mrb[0].mxu0 %v2794
      %v3168 = vpop.f32.mrb[0].mxu0
      %v3169 = vadd.f32 %v2682, %v3168
      %v3170 = vpop.f32.mrb[0].mxu0
      %v3171 = vpop.f32.mrb[0].mxu0
      %v3172 = vadd.f32 %v2682, %v3171
      %v3173 = vpop.f32.mrb[0].mxu0
      %3174 = vmatprep.mubr.bf16.mxu0 0
      %3175 = vmatmul.mubr.bf16.gmra.mrb[0].mxu0 %v2797
      %v3176 = vpop.f32.mrb[0].mxu0
      %v3177 = vadd.f32 %v2682, %v3176
      %v3178 = vpop.f32.mrb[0].mxu0
      %v3179 = vpop.f32.mrb[0].mxu0
      %v3180 = vadd.f32 %v2682, %v3179
      %v3181 = vpop.f32.mrb[0].mxu0
      %3182 = vmatprep.mubr.bf16.mxu0 0
      %3183 = vmatmul.mubr.bf16.gmra.mrb[0].mxu0 %v2800
      %v3184 = vpop.f32.mrb[0].mxu0
      %v3185 = vadd.f32 %v2682, %v3184
      %v3186 = vpop.f32.mrb[0].mxu0
      %v3187 = vpop.f32.mrb[0].mxu0
      %v3188 = vadd.f32 %v2682, %v3187
      %v3189 = vpop.f32.mrb[0].mxu0
      %3190 = vmatprep.mubr.bf16.mxu0 0
      %3191 = vmatmul.mubr.bf16.gmra.mrb[0].mxu0 %v2803
      %v3192 = vpop.f32.mrb[0].mxu0
      %v3193 = vadd.f32 %v2682, %v3192
      %v3194 = vpop.f32.mrb[0].mxu0
      %v3195 = vpop.f32.mrb[0].mxu0
      %v3196 = vadd.f32 %v2682, %v3195
      %v3197 = vpop.f32.mrb[0].mxu0
      %3198 = vmatprep.mubr.bf16.mxu0 0
      %3199 = vmatmul.mubr.bf16.gmra.mrb[0].mxu0 %v2806
      %v3200 = vpop.f32.mrb[0].mxu0
      %v3201 = vadd.f32 %v2682, %v3200
      %v3202 = vpop.f32.mrb[0].mxu0
      %v3203 = vpop.f32.mrb[0].mxu0
      %v3204 = vadd.f32 %v2682, %v3203
      %v3205 = vpop.f32.mrb[0].mxu0
      %3206 = vmatprep.mubr.bf16.mxu0 0
      %3207 = vmatmul.mubr.bf16.gmra.mrb[0].mxu0 %v2809
      %v3208 = vpop.f32.mrb[0].mxu0
      %v3209 = vadd.f32 %v2682, %v3208
      %v3210 = vpop.f32.mrb[0].mxu0
      %v3211 = vpop.f32.mrb[0].mxu0
      %v3212 = vadd.f32 %v2682, %v3211
      %v3213 = vpop.f32.mrb[0].mxu0
      %3214 = vmatprep.mubr.bf16.mxu0 0
      %3215 = vmatmul.mubr.bf16.gmra.mrb[0].mxu0 %v2812
      %v3216 = vpop.f32.mrb[0].mxu0
      %v3217 = vadd.f32 %v2682, %v3216
      %v3218 = vpop.f32.mrb[0].mxu0
      %v3219 = vpop.f32.mrb[0].mxu0
      %v3220 = vadd.f32 %v2682, %v3219
      %v3221 = vpop.f32.mrb[0].mxu0
      %3222 = vmatprep.mubr.bf16.mxu0 0
      %3223 = vmatmul.mubr.bf16.gmra.mrb[0].mxu0 %v2815
      %v3224 = vpop.f32.mrb[0].mxu0
      %v3225 = vadd.f32 %v2682, %v3224
      %v3226 = vpop.f32.mrb[0].mxu0
      %v3227 = vpop.f32.mrb[0].mxu0
      %v3228 = vadd.f32 %v2682, %v3227
      %v3229 = vpop.f32.mrb[0].mxu0
      %3230 = vmatprep.mubr.bf16.mxu0 0
      %3231 = vmatmul.mubr.bf16.gmra.mrb[0].mxu0 %v2818
      %v3232 = vpop.f32.mrb[0].mxu0
      %v3233 = vadd.f32 %v2682, %v3232
      %v3234 = vpop.f32.mrb[0].mxu0
      %v3235 = vpop.f32.mrb[0].mxu0
      %v3236 = vadd.f32 %v2682, %v3235
      %v3237 = vpop.f32.mrb[0].mxu0
      %3238 = vmatprep.mubr.bf16.mxu0 0
      %3239 = vmatmul.mubr.bf16.gmra.mrb[0].mxu0 %v2821
      %v3240 = vpop.f32.mrb[0].mxu0
      %v3241 = vadd.f32 %v2682, %v3240
      %v3242 = vpop.f32.mrb[0].mxu0
      %v3243 = vpop.f32.mrb[0].mxu0
      %v3244 = vadd.f32 %v2682, %v3243
      %v3245 = vpop.f32.mrb[0].mxu0
      %3246 = vmatprep.mubr.bf16.mxu0 0
      %3247 = vmatmul.mubr.bf16.gmra.mrb[0].mxu0 %v2824
      %v3248 = vpop.f32.mrb[0].mxu0
      %v3249 = vadd.f32 %v2682, %v3248
      %v3250 = vpop.f32.mrb[0].mxu0
      %v3251 = vpop.f32.mrb[0].mxu0
      %v3252 = vadd.f32 %v2682, %v3251
      %v3253 = vpop.f32.mrb[0].mxu0
      %3254 = vmatprep.mubr.bf16.mxu0 0
      %3255 = vmatmul.mubr.bf16.gmra.mrb[0].mxu0 %v2827
      %v3256 = vpop.f32.mrb[0].mxu0
      %v3257 = vadd.f32 %v2682, %v3256
      %v3258 = vpop.f32.mrb[0].mxu0
      %v3259 = vpop.f32.mrb[0].mxu0
      %v3260 = vadd.f32 %v2682, %v3259
      %v3261 = vpop.f32.mrb[0].mxu0
      %3262 = vmatprep.mubr.bf16.mxu0 0
      %3263 = vmatmul.mubr.bf16.gmra.mrb[0].mxu0 %v2830
      %v3264 = vpop.f32.mrb[0].mxu0
      %v3265 = vadd.f32 %v2682, %v3264
      %v3266 = vpop.f32.mrb[0].mxu0
      %v3267 = vpop.f32.mrb[0].mxu0
      %v3268 = vadd.f32 %v2682, %v3267
      %v3269 = vpop.f32.mrb[0].mxu0
      %3270 = vmatprep.mubr.bf16.mxu0 0
      %3271 = vmatmul.mubr.bf16.gmra.mrb[0].mxu0 %v2833
      %v3272 = vpop.f32.mrb[0].mxu0
      %v3273 = vadd.f32 %v2682, %v3272
      %v3274 = vpop.f32.mrb[0].mxu0
      %v3275 = vpop.f32.mrb[0].mxu0
      %v3276 = vadd.f32 %v2682, %v3275
      %v3277 = vpop.f32.mrb[0].mxu0
      %3278 = vmatprep.mubr.bf16.mxu0 0
      %3279 = vmatmul.mubr.bf16.gmra.mrb[0].mxu0 %v2836
      %v3280 = vpop.f32.mrb[0].mxu0
      %v3281 = vadd.f32 %v2682, %v3280
      %v3282 = vpop.f32.mrb[0].mxu0
      %v3283 = vpop.f32.mrb[0].mxu0
      %v3284 = vadd.f32 %v2682, %v3283
      %v3285 = vpop.f32.mrb[0].mxu0
      %3286 = vmatprep.mubr.bf16.mxu0 0
      %3287 = vmatmul.mubr.bf16.gmra.mrb[0].mxu0 %v2839
      %v3288 = vpop.f32.mrb[0].mxu0
      %v3289 = vadd.f32 %v2682, %v3288
      %v3290 = vpop.f32.mrb[0].mxu0
      %v3291 = vpop.f32.mrb[0].mxu0
      %v3292 = vadd.f32 %v2682, %v3291
      %v3293 = vpop.f32.mrb[0].mxu0
      %3294 = vmatprep.mubr.bf16.mxu0 0
      %3295 = vmatmul.mubr.bf16.gmra.mrb[0].mxu0 %v2842
      %v3296 = vpop.f32.mrb[0].mxu0
      %v3297 = vadd.f32 %v2682, %v3296
      %v3298 = vpop.f32.mrb[0].mxu0
      %v3299 = vpop.f32.mrb[0].mxu0
      %v3300 = vadd.f32 %v2682, %v3299
      %v3301 = vpop.f32.mrb[0].mxu0
      %3302 = vmatprep.mubr.bf16.mxu0 0
      %3303 = vmatmul.mubr.bf16.gmra.mrb[0].mxu0 %v2845
      %v3304 = vpop.f32.mrb[0].mxu0
      %v3305 = vadd.f32 %v2682, %v3304
      %v3306 = vpop.f32.mrb[0].mxu0
      %v3307 = vpop.f32.mrb[0].mxu0
      %v3308 = vadd.f32 %v2682, %v3307
      %v3309 = vpop.f32.mrb[0].mxu0
      %3310 = vmatprep.mubr.bf16.mxu0 0
      %3311 = vmatmul.mubr.bf16.gmra.mrb[0].mxu0 %v2848
      %v3312 = vpop.f32.mrb[0].mxu0
      %v3313 = vadd.f32 %v2682, %v3312
      %v3314 = vpop.f32.mrb[0].mxu0
      %v3315 = vpop.f32.mrb[0].mxu0
      %v3316 = vadd.f32 %v2682, %v3315
      %v3317 = vpop.f32.mrb[0].mxu0
      %3318 = vmatprep.mubr.bf16.mxu0 0
      %3319 = vmatmul.mubr.bf16.gmra.mrb[0].mxu0 %v2851
      %v3320 = vpop.f32.mrb[0].mxu0
      %v3321 = vadd.f32 %v2682, %v3320
      %v3322 = vpop.f32.mrb[0].mxu0
      %v3323 = vpop.f32.mrb[0].mxu0
      %v3324 = vadd.f32 %v2682, %v3323
      %v3325 = vpop.f32.mrb[0].mxu0
      %3326 = vmatprep.mubr.bf16.mxu0 0
      %3327 = vmatmul.mubr.bf16.gmra.mrb[0].mxu0 %v2854
      %v3328 = vpop.f32.mrb[0].mxu0
      %v3329 = vadd.f32 %v2682, %v3328
      %v3330 = vpop.f32.mrb[0].mxu0
      %v3331 = vpop.f32.mrb[0].mxu0
      %v3332 = vadd.f32 %v2682, %v3331
      %v3333 = vpop.f32.mrb[0].mxu0
      %3334 = vmatprep.mubr.bf16.mxu0 0
      %3335 = vmatmul.mubr.bf16.gmra.mrb[0].mxu0 %v2857
      %v3336 = vpop.f32.mrb[0].mxu0
      %v3337 = vadd.f32 %v2682, %v3336
      %v3338 = vpop.f32.mrb[0].mxu0
      %v3339 = vpop.f32.mrb[0].mxu0
      %v3340 = vadd.f32 %v2682, %v3339
      %v3341 = vpop.f32.mrb[0].mxu0
      %3342 = vmatprep.mubr.bf16.mxu0 0
      %3343 = vmatmul.mubr.bf16.gmra.mrb[0].mxu0 %v2860
      %v3344 = vpop.f32.mrb[0].mxu0
      %v3345 = vadd.f32 %v2682, %v3344
      %v3346 = vpop.f32.mrb[0].mxu0
      %v3347 = vpop.f32.mrb[0].mxu0
      %v3348 = vadd.f32 %v2682, %v3347
      %v3349 = vpop.f32.mrb[0].mxu0
      %3350 = vmatprep.mubr.bf16.mxu0 0
      %3351 = vmatmul.mubr.bf16.gmra.mrb[0].mxu0 %v2863
      %v3352 = vpop.f32.mrb[0].mxu0
      %v3353 = vadd.f32 %v2682, %v3352
      %v3354 = vpop.f32.mrb[0].mxu0
      %v3355 = vpop.f32.mrb[0].mxu0
      %v3356 = vadd.f32 %v2682, %v3355
      %v3357 = vpop.f32.mrb[0].mxu0
      %3358 = vmatprep.mubr.bf16.mxu0 0
      %3359 = vmatmul.mubr.bf16.gmra.mrb[0].mxu0 %v2866
      %v3360 = vpop.f32.mrb[0].mxu0
      %v3361 = vadd.f32 %v2682, %v3360
      %v3362 = vpop.f32.mrb[0].mxu0
      %v3363 = vpop.f32.mrb[0].mxu0
      %v3364 = vadd.f32 %v2682, %v3363
      %v3365 = vpop.f32.mrb[0].mxu0
      %3366 = vmatprep.mubr.bf16.mxu0 0
      %3367 = vmatmul.mubr.bf16.gmra.mrb[0].mxu0 %v2869
      %v3368 = vpop.f32.mrb[0].mxu0
      %v3369 = vadd.f32 %v2682, %v3368
      %v3370 = vpop.f32.mrb[0].mxu0
      %v3371 = vpop.f32.mrb[0].mxu0
      %v3372 = vadd.f32 %v2682, %v3371
      %v3373 = vpop.f32.mrb[0].mxu0
      %3374 = vmatprep.mubr.bf16.mxu0 0
      %3375 = vmatmul.mubr.bf16.gmra.mrb[0].mxu0 %v2872
      %v3376 = vpop.f32.mrb[0].mxu0
      %v3377 = vadd.f32 %v2682, %v3376
      %v3378 = vpop.f32.mrb[0].mxu0
      %v3379 = vpop.f32.mrb[0].mxu0
      %v3380 = vadd.f32 %v2682, %v3379
      %v3381 = vpop.f32.mrb[0].mxu0
      %3382 = vmatprep.mubr.bf16.mxu0 0
      %3383 = vmatmul.mubr.bf16.gmra.mrb[0].mxu0 %v2875
      %v3384 = vpop.f32.mrb[0].mxu0
      %v3385 = vadd.f32 %v2682, %v3384
      %v3386 = vpop.f32.mrb[0].mxu0
      %v3387 = vpop.f32.mrb[0].mxu0
      %v3388 = vadd.f32 %v2682, %v3387
      %v3389 = vpop.f32.mrb[0].mxu0
      %3390 = vmatprep.mubr.bf16.mxu0 0
      %3391 = vmatmul.mubr.bf16.gmra.mrb[0].mxu0 %v2878
      %v3392 = vpop.f32.mrb[0].mxu0
      %v3393 = vadd.f32 %v2682, %v3392
      %v3394 = vpop.f32.mrb[0].mxu0
      %v3395 = vpop.f32.mrb[0].mxu0
      %v3396 = vadd.f32 %v2682, %v3395
      %v3397 = vpop.f32.mrb[0].mxu0
      %3398 = vmatprep.mubr.bf16.mxu0 0
      %3399 = vmatmul.mubr.bf16.gmra.mrb[0].mxu0 %v2881
      %v3400 = vpop.f32.mrb[0].mxu0
      %v3401 = vadd.f32 %v2682, %v3400
      %v3402 = vpop.f32.mrb[0].mxu0
      %v3403 = vpop.f32.mrb[0].mxu0
      %v3404 = vadd.f32 %v2682, %v3403
      %v3405 = vpop.f32.mrb[0].mxu0
      %3406 = vmatprep.mubr.bf16.mxu0 0
      %3407 = vmatmul.mubr.bf16.gmra.mrb[0].mxu0 %v2884
      %v3408 = vpop.f32.mrb[0].mxu0
      %v3409 = vadd.f32 %v2682, %v3408
      %v3410 = vpop.f32.mrb[0].mxu0
      %v3411 = vpop.f32.mrb[0].mxu0
      %v3412 = vadd.f32 %v2682, %v3411
      %v3413 = vpop.f32.mrb[0].mxu0
      %3414 = vmatprep.mubr.bf16.mxu0 0
      %3415 = vmatmul.mubr.bf16.gmra.mrb[0].mxu0 %v2887
      %v3416 = vpop.f32.mrb[0].mxu0
      %v3417 = vadd.f32 %v2682, %v3416
      %v3418 = vpop.f32.mrb[0].mxu0
      %v3419 = vpop.f32.mrb[0].mxu0
      %v3420 = vadd.f32 %v2682, %v3419
      %v3421 = vpop.f32.mrb[0].mxu0
      %3422 = vmatprep.mubr.bf16.mxu0 0
      %3423 = vmatmul.mubr.bf16.gmra.mrb[0].mxu0 %v2890
      %v3424 = vpop.f32.mrb[0].mxu0
      %v3425 = vadd.f32 %v2682, %v3424
      %v3426 = vpop.f32.mrb[0].mxu0
      %v3427 = vpop.f32.mrb[0].mxu0
      %v3428 = vadd.f32 %v2682, %v3427
      %v3429 = vpop.f32.mrb[0].mxu0
      %3430 = vmatprep.mubr.bf16.mxu0 0
      %3431 = vmatmul.mubr.bf16.gmra.mrb[0].mxu0 %v2893
      %v3432 = vpop.f32.mrb[0].mxu0
      %v3433 = vadd.f32 %v2682, %v3432
      %v3434 = vpop.f32.mrb[0].mxu0
      %v3435 = vpop.f32.mrb[0].mxu0
      %v3436 = vadd.f32 %v2682, %v3435
      %v3437 = vpop.f32.mrb[0].mxu0
      %3438 = vmatprep.mubr.bf16.mxu0 0
      %3439 = vmatmul.mubr.bf16.gmra.mrb[0].mxu0 %v2896
      %v3440 = vpop.f32.mrb[0].mxu0
      %v3441 = vadd.f32 %v2682, %v3440
      %v3442 = vpop.f32.mrb[0].mxu0
      %v3443 = vpop.f32.mrb[0].mxu0
      %v3444 = vadd.f32 %v2682, %v3443
      %v3445 = vpop.f32.mrb[0].mxu0
      %3446 = vdwg.mxu0
      %v3447 = vmul.f32 %v2937, 0.5
      %v3448 = vmul.f32 %v2940, 0.5
      %v3449 = vmul.f32 %v2945, 0.5
      %v3450 = vmul.f32 %v2948, 0.5
      %v3451 = vmul.f32 %v2953, 0.5
      %v3452 = vmul.f32 %v2956, 0.5
      %v3453 = vmul.f32 %v2961, 0.5
      %v3454 = vmul.f32 %v2964, 0.5
      %v3455 = vmul.f32 %v2969, 0.5
      %v3456 = vmul.f32 %v2972, 0.5
      %v3457 = vmul.f32 %v2977, 0.5
      %v3458 = vmul.f32 %v2980, 0.5
      %v3459 = vmul.f32 %v2985, 0.5
      %v3460 = vmul.f32 %v2988, 0.5
      %v3461 = vmul.f32 %v2993, 0.5
      %v3462 = vmul.f32 %v2996, 0.5
      %v3463 = vmul.f32 %v3001, 0.5
      %v3464 = vmul.f32 %v3004, 0.5
      %v3465 = vmul.f32 %v3009, 0.5
      %v3466 = vmul.f32 %v3012, 0.5
      %v3467 = vmul.f32 %v3017, 0.5
      %v3468 = vmul.f32 %v3020, 0.5
      %v3469 = vmul.f32 %v3025, 0.5
      %v3470 = vmul.f32 %v3028, 0.5
      %v3471 = vmul.f32 %v3033, 0.5
      %v3472 = vmul.f32 %v3036, 0.5
      %v3473 = vmul.f32 %v3041, 0.5
      %v3474 = vmul.f32 %v3044, 0.5
      %v3475 = vmul.f32 %v3049, 0.5
      %v3476 = vmul.f32 %v3052, 0.5
      %v3477 = vmul.f32 %v3057, 0.5
      %v3478 = vmul.f32 %v3060, 0.5
      %v3479 = vmul.f32 %v3065, 0.5
      %v3480 = vmul.f32 %v3068, 0.5
      %v3481 = vmul.f32 %v3073, 0.5
      %v3482 = vmul.f32 %v3076, 0.5
      %v3483 = vmul.f32 %v3081, 0.5
      %v3484 = vmul.f32 %v3084, 0.5
      %v3485 = vmul.f32 %v3089, 0.5
      %v3486 = vmul.f32 %v3092, 0.5
      %v3487 = vmul.f32 %v3097, 0.5
      %v3488 = vmul.f32 %v3100, 0.5
      %v3489 = vmul.f32 %v3105, 0.5
      %v3490 = vmul.f32 %v3108, 0.5
      %v3491 = vmul.f32 %v3113, 0.5
      %v3492 = vmul.f32 %v3116, 0.5
      %v3493 = vmul.f32 %v3121, 0.5
      %v3494 = vmul.f32 %v3124, 0.5
      %v3495 = vmul.f32 %v3129, 0.5
      %v3496 = vmul.f32 %v3132, 0.5
      %v3497 = vmul.f32 %v3137, 0.5
      %v3498 = vmul.f32 %v3140, 0.5
      %v3499 = vmul.f32 %v3145, 0.5
      %v3500 = vmul.f32 %v3148, 0.5
      %v3501 = vmul.f32 %v3153, 0.5
      %v3502 = vmul.f32 %v3156, 0.5
      %v3503 = vmul.f32 %v3161, 0.5
      %v3504 = vmul.f32 %v3164, 0.5
      %v3505 = vmul.f32 %v3169, 0.5
      %v3506 = vmul.f32 %v3172, 0.5
      %v3507 = vmul.f32 %v3177, 0.5
      %v3508 = vmul.f32 %v3180, 0.5
      %v3509 = vmul.f32 %v3185, 0.5
      %v3510 = vmul.f32 %v3188, 0.5
      %v3511 = vmul.f32 %v3193, 0.5
      %v3512 = vmul.f32 %v3196, 0.5
      %v3513 = vmul.f32 %v3201, 0.5
      %v3514 = vmul.f32 %v3204, 0.5
      %v3515 = vmul.f32 %v3209, 0.5
      %v3516 = vmul.f32 %v3212, 0.5
      %v3517 = vmul.f32 %v3217, 0.5
      %v3518 = vmul.f32 %v3220, 0.5
      %v3519 = vmul.f32 %v3225, 0.5
      %v3520 = vmul.f32 %v3228, 0.5
      %v3521 = vmul.f32 %v3233, 0.5
      %v3522 = vmul.f32 %v3236, 0.5
      %v3523 = vmul.f32 %v3241, 0.5
      %v3524 = vmul.f32 %v3244, 0.5
      %v3525 = vmul.f32 %v3249, 0.5
      %v3526 = vmul.f32 %v3252, 0.5
      %v3527 = vmul.f32 %v3257, 0.5
      %v3528 = vmul.f32 %v3260, 0.5
      %v3529 = vmul.f32 %v3265, 0.5
      %v3530 = vmul.f32 %v3268, 0.5
      %v3531 = vmul.f32 %v3273, 0.5
      %v3532 = vmul.f32 %v3276, 0.5
      %v3533 = vmul.f32 %v3281, 0.5
      %v3534 = vmul.f32 %v3284, 0.5
      %v3535 = vmul.f32 %v3289, 0.5
      %v3536 = vmul.f32 %v3292, 0.5
      %v3537 = vmul.f32 %v3297, 0.5
      %v3538 = vmul.f32 %v3300, 0.5
      %v3539 = vmul.f32 %v3305, 0.5
      %v3540 = vmul.f32 %v3308, 0.5
      %v3541 = vmul.f32 %v3313, 0.5
      %v3542 = vmul.f32 %v3316, 0.5
      %v3543 = vmul.f32 %v3321, 0.5
      %v3544 = vmul.f32 %v3324, 0.5
      %v3545 = vmul.f32 %v3329, 0.5
      %v3546 = vmul.f32 %v3332, 0.5
      %v3547 = vmul.f32 %v3337, 0.5
      %v3548 = vmul.f32 %v3340, 0.5
      %v3549 = vmul.f32 %v3345, 0.5
      %v3550 = vmul.f32 %v3348, 0.5
      %v3551 = vmul.f32 %v3353, 0.5
      %v3552 = vmul.f32 %v3356, 0.5
      %v3553 = vmul.f32 %v3361, 0.5
      %v3554 = vmul.f32 %v3364, 0.5
      %v3555 = vmul.f32 %v3369, 0.5
      %v3556 = vmul.f32 %v3372, 0.5
      %v3557 = vmul.f32 %v3377, 0.5
      %v3558 = vmul.f32 %v3380, 0.5
      %v3559 = vmul.f32 %v3385, 0.5
      %v3560 = vmul.f32 %v3388, 0.5
      %v3561 = vmul.f32 %v3393, 0.5
      %v3562 = vmul.f32 %v3396, 0.5
      %v3563 = vmul.f32 %v3401, 0.5
      %v3564 = vmul.f32 %v3404, 0.5
      %v3565 = vmul.f32 %v3409, 0.5
      %v3566 = vmul.f32 %v3412, 0.5
      %v3567 = vmul.f32 %v3417, 0.5
      %v3568 = vmul.f32 %v3420, 0.5
      %v3569 = vmul.f32 %v3425, 0.5
      %v3570 = vmul.f32 %v3428, 0.5
      %v3571 = vmul.f32 %v3433, 0.5
      %v3572 = vmul.f32 %v3436, 0.5
      %v3573 = vmul.f32 %v3441, 0.5
      %v3574 = vmul.f32 %v3444, 0.5
      %v3575 = vtanh.pop %v3447
      %v3576 = vtanh.pop %v3448
      %v3577 = vtanh.pop %v3449
      %v3578 = vtanh.pop %v3450
      %v3579 = vtanh.pop %v3451
      %v3580 = vtanh.pop %v3452
      %v3581 = vtanh.pop %v3453
      %v3582 = vtanh.pop %v3454
      %v3583 = vtanh.pop %v3455
      %v3584 = vtanh.pop %v3456
      %v3585 = vtanh.pop %v3457
      %v3586 = vtanh.pop %v3458
      %v3587 = vtanh.pop %v3459
      %v3588 = vtanh.pop %v3460
      %v3589 = vtanh.pop %v3461
      %v3590 = vtanh.pop %v3462
      %v3591 = vtanh.pop %v3463
      %v3592 = vtanh.pop %v3464
      %v3593 = vtanh.pop %v3465
      %v3594 = vtanh.pop %v3466
      %v3595 = vtanh.pop %v3467
      %v3596 = vtanh.pop %v3468
      %v3597 = vtanh.pop %v3469
      %v3598 = vtanh.pop %v3470
      %v3599 = vtanh.pop %v3471
      %v3600 = vtanh.pop %v3472
      %v3601 = vtanh.pop %v3473
      %v3602 = vtanh.pop %v3474
      %v3603 = vtanh.pop %v3475
      %v3604 = vtanh.pop %v3476
      %v3605 = vtanh.pop %v3477
      %v3606 = vtanh.pop %v3478
      %v3607 = vtanh.pop %v3479
      %v3608 = vtanh.pop %v3480
      %v3609 = vtanh.pop %v3481
      %v3610 = vtanh.pop %v3482
      %v3611 = vtanh.pop %v3483
      %v3612 = vtanh.pop %v3484
      %v3613 = vtanh.pop %v3485
      %v3614 = vtanh.pop %v3486
      %v3615 = vtanh.pop %v3487
      %v3616 = vtanh.pop %v3488
      %v3617 = vtanh.pop %v3489
      %v3618 = vtanh.pop %v3490
      %v3619 = vtanh.pop %v3491
      %v3620 = vtanh.pop %v3492
      %v3621 = vtanh.pop %v3493
      %v3622 = vtanh.pop %v3494
      %v3623 = vtanh.pop %v3495
      %v3624 = vtanh.pop %v3496
      %v3625 = vtanh.pop %v3497
      %v3626 = vtanh.pop %v3498
      %v3627 = vtanh.pop %v3499
      %v3628 = vtanh.pop %v3500
      %v3629 = vtanh.pop %v3501
      %v3630 = vtanh.pop %v3502
      %v3631 = vtanh.pop %v3503
      %v3632 = vtanh.pop %v3504
      %v3633 = vtanh.pop %v3505
      %v3634 = vtanh.pop %v3506
      %v3635 = vtanh.pop %v3507
      %v3636 = vtanh.pop %v3508
      %v3637 = vtanh.pop %v3509
      %v3638 = vtanh.pop %v3510
      %v3639 = vtanh.pop %v3511
      %v3640 = vtanh.pop %v3512
      %v3641 = vtanh.pop %v3513
      %v3642 = vtanh.pop %v3514
      %v3643 = vtanh.pop %v3515
      %v3644 = vtanh.pop %v3516
      %v3645 = vtanh.pop %v3517
      %v3646 = vtanh.pop %v3518
      %v3647 = vtanh.pop %v3519
      %v3648 = vtanh.pop %v3520
      %v3649 = vtanh.pop %v3521
      %v3650 = vtanh.pop %v3522
      %v3651 = vtanh.pop %v3523
      %v3652 = vtanh.pop %v3524
      %v3653 = vtanh.pop %v3525
      %v3654 = vtanh.pop %v3526
      %v3655 = vtanh.pop %v3527
      %v3656 = vtanh.pop %v3528
      %v3657 = vtanh.pop %v3529
      %v3658 = vtanh.pop %v3530
      %v3659 = vtanh.pop %v3531
      %v3660 = vtanh.pop %v3532
      %v3661 = vtanh.pop %v3533
      %v3662 = vtanh.pop %v3534
      %v3663 = vtanh.pop %v3535
      %v3664 = vtanh.pop %v3536
      %v3665 = vtanh.pop %v3537
      %v3666 = vtanh.pop %v3538
      %v3667 = vtanh.pop %v3539
      %v3668 = vtanh.pop %v3540
      %v3669 = vtanh.pop %v3541
      %v3670 = vtanh.pop %v3542
      %v3671 = vtanh.pop %v3543
      %v3672 = vtanh.pop %v3544
      %v3673 = vtanh.pop %v3545
      %v3674 = vtanh.pop %v3546
      %v3675 = vtanh.pop %v3547
      %v3676 = vtanh.pop %v3548
      %v3677 = vtanh.pop %v3549
      %v3678 = vtanh.pop %v3550
      %v3679 = vtanh.pop %v3551
      %v3680 = vtanh.pop %v3552
      %v3681 = vtanh.pop %v3553
      %v3682 = vtanh.pop %v3554
      %v3683 = vtanh.pop %v3555
      %v3684 = vtanh.pop %v3556
      %v3685 = vtanh.pop %v3557
      %v3686 = vtanh.pop %v3558
      %v3687 = vtanh.pop %v3559
      %v3688 = vtanh.pop %v3560
      %v3689 = vtanh.pop %v3561
      %v3690 = vtanh.pop %v3562
      %v3691 = vtanh.pop %v3563
      %v3692 = vtanh.pop %v3564
      %v3693 = vtanh.pop %v3565
      %v3694 = vtanh.pop %v3566
      %v3695 = vtanh.pop %v3567
      %v3696 = vtanh.pop %v3568
      %v3697 = vtanh.pop %v3569
      %v3698 = vtanh.pop %v3570
      %v3699 = vtanh.pop %v3571
      %v3700 = vtanh.pop %v3572
      %v3701 = vtanh.pop %v3573
      %v3702 = vtanh.pop %v3574
      %v3703 = vadd.f32 %v3575, 1.0
      %v3704 = vadd.f32 %v3576, 1.0
      %v3705 = vadd.f32 %v3577, 1.0
      %v3706 = vadd.f32 %v3578, 1.0
      %v3707 = vadd.f32 %v3579, 1.0
      %v3708 = vadd.f32 %v3580, 1.0
      %v3709 = vadd.f32 %v3581, 1.0
      %v3710 = vadd.f32 %v3582, 1.0
      %v3711 = vadd.f32 %v3583, 1.0
      %v3712 = vadd.f32 %v3584, 1.0
      %v3713 = vadd.f32 %v3585, 1.0
      %v3714 = vadd.f32 %v3586, 1.0
      %v3715 = vadd.f32 %v3587, 1.0
      %v3716 = vadd.f32 %v3588, 1.0
      %v3717 = vadd.f32 %v3589, 1.0
      %v3718 = vadd.f32 %v3590, 1.0
      %v3719 = vadd.f32 %v3591, 1.0
      %v3720 = vadd.f32 %v3592, 1.0
      %v3721 = vadd.f32 %v3593, 1.0
      %v3722 = vadd.f32 %v3594, 1.0
      %v3723 = vadd.f32 %v3595, 1.0
      %v3724 = vadd.f32 %v3596, 1.0
      %v3725 = vadd.f32 %v3597, 1.0
      %v3726 = vadd.f32 %v3598, 1.0
      %v3727 = vadd.f32 %v3599, 1.0
      %v3728 = vadd.f32 %v3600, 1.0
      %v3729 = vadd.f32 %v3601, 1.0
      %v3730 = vadd.f32 %v3602, 1.0
      %v3731 = vadd.f32 %v3603, 1.0
      %v3732 = vadd.f32 %v3604, 1.0
      %v3733 = vadd.f32 %v3605, 1.0
      %v3734 = vadd.f32 %v3606, 1.0
      %v3735 = vadd.f32 %v3607, 1.0
      %v3736 = vadd.f32 %v3608, 1.0
      %v3737 = vadd.f32 %v3609, 1.0
      %v3738 = vadd.f32 %v3610, 1.0
      %v3739 = vadd.f32 %v3611, 1.0
      %v3740 = vadd.f32 %v3612, 1.0
      %v3741 = vadd.f32 %v3613, 1.0
      %v3742 = vadd.f32 %v3614, 1.0
      %v3743 = vadd.f32 %v3615, 1.0
      %v3744 = vadd.f32 %v3616, 1.0
      %v3745 = vadd.f32 %v3617, 1.0
      %v3746 = vadd.f32 %v3618, 1.0
      %v3747 = vadd.f32 %v3619, 1.0
      %v3748 = vadd.f32 %v3620, 1.0
      %v3749 = vadd.f32 %v3621, 1.0
      %v3750 = vadd.f32 %v3622, 1.0
      %v3751 = vadd.f32 %v3623, 1.0
      %v3752 = vadd.f32 %v3624, 1.0
      %v3753 = vadd.f32 %v3625, 1.0
      %v3754 = vadd.f32 %v3626, 1.0
      %v3755 = vadd.f32 %v3627, 1.0
      %v3756 = vadd.f32 %v3628, 1.0
      %v3757 = vadd.f32 %v3629, 1.0
      %v3758 = vadd.f32 %v3630, 1.0
      %v3759 = vadd.f32 %v3631, 1.0
      %v3760 = vadd.f32 %v3632, 1.0
      %v3761 = vadd.f32 %v3633, 1.0
      %v3762 = vadd.f32 %v3634, 1.0
      %v3763 = vadd.f32 %v3635, 1.0
      %v3764 = vadd.f32 %v3636, 1.0
      %v3765 = vadd.f32 %v3637, 1.0
      %v3766 = vadd.f32 %v3638, 1.0
      %v3767 = vadd.f32 %v3639, 1.0
      %v3768 = vadd.f32 %v3640, 1.0
      %v3769 = vadd.f32 %v3641, 1.0
      %v3770 = vadd.f32 %v3642, 1.0
      %v3771 = vadd.f32 %v3643, 1.0
      %v3772 = vadd.f32 %v3644, 1.0
      %v3773 = vadd.f32 %v3645, 1.0
      %v3774 = vadd.f32 %v3646, 1.0
      %v3775 = vadd.f32 %v3647, 1.0
      %v3776 = vadd.f32 %v3648, 1.0
      %v3777 = vadd.f32 %v3649, 1.0
      %v3778 = vadd.f32 %v3650, 1.0
      %v3779 = vadd.f32 %v3651, 1.0
      %v3780 = vadd.f32 %v3652, 1.0
      %v3781 = vadd.f32 %v3653, 1.0
      %v3782 = vadd.f32 %v3654, 1.0
      %v3783 = vadd.f32 %v3655, 1.0
      %v3784 = vadd.f32 %v3656, 1.0
      %v3785 = vadd.f32 %v3657, 1.0
      %v3786 = vadd.f32 %v3658, 1.0
      %v3787 = vadd.f32 %v3659, 1.0
      %v3788 = vadd.f32 %v3660, 1.0
      %v3789 = vadd.f32 %v3661, 1.0
      %v3790 = vadd.f32 %v3662, 1.0
      %v3791 = vadd.f32 %v3663, 1.0
      %v3792 = vadd.f32 %v3664, 1.0
      %v3793 = vadd.f32 %v3665, 1.0
      %v3794 = vadd.f32 %v3666, 1.0
      %v3795 = vadd.f32 %v3667, 1.0
      %v3796 = vadd.f32 %v3668, 1.0
      %v3797 = vadd.f32 %v3669, 1.0
      %v3798 = vadd.f32 %v3670, 1.0
      %v3799 = vadd.f32 %v3671, 1.0
      %v3800 = vadd.f32 %v3672, 1.0
      %v3801 = vadd.f32 %v3673, 1.0
      %v3802 = vadd.f32 %v3674, 1.0
      %v3803 = vadd.f32 %v3675, 1.0
      %v3804 = vadd.f32 %v3676, 1.0
      %v3805 = vadd.f32 %v3677, 1.0
      %v3806 = vadd.f32 %v3678, 1.0
      %v3807 = vadd.f32 %v3679, 1.0
      %v3808 = vadd.f32 %v3680, 1.0
      %v3809 = vadd.f32 %v3681, 1.0
      %v3810 = vadd.f32 %v3682, 1.0
      %v3811 = vadd.f32 %v3683, 1.0
      %v3812 = vadd.f32 %v3684, 1.0
      %v3813 = vadd.f32 %v3685, 1.0
      %v3814 = vadd.f32 %v3686, 1.0
      %v3815 = vadd.f32 %v3687, 1.0
      %v3816 = vadd.f32 %v3688, 1.0
      %v3817 = vadd.f32 %v3689, 1.0
      %v3818 = vadd.f32 %v3690, 1.0
      %v3819 = vadd.f32 %v3691, 1.0
      %v3820 = vadd.f32 %v3692, 1.0
      %v3821 = vadd.f32 %v3693, 1.0
      %v3822 = vadd.f32 %v3694, 1.0
      %v3823 = vadd.f32 %v3695, 1.0
      %v3824 = vadd.f32 %v3696, 1.0
      %v3825 = vadd.f32 %v3697, 1.0
      %v3826 = vadd.f32 %v3698, 1.0
      %v3827 = vadd.f32 %v3699, 1.0
      %v3828 = vadd.f32 %v3700, 1.0
      %v3829 = vadd.f32 %v3701, 1.0
      %v3830 = vadd.f32 %v3702, 1.0
      %v3831 = vmul.f32 %v3703, 0.5
      %v3832 = vmul.f32 %v3704, 0.5
      %v3833 = vmul.f32 %v3705, 0.5
      %v3834 = vmul.f32 %v3706, 0.5
      %v3835 = vmul.f32 %v3707, 0.5
      %v3836 = vmul.f32 %v3708, 0.5
      %v3837 = vmul.f32 %v3709, 0.5
      %v3838 = vmul.f32 %v3710, 0.5
      %v3839 = vmul.f32 %v3711, 0.5
      %v3840 = vmul.f32 %v3712, 0.5
      %v3841 = vmul.f32 %v3713, 0.5
      %v3842 = vmul.f32 %v3714, 0.5
      %v3843 = vmul.f32 %v3715, 0.5
      %v3844 = vmul.f32 %v3716, 0.5
      %v3845 = vmul.f32 %v3717, 0.5
      %v3846 = vmul.f32 %v3718, 0.5
      %v3847 = vmul.f32 %v3719, 0.5
      %v3848 = vmul.f32 %v3720, 0.5
      %v3849 = vmul.f32 %v3721, 0.5
      %v3850 = vmul.f32 %v3722, 0.5
      %v3851 = vmul.f32 %v3723, 0.5
      %v3852 = vmul.f32 %v3724, 0.5
      %v3853 = vmul.f32 %v3725, 0.5
      %v3854 = vmul.f32 %v3726, 0.5
      %v3855 = vmul.f32 %v3727, 0.5
      %v3856 = vmul.f32 %v3728, 0.5
      %v3857 = vmul.f32 %v3729, 0.5
      %v3858 = vmul.f32 %v3730, 0.5
      %v3859 = vmul.f32 %v3731, 0.5
      %v3860 = vmul.f32 %v3732, 0.5
      %v3861 = vmul.f32 %v3733, 0.5
      %v3862 = vmul.f32 %v3734, 0.5
      %v3863 = vmul.f32 %v3735, 0.5
      %v3864 = vmul.f32 %v3736, 0.5
      %v3865 = vmul.f32 %v3737, 0.5
      %v3866 = vmul.f32 %v3738, 0.5
      %v3867 = vmul.f32 %v3739, 0.5
      %v3868 = vmul.f32 %v3740, 0.5
      %v3869 = vmul.f32 %v3741, 0.5
      %v3870 = vmul.f32 %v3742, 0.5
      %v3871 = vmul.f32 %v3743, 0.5
      %v3872 = vmul.f32 %v3744, 0.5
      %v3873 = vmul.f32 %v3745, 0.5
      %v3874 = vmul.f32 %v3746, 0.5
      %v3875 = vmul.f32 %v3747, 0.5
      %v3876 = vmul.f32 %v3748, 0.5
      %v3877 = vmul.f32 %v3749, 0.5
      %v3878 = vmul.f32 %v3750, 0.5
      %v3879 = vmul.f32 %v3751, 0.5
      %v3880 = vmul.f32 %v3752, 0.5
      %v3881 = vmul.f32 %v3753, 0.5
      %v3882 = vmul.f32 %v3754, 0.5
      %v3883 = vmul.f32 %v3755, 0.5
      %v3884 = vmul.f32 %v3756, 0.5
      %v3885 = vmul.f32 %v3757, 0.5
      %v3886 = vmul.f32 %v3758, 0.5
      %v3887 = vmul.f32 %v3759, 0.5
      %v3888 = vmul.f32 %v3760, 0.5
      %v3889 = vmul.f32 %v3761, 0.5
      %v3890 = vmul.f32 %v3762, 0.5
      %v3891 = vmul.f32 %v3763, 0.5
      %v3892 = vmul.f32 %v3764, 0.5
      %v3893 = vmul.f32 %v3765, 0.5
      %v3894 = vmul.f32 %v3766, 0.5
      %v3895 = vmul.f32 %v3767, 0.5
      %v3896 = vmul.f32 %v3768, 0.5
      %v3897 = vmul.f32 %v3769, 0.5
      %v3898 = vmul.f32 %v3770, 0.5
      %v3899 = vmul.f32 %v3771, 0.5
      %v3900 = vmul.f32 %v3772, 0.5
      %v3901 = vmul.f32 %v3773, 0.5
      %v3902 = vmul.f32 %v3774, 0.5
      %v3903 = vmul.f32 %v3775, 0.5
      %v3904 = vmul.f32 %v3776, 0.5
      %v3905 = vmul.f32 %v3777, 0.5
      %v3906 = vmul.f32 %v3778, 0.5
      %v3907 = vmul.f32 %v3779, 0.5
      %v3908 = vmul.f32 %v3780, 0.5
      %v3909 = vmul.f32 %v3781, 0.5
      %v3910 = vmul.f32 %v3782, 0.5
      %v3911 = vmul.f32 %v3783, 0.5
      %v3912 = vmul.f32 %v3784, 0.5
      %v3913 = vmul.f32 %v3785, 0.5
      %v3914 = vmul.f32 %v3786, 0.5
      %v3915 = vmul.f32 %v3787, 0.5
      %v3916 = vmul.f32 %v3788, 0.5
      %v3917 = vmul.f32 %v3789, 0.5
      %v3918 = vmul.f32 %v3790, 0.5
      %v3919 = vmul.f32 %v3791, 0.5
      %v3920 = vmul.f32 %v3792, 0.5
      %v3921 = vmul.f32 %v3793, 0.5
      %v3922 = vmul.f32 %v3794, 0.5
      %v3923 = vmul.f32 %v3795, 0.5
      %v3924 = vmul.f32 %v3796, 0.5
      %v3925 = vmul.f32 %v3797, 0.5
      %v3926 = vmul.f32 %v3798, 0.5
      %v3927 = vmul.f32 %v3799, 0.5
      %v3928 = vmul.f32 %v3800, 0.5
      %v3929 = vmul.f32 %v3801, 0.5
      %v3930 = vmul.f32 %v3802, 0.5
      %v3931 = vmul.f32 %v3803, 0.5
      %v3932 = vmul.f32 %v3804, 0.5
      %v3933 = vmul.f32 %v3805, 0.5
      %v3934 = vmul.f32 %v3806, 0.5
      %v3935 = vmul.f32 %v3807, 0.5
      %v3936 = vmul.f32 %v3808, 0.5
      %v3937 = vmul.f32 %v3809, 0.5
      %v3938 = vmul.f32 %v3810, 0.5
      %v3939 = vmul.f32 %v3811, 0.5
      %v3940 = vmul.f32 %v3812, 0.5
      %v3941 = vmul.f32 %v3813, 0.5
      %v3942 = vmul.f32 %v3814, 0.5
      %v3943 = vmul.f32 %v3815, 0.5
      %v3944 = vmul.f32 %v3816, 0.5
      %v3945 = vmul.f32 %v3817, 0.5
      %v3946 = vmul.f32 %v3818, 0.5
      %v3947 = vmul.f32 %v3819, 0.5
      %v3948 = vmul.f32 %v3820, 0.5
      %v3949 = vmul.f32 %v3821, 0.5
      %v3950 = vmul.f32 %v3822, 0.5
      %v3951 = vmul.f32 %v3823, 0.5
      %v3952 = vmul.f32 %v3824, 0.5
      %v3953 = vmul.f32 %v3825, 0.5
      %v3954 = vmul.f32 %v3826, 0.5
      %v3955 = vmul.f32 %v3827, 0.5
      %v3956 = vmul.f32 %v3828, 0.5
      %v3957 = vmul.f32 %v3829, 0.5
      %v3958 = vmul.f32 %v3830, 0.5
      %v3959 = vpack.c.bf16 %v3832, %v3831
      %v3960 = vpack.c.bf16 %v3834, %v3833
      %v3961 = vpack.c.bf16 %v3836, %v3835
      %v3962 = vpack.c.bf16 %v3838, %v3837
      %v3963 = vpack.c.bf16 %v3840, %v3839
      %v3964 = vpack.c.bf16 %v3842, %v3841
      %v3965 = vpack.c.bf16 %v3844, %v3843
      %v3966 = vpack.c.bf16 %v3846, %v3845
      %v3967 = vpack.c.bf16 %v3848, %v3847
      %v3968 = vpack.c.bf16 %v3850, %v3849
      %v3969 = vpack.c.bf16 %v3852, %v3851
      %v3970 = vpack.c.bf16 %v3854, %v3853
      %v3971 = vpack.c.bf16 %v3856, %v3855
      %v3972 = vpack.c.bf16 %v3858, %v3857
      %v3973 = vpack.c.bf16 %v3860, %v3859
      %v3974 = vpack.c.bf16 %v3862, %v3861
      %v3975 = vpack.c.bf16 %v3864, %v3863
      %v3976 = vpack.c.bf16 %v3866, %v3865
      %v3977 = vpack.c.bf16 %v3868, %v3867
      %v3978 = vpack.c.bf16 %v3870, %v3869
      %v3979 = vpack.c.bf16 %v3872, %v3871
      %v3980 = vpack.c.bf16 %v3874, %v3873
      %v3981 = vpack.c.bf16 %v3876, %v3875
      %v3982 = vpack.c.bf16 %v3878, %v3877
      %v3983 = vpack.c.bf16 %v3880, %v3879
      %v3984 = vpack.c.bf16 %v3882, %v3881
      %v3985 = vpack.c.bf16 %v3884, %v3883
      %v3986 = vpack.c.bf16 %v3886, %v3885
      %v3987 = vpack.c.bf16 %v3888, %v3887
      %v3988 = vpack.c.bf16 %v3890, %v3889
      %v3989 = vpack.c.bf16 %v3892, %v3891
      %v3990 = vpack.c.bf16 %v3894, %v3893
      %v3991 = vpack.c.bf16 %v3896, %v3895
      %v3992 = vpack.c.bf16 %v3898, %v3897
      %v3993 = vpack.c.bf16 %v3900, %v3899
      %v3994 = vpack.c.bf16 %v3902, %v3901
      %v3995 = vpack.c.bf16 %v3904, %v3903
      %v3996 = vpack.c.bf16 %v3906, %v3905
      %v3997 = vpack.c.bf16 %v3908, %v3907
      %v3998 = vpack.c.bf16 %v3910, %v3909
      %v3999 = vpack.c.bf16 %v3912, %v3911
      %v4000 = vpack.c.bf16 %v3914, %v3913
      %v4001 = vpack.c.bf16 %v3916, %v3915
      %v4002 = vpack.c.bf16 %v3918, %v3917
      %v4003 = vpack.c.bf16 %v3920, %v3919
      %v4004 = vpack.c.bf16 %v3922, %v3921
      %v4005 = vpack.c.bf16 %v3924, %v3923
      %v4006 = vpack.c.bf16 %v3926, %v3925
      %v4007 = vpack.c.bf16 %v3928, %v3927
      %v4008 = vpack.c.bf16 %v3930, %v3929
      %v4009 = vpack.c.bf16 %v3932, %v3931
      %v4010 = vpack.c.bf16 %v3934, %v3933
      %v4011 = vpack.c.bf16 %v3936, %v3935
      %v4012 = vpack.c.bf16 %v3938, %v3937
      %v4013 = vpack.c.bf16 %v3940, %v3939
      %v4014 = vpack.c.bf16 %v3942, %v3941
      %v4015 = vpack.c.bf16 %v3944, %v3943
      %v4016 = vpack.c.bf16 %v3946, %v3945
      %v4017 = vpack.c.bf16 %v3948, %v3947
      %v4018 = vpack.c.bf16 %v3950, %v3949
      %v4019 = vpack.c.bf16 %v3952, %v3951
      %v4020 = vpack.c.bf16 %v3954, %v3953
      %v4021 = vpack.c.bf16 %v3956, %v3955
      %v4022 = vpack.c.bf16 %v3958, %v3957
      %s4023 = scalar_lea.vmem %s3, 28
      %v4024 = vld [vmem:[%s4023] sm:$0xf]
      %v4025 = vld [vmem:[%s4023 + $0x4] sm:$0xf]
      %v4026 = vld [vmem:[%s4023 + $0x8] sm:$0xf]
      %v4027 = vld [vmem:[%s4023 + $0xc] sm:$0xf]
      %v4028 = vld [vmem:[%s4023 + $0x10] sm:$0xf]
      %v4029 = vld [vmem:[%s4023 + $0x14] sm:$0xf]
      %v4030 = vld [vmem:[%s4023 + $0x18] sm:$0x1]
      %s4031 = scalar_lea.vmem %s4, 1
      %v4032 = vld [vmem:[%s4031] sm:$0x1]
      %v4034 = vlaneseq
      %v4035 = vshrl.u32 %v4034, 7
      %v4036 = vsub.s32 0, %v4035
      %v4037 = vrot.slane %v4032, %v4036
      %v4046 = vunpack.c.l.b16 %v4024
      %v4047 = vunpack.c.l.b16 %v4025
      %v4048 = vunpack.c.l.b16 %v4026
      %v4049 = vunpack.c.l.b16 %v4027
      %v4050 = vunpack.c.l.b16 %v4028
      %v4051 = vunpack.c.l.b16 %v4029
      %v4052 = vunpack.c.l.b16 %v4030
      %v4053 = vpack.c.b16 %v4047, %v4046
      %v4054 = vpack.c.b16 %v4049, %v4048
      %v4055 = vpack.c.b16 %v4051, %v4050
      %v4056 = vpack.c.b16 %v4052, %v4052
      %v4061 = vsel %vm2705, %v3959, 0
      %v4064 = vsel %vm2705, %v3960, 0
      %v4067 = vsel %vm2705, %v3961, 0
      %v4070 = vsel %vm2705, %v3962, 0
      %v4073 = vsel %vm2705, %v3963, 0
      %v4076 = vsel %vm2705, %v3964, 0
      %v4079 = vsel %vm2705, %v3965, 0
      %v4082 = vsel %vm2705, %v3966, 0
      %v4085 = vsel %vm2705, %v3967, 0
      %v4088 = vsel %vm2705, %v3968, 0
      %v4091 = vsel %vm2705, %v3969, 0
      %v4094 = vsel %vm2705, %v3970, 0
      %v4097 = vsel %vm2705, %v3971, 0
      %v4100 = vsel %vm2705, %v3972, 0
      %v4103 = vsel %vm2705, %v3973, 0
      %v4106 = vsel %vm2705, %v3974, 0
      %v4109 = vsel %vm2705, %v3975, 0
      %v4112 = vsel %vm2705, %v3976, 0
      %v4115 = vsel %vm2705, %v3977, 0
      %v4118 = vsel %vm2705, %v3978, 0
      %v4121 = vsel %vm2705, %v3979, 0
      %v4124 = vsel %vm2705, %v3980, 0
      %v4127 = vsel %vm2705, %v3981, 0
      %v4130 = vsel %vm2705, %v3982, 0
      %v4133 = vsel %vm2705, %v3983, 0
      %v4136 = vsel %vm2705, %v3984, 0
      %v4139 = vsel %vm2705, %v3985, 0
      %v4142 = vsel %vm2705, %v3986, 0
      %v4145 = vsel %vm2705, %v3987, 0
      %v4148 = vsel %vm2705, %v3988, 0
      %v4151 = vsel %vm2705, %v3989, 0
      %v4154 = vsel %vm2705, %v3990, 0
      %v4157 = vsel %vm2705, %v3991, 0
      %v4160 = vsel %vm2705, %v3992, 0
      %v4163 = vsel %vm2705, %v3993, 0
      %v4166 = vsel %vm2705, %v3994, 0
      %v4169 = vsel %vm2705, %v3995, 0
      %v4172 = vsel %vm2705, %v3996, 0
      %v4175 = vsel %vm2705, %v3997, 0
      %v4178 = vsel %vm2705, %v3998, 0
      %v4181 = vsel %vm2705, %v3999, 0
      %v4184 = vsel %vm2705, %v4000, 0
      %v4187 = vsel %vm2705, %v4001, 0
      %v4190 = vsel %vm2705, %v4002, 0
      %v4193 = vsel %vm2705, %v4003, 0
      %v4196 = vsel %vm2705, %v4004, 0
      %v4199 = vsel %vm2705, %v4005, 0
      %v4202 = vsel %vm2705, %v4006, 0
      %v4205 = vsel %vm2705, %v4007, 0
      %v4208 = vsel %vm2705, %v4008, 0
      %v4211 = vsel %vm2705, %v4009, 0
      %v4214 = vsel %vm2705, %v4010, 0
      %v4217 = vsel %vm2705, %v4011, 0
      %v4220 = vsel %vm2705, %v4012, 0
      %v4223 = vsel %vm2705, %v4013, 0
      %v4226 = vsel %vm2705, %v4014, 0
      %v4229 = vsel %vm2705, %v4015, 0
      %v4232 = vsel %vm2705, %v4016, 0
      %v4235 = vsel %vm2705, %v4017, 0
      %v4238 = vsel %vm2705, %v4018, 0
      %v4241 = vsel %vm2705, %v4019, 0
      %v4244 = vsel %vm2705, %v4020, 0
      %v4247 = vsel %vm2705, %v4021, 0
      %v4250 = vsel %vm2705, %v4022, 0
      %v4253 = vsel %vm2898, %v4056, 0
      %4255 = vmatprep.subr.bf16.mxu0 0
      %4256 = vmatpush1.bf16.msra.mxu0 %v4053
      %4257 = vmatprep.subr.bf16.mxu0 0
      %4258 = vmatpush1.bf16.msra.mxu0 %v4054
      %4259 = vmatprep.subr.bf16.mxu0 0
      %4260 = vmatpush1.bf16.msra.mxu0 %v4055
      %4261 = vmatprep.subr.bf16.mxu0 0
      %4262 = vmatpush1.bf16.msra.mxu0 %v4253
      %4263 = vmatprep.subr.bf16.mxu0 0
      %4264 = vmatpush1.bf16.msra.mxu0 0
      %4265 = vmatprep.subr.bf16.mxu0 0
      %4266 = vmatpush1.bf16.msra.mxu0 0
      %4267 = vmatprep.subr.bf16.mxu0 0
      %4268 = vmatpush1.bf16.msra.mxu0 0
      %4269 = vmatprep.subr.bf16.mxu0 0
      %4270 = vmatpush1.bf16.msra.mxu0 0
      %4271 = vmatprep.subr.bf16.mxu0 0
      %4272 = vmatpush1.bf16.msra.mxu0 0
      %4273 = vmatprep.subr.bf16.mxu0 0
      %4274 = vmatpush1.bf16.msra.mxu0 0
      %4275 = vmatprep.subr.bf16.mxu0 0
      %4276 = vmatpush1.bf16.msra.mxu0 0
      %4277 = vmatprep.subr.bf16.mxu0 0
      %4278 = vmatpush1.bf16.msra.mxu0 0
      %4279 = vmatprep.subr.bf16.mxu0 0
      %4280 = vmatpush1.bf16.msra.mxu0 0
      %4281 = vmatprep.subr.bf16.mxu0 0
      %4282 = vmatpush1.bf16.msra.mxu0 0
      %4283 = vmatprep.subr.bf16.mxu0 0
      %4284 = vmatpush1.bf16.msra.mxu0 0
      %4285 = vmatprep.subr.bf16.mxu0 0
      %4286 = vmatpush1.bf16.msra.mxu0 0
      %4287 = vmatprep.mubr.bf16.mxu0 0
      %4288 = vmatmul.mubr.bf16.gmra.mrb[0].mxu0 %v4061
      %v4289 = vpop.f32.mrb[0].mxu0
      %v4290 = vadd.f32 %v4037, %v4289
      %v4291 = vpop.f32.mrb[0].mxu0
      %v4292 = vpop.f32.mrb[0].mxu0
      %v4293 = vadd.f32 %v4037, %v4292
      %v4294 = vpop.f32.mrb[0].mxu0
      %4295 = vmatprep.mubr.bf16.mxu0 0
      %4296 = vmatmul.mubr.bf16.gmra.mrb[0].mxu0 %v4064
      %v4297 = vpop.f32.mrb[0].mxu0
      %v4298 = vadd.f32 %v4037, %v4297
      %v4299 = vpop.f32.mrb[0].mxu0
      %v4300 = vpop.f32.mrb[0].mxu0
      %v4301 = vadd.f32 %v4037, %v4300
      %v4302 = vpop.f32.mrb[0].mxu0
      %4303 = vmatprep.mubr.bf16.mxu0 0
      %4304 = vmatmul.mubr.bf16.gmra.mrb[0].mxu0 %v4067
      %v4305 = vpop.f32.mrb[0].mxu0
      %v4306 = vadd.f32 %v4037, %v4305
      %v4307 = vpop.f32.mrb[0].mxu0
      %v4308 = vpop.f32.mrb[0].mxu0
      %v4309 = vadd.f32 %v4037, %v4308
      %v4310 = vpop.f32.mrb[0].mxu0
      %4311 = vmatprep.mubr.bf16.mxu0 0
      %4312 = vmatmul.mubr.bf16.gmra.mrb[0].mxu0 %v4070
      %v4313 = vpop.f32.mrb[0].mxu0
      %v4314 = vadd.f32 %v4037, %v4313
      %v4315 = vpop.f32.mrb[0].mxu0
      %v4316 = vpop.f32.mrb[0].mxu0
      %v4317 = vadd.f32 %v4037, %v4316
      %v4318 = vpop.f32.mrb[0].mxu0
      %4319 = vmatprep.mubr.bf16.mxu0 0
      %4320 = vmatmul.mubr.bf16.gmra.mrb[0].mxu0 %v4073
      %v4321 = vpop.f32.mrb[0].mxu0
      %v4322 = vadd.f32 %v4037, %v4321
      %v4323 = vpop.f32.mrb[0].mxu0
      %v4324 = vpop.f32.mrb[0].mxu0
      %v4325 = vadd.f32 %v4037, %v4324
      %v4326 = vpop.f32.mrb[0].mxu0
      %4327 = vmatprep.mubr.bf16.mxu0 0
      %4328 = vmatmul.mubr.bf16.gmra.mrb[0].mxu0 %v4076
      %v4329 = vpop.f32.mrb[0].mxu0
      %v4330 = vadd.f32 %v4037, %v4329
      %v4331 = vpop.f32.mrb[0].mxu0
      %v4332 = vpop.f32.mrb[0].mxu0
      %v4333 = vadd.f32 %v4037, %v4332
      %v4334 = vpop.f32.mrb[0].mxu0
      %4335 = vmatprep.mubr.bf16.mxu0 0
      %4336 = vmatmul.mubr.bf16.gmra.mrb[0].mxu0 %v4079
      %v4337 = vpop.f32.mrb[0].mxu0
      %v4338 = vadd.f32 %v4037, %v4337
      %v4339 = vpop.f32.mrb[0].mxu0
      %v4340 = vpop.f32.mrb[0].mxu0
      %v4341 = vadd.f32 %v4037, %v4340
      %v4342 = vpop.f32.mrb[0].mxu0
      %4343 = vmatprep.mubr.bf16.mxu0 0
      %4344 = vmatmul.mubr.bf16.gmra.mrb[0].mxu0 %v4082
      %v4345 = vpop.f32.mrb[0].mxu0
      %v4346 = vadd.f32 %v4037, %v4345
      %v4347 = vpop.f32.mrb[0].mxu0
      %v4348 = vpop.f32.mrb[0].mxu0
      %v4349 = vadd.f32 %v4037, %v4348
      %v4350 = vpop.f32.mrb[0].mxu0
      %4351 = vmatprep.mubr.bf16.mxu0 0
      %4352 = vmatmul.mubr.bf16.gmra.mrb[0].mxu0 %v4085
      %v4353 = vpop.f32.mrb[0].mxu0
      %v4354 = vadd.f32 %v4037, %v4353
      %v4355 = vpop.f32.mrb[0].mxu0
      %v4356 = vpop.f32.mrb[0].mxu0
      %v4357 = vadd.f32 %v4037, %v4356
      %v4358 = vpop.f32.mrb[0].mxu0
      %4359 = vmatprep.mubr.bf16.mxu0 0
      %4360 = vmatmul.mubr.bf16.gmra.mrb[0].mxu0 %v4088
      %v4361 = vpop.f32.mrb[0].mxu0
      %v4362 = vadd.f32 %v4037, %v4361
      %v4363 = vpop.f32.mrb[0].mxu0
      %v4364 = vpop.f32.mrb[0].mxu0
      %v4365 = vadd.f32 %v4037, %v4364
      %v4366 = vpop.f32.mrb[0].mxu0
      %4367 = vmatprep.mubr.bf16.mxu0 0
      %4368 = vmatmul.mubr.bf16.gmra.mrb[0].mxu0 %v4091
      %v4369 = vpop.f32.mrb[0].mxu0
      %v4370 = vadd.f32 %v4037, %v4369
      %v4371 = vpop.f32.mrb[0].mxu0
      %v4372 = vpop.f32.mrb[0].mxu0
      %v4373 = vadd.f32 %v4037, %v4372
      %v4374 = vpop.f32.mrb[0].mxu0
      %4375 = vmatprep.mubr.bf16.mxu0 0
      %4376 = vmatmul.mubr.bf16.gmra.mrb[0].mxu0 %v4094
      %v4377 = vpop.f32.mrb[0].mxu0
      %v4378 = vadd.f32 %v4037, %v4377
      %v4379 = vpop.f32.mrb[0].mxu0
      %v4380 = vpop.f32.mrb[0].mxu0
      %v4381 = vadd.f32 %v4037, %v4380
      %v4382 = vpop.f32.mrb[0].mxu0
      %4383 = vmatprep.mubr.bf16.mxu0 0
      %4384 = vmatmul.mubr.bf16.gmra.mrb[0].mxu0 %v4097
      %v4385 = vpop.f32.mrb[0].mxu0
      %v4386 = vadd.f32 %v4037, %v4385
      %v4387 = vpop.f32.mrb[0].mxu0
      %v4388 = vpop.f32.mrb[0].mxu0
      %v4389 = vadd.f32 %v4037, %v4388
      %v4390 = vpop.f32.mrb[0].mxu0
      %4391 = vmatprep.mubr.bf16.mxu0 0
      %4392 = vmatmul.mubr.bf16.gmra.mrb[0].mxu0 %v4100
      %v4393 = vpop.f32.mrb[0].mxu0
      %v4394 = vadd.f32 %v4037, %v4393
      %v4395 = vpop.f32.mrb[0].mxu0
      %v4396 = vpop.f32.mrb[0].mxu0
      %v4397 = vadd.f32 %v4037, %v4396
      %v4398 = vpop.f32.mrb[0].mxu0
      %4399 = vmatprep.mubr.bf16.mxu0 0
      %4400 = vmatmul.mubr.bf16.gmra.mrb[0].mxu0 %v4103
      %v4401 = vpop.f32.mrb[0].mxu0
      %v4402 = vadd.f32 %v4037, %v4401
      %v4403 = vpop.f32.mrb[0].mxu0
      %v4404 = vpop.f32.mrb[0].mxu0
      %v4405 = vadd.f32 %v4037, %v4404
      %v4406 = vpop.f32.mrb[0].mxu0
      %4407 = vmatprep.mubr.bf16.mxu0 0
      %4408 = vmatmul.mubr.bf16.gmra.mrb[0].mxu0 %v4106
      %v4409 = vpop.f32.mrb[0].mxu0
      %v4410 = vadd.f32 %v4037, %v4409
      %v4411 = vpop.f32.mrb[0].mxu0
      %v4412 = vpop.f32.mrb[0].mxu0
      %v4413 = vadd.f32 %v4037, %v4412
      %v4414 = vpop.f32.mrb[0].mxu0
      %4415 = vmatprep.mubr.bf16.mxu0 0
      %4416 = vmatmul.mubr.bf16.gmra.mrb[0].mxu0 %v4109
      %v4417 = vpop.f32.mrb[0].mxu0
      %v4418 = vadd.f32 %v4037, %v4417
      %v4419 = vpop.f32.mrb[0].mxu0
      %v4420 = vpop.f32.mrb[0].mxu0
      %v4421 = vadd.f32 %v4037, %v4420
      %v4422 = vpop.f32.mrb[0].mxu0
      %4423 = vmatprep.mubr.bf16.mxu0 0
      %4424 = vmatmul.mubr.bf16.gmra.mrb[0].mxu0 %v4112
      %v4425 = vpop.f32.mrb[0].mxu0
      %v4426 = vadd.f32 %v4037, %v4425
      %v4427 = vpop.f32.mrb[0].mxu0
      %v4428 = vpop.f32.mrb[0].mxu0
      %v4429 = vadd.f32 %v4037, %v4428
      %v4430 = vpop.f32.mrb[0].mxu0
      %4431 = vmatprep.mubr.bf16.mxu0 0
      %4432 = vmatmul.mubr.bf16.gmra.mrb[0].mxu0 %v4115
      %v4433 = vpop.f32.mrb[0].mxu0
      %v4434 = vadd.f32 %v4037, %v4433
      %v4435 = vpop.f32.mrb[0].mxu0
      %v4436 = vpop.f32.mrb[0].mxu0
      %v4437 = vadd.f32 %v4037, %v4436
      %v4438 = vpop.f32.mrb[0].mxu0
      %4439 = vmatprep.mubr.bf16.mxu0 0
      %4440 = vmatmul.mubr.bf16.gmra.mrb[0].mxu0 %v4118
      %v4441 = vpop.f32.mrb[0].mxu0
      %v4442 = vadd.f32 %v4037, %v4441
      %v4443 = vpop.f32.mrb[0].mxu0
      %v4444 = vpop.f32.mrb[0].mxu0
      %v4445 = vadd.f32 %v4037, %v4444
      %v4446 = vpop.f32.mrb[0].mxu0
      %4447 = vmatprep.mubr.bf16.mxu0 0
      %4448 = vmatmul.mubr.bf16.gmra.mrb[0].mxu0 %v4121
      %v4449 = vpop.f32.mrb[0].mxu0
      %v4450 = vadd.f32 %v4037, %v4449
      %v4451 = vpop.f32.mrb[0].mxu0
      %v4452 = vpop.f32.mrb[0].mxu0
      %v4453 = vadd.f32 %v4037, %v4452
      %v4454 = vpop.f32.mrb[0].mxu0
      %4455 = vmatprep.mubr.bf16.mxu0 0
      %4456 = vmatmul.mubr.bf16.gmra.mrb[0].mxu0 %v4124
      %v4457 = vpop.f32.mrb[0].mxu0
      %v4458 = vadd.f32 %v4037, %v4457
      %v4459 = vpop.f32.mrb[0].mxu0
      %v4460 = vpop.f32.mrb[0].mxu0
      %v4461 = vadd.f32 %v4037, %v4460
      %v4462 = vpop.f32.mrb[0].mxu0
      %4463 = vmatprep.mubr.bf16.mxu0 0
      %4464 = vmatmul.mubr.bf16.gmra.mrb[0].mxu0 %v4127
      %v4465 = vpop.f32.mrb[0].mxu0
      %v4466 = vadd.f32 %v4037, %v4465
      %v4467 = vpop.f32.mrb[0].mxu0
      %v4468 = vpop.f32.mrb[0].mxu0
      %v4469 = vadd.f32 %v4037, %v4468
      %v4470 = vpop.f32.mrb[0].mxu0
      %4471 = vmatprep.mubr.bf16.mxu0 0
      %4472 = vmatmul.mubr.bf16.gmra.mrb[0].mxu0 %v4130
      %v4473 = vpop.f32.mrb[0].mxu0
      %v4474 = vadd.f32 %v4037, %v4473
      %v4475 = vpop.f32.mrb[0].mxu0
      %v4476 = vpop.f32.mrb[0].mxu0
      %v4477 = vadd.f32 %v4037, %v4476
      %v4478 = vpop.f32.mrb[0].mxu0
      %4479 = vmatprep.mubr.bf16.mxu0 0
      %4480 = vmatmul.mubr.bf16.gmra.mrb[0].mxu0 %v4133
      %v4481 = vpop.f32.mrb[0].mxu0
      %v4482 = vadd.f32 %v4037, %v4481
      %v4483 = vpop.f32.mrb[0].mxu0
      %v4484 = vpop.f32.mrb[0].mxu0
      %v4485 = vadd.f32 %v4037, %v4484
      %v4486 = vpop.f32.mrb[0].mxu0
      %4487 = vmatprep.mubr.bf16.mxu0 0
      %4488 = vmatmul.mubr.bf16.gmra.mrb[0].mxu0 %v4136
      %v4489 = vpop.f32.mrb[0].mxu0
      %v4490 = vadd.f32 %v4037, %v4489
      %v4491 = vpop.f32.mrb[0].mxu0
      %v4492 = vpop.f32.mrb[0].mxu0
      %v4493 = vadd.f32 %v4037, %v4492
      %v4494 = vpop.f32.mrb[0].mxu0
      %4495 = vmatprep.mubr.bf16.mxu0 0
      %4496 = vmatmul.mubr.bf16.gmra.mrb[0].mxu0 %v4139
      %v4497 = vpop.f32.mrb[0].mxu0
      %v4498 = vadd.f32 %v4037, %v4497
      %v4499 = vpop.f32.mrb[0].mxu0
      %v4500 = vpop.f32.mrb[0].mxu0
      %v4501 = vadd.f32 %v4037, %v4500
      %v4502 = vpop.f32.mrb[0].mxu0
      %4503 = vmatprep.mubr.bf16.mxu0 0
      %4504 = vmatmul.mubr.bf16.gmra.mrb[0].mxu0 %v4142
      %v4505 = vpop.f32.mrb[0].mxu0
      %v4506 = vadd.f32 %v4037, %v4505
      %v4507 = vpop.f32.mrb[0].mxu0
      %v4508 = vpop.f32.mrb[0].mxu0
      %v4509 = vadd.f32 %v4037, %v4508
      %v4510 = vpop.f32.mrb[0].mxu0
      %4511 = vmatprep.mubr.bf16.mxu0 0
      %4512 = vmatmul.mubr.bf16.gmra.mrb[0].mxu0 %v4145
      %v4513 = vpop.f32.mrb[0].mxu0
      %v4514 = vadd.f32 %v4037, %v4513
      %v4515 = vpop.f32.mrb[0].mxu0
      %v4516 = vpop.f32.mrb[0].mxu0
      %v4517 = vadd.f32 %v4037, %v4516
      %v4518 = vpop.f32.mrb[0].mxu0
      %4519 = vmatprep.mubr.bf16.mxu0 0
      %4520 = vmatmul.mubr.bf16.gmra.mrb[0].mxu0 %v4148
      %v4521 = vpop.f32.mrb[0].mxu0
      %v4522 = vadd.f32 %v4037, %v4521
      %v4523 = vpop.f32.mrb[0].mxu0
      %v4524 = vpop.f32.mrb[0].mxu0
      %v4525 = vadd.f32 %v4037, %v4524
      %v4526 = vpop.f32.mrb[0].mxu0
      %4527 = vmatprep.mubr.bf16.mxu0 0
      %4528 = vmatmul.mubr.bf16.gmra.mrb[0].mxu0 %v4151
      %v4529 = vpop.f32.mrb[0].mxu0
      %v4530 = vadd.f32 %v4037, %v4529
      %v4531 = vpop.f32.mrb[0].mxu0
      %v4532 = vpop.f32.mrb[0].mxu0
      %v4533 = vadd.f32 %v4037, %v4532
      %v4534 = vpop.f32.mrb[0].mxu0
      %4535 = vmatprep.mubr.bf16.mxu0 0
      %4536 = vmatmul.mubr.bf16.gmra.mrb[0].mxu0 %v4154
      %v4537 = vpop.f32.mrb[0].mxu0
      %v4538 = vadd.f32 %v4037, %v4537
      %v4539 = vpop.f32.mrb[0].mxu0
      %v4540 = vpop.f32.mrb[0].mxu0
      %v4541 = vadd.f32 %v4037, %v4540
      %v4542 = vpop.f32.mrb[0].mxu0
      %4543 = vmatprep.mubr.bf16.mxu0 0
      %4544 = vmatmul.mubr.bf16.gmra.mrb[0].mxu0 %v4157
      %v4545 = vpop.f32.mrb[0].mxu0
      %v4546 = vadd.f32 %v4037, %v4545
      %v4547 = vpop.f32.mrb[0].mxu0
      %v4548 = vpop.f32.mrb[0].mxu0
      %v4549 = vadd.f32 %v4037, %v4548
      %v4550 = vpop.f32.mrb[0].mxu0
      %4551 = vmatprep.mubr.bf16.mxu0 0
      %4552 = vmatmul.mubr.bf16.gmra.mrb[0].mxu0 %v4160
      %v4553 = vpop.f32.mrb[0].mxu0
      %v4554 = vadd.f32 %v4037, %v4553
      %v4555 = vpop.f32.mrb[0].mxu0
      %v4556 = vpop.f32.mrb[0].mxu0
      %v4557 = vadd.f32 %v4037, %v4556
      %v4558 = vpop.f32.mrb[0].mxu0
      %4559 = vmatprep.mubr.bf16.mxu0 0
      %4560 = vmatmul.mubr.bf16.gmra.mrb[0].mxu0 %v4163
      %v4561 = vpop.f32.mrb[0].mxu0
      %v4562 = vadd.f32 %v4037, %v4561
      %v4563 = vpop.f32.mrb[0].mxu0
      %v4564 = vpop.f32.mrb[0].mxu0
      %v4565 = vadd.f32 %v4037, %v4564
      %v4566 = vpop.f32.mrb[0].mxu0
      %4567 = vmatprep.mubr.bf16.mxu0 0
      %4568 = vmatmul.mubr.bf16.gmra.mrb[0].mxu0 %v4166
      %v4569 = vpop.f32.mrb[0].mxu0
      %v4570 = vadd.f32 %v4037, %v4569
      %v4571 = vpop.f32.mrb[0].mxu0
      %v4572 = vpop.f32.mrb[0].mxu0
      %v4573 = vadd.f32 %v4037, %v4572
      %v4574 = vpop.f32.mrb[0].mxu0
      %4575 = vmatprep.mubr.bf16.mxu0 0
      %4576 = vmatmul.mubr.bf16.gmra.mrb[0].mxu0 %v4169
      %v4577 = vpop.f32.mrb[0].mxu0
      %v4578 = vadd.f32 %v4037, %v4577
      %v4579 = vpop.f32.mrb[0].mxu0
      %v4580 = vpop.f32.mrb[0].mxu0
      %v4581 = vadd.f32 %v4037, %v4580
      %v4582 = vpop.f32.mrb[0].mxu0
      %4583 = vmatprep.mubr.bf16.mxu0 0
      %4584 = vmatmul.mubr.bf16.gmra.mrb[0].mxu0 %v4172
      %v4585 = vpop.f32.mrb[0].mxu0
      %v4586 = vadd.f32 %v4037, %v4585
      %v4587 = vpop.f32.mrb[0].mxu0
      %v4588 = vpop.f32.mrb[0].mxu0
      %v4589 = vadd.f32 %v4037, %v4588
      %v4590 = vpop.f32.mrb[0].mxu0
      %4591 = vmatprep.mubr.bf16.mxu0 0
      %4592 = vmatmul.mubr.bf16.gmra.mrb[0].mxu0 %v4175
      %v4593 = vpop.f32.mrb[0].mxu0
      %v4594 = vadd.f32 %v4037, %v4593
      %v4595 = vpop.f32.mrb[0].mxu0
      %v4596 = vpop.f32.mrb[0].mxu0
      %v4597 = vadd.f32 %v4037, %v4596
      %v4598 = vpop.f32.mrb[0].mxu0
      %4599 = vmatprep.mubr.bf16.mxu0 0
      %4600 = vmatmul.mubr.bf16.gmra.mrb[0].mxu0 %v4178
      %v4601 = vpop.f32.mrb[0].mxu0
      %v4602 = vadd.f32 %v4037, %v4601
      %v4603 = vpop.f32.mrb[0].mxu0
      %v4604 = vpop.f32.mrb[0].mxu0
      %v4605 = vadd.f32 %v4037, %v4604
      %v4606 = vpop.f32.mrb[0].mxu0
      %4607 = vmatprep.mubr.bf16.mxu0 0
      %4608 = vmatmul.mubr.bf16.gmra.mrb[0].mxu0 %v4181
      %v4609 = vpop.f32.mrb[0].mxu0
      %v4610 = vadd.f32 %v4037, %v4609
      %v4611 = vpop.f32.mrb[0].mxu0
      %v4612 = vpop.f32.mrb[0].mxu0
      %v4613 = vadd.f32 %v4037, %v4612
      %v4614 = vpop.f32.mrb[0].mxu0
      %4615 = vmatprep.mubr.bf16.mxu0 0
      %4616 = vmatmul.mubr.bf16.gmra.mrb[0].mxu0 %v4184
      %v4617 = vpop.f32.mrb[0].mxu0
      %v4618 = vadd.f32 %v4037, %v4617
      %v4619 = vpop.f32.mrb[0].mxu0
      %v4620 = vpop.f32.mrb[0].mxu0
      %v4621 = vadd.f32 %v4037, %v4620
      %v4622 = vpop.f32.mrb[0].mxu0
      %4623 = vmatprep.mubr.bf16.mxu0 0
      %4624 = vmatmul.mubr.bf16.gmra.mrb[0].mxu0 %v4187
      %v4625 = vpop.f32.mrb[0].mxu0
      %v4626 = vadd.f32 %v4037, %v4625
      %v4627 = vpop.f32.mrb[0].mxu0
      %v4628 = vpop.f32.mrb[0].mxu0
      %v4629 = vadd.f32 %v4037, %v4628
      %v4630 = vpop.f32.mrb[0].mxu0
      %4631 = vmatprep.mubr.bf16.mxu0 0
      %4632 = vmatmul.mubr.bf16.gmra.mrb[0].mxu0 %v4190
      %v4633 = vpop.f32.mrb[0].mxu0
      %v4634 = vadd.f32 %v4037, %v4633
      %v4635 = vpop.f32.mrb[0].mxu0
      %v4636 = vpop.f32.mrb[0].mxu0
      %v4637 = vadd.f32 %v4037, %v4636
      %v4638 = vpop.f32.mrb[0].mxu0
      %4639 = vmatprep.mubr.bf16.mxu0 0
      %4640 = vmatmul.mubr.bf16.gmra.mrb[0].mxu0 %v4193
      %v4641 = vpop.f32.mrb[0].mxu0
      %v4642 = vadd.f32 %v4037, %v4641
      %v4643 = vpop.f32.mrb[0].mxu0
      %v4644 = vpop.f32.mrb[0].mxu0
      %v4645 = vadd.f32 %v4037, %v4644
      %v4646 = vpop.f32.mrb[0].mxu0
      %4647 = vmatprep.mubr.bf16.mxu0 0
      %4648 = vmatmul.mubr.bf16.gmra.mrb[0].mxu0 %v4196
      %v4649 = vpop.f32.mrb[0].mxu0
      %v4650 = vadd.f32 %v4037, %v4649
      %v4651 = vpop.f32.mrb[0].mxu0
      %v4652 = vpop.f32.mrb[0].mxu0
      %v4653 = vadd.f32 %v4037, %v4652
      %v4654 = vpop.f32.mrb[0].mxu0
      %4655 = vmatprep.mubr.bf16.mxu0 0
      %4656 = vmatmul.mubr.bf16.gmra.mrb[0].mxu0 %v4199
      %v4657 = vpop.f32.mrb[0].mxu0
      %v4658 = vadd.f32 %v4037, %v4657
      %v4659 = vpop.f32.mrb[0].mxu0
      %v4660 = vpop.f32.mrb[0].mxu0
      %v4661 = vadd.f32 %v4037, %v4660
      %v4662 = vpop.f32.mrb[0].mxu0
      %4663 = vmatprep.mubr.bf16.mxu0 0
      %4664 = vmatmul.mubr.bf16.gmra.mrb[0].mxu0 %v4202
      %v4665 = vpop.f32.mrb[0].mxu0
      %v4666 = vadd.f32 %v4037, %v4665
      %v4667 = vpop.f32.mrb[0].mxu0
      %v4668 = vpop.f32.mrb[0].mxu0
      %v4669 = vadd.f32 %v4037, %v4668
      %v4670 = vpop.f32.mrb[0].mxu0
      %4671 = vmatprep.mubr.bf16.mxu0 0
      %4672 = vmatmul.mubr.bf16.gmra.mrb[0].mxu0 %v4205
      %v4673 = vpop.f32.mrb[0].mxu0
      %v4674 = vadd.f32 %v4037, %v4673
      %v4675 = vpop.f32.mrb[0].mxu0
      %v4676 = vpop.f32.mrb[0].mxu0
      %v4677 = vadd.f32 %v4037, %v4676
      %v4678 = vpop.f32.mrb[0].mxu0
      %4679 = vmatprep.mubr.bf16.mxu0 0
      %4680 = vmatmul.mubr.bf16.gmra.mrb[0].mxu0 %v4208
      %v4681 = vpop.f32.mrb[0].mxu0
      %v4682 = vadd.f32 %v4037, %v4681
      %v4683 = vpop.f32.mrb[0].mxu0
      %v4684 = vpop.f32.mrb[0].mxu0
      %v4685 = vadd.f32 %v4037, %v4684
      %v4686 = vpop.f32.mrb[0].mxu0
      %4687 = vmatprep.mubr.bf16.mxu0 0
      %4688 = vmatmul.mubr.bf16.gmra.mrb[0].mxu0 %v4211
      %v4689 = vpop.f32.mrb[0].mxu0
      %v4690 = vadd.f32 %v4037, %v4689
      %v4691 = vpop.f32.mrb[0].mxu0
      %v4692 = vpop.f32.mrb[0].mxu0
      %v4693 = vadd.f32 %v4037, %v4692
      %v4694 = vpop.f32.mrb[0].mxu0
      %4695 = vmatprep.mubr.bf16.mxu0 0
      %4696 = vmatmul.mubr.bf16.gmra.mrb[0].mxu0 %v4214
      %v4697 = vpop.f32.mrb[0].mxu0
      %v4698 = vadd.f32 %v4037, %v4697
      %v4699 = vpop.f32.mrb[0].mxu0
      %v4700 = vpop.f32.mrb[0].mxu0
      %v4701 = vadd.f32 %v4037, %v4700
      %v4702 = vpop.f32.mrb[0].mxu0
      %4703 = vmatprep.mubr.bf16.mxu0 0
      %4704 = vmatmul.mubr.bf16.gmra.mrb[0].mxu0 %v4217
      %v4705 = vpop.f32.mrb[0].mxu0
      %v4706 = vadd.f32 %v4037, %v4705
      %v4707 = vpop.f32.mrb[0].mxu0
      %v4708 = vpop.f32.mrb[0].mxu0
      %v4709 = vadd.f32 %v4037, %v4708
      %v4710 = vpop.f32.mrb[0].mxu0
      %4711 = vmatprep.mubr.bf16.mxu0 0
      %4712 = vmatmul.mubr.bf16.gmra.mrb[0].mxu0 %v4220
      %v4713 = vpop.f32.mrb[0].mxu0
      %v4714 = vadd.f32 %v4037, %v4713
      %v4715 = vpop.f32.mrb[0].mxu0
      %v4716 = vpop.f32.mrb[0].mxu0
      %v4717 = vadd.f32 %v4037, %v4716
      %v4718 = vpop.f32.mrb[0].mxu0
      %4719 = vmatprep.mubr.bf16.mxu0 0
      %4720 = vmatmul.mubr.bf16.gmra.mrb[0].mxu0 %v4223
      %v4721 = vpop.f32.mrb[0].mxu0
      %v4722 = vadd.f32 %v4037, %v4721
      %v4723 = vpop.f32.mrb[0].mxu0
      %v4724 = vpop.f32.mrb[0].mxu0
      %v4725 = vadd.f32 %v4037, %v4724
      %v4726 = vpop.f32.mrb[0].mxu0
      %4727 = vmatprep.mubr.bf16.mxu0 0
      %4728 = vmatmul.mubr.bf16.gmra.mrb[0].mxu0 %v4226
      %v4729 = vpop.f32.mrb[0].mxu0
      %v4730 = vadd.f32 %v4037, %v4729
      %v4731 = vpop.f32.mrb[0].mxu0
      %v4732 = vpop.f32.mrb[0].mxu0
      %v4733 = vadd.f32 %v4037, %v4732
      %v4734 = vpop.f32.mrb[0].mxu0
      %4735 = vmatprep.mubr.bf16.mxu0 0
      %4736 = vmatmul.mubr.bf16.gmra.mrb[0].mxu0 %v4229
      %v4737 = vpop.f32.mrb[0].mxu0
      %v4738 = vadd.f32 %v4037, %v4737
      %v4739 = vpop.f32.mrb[0].mxu0
      %v4740 = vpop.f32.mrb[0].mxu0
      %v4741 = vadd.f32 %v4037, %v4740
      %v4742 = vpop.f32.mrb[0].mxu0
      %4743 = vmatprep.mubr.bf16.mxu0 0
      %4744 = vmatmul.mubr.bf16.gmra.mrb[0].mxu0 %v4232
      %v4745 = vpop.f32.mrb[0].mxu0
      %v4746 = vadd.f32 %v4037, %v4745
      %v4747 = vpop.f32.mrb[0].mxu0
      %v4748 = vpop.f32.mrb[0].mxu0
      %v4749 = vadd.f32 %v4037, %v4748
      %v4750 = vpop.f32.mrb[0].mxu0
      %4751 = vmatprep.mubr.bf16.mxu0 0
      %4752 = vmatmul.mubr.bf16.gmra.mrb[0].mxu0 %v4235
      %v4753 = vpop.f32.mrb[0].mxu0
      %v4754 = vadd.f32 %v4037, %v4753
      %v4755 = vpop.f32.mrb[0].mxu0
      %v4756 = vpop.f32.mrb[0].mxu0
      %v4757 = vadd.f32 %v4037, %v4756
      %v4758 = vpop.f32.mrb[0].mxu0
      %4759 = vmatprep.mubr.bf16.mxu0 0
      %4760 = vmatmul.mubr.bf16.gmra.mrb[0].mxu0 %v4238
      %v4761 = vpop.f32.mrb[0].mxu0
      %v4762 = vadd.f32 %v4037, %v4761
      %v4763 = vpop.f32.mrb[0].mxu0
      %v4764 = vpop.f32.mrb[0].mxu0
      %v4765 = vadd.f32 %v4037, %v4764
      %v4766 = vpop.f32.mrb[0].mxu0
      %4767 = vmatprep.mubr.bf16.mxu0 0
      %4768 = vmatmul.mubr.bf16.gmra.mrb[0].mxu0 %v4241
      %v4769 = vpop.f32.mrb[0].mxu0
      %v4770 = vadd.f32 %v4037, %v4769
      %v4771 = vpop.f32.mrb[0].mxu0
      %v4772 = vpop.f32.mrb[0].mxu0
      %v4773 = vadd.f32 %v4037, %v4772
      %v4774 = vpop.f32.mrb[0].mxu0
      %4775 = vmatprep.mubr.bf16.mxu0 0
      %4776 = vmatmul.mubr.bf16.gmra.mrb[0].mxu0 %v4244
      %v4777 = vpop.f32.mrb[0].mxu0
      %v4778 = vadd.f32 %v4037, %v4777
      %v4779 = vpop.f32.mrb[0].mxu0
      %v4780 = vpop.f32.mrb[0].mxu0
      %v4781 = vadd.f32 %v4037, %v4780
      %v4782 = vpop.f32.mrb[0].mxu0
      %4783 = vmatprep.mubr.bf16.mxu0 0
      %4784 = vmatmul.mubr.bf16.gmra.mrb[0].mxu0 %v4247
      %v4785 = vpop.f32.mrb[0].mxu0
      %v4786 = vadd.f32 %v4037, %v4785
      %v4787 = vpop.f32.mrb[0].mxu0
      %v4788 = vpop.f32.mrb[0].mxu0
      %v4789 = vadd.f32 %v4037, %v4788
      %v4790 = vpop.f32.mrb[0].mxu0
      %4791 = vmatprep.mubr.bf16.mxu0 0
      %4792 = vmatmul.mubr.bf16.gmra.mrb[0].mxu0 %v4250
      %v4793 = vpop.f32.mrb[0].mxu0
      %v4794 = vadd.f32 %v4037, %v4793
      %v4795 = vpop.f32.mrb[0].mxu0
      %v4796 = vpop.f32.mrb[0].mxu0
      %v4797 = vadd.f32 %v4037, %v4796
      %v4798 = vpop.f32.mrb[0].mxu0
      %4799 = vdwg.mxu0
      %v4800 = vmul.f32 %v4290, 0.5
      %v4801 = vmul.f32 %v4293, 0.5
      %v4802 = vmul.f32 %v4298, 0.5
      %v4803 = vmul.f32 %v4301, 0.5
      %v4804 = vmul.f32 %v4306, 0.5
      %v4805 = vmul.f32 %v4309, 0.5
      %v4806 = vmul.f32 %v4314, 0.5
      %v4807 = vmul.f32 %v4317, 0.5
      %v4808 = vmul.f32 %v4322, 0.5
      %v4809 = vmul.f32 %v4325, 0.5
      %v4810 = vmul.f32 %v4330, 0.5
      %v4811 = vmul.f32 %v4333, 0.5
      %v4812 = vmul.f32 %v4338, 0.5
      %v4813 = vmul.f32 %v4341, 0.5
      %v4814 = vmul.f32 %v4346, 0.5
      %v4815 = vmul.f32 %v4349, 0.5
      %v4816 = vmul.f32 %v4354, 0.5
      %v4817 = vmul.f32 %v4357, 0.5
      %v4818 = vmul.f32 %v4362, 0.5
      %v4819 = vmul.f32 %v4365, 0.5
      %v4820 = vmul.f32 %v4370, 0.5
      %v4821 = vmul.f32 %v4373, 0.5
      %v4822 = vmul.f32 %v4378, 0.5
      %v4823 = vmul.f32 %v4381, 0.5
      %v4824 = vmul.f32 %v4386, 0.5
      %v4825 = vmul.f32 %v4389, 0.5
      %v4826 = vmul.f32 %v4394, 0.5
      %v4827 = vmul.f32 %v4397, 0.5
      %v4828 = vmul.f32 %v4402, 0.5
      %v4829 = vmul.f32 %v4405, 0.5
      %v4830 = vmul.f32 %v4410, 0.5
      %v4831 = vmul.f32 %v4413, 0.5
      %v4832 = vmul.f32 %v4418, 0.5
      %v4833 = vmul.f32 %v4421, 0.5
      %v4834 = vmul.f32 %v4426, 0.5
      %v4835 = vmul.f32 %v4429, 0.5
      %v4836 = vmul.f32 %v4434, 0.5
      %v4837 = vmul.f32 %v4437, 0.5
      %v4838 = vmul.f32 %v4442, 0.5
      %v4839 = vmul.f32 %v4445, 0.5
      %v4840 = vmul.f32 %v4450, 0.5
      %v4841 = vmul.f32 %v4453, 0.5
      %v4842 = vmul.f32 %v4458, 0.5
      %v4843 = vmul.f32 %v4461, 0.5
      %v4844 = vmul.f32 %v4466, 0.5
      %v4845 = vmul.f32 %v4469, 0.5
      %v4846 = vmul.f32 %v4474, 0.5
      %v4847 = vmul.f32 %v4477, 0.5
      %v4848 = vmul.f32 %v4482, 0.5
      %v4849 = vmul.f32 %v4485, 0.5
      %v4850 = vmul.f32 %v4490, 0.5
      %v4851 = vmul.f32 %v4493, 0.5
      %v4852 = vmul.f32 %v4498, 0.5
      %v4853 = vmul.f32 %v4501, 0.5
      %v4854 = vmul.f32 %v4506, 0.5
      %v4855 = vmul.f32 %v4509, 0.5
      %v4856 = vmul.f32 %v4514, 0.5
      %v4857 = vmul.f32 %v4517, 0.5
      %v4858 = vmul.f32 %v4522, 0.5
      %v4859 = vmul.f32 %v4525, 0.5
      %v4860 = vmul.f32 %v4530, 0.5
      %v4861 = vmul.f32 %v4533, 0.5
      %v4862 = vmul.f32 %v4538, 0.5
      %v4863 = vmul.f32 %v4541, 0.5
      %v4864 = vmul.f32 %v4546, 0.5
      %v4865 = vmul.f32 %v4549, 0.5
      %v4866 = vmul.f32 %v4554, 0.5
      %v4867 = vmul.f32 %v4557, 0.5
      %v4868 = vmul.f32 %v4562, 0.5
      %v4869 = vmul.f32 %v4565, 0.5
      %v4870 = vmul.f32 %v4570, 0.5
      %v4871 = vmul.f32 %v4573, 0.5
      %v4872 = vmul.f32 %v4578, 0.5
      %v4873 = vmul.f32 %v4581, 0.5
      %v4874 = vmul.f32 %v4586, 0.5
      %v4875 = vmul.f32 %v4589, 0.5
      %v4876 = vmul.f32 %v4594, 0.5
      %v4877 = vmul.f32 %v4597, 0.5
      %v4878 = vmul.f32 %v4602, 0.5
      %v4879 = vmul.f32 %v4605, 0.5
      %v4880 = vmul.f32 %v4610, 0.5
      %v4881 = vmul.f32 %v4613, 0.5
      %v4882 = vmul.f32 %v4618, 0.5
      %v4883 = vmul.f32 %v4621, 0.5
      %v4884 = vmul.f32 %v4626, 0.5
      %v4885 = vmul.f32 %v4629, 0.5
      %v4886 = vmul.f32 %v4634, 0.5
      %v4887 = vmul.f32 %v4637, 0.5
      %v4888 = vmul.f32 %v4642, 0.5
      %v4889 = vmul.f32 %v4645, 0.5
      %v4890 = vmul.f32 %v4650, 0.5
      %v4891 = vmul.f32 %v4653, 0.5
      %v4892 = vmul.f32 %v4658, 0.5
      %v4893 = vmul.f32 %v4661, 0.5
      %v4894 = vmul.f32 %v4666, 0.5
      %v4895 = vmul.f32 %v4669, 0.5
      %v4896 = vmul.f32 %v4674, 0.5
      %v4897 = vmul.f32 %v4677, 0.5
      %v4898 = vmul.f32 %v4682, 0.5
      %v4899 = vmul.f32 %v4685, 0.5
      %v4900 = vmul.f32 %v4690, 0.5
      %v4901 = vmul.f32 %v4693, 0.5
      %v4902 = vmul.f32 %v4698, 0.5
      %v4903 = vmul.f32 %v4701, 0.5
      %v4904 = vmul.f32 %v4706, 0.5
      %v4905 = vmul.f32 %v4709, 0.5
      %v4906 = vmul.f32 %v4714, 0.5
      %v4907 = vmul.f32 %v4717, 0.5
      %v4908 = vmul.f32 %v4722, 0.5
      %v4909 = vmul.f32 %v4725, 0.5
      %v4910 = vmul.f32 %v4730, 0.5
      %v4911 = vmul.f32 %v4733, 0.5
      %v4912 = vmul.f32 %v4738, 0.5
      %v4913 = vmul.f32 %v4741, 0.5
      %v4914 = vmul.f32 %v4746, 0.5
      %v4915 = vmul.f32 %v4749, 0.5
      %v4916 = vmul.f32 %v4754, 0.5
      %v4917 = vmul.f32 %v4757, 0.5
      %v4918 = vmul.f32 %v4762, 0.5
      %v4919 = vmul.f32 %v4765, 0.5
      %v4920 = vmul.f32 %v4770, 0.5
      %v4921 = vmul.f32 %v4773, 0.5
      %v4922 = vmul.f32 %v4778, 0.5
      %v4923 = vmul.f32 %v4781, 0.5
      %v4924 = vmul.f32 %v4786, 0.5
      %v4925 = vmul.f32 %v4789, 0.5
      %v4926 = vmul.f32 %v4794, 0.5
      %v4927 = vmul.f32 %v4797, 0.5
      %v4928 = vtanh.pop %v4800
      %v4929 = vtanh.pop %v4801
      %v4930 = vtanh.pop %v4802
      %v4931 = vtanh.pop %v4803
      %v4932 = vtanh.pop %v4804
      %v4933 = vtanh.pop %v4805
      %v4934 = vtanh.pop %v4806
      %v4935 = vtanh.pop %v4807
      %v4936 = vtanh.pop %v4808
      %v4937 = vtanh.pop %v4809
      %v4938 = vtanh.pop %v4810
      %v4939 = vtanh.pop %v4811
      %v4940 = vtanh.pop %v4812
      %v4941 = vtanh.pop %v4813
      %v4942 = vtanh.pop %v4814
      %v4943 = vtanh.pop %v4815
      %v4944 = vtanh.pop %v4816
      %v4945 = vtanh.pop %v4817
      %v4946 = vtanh.pop %v4818
      %v4947 = vtanh.pop %v4819
      %v4948 = vtanh.pop %v4820
      %v4949 = vtanh.pop %v4821
      %v4950 = vtanh.pop %v4822
      %v4951 = vtanh.pop %v4823
      %v4952 = vtanh.pop %v4824
      %v4953 = vtanh.pop %v4825
      %v4954 = vtanh.pop %v4826
      %v4955 = vtanh.pop %v4827
      %v4956 = vtanh.pop %v4828
      %v4957 = vtanh.pop %v4829
      %v4958 = vtanh.pop %v4830
      %v4959 = vtanh.pop %v4831
      %v4960 = vtanh.pop %v4832
      %v4961 = vtanh.pop %v4833
      %v4962 = vtanh.pop %v4834
      %v4963 = vtanh.pop %v4835
      %v4964 = vtanh.pop %v4836
      %v4965 = vtanh.pop %v4837
      %v4966 = vtanh.pop %v4838
      %v4967 = vtanh.pop %v4839
      %v4968 = vtanh.pop %v4840
      %v4969 = vtanh.pop %v4841
      %v4970 = vtanh.pop %v4842
      %v4971 = vtanh.pop %v4843
      %v4972 = vtanh.pop %v4844
      %v4973 = vtanh.pop %v4845
      %v4974 = vtanh.pop %v4846
      %v4975 = vtanh.pop %v4847
      %v4976 = vtanh.pop %v4848
      %v4977 = vtanh.pop %v4849
      %v4978 = vtanh.pop %v4850
      %v4979 = vtanh.pop %v4851
      %v4980 = vtanh.pop %v4852
      %v4981 = vtanh.pop %v4853
      %v4982 = vtanh.pop %v4854
      %v4983 = vtanh.pop %v4855
      %v4984 = vtanh.pop %v4856
      %v4985 = vtanh.pop %v4857
      %v4986 = vtanh.pop %v4858
      %v4987 = vtanh.pop %v4859
      %v4988 = vtanh.pop %v4860
      %v4989 = vtanh.pop %v4861
      %v4990 = vtanh.pop %v4862
      %v4991 = vtanh.pop %v4863
      %v4992 = vtanh.pop %v4864
      %v4993 = vtanh.pop %v4865
      %v4994 = vtanh.pop %v4866
      %v4995 = vtanh.pop %v4867
      %v4996 = vtanh.pop %v4868
      %v4997 = vtanh.pop %v4869
      %v4998 = vtanh.pop %v4870
      %v4999 = vtanh.pop %v4871
      %v5000 = vtanh.pop %v4872
      %v5001 = vtanh.pop %v4873
      %v5002 = vtanh.pop %v4874
      %v5003 = vtanh.pop %v4875
      %v5004 = vtanh.pop %v4876
      %v5005 = vtanh.pop %v4877
      %v5006 = vtanh.pop %v4878
      %v5007 = vtanh.pop %v4879
      %v5008 = vtanh.pop %v4880
      %v5009 = vtanh.pop %v4881
      %v5010 = vtanh.pop %v4882
      %v5011 = vtanh.pop %v4883
      %v5012 = vtanh.pop %v4884
      %v5013 = vtanh.pop %v4885
      %v5014 = vtanh.pop %v4886
      %v5015 = vtanh.pop %v4887
      %v5016 = vtanh.pop %v4888
      %v5017 = vtanh.pop %v4889
      %v5018 = vtanh.pop %v4890
      %v5019 = vtanh.pop %v4891
      %v5020 = vtanh.pop %v4892
      %v5021 = vtanh.pop %v4893
      %v5022 = vtanh.pop %v4894
      %v5023 = vtanh.pop %v4895
      %v5024 = vtanh.pop %v4896
      %v5025 = vtanh.pop %v4897
      %v5026 = vtanh.pop %v4898
      %v5027 = vtanh.pop %v4899
      %v5028 = vtanh.pop %v4900
      %v5029 = vtanh.pop %v4901
      %v5030 = vtanh.pop %v4902
      %v5031 = vtanh.pop %v4903
      %v5032 = vtanh.pop %v4904
      %v5033 = vtanh.pop %v4905
      %v5034 = vtanh.pop %v4906
      %v5035 = vtanh.pop %v4907
      %v5036 = vtanh.pop %v4908
      %v5037 = vtanh.pop %v4909
      %v5038 = vtanh.pop %v4910
      %v5039 = vtanh.pop %v4911
      %v5040 = vtanh.pop %v4912
      %v5041 = vtanh.pop %v4913
      %v5042 = vtanh.pop %v4914
      %v5043 = vtanh.pop %v4915
      %v5044 = vtanh.pop %v4916
      %v5045 = vtanh.pop %v4917
      %v5046 = vtanh.pop %v4918
      %v5047 = vtanh.pop %v4919
      %v5048 = vtanh.pop %v4920
      %v5049 = vtanh.pop %v4921
      %v5050 = vtanh.pop %v4922
      %v5051 = vtanh.pop %v4923
      %v5052 = vtanh.pop %v4924
      %v5053 = vtanh.pop %v4925
      %v5054 = vtanh.pop %v4926
      %v5055 = vtanh.pop %v4927
      %v5056 = vadd.f32 %v4928, 1.0
      %v5057 = vadd.f32 %v4929, 1.0
      %v5058 = vadd.f32 %v4930, 1.0
      %v5059 = vadd.f32 %v4931, 1.0
      %v5060 = vadd.f32 %v4932, 1.0
      %v5061 = vadd.f32 %v4933, 1.0
      %v5062 = vadd.f32 %v4934, 1.0
      %v5063 = vadd.f32 %v4935, 1.0
      %v5064 = vadd.f32 %v4936, 1.0
      %v5065 = vadd.f32 %v4937, 1.0
      %v5066 = vadd.f32 %v4938, 1.0
      %v5067 = vadd.f32 %v4939, 1.0
      %v5068 = vadd.f32 %v4940, 1.0
      %v5069 = vadd.f32 %v4941, 1.0
      %v5070 = vadd.f32 %v4942, 1.0
      %v5071 = vadd.f32 %v4943, 1.0
      %v5072 = vadd.f32 %v4944, 1.0
      %v5073 = vadd.f32 %v4945, 1.0
      %v5074 = vadd.f32 %v4946, 1.0
      %v5075 = vadd.f32 %v4947, 1.0
      %v5076 = vadd.f32 %v4948, 1.0
      %v5077 = vadd.f32 %v4949, 1.0
      %v5078 = vadd.f32 %v4950, 1.0
      %v5079 = vadd.f32 %v4951, 1.0
      %v5080 = vadd.f32 %v4952, 1.0
      %v5081 = vadd.f32 %v4953, 1.0
      %v5082 = vadd.f32 %v4954, 1.0
      %v5083 = vadd.f32 %v4955, 1.0
      %v5084 = vadd.f32 %v4956, 1.0
      %v5085 = vadd.f32 %v4957, 1.0
      %v5086 = vadd.f32 %v4958, 1.0
      %v5087 = vadd.f32 %v4959, 1.0
      %v5088 = vadd.f32 %v4960, 1.0
      %v5089 = vadd.f32 %v4961, 1.0
      %v5090 = vadd.f32 %v4962, 1.0
      %v5091 = vadd.f32 %v4963, 1.0
      %v5092 = vadd.f32 %v4964, 1.0
      %v5093 = vadd.f32 %v4965, 1.0
      %v5094 = vadd.f32 %v4966, 1.0
      %v5095 = vadd.f32 %v4967, 1.0
      %v5096 = vadd.f32 %v4968, 1.0
      %v5097 = vadd.f32 %v4969, 1.0
      %v5098 = vadd.f32 %v4970, 1.0
      %v5099 = vadd.f32 %v4971, 1.0
      %v5100 = vadd.f32 %v4972, 1.0
      %v5101 = vadd.f32 %v4973, 1.0
      %v5102 = vadd.f32 %v4974, 1.0
      %v5103 = vadd.f32 %v4975, 1.0
      %v5104 = vadd.f32 %v4976, 1.0
      %v5105 = vadd.f32 %v4977, 1.0
      %v5106 = vadd.f32 %v4978, 1.0
      %v5107 = vadd.f32 %v4979, 1.0
      %v5108 = vadd.f32 %v4980, 1.0
      %v5109 = vadd.f32 %v4981, 1.0
      %v5110 = vadd.f32 %v4982, 1.0
      %v5111 = vadd.f32 %v4983, 1.0
      %v5112 = vadd.f32 %v4984, 1.0
      %v5113 = vadd.f32 %v4985, 1.0
      %v5114 = vadd.f32 %v4986, 1.0
      %v5115 = vadd.f32 %v4987, 1.0
      %v5116 = vadd.f32 %v4988, 1.0
      %v5117 = vadd.f32 %v4989, 1.0
      %v5118 = vadd.f32 %v4990, 1.0
      %v5119 = vadd.f32 %v4991, 1.0
      %v5120 = vadd.f32 %v4992, 1.0
      %v5121 = vadd.f32 %v4993, 1.0
      %v5122 = vadd.f32 %v4994, 1.0
      %v5123 = vadd.f32 %v4995, 1.0
      %v5124 = vadd.f32 %v4996, 1.0
      %v5125 = vadd.f32 %v4997, 1.0
      %v5126 = vadd.f32 %v4998, 1.0
      %v5127 = vadd.f32 %v4999, 1.0
      %v5128 = vadd.f32 %v5000, 1.0
      %v5129 = vadd.f32 %v5001, 1.0
      %v5130 = vadd.f32 %v5002, 1.0
      %v5131 = vadd.f32 %v5003, 1.0
      %v5132 = vadd.f32 %v5004, 1.0
      %v5133 = vadd.f32 %v5005, 1.0
      %v5134 = vadd.f32 %v5006, 1.0
      %v5135 = vadd.f32 %v5007, 1.0
      %v5136 = vadd.f32 %v5008, 1.0
      %v5137 = vadd.f32 %v5009, 1.0
      %v5138 = vadd.f32 %v5010, 1.0
      %v5139 = vadd.f32 %v5011, 1.0
      %v5140 = vadd.f32 %v5012, 1.0
      %v5141 = vadd.f32 %v5013, 1.0
      %v5142 = vadd.f32 %v5014, 1.0
      %v5143 = vadd.f32 %v5015, 1.0
      %v5144 = vadd.f32 %v5016, 1.0
      %v5145 = vadd.f32 %v5017, 1.0
      %v5146 = vadd.f32 %v5018, 1.0
      %v5147 = vadd.f32 %v5019, 1.0
      %v5148 = vadd.f32 %v5020, 1.0
      %v5149 = vadd.f32 %v5021, 1.0
      %v5150 = vadd.f32 %v5022, 1.0
      %v5151 = vadd.f32 %v5023, 1.0
      %v5152 = vadd.f32 %v5024, 1.0
      %v5153 = vadd.f32 %v5025, 1.0
      %v5154 = vadd.f32 %v5026, 1.0
      %v5155 = vadd.f32 %v5027, 1.0
      %v5156 = vadd.f32 %v5028, 1.0
      %v5157 = vadd.f32 %v5029, 1.0
      %v5158 = vadd.f32 %v5030, 1.0
      %v5159 = vadd.f32 %v5031, 1.0
      %v5160 = vadd.f32 %v5032, 1.0
      %v5161 = vadd.f32 %v5033, 1.0
      %v5162 = vadd.f32 %v5034, 1.0
      %v5163 = vadd.f32 %v5035, 1.0
      %v5164 = vadd.f32 %v5036, 1.0
      %v5165 = vadd.f32 %v5037, 1.0
      %v5166 = vadd.f32 %v5038, 1.0
      %v5167 = vadd.f32 %v5039, 1.0
      %v5168 = vadd.f32 %v5040, 1.0
      %v5169 = vadd.f32 %v5041, 1.0
      %v5170 = vadd.f32 %v5042, 1.0
      %v5171 = vadd.f32 %v5043, 1.0
      %v5172 = vadd.f32 %v5044, 1.0
      %v5173 = vadd.f32 %v5045, 1.0
      %v5174 = vadd.f32 %v5046, 1.0
      %v5175 = vadd.f32 %v5047, 1.0
      %v5176 = vadd.f32 %v5048, 1.0
      %v5177 = vadd.f32 %v5049, 1.0
      %v5178 = vadd.f32 %v5050, 1.0
      %v5179 = vadd.f32 %v5051, 1.0
      %v5180 = vadd.f32 %v5052, 1.0
      %v5181 = vadd.f32 %v5053, 1.0
      %v5182 = vadd.f32 %v5054, 1.0
      %v5183 = vadd.f32 %v5055, 1.0
      %v5184 = vmul.f32 %v5056, 0.5
      %v5185 = vmul.f32 %v5057, 0.5
      %v5186 = vmul.f32 %v5058, 0.5
      %v5187 = vmul.f32 %v5059, 0.5
      %v5188 = vmul.f32 %v5060, 0.5
      %v5189 = vmul.f32 %v5061, 0.5
      %v5190 = vmul.f32 %v5062, 0.5
      %v5191 = vmul.f32 %v5063, 0.5
      %v5192 = vmul.f32 %v5064, 0.5
      %v5193 = vmul.f32 %v5065, 0.5
      %v5194 = vmul.f32 %v5066, 0.5
      %v5195 = vmul.f32 %v5067, 0.5
      %v5196 = vmul.f32 %v5068, 0.5
      %v5197 = vmul.f32 %v5069, 0.5
      %v5198 = vmul.f32 %v5070, 0.5
      %v5199 = vmul.f32 %v5071, 0.5
      %v5200 = vmul.f32 %v5072, 0.5
      %v5201 = vmul.f32 %v5073, 0.5
      %v5202 = vmul.f32 %v5074, 0.5
      %v5203 = vmul.f32 %v5075, 0.5
      %v5204 = vmul.f32 %v5076, 0.5
      %v5205 = vmul.f32 %v5077, 0.5
      %v5206 = vmul.f32 %v5078, 0.5
      %v5207 = vmul.f32 %v5079, 0.5
      %v5208 = vmul.f32 %v5080, 0.5
      %v5209 = vmul.f32 %v5081, 0.5
      %v5210 = vmul.f32 %v5082, 0.5
      %v5211 = vmul.f32 %v5083, 0.5
      %v5212 = vmul.f32 %v5084, 0.5
      %v5213 = vmul.f32 %v5085, 0.5
      %v5214 = vmul.f32 %v5086, 0.5
      %v5215 = vmul.f32 %v5087, 0.5
      %v5216 = vmul.f32 %v5088, 0.5
      %v5217 = vmul.f32 %v5089, 0.5
      %v5218 = vmul.f32 %v5090, 0.5
      %v5219 = vmul.f32 %v5091, 0.5
      %v5220 = vmul.f32 %v5092, 0.5
      %v5221 = vmul.f32 %v5093, 0.5
      %v5222 = vmul.f32 %v5094, 0.5
      %v5223 = vmul.f32 %v5095, 0.5
      %v5224 = vmul.f32 %v5096, 0.5
      %v5225 = vmul.f32 %v5097, 0.5
      %v5226 = vmul.f32 %v5098, 0.5
      %v5227 = vmul.f32 %v5099, 0.5
      %v5228 = vmul.f32 %v5100, 0.5
      %v5229 = vmul.f32 %v5101, 0.5
      %v5230 = vmul.f32 %v5102, 0.5
      %v5231 = vmul.f32 %v5103, 0.5
      %v5232 = vmul.f32 %v5104, 0.5
      %v5233 = vmul.f32 %v5105, 0.5
      %v5234 = vmul.f32 %v5106, 0.5
      %v5235 = vmul.f32 %v5107, 0.5
      %v5236 = vmul.f32 %v5108, 0.5
      %v5237 = vmul.f32 %v5109, 0.5
      %v5238 = vmul.f32 %v5110, 0.5
      %v5239 = vmul.f32 %v5111, 0.5
      %v5240 = vmul.f32 %v5112, 0.5
      %v5241 = vmul.f32 %v5113, 0.5
      %v5242 = vmul.f32 %v5114, 0.5
      %v5243 = vmul.f32 %v5115, 0.5
      %v5244 = vmul.f32 %v5116, 0.5
      %v5245 = vmul.f32 %v5117, 0.5
      %v5246 = vmul.f32 %v5118, 0.5
      %v5247 = vmul.f32 %v5119, 0.5
      %v5248 = vmul.f32 %v5120, 0.5
      %v5249 = vmul.f32 %v5121, 0.5
      %v5250 = vmul.f32 %v5122, 0.5
      %v5251 = vmul.f32 %v5123, 0.5
      %v5252 = vmul.f32 %v5124, 0.5
      %v5253 = vmul.f32 %v5125, 0.5
      %v5254 = vmul.f32 %v5126, 0.5
      %v5255 = vmul.f32 %v5127, 0.5
      %v5256 = vmul.f32 %v5128, 0.5
      %v5257 = vmul.f32 %v5129, 0.5
      %v5258 = vmul.f32 %v5130, 0.5
      %v5259 = vmul.f32 %v5131, 0.5
      %v5260 = vmul.f32 %v5132, 0.5
      %v5261 = vmul.f32 %v5133, 0.5
      %v5262 = vmul.f32 %v5134, 0.5
      %v5263 = vmul.f32 %v5135, 0.5
      %v5264 = vmul.f32 %v5136, 0.5
      %v5265 = vmul.f32 %v5137, 0.5
      %v5266 = vmul.f32 %v5138, 0.5
      %v5267 = vmul.f32 %v5139, 0.5
      %v5268 = vmul.f32 %v5140, 0.5
      %v5269 = vmul.f32 %v5141, 0.5
      %v5270 = vmul.f32 %v5142, 0.5
      %v5271 = vmul.f32 %v5143, 0.5
      %v5272 = vmul.f32 %v5144, 0.5
      %v5273 = vmul.f32 %v5145, 0.5
      %v5274 = vmul.f32 %v5146, 0.5
      %v5275 = vmul.f32 %v5147, 0.5
      %v5276 = vmul.f32 %v5148, 0.5
      %v5277 = vmul.f32 %v5149, 0.5
      %v5278 = vmul.f32 %v5150, 0.5
      %v5279 = vmul.f32 %v5151, 0.5
      %v5280 = vmul.f32 %v5152, 0.5
      %v5281 = vmul.f32 %v5153, 0.5
      %v5282 = vmul.f32 %v5154, 0.5
      %v5283 = vmul.f32 %v5155, 0.5
      %v5284 = vmul.f32 %v5156, 0.5
      %v5285 = vmul.f32 %v5157, 0.5
      %v5286 = vmul.f32 %v5158, 0.5
      %v5287 = vmul.f32 %v5159, 0.5
      %v5288 = vmul.f32 %v5160, 0.5
      %v5289 = vmul.f32 %v5161, 0.5
      %v5290 = vmul.f32 %v5162, 0.5
      %v5291 = vmul.f32 %v5163, 0.5
      %v5292 = vmul.f32 %v5164, 0.5
      %v5293 = vmul.f32 %v5165, 0.5
      %v5294 = vmul.f32 %v5166, 0.5
      %v5295 = vmul.f32 %v5167, 0.5
      %v5296 = vmul.f32 %v5168, 0.5
      %v5297 = vmul.f32 %v5169, 0.5
      %v5298 = vmul.f32 %v5170, 0.5
      %v5299 = vmul.f32 %v5171, 0.5
      %v5300 = vmul.f32 %v5172, 0.5
      %v5301 = vmul.f32 %v5173, 0.5
      %v5302 = vmul.f32 %v5174, 0.5
      %v5303 = vmul.f32 %v5175, 0.5
      %v5304 = vmul.f32 %v5176, 0.5
      %v5305 = vmul.f32 %v5177, 0.5
      %v5306 = vmul.f32 %v5178, 0.5
      %v5307 = vmul.f32 %v5179, 0.5
      %v5308 = vmul.f32 %v5180, 0.5
      %v5309 = vmul.f32 %v5181, 0.5
      %v5310 = vmul.f32 %v5182, 0.5
      %v5311 = vmul.f32 %v5183, 0.5
      %v5312 = vadd.f32 %v5184, %v2478
      %v5313 = vadd.f32 %v5185, %v2479
      %v5314 = vadd.f32 %v5186, %v2480
      %v5315 = vadd.f32 %v5187, %v2481
      %v5316 = vadd.f32 %v5188, %v2482
      %v5317 = vadd.f32 %v5189, %v2483
      %v5318 = vadd.f32 %v5190, %v2484
      %v5319 = vadd.f32 %v5191, %v2485
      %v5320 = vadd.f32 %v5192, %v2486
      %v5321 = vadd.f32 %v5193, %v2487
      %v5322 = vadd.f32 %v5194, %v2488
      %v5323 = vadd.f32 %v5195, %v2489
      %v5324 = vadd.f32 %v5196, %v2490
      %v5325 = vadd.f32 %v5197, %v2491
      %v5326 = vadd.f32 %v5198, %v2492
      %v5327 = vadd.f32 %v5199, %v2493
      %v5328 = vadd.f32 %v5200, %v2494
      %v5329 = vadd.f32 %v5201, %v2495
      %v5330 = vadd.f32 %v5202, %v2496
      %v5331 = vadd.f32 %v5203, %v2497
      %v5332 = vadd.f32 %v5204, %v2498
      %v5333 = vadd.f32 %v5205, %v2499
      %v5334 = vadd.f32 %v5206, %v2500
      %v5335 = vadd.f32 %v5207, %v2501
      %v5336 = vadd.f32 %v5208, %v2502
      %v5337 = vadd.f32 %v5209, %v2503
      %v5338 = vadd.f32 %v5210, %v2504
      %v5339 = vadd.f32 %v5211, %v2505
      %v5340 = vadd.f32 %v5212, %v2506
      %v5341 = vadd.f32 %v5213, %v2507
      %v5342 = vadd.f32 %v5214, %v2508
      %v5343 = vadd.f32 %v5215, %v2509
      %v5344 = vadd.f32 %v5216, %v2510
      %v5345 = vadd.f32 %v5217, %v2511
      %v5346 = vadd.f32 %v5218, %v2512
      %v5347 = vadd.f32 %v5219, %v2513
      %v5348 = vadd.f32 %v5220, %v2514
      %v5349 = vadd.f32 %v5221, %v2515
      %v5350 = vadd.f32 %v5222, %v2516
      %v5351 = vadd.f32 %v5223, %v2517
      %v5352 = vadd.f32 %v5224, %v2518
      %v5353 = vadd.f32 %v5225, %v2519
      %v5354 = vadd.f32 %v5226, %v2520
      %v5355 = vadd.f32 %v5227, %v2521
      %v5356 = vadd.f32 %v5228, %v2522
      %v5357 = vadd.f32 %v5229, %v2523
      %v5358 = vadd.f32 %v5230, %v2524
      %v5359 = vadd.f32 %v5231, %v2525
      %v5360 = vadd.f32 %v5232, %v2526
      %v5361 = vadd.f32 %v5233, %v2527
      %v5362 = vadd.f32 %v5234, %v2528
      %v5363 = vadd.f32 %v5235, %v2529
      %v5364 = vadd.f32 %v5236, %v2530
      %v5365 = vadd.f32 %v5237, %v2531
      %v5366 = vadd.f32 %v5238, %v2532
      %v5367 = vadd.f32 %v5239, %v2533
      %v5368 = vadd.f32 %v5240, %v2534
      %v5369 = vadd.f32 %v5241, %v2535
      %v5370 = vadd.f32 %v5242, %v2536
      %v5371 = vadd.f32 %v5243, %v2537
      %v5372 = vadd.f32 %v5244, %v2538
      %v5373 = vadd.f32 %v5245, %v2539
      %v5374 = vadd.f32 %v5246, %v2540
      %v5375 = vadd.f32 %v5247, %v2541
      %v5376 = vadd.f32 %v5248, %v2542
      %v5377 = vadd.f32 %v5249, %v2543
      %v5378 = vadd.f32 %v5250, %v2544
      %v5379 = vadd.f32 %v5251, %v2545
      %v5380 = vadd.f32 %v5252, %v2546
      %v5381 = vadd.f32 %v5253, %v2547
      %v5382 = vadd.f32 %v5254, %v2548
      %v5383 = vadd.f32 %v5255, %v2549
      %v5384 = vadd.f32 %v5256, %v2550
      %v5385 = vadd.f32 %v5257, %v2551
      %v5386 = vadd.f32 %v5258, %v2552
      %v5387 = vadd.f32 %v5259, %v2553
      %v5388 = vadd.f32 %v5260, %v2554
      %v5389 = vadd.f32 %v5261, %v2555
      %v5390 = vadd.f32 %v5262, %v2556
      %v5391 = vadd.f32 %v5263, %v2557
      %v5392 = vadd.f32 %v5264, %v2558
      %v5393 = vadd.f32 %v5265, %v2559
      %v5394 = vadd.f32 %v5266, %v2560
      %v5395 = vadd.f32 %v5267, %v2561
      %v5396 = vadd.f32 %v5268, %v2562
      %v5397 = vadd.f32 %v5269, %v2563
      %v5398 = vadd.f32 %v5270, %v2564
      %v5399 = vadd.f32 %v5271, %v2565
      %v5400 = vadd.f32 %v5272, %v2566
      %v5401 = vadd.f32 %v5273, %v2567
      %v5402 = vadd.f32 %v5274, %v2568
      %v5403 = vadd.f32 %v5275, %v2569
      %v5404 = vadd.f32 %v5276, %v2570
      %v5405 = vadd.f32 %v5277, %v2571
      %v5406 = vadd.f32 %v5278, %v2572
      %v5407 = vadd.f32 %v5279, %v2573
      %v5408 = vadd.f32 %v5280, %v2574
      %v5409 = vadd.f32 %v5281, %v2575
      %v5410 = vadd.f32 %v5282, %v2576
      %v5411 = vadd.f32 %v5283, %v2577
      %v5412 = vadd.f32 %v5284, %v2578
      %v5413 = vadd.f32 %v5285, %v2579
      %v5414 = vadd.f32 %v5286, %v2580
      %v5415 = vadd.f32 %v5287, %v2581
      %v5416 = vadd.f32 %v5288, %v2582
      %v5417 = vadd.f32 %v5289, %v2583
      %v5418 = vadd.f32 %v5290, %v2584
      %v5419 = vadd.f32 %v5291, %v2585
      %v5420 = vadd.f32 %v5292, %v2586
      %v5421 = vadd.f32 %v5293, %v2587
      %v5422 = vadd.f32 %v5294, %v2588
      %v5423 = vadd.f32 %v5295, %v2589
      %v5424 = vadd.f32 %v5296, %v2590
      %v5425 = vadd.f32 %v5297, %v2591
      %v5426 = vadd.f32 %v5298, %v2592
      %v5427 = vadd.f32 %v5299, %v2593
      %v5428 = vadd.f32 %v5300, %v2594
      %v5429 = vadd.f32 %v5301, %v2595
      %v5430 = vadd.f32 %v5302, %v2596
      %v5431 = vadd.f32 %v5303, %v2597
      %v5432 = vadd.f32 %v5304, %v2598
      %v5433 = vadd.f32 %v5305, %v2599
      %v5434 = vadd.f32 %v5306, %v2600
      %v5435 = vadd.f32 %v5307, %v2601
      %v5436 = vadd.f32 %v5308, %v2602
      %v5437 = vadd.f32 %v5309, %v2603
      %v5438 = vadd.f32 %v5310, %v2604
      %v5439 = vadd.f32 %v5311, %v2605
      %v5440 = vpack.c.bf16 %v5313, %v5312
      %v5441 = vpack.c.bf16 %v5315, %v5314
      %v5442 = vpack.c.bf16 %v5317, %v5316
      %v5443 = vpack.c.bf16 %v5319, %v5318
      %v5444 = vpack.c.bf16 %v5321, %v5320
      %v5445 = vpack.c.bf16 %v5323, %v5322
      %v5446 = vpack.c.bf16 %v5325, %v5324
      %v5447 = vpack.c.bf16 %v5327, %v5326
      %v5448 = vpack.c.bf16 %v5329, %v5328
      %v5449 = vpack.c.bf16 %v5331, %v5330
      %v5450 = vpack.c.bf16 %v5333, %v5332
      %v5451 = vpack.c.bf16 %v5335, %v5334
      %v5452 = vpack.c.bf16 %v5337, %v5336
      %v5453 = vpack.c.bf16 %v5339, %v5338
      %v5454 = vpack.c.bf16 %v5341, %v5340
      %v5455 = vpack.c.bf16 %v5343, %v5342
      %v5456 = vpack.c.bf16 %v5345, %v5344
      %v5457 = vpack.c.bf16 %v5347, %v5346
      %v5458 = vpack.c.bf16 %v5349, %v5348
      %v5459 = vpack.c.bf16 %v5351, %v5350
      %v5460 = vpack.c.bf16 %v5353, %v5352
      %v5461 = vpack.c.bf16 %v5355, %v5354
      %v5462 = vpack.c.bf16 %v5357, %v5356
      %v5463 = vpack.c.bf16 %v5359, %v5358
      %v5464 = vpack.c.bf16 %v5361, %v5360
      %v5465 = vpack.c.bf16 %v5363, %v5362
      %v5466 = vpack.c.bf16 %v5365, %v5364
      %v5467 = vpack.c.bf16 %v5367, %v5366
      %v5468 = vpack.c.bf16 %v5369, %v5368
      %v5469 = vpack.c.bf16 %v5371, %v5370
      %v5470 = vpack.c.bf16 %v5373, %v5372
      %v5471 = vpack.c.bf16 %v5375, %v5374
      %v5472 = vpack.c.bf16 %v5377, %v5376
      %v5473 = vpack.c.bf16 %v5379, %v5378
      %v5474 = vpack.c.bf16 %v5381, %v5380
      %v5475 = vpack.c.bf16 %v5383, %v5382
      %v5476 = vpack.c.bf16 %v5385, %v5384
      %v5477 = vpack.c.bf16 %v5387, %v5386
      %v5478 = vpack.c.bf16 %v5389, %v5388
      %v5479 = vpack.c.bf16 %v5391, %v5390
      %v5480 = vpack.c.bf16 %v5393, %v5392
      %v5481 = vpack.c.bf16 %v5395, %v5394
      %v5482 = vpack.c.bf16 %v5397, %v5396
      %v5483 = vpack.c.bf16 %v5399, %v5398
      %v5484 = vpack.c.bf16 %v5401, %v5400
      %v5485 = vpack.c.bf16 %v5403, %v5402
      %v5486 = vpack.c.bf16 %v5405, %v5404
      %v5487 = vpack.c.bf16 %v5407, %v5406
      %v5488 = vpack.c.bf16 %v5409, %v5408
      %v5489 = vpack.c.bf16 %v5411, %v5410
      %v5490 = vpack.c.bf16 %v5413, %v5412
      %v5491 = vpack.c.bf16 %v5415, %v5414
      %v5492 = vpack.c.bf16 %v5417, %v5416
      %v5493 = vpack.c.bf16 %v5419, %v5418
      %v5494 = vpack.c.bf16 %v5421, %v5420
      %v5495 = vpack.c.bf16 %v5423, %v5422
      %v5496 = vpack.c.bf16 %v5425, %v5424
      %v5497 = vpack.c.bf16 %v5427, %v5426
      %v5498 = vpack.c.bf16 %v5429, %v5428
      %v5499 = vpack.c.bf16 %v5431, %v5430
      %v5500 = vpack.c.bf16 %v5433, %v5432
      %v5501 = vpack.c.bf16 %v5435, %v5434
      %v5502 = vpack.c.bf16 %v5437, %v5436
      %v5503 = vpack.c.bf16 %v5439, %v5438
      %s5504 = scalar_lea.vmem %s3, 56
      %v5505 = vld [vmem:[%s5504] sm:$0xf]
      %v5506 = vld [vmem:[%s5504 + $0x4] sm:$0xf]
      %v5507 = vld [vmem:[%s5504 + $0x8] sm:$0xf]
      %v5508 = vld [vmem:[%s5504 + $0xc] sm:$0xf]
      %v5509 = vld [vmem:[%s5504 + $0x10] sm:$0xf]
      %v5510 = vld [vmem:[%s5504 + $0x14] sm:$0xf]
      %v5511 = vld [vmem:[%s5504 + $0x18] sm:$0x1]
      %s5512 = scalar_lea.vmem %s4, 2
      %v5513 = vld [vmem:[%s5512] sm:$0x1]
      %v5515 = vlaneseq
      %v5516 = vshrl.u32 %v5515, 7
      %v5517 = vsub.s32 0, %v5516
      %v5518 = vrot.slane %v5513, %v5517
      %v5527 = vunpack.c.l.b16 %v5505
      %v5528 = vunpack.c.l.b16 %v5506
      %v5529 = vunpack.c.l.b16 %v5507
      %v5530 = vunpack.c.l.b16 %v5508
      %v5531 = vunpack.c.l.b16 %v5509
      %v5532 = vunpack.c.l.b16 %v5510
      %v5533 = vunpack.c.l.b16 %v5511
      %v5534 = vpack.c.b16 %v5528, %v5527
      %v5535 = vpack.c.b16 %v5530, %v5529
      %v5536 = vpack.c.b16 %v5532, %v5531
      %v5537 = vpack.c.b16 %v5533, %v5533
      %v5542 = vsel %vm2705, %v5440, 0
      %v5545 = vsel %vm2705, %v5441, 0
      %v5548 = vsel %vm2705, %v5442, 0
      %v5551 = vsel %vm2705, %v5443, 0
      %v5554 = vsel %vm2705, %v5444, 0
      %v5557 = vsel %vm2705, %v5445, 0
      %v5560 = vsel %vm2705, %v5446, 0
      %v5563 = vsel %vm2705, %v5447, 0
      %v5566 = vsel %vm2705, %v5448, 0
      %v5569 = vsel %vm2705, %v5449, 0
      %v5572 = vsel %vm2705, %v5450, 0
      %v5575 = vsel %vm2705, %v5451, 0
      %v5578 = vsel %vm2705, %v5452, 0
      %v5581 = vsel %vm2705, %v5453, 0
      %v5584 = vsel %vm2705, %v5454, 0
      %v5587 = vsel %vm2705, %v5455, 0
      %v5590 = vsel %vm2705, %v5456, 0
      %v5593 = vsel %vm2705, %v5457, 0
      %v5596 = vsel %vm2705, %v5458, 0
      %v5599 = vsel %vm2705, %v5459, 0
      %v5602 = vsel %vm2705, %v5460, 0
      %v5605 = vsel %vm2705, %v5461, 0
      %v5608 = vsel %vm2705, %v5462, 0
      %v5611 = vsel %vm2705, %v5463, 0
      %v5614 = vsel %vm2705, %v5464, 0
      %v5617 = vsel %vm2705, %v5465, 0
      %v5620 = vsel %vm2705, %v5466, 0
      %v5623 = vsel %vm2705, %v5467, 0
      %v5626 = vsel %vm2705, %v5468, 0
      %v5629 = vsel %vm2705, %v5469, 0
      %v5632 = vsel %vm2705, %v5470, 0
      %v5635 = vsel %vm2705, %v5471, 0
      %v5638 = vsel %vm2705, %v5472, 0
      %v5641 = vsel %vm2705, %v5473, 0
      %v5644 = vsel %vm2705, %v5474, 0
      %v5647 = vsel %vm2705, %v5475, 0
      %v5650 = vsel %vm2705, %v5476, 0
      %v5653 = vsel %vm2705, %v5477, 0
      %v5656 = vsel %vm2705, %v5478, 0
      %v5659 = vsel %vm2705, %v5479, 0
      %v5662 = vsel %vm2705, %v5480, 0
      %v5665 = vsel %vm2705, %v5481, 0
      %v5668 = vsel %vm2705, %v5482, 0
      %v5671 = vsel %vm2705, %v5483, 0
      %v5674 = vsel %vm2705, %v5484, 0
      %v5677 = vsel %vm2705, %v5485, 0
      %v5680 = vsel %vm2705, %v5486, 0
      %v5683 = vsel %vm2705, %v5487, 0
      %v5686 = vsel %vm2705, %v5488, 0
      %v5689 = vsel %vm2705, %v5489, 0
      %v5692 = vsel %vm2705, %v5490, 0
      %v5695 = vsel %vm2705, %v5491, 0
      %v5698 = vsel %vm2705, %v5492, 0
      %v5701 = vsel %vm2705, %v5493, 0
      %v5704 = vsel %vm2705, %v5494, 0
      %v5707 = vsel %vm2705, %v5495, 0
      %v5710 = vsel %vm2705, %v5496, 0
      %v5713 = vsel %vm2705, %v5497, 0
      %v5716 = vsel %vm2705, %v5498, 0
      %v5719 = vsel %vm2705, %v5499, 0
      %v5722 = vsel %vm2705, %v5500, 0
      %v5725 = vsel %vm2705, %v5501, 0
      %v5728 = vsel %vm2705, %v5502, 0
      %v5731 = vsel %vm2705, %v5503, 0
      %v5734 = vsel %vm2898, %v5537, 0
      %5736 = vmatprep.subr.bf16.mxu0 0
      %5737 = vmatpush1.bf16.msra.mxu0 %v5534
      %5738 = vmatprep.subr.bf16.mxu0 0
      %5739 = vmatpush1.bf16.msra.mxu0 %v5535
      %5740 = vmatprep.subr.bf16.mxu0 0
      %5741 = vmatpush1.bf16.msra.mxu0 %v5536
      %5742 = vmatprep.subr.bf16.mxu0 0
      %5743 = vmatpush1.bf16.msra.mxu0 %v5734
      %5744 = vmatprep.subr.bf16.mxu0 0
      %5745 = vmatpush1.bf16.msra.mxu0 0
      %5746 = vmatprep.subr.bf16.mxu0 0
      %5747 = vmatpush1.bf16.msra.mxu0 0
      %5748 = vmatprep.subr.bf16.mxu0 0
      %5749 = vmatpush1.bf16.msra.mxu0 0
      %5750 = vmatprep.subr.bf16.mxu0 0
      %5751 = vmatpush1.bf16.msra.mxu0 0
      %5752 = vmatprep.subr.bf16.mxu0 0
      %5753 = vmatpush1.bf16.msra.mxu0 0
      %5754 = vmatprep.subr.bf16.mxu0 0
      %5755 = vmatpush1.bf16.msra.mxu0 0
      %5756 = vmatprep.subr.bf16.mxu0 0
      %5757 = vmatpush1.bf16.msra.mxu0 0
      %5758 = vmatprep.subr.bf16.mxu0 0
      %5759 = vmatpush1.bf16.msra.mxu0 0
      %5760 = vmatprep.subr.bf16.mxu0 0
      %5761 = vmatpush1.bf16.msra.mxu0 0
      %5762 = vmatprep.subr.bf16.mxu0 0
      %5763 = vmatpush1.bf16.msra.mxu0 0
      %5764 = vmatprep.subr.bf16.mxu0 0
      %5765 = vmatpush1.bf16.msra.mxu0 0
      %5766 = vmatprep.subr.bf16.mxu0 0
      %5767 = vmatpush1.bf16.msra.mxu0 0
      %5768 = vmatprep.mubr.bf16.mxu0 0
      %5769 = vmatmul.mubr.bf16.gmra.mrb[0].mxu0 %v5542
      %v5770 = vpop.f32.mrb[0].mxu0
      %v5771 = vadd.f32 %v5518, %v5770
      %v5772 = vpop.f32.mrb[0].mxu0
      %v5773 = vpop.f32.mrb[0].mxu0
      %v5774 = vadd.f32 %v5518, %v5773
      %v5775 = vpop.f32.mrb[0].mxu0
      %5776 = vmatprep.mubr.bf16.mxu0 0
      %5777 = vmatmul.mubr.bf16.gmra.mrb[0].mxu0 %v5545
      %v5778 = vpop.f32.mrb[0].mxu0
      %v5779 = vadd.f32 %v5518, %v5778
      %v5780 = vpop.f32.mrb[0].mxu0
      %v5781 = vpop.f32.mrb[0].mxu0
      %v5782 = vadd.f32 %v5518, %v5781
      %v5783 = vpop.f32.mrb[0].mxu0
      %5784 = vmatprep.mubr.bf16.mxu0 0
      %5785 = vmatmul.mubr.bf16.gmra.mrb[0].mxu0 %v5548
      %v5786 = vpop.f32.mrb[0].mxu0
      %v5787 = vadd.f32 %v5518, %v5786
      %v5788 = vpop.f32.mrb[0].mxu0
      %v5789 = vpop.f32.mrb[0].mxu0
      %v5790 = vadd.f32 %v5518, %v5789
      %v5791 = vpop.f32.mrb[0].mxu0
      %5792 = vmatprep.mubr.bf16.mxu0 0
      %5793 = vmatmul.mubr.bf16.gmra.mrb[0].mxu0 %v5551
      %v5794 = vpop.f32.mrb[0].mxu0
      %v5795 = vadd.f32 %v5518, %v5794
      %v5796 = vpop.f32.mrb[0].mxu0
      %v5797 = vpop.f32.mrb[0].mxu0
      %v5798 = vadd.f32 %v5518, %v5797
      %v5799 = vpop.f32.mrb[0].mxu0
      %5800 = vmatprep.mubr.bf16.mxu0 0
      %5801 = vmatmul.mubr.bf16.gmra.mrb[0].mxu0 %v5554
      %v5802 = vpop.f32.mrb[0].mxu0
      %v5803 = vadd.f32 %v5518, %v5802
      %v5804 = vpop.f32.mrb[0].mxu0
      %v5805 = vpop.f32.mrb[0].mxu0
      %v5806 = vadd.f32 %v5518, %v5805
      %v5807 = vpop.f32.mrb[0].mxu0
      %5808 = vmatprep.mubr.bf16.mxu0 0
      %5809 = vmatmul.mubr.bf16.gmra.mrb[0].mxu0 %v5557
      %v5810 = vpop.f32.mrb[0].mxu0
      %v5811 = vadd.f32 %v5518, %v5810
      %v5812 = vpop.f32.mrb[0].mxu0
      %v5813 = vpop.f32.mrb[0].mxu0
      %v5814 = vadd.f32 %v5518, %v5813
      %v5815 = vpop.f32.mrb[0].mxu0
      %5816 = vmatprep.mubr.bf16.mxu0 0
      %5817 = vmatmul.mubr.bf16.gmra.mrb[0].mxu0 %v5560
      %v5818 = vpop.f32.mrb[0].mxu0
      %v5819 = vadd.f32 %v5518, %v5818
      %v5820 = vpop.f32.mrb[0].mxu0
      %v5821 = vpop.f32.mrb[0].mxu0
      %v5822 = vadd.f32 %v5518, %v5821
      %v5823 = vpop.f32.mrb[0].mxu0
      %5824 = vmatprep.mubr.bf16.mxu0 0
      %5825 = vmatmul.mubr.bf16.gmra.mrb[0].mxu0 %v5563
      %v5826 = vpop.f32.mrb[0].mxu0
      %v5827 = vadd.f32 %v5518, %v5826
      %v5828 = vpop.f32.mrb[0].mxu0
      %v5829 = vpop.f32.mrb[0].mxu0
      %v5830 = vadd.f32 %v5518, %v5829
      %v5831 = vpop.f32.mrb[0].mxu0
      %5832 = vmatprep.mubr.bf16.mxu0 0
      %5833 = vmatmul.mubr.bf16.gmra.mrb[0].mxu0 %v5566
      %v5834 = vpop.f32.mrb[0].mxu0
      %v5835 = vadd.f32 %v5518, %v5834
      %v5836 = vpop.f32.mrb[0].mxu0
      %v5837 = vpop.f32.mrb[0].mxu0
      %v5838 = vadd.f32 %v5518, %v5837
      %v5839 = vpop.f32.mrb[0].mxu0
      %5840 = vmatprep.mubr.bf16.mxu0 0
      %5841 = vmatmul.mubr.bf16.gmra.mrb[0].mxu0 %v5569
      %v5842 = vpop.f32.mrb[0].mxu0
      %v5843 = vadd.f32 %v5518, %v5842
      %v5844 = vpop.f32.mrb[0].mxu0
      %v5845 = vpop.f32.mrb[0].mxu0
      %v5846 = vadd.f32 %v5518, %v5845
      %v5847 = vpop.f32.mrb[0].mxu0
      %5848 = vmatprep.mubr.bf16.mxu0 0
      %5849 = vmatmul.mubr.bf16.gmra.mrb[0].mxu0 %v5572
      %v5850 = vpop.f32.mrb[0].mxu0
      %v5851 = vadd.f32 %v5518, %v5850
      %v5852 = vpop.f32.mrb[0].mxu0
      %v5853 = vpop.f32.mrb[0].mxu0
      %v5854 = vadd.f32 %v5518, %v5853
      %v5855 = vpop.f32.mrb[0].mxu0
      %5856 = vmatprep.mubr.bf16.mxu0 0
      %5857 = vmatmul.mubr.bf16.gmra.mrb[0].mxu0 %v5575
      %v5858 = vpop.f32.mrb[0].mxu0
      %v5859 = vadd.f32 %v5518, %v5858
      %v5860 = vpop.f32.mrb[0].mxu0
      %v5861 = vpop.f32.mrb[0].mxu0
      %v5862 = vadd.f32 %v5518, %v5861
      %v5863 = vpop.f32.mrb[0].mxu0
      %5864 = vmatprep.mubr.bf16.mxu0 0
      %5865 = vmatmul.mubr.bf16.gmra.mrb[0].mxu0 %v5578
      %v5866 = vpop.f32.mrb[0].mxu0
      %v5867 = vadd.f32 %v5518, %v5866
      %v5868 = vpop.f32.mrb[0].mxu0
      %v5869 = vpop.f32.mrb[0].mxu0
      %v5870 = vadd.f32 %v5518, %v5869
      %v5871 = vpop.f32.mrb[0].mxu0
      %5872 = vmatprep.mubr.bf16.mxu0 0
      %5873 = vmatmul.mubr.bf16.gmra.mrb[0].mxu0 %v5581
      %v5874 = vpop.f32.mrb[0].mxu0
      %v5875 = vadd.f32 %v5518, %v5874
      %v5876 = vpop.f32.mrb[0].mxu0
      %v5877 = vpop.f32.mrb[0].mxu0
      %v5878 = vadd.f32 %v5518, %v5877
      %v5879 = vpop.f32.mrb[0].mxu0
      %5880 = vmatprep.mubr.bf16.mxu0 0
      %5881 = vmatmul.mubr.bf16.gmra.mrb[0].mxu0 %v5584
      %v5882 = vpop.f32.mrb[0].mxu0
      %v5883 = vadd.f32 %v5518, %v5882
      %v5884 = vpop.f32.mrb[0].mxu0
      %v5885 = vpop.f32.mrb[0].mxu0
      %v5886 = vadd.f32 %v5518, %v5885
      %v5887 = vpop.f32.mrb[0].mxu0
      %5888 = vmatprep.mubr.bf16.mxu0 0
      %5889 = vmatmul.mubr.bf16.gmra.mrb[0].mxu0 %v5587
      %v5890 = vpop.f32.mrb[0].mxu0
      %v5891 = vadd.f32 %v5518, %v5890
      %v5892 = vpop.f32.mrb[0].mxu0
      %v5893 = vpop.f32.mrb[0].mxu0
      %v5894 = vadd.f32 %v5518, %v5893
      %v5895 = vpop.f32.mrb[0].mxu0
      %5896 = vmatprep.mubr.bf16.mxu0 0
      %5897 = vmatmul.mubr.bf16.gmra.mrb[0].mxu0 %v5590
      %v5898 = vpop.f32.mrb[0].mxu0
      %v5899 = vadd.f32 %v5518, %v5898
      %v5900 = vpop.f32.mrb[0].mxu0
      %v5901 = vpop.f32.mrb[0].mxu0
      %v5902 = vadd.f32 %v5518, %v5901
      %v5903 = vpop.f32.mrb[0].mxu0
      %5904 = vmatprep.mubr.bf16.mxu0 0
      %5905 = vmatmul.mubr.bf16.gmra.mrb[0].mxu0 %v5593
      %v5906 = vpop.f32.mrb[0].mxu0
      %v5907 = vadd.f32 %v5518, %v5906
      %v5908 = vpop.f32.mrb[0].mxu0
      %v5909 = vpop.f32.mrb[0].mxu0
      %v5910 = vadd.f32 %v5518, %v5909
      %v5911 = vpop.f32.mrb[0].mxu0
      %5912 = vmatprep.mubr.bf16.mxu0 0
      %5913 = vmatmul.mubr.bf16.gmra.mrb[0].mxu0 %v5596
      %v5914 = vpop.f32.mrb[0].mxu0
      %v5915 = vadd.f32 %v5518, %v5914
      %v5916 = vpop.f32.mrb[0].mxu0
      %v5917 = vpop.f32.mrb[0].mxu0
      %v5918 = vadd.f32 %v5518, %v5917
      %v5919 = vpop.f32.mrb[0].mxu0
      %5920 = vmatprep.mubr.bf16.mxu0 0
      %5921 = vmatmul.mubr.bf16.gmra.mrb[0].mxu0 %v5599
      %v5922 = vpop.f32.mrb[0].mxu0
      %v5923 = vadd.f32 %v5518, %v5922
      %v5924 = vpop.f32.mrb[0].mxu0
      %v5925 = vpop.f32.mrb[0].mxu0
      %v5926 = vadd.f32 %v5518, %v5925
      %v5927 = vpop.f32.mrb[0].mxu0
      %5928 = vmatprep.mubr.bf16.mxu0 0
      %5929 = vmatmul.mubr.bf16.gmra.mrb[0].mxu0 %v5602
      %v5930 = vpop.f32.mrb[0].mxu0
      %v5931 = vadd.f32 %v5518, %v5930
      %v5932 = vpop.f32.mrb[0].mxu0
      %v5933 = vpop.f32.mrb[0].mxu0
      %v5934 = vadd.f32 %v5518, %v5933
      %v5935 = vpop.f32.mrb[0].mxu0
      %5936 = vmatprep.mubr.bf16.mxu0 0
      %5937 = vmatmul.mubr.bf16.gmra.mrb[0].mxu0 %v5605
      %v5938 = vpop.f32.mrb[0].mxu0
      %v5939 = vadd.f32 %v5518, %v5938
      %v5940 = vpop.f32.mrb[0].mxu0
      %v5941 = vpop.f32.mrb[0].mxu0
      %v5942 = vadd.f32 %v5518, %v5941
      %v5943 = vpop.f32.mrb[0].mxu0
      %5944 = vmatprep.mubr.bf16.mxu0 0
      %5945 = vmatmul.mubr.bf16.gmra.mrb[0].mxu0 %v5608
      %v5946 = vpop.f32.mrb[0].mxu0
      %v5947 = vadd.f32 %v5518, %v5946
      %v5948 = vpop.f32.mrb[0].mxu0
      %v5949 = vpop.f32.mrb[0].mxu0
      %v5950 = vadd.f32 %v5518, %v5949
      %v5951 = vpop.f32.mrb[0].mxu0
      %5952 = vmatprep.mubr.bf16.mxu0 0
      %5953 = vmatmul.mubr.bf16.gmra.mrb[0].mxu0 %v5611
      %v5954 = vpop.f32.mrb[0].mxu0
      %v5955 = vadd.f32 %v5518, %v5954
      %v5956 = vpop.f32.mrb[0].mxu0
      %v5957 = vpop.f32.mrb[0].mxu0
      %v5958 = vadd.f32 %v5518, %v5957
      %v5959 = vpop.f32.mrb[0].mxu0
      %5960 = vmatprep.mubr.bf16.mxu0 0
      %5961 = vmatmul.mubr.bf16.gmra.mrb[0].mxu0 %v5614
      %v5962 = vpop.f32.mrb[0].mxu0
      %v5963 = vadd.f32 %v5518, %v5962
      %v5964 = vpop.f32.mrb[0].mxu0
      %v5965 = vpop.f32.mrb[0].mxu0
      %v5966 = vadd.f32 %v5518, %v5965
      %v5967 = vpop.f32.mrb[0].mxu0
      %5968 = vmatprep.mubr.bf16.mxu0 0
      %5969 = vmatmul.mubr.bf16.gmra.mrb[0].mxu0 %v5617
      %v5970 = vpop.f32.mrb[0].mxu0
      %v5971 = vadd.f32 %v5518, %v5970
      %v5972 = vpop.f32.mrb[0].mxu0
      %v5973 = vpop.f32.mrb[0].mxu0
      %v5974 = vadd.f32 %v5518, %v5973
      %v5975 = vpop.f32.mrb[0].mxu0
      %5976 = vmatprep.mubr.bf16.mxu0 0
      %5977 = vmatmul.mubr.bf16.gmra.mrb[0].mxu0 %v5620
      %v5978 = vpop.f32.mrb[0].mxu0
      %v5979 = vadd.f32 %v5518, %v5978
      %v5980 = vpop.f32.mrb[0].mxu0
      %v5981 = vpop.f32.mrb[0].mxu0
      %v5982 = vadd.f32 %v5518, %v5981
      %v5983 = vpop.f32.mrb[0].mxu0
      %5984 = vmatprep.mubr.bf16.mxu0 0
      %5985 = vmatmul.mubr.bf16.gmra.mrb[0].mxu0 %v5623
      %v5986 = vpop.f32.mrb[0].mxu0
      %v5987 = vadd.f32 %v5518, %v5986
      %v5988 = vpop.f32.mrb[0].mxu0
      %v5989 = vpop.f32.mrb[0].mxu0
      %v5990 = vadd.f32 %v5518, %v5989
      %v5991 = vpop.f32.mrb[0].mxu0
      %5992 = vmatprep.mubr.bf16.mxu0 0
      %5993 = vmatmul.mubr.bf16.gmra.mrb[0].mxu0 %v5626
      %v5994 = vpop.f32.mrb[0].mxu0
      %v5995 = vadd.f32 %v5518, %v5994
      %v5996 = vpop.f32.mrb[0].mxu0
      %v5997 = vpop.f32.mrb[0].mxu0
      %v5998 = vadd.f32 %v5518, %v5997
      %v5999 = vpop.f32.mrb[0].mxu0
      %6000 = vmatprep.mubr.bf16.mxu0 0
      %6001 = vmatmul.mubr.bf16.gmra.mrb[0].mxu0 %v5629
      %v6002 = vpop.f32.mrb[0].mxu0
      %v6003 = vadd.f32 %v5518, %v6002
      %v6004 = vpop.f32.mrb[0].mxu0
      %v6005 = vpop.f32.mrb[0].mxu0
      %v6006 = vadd.f32 %v5518, %v6005
      %v6007 = vpop.f32.mrb[0].mxu0
      %6008 = vmatprep.mubr.bf16.mxu0 0
      %6009 = vmatmul.mubr.bf16.gmra.mrb[0].mxu0 %v5632
      %v6010 = vpop.f32.mrb[0].mxu0
      %v6011 = vadd.f32 %v5518, %v6010
      %v6012 = vpop.f32.mrb[0].mxu0
      %v6013 = vpop.f32.mrb[0].mxu0
      %v6014 = vadd.f32 %v5518, %v6013
      %v6015 = vpop.f32.mrb[0].mxu0
      %6016 = vmatprep.mubr.bf16.mxu0 0
      %6017 = vmatmul.mubr.bf16.gmra.mrb[0].mxu0 %v5635
      %v6018 = vpop.f32.mrb[0].mxu0
      %v6019 = vadd.f32 %v5518, %v6018
      %v6020 = vpop.f32.mrb[0].mxu0
      %v6021 = vpop.f32.mrb[0].mxu0
      %v6022 = vadd.f32 %v5518, %v6021
      %v6023 = vpop.f32.mrb[0].mxu0
      %6024 = vmatprep.mubr.bf16.mxu0 0
      %6025 = vmatmul.mubr.bf16.gmra.mrb[0].mxu0 %v5638
      %v6026 = vpop.f32.mrb[0].mxu0
      %v6027 = vadd.f32 %v5518, %v6026
      %v6028 = vpop.f32.mrb[0].mxu0
      %v6029 = vpop.f32.mrb[0].mxu0
      %v6030 = vadd.f32 %v5518, %v6029
      %v6031 = vpop.f32.mrb[0].mxu0
      %6032 = vmatprep.mubr.bf16.mxu0 0
      %6033 = vmatmul.mubr.bf16.gmra.mrb[0].mxu0 %v5641
      %v6034 = vpop.f32.mrb[0].mxu0
      %v6035 = vadd.f32 %v5518, %v6034
      %v6036 = vpop.f32.mrb[0].mxu0
      %v6037 = vpop.f32.mrb[0].mxu0
      %v6038 = vadd.f32 %v5518, %v6037
      %v6039 = vpop.f32.mrb[0].mxu0
      %6040 = vmatprep.mubr.bf16.mxu0 0
      %6041 = vmatmul.mubr.bf16.gmra.mrb[0].mxu0 %v5644
      %v6042 = vpop.f32.mrb[0].mxu0
      %v6043 = vadd.f32 %v5518, %v6042
      %v6044 = vpop.f32.mrb[0].mxu0
      %v6045 = vpop.f32.mrb[0].mxu0
      %v6046 = vadd.f32 %v5518, %v6045
      %v6047 = vpop.f32.mrb[0].mxu0
      %6048 = vmatprep.mubr.bf16.mxu0 0
      %6049 = vmatmul.mubr.bf16.gmra.mrb[0].mxu0 %v5647
      %v6050 = vpop.f32.mrb[0].mxu0
      %v6051 = vadd.f32 %v5518, %v6050
      %v6052 = vpop.f32.mrb[0].mxu0
      %v6053 = vpop.f32.mrb[0].mxu0
      %v6054 = vadd.f32 %v5518, %v6053
      %v6055 = vpop.f32.mrb[0].mxu0
      %6056 = vmatprep.mubr.bf16.mxu0 0
      %6057 = vmatmul.mubr.bf16.gmra.mrb[0].mxu0 %v5650
      %v6058 = vpop.f32.mrb[0].mxu0
      %v6059 = vadd.f32 %v5518, %v6058
      %v6060 = vpop.f32.mrb[0].mxu0
      %v6061 = vpop.f32.mrb[0].mxu0
      %v6062 = vadd.f32 %v5518, %v6061
      %v6063 = vpop.f32.mrb[0].mxu0
      %6064 = vmatprep.mubr.bf16.mxu0 0
      %6065 = vmatmul.mubr.bf16.gmra.mrb[0].mxu0 %v5653
      %v6066 = vpop.f32.mrb[0].mxu0
      %v6067 = vadd.f32 %v5518, %v6066
      %v6068 = vpop.f32.mrb[0].mxu0
      %v6069 = vpop.f32.mrb[0].mxu0
      %v6070 = vadd.f32 %v5518, %v6069
      %v6071 = vpop.f32.mrb[0].mxu0
      %6072 = vmatprep.mubr.bf16.mxu0 0
      %6073 = vmatmul.mubr.bf16.gmra.mrb[0].mxu0 %v5656
      %v6074 = vpop.f32.mrb[0].mxu0
      %v6075 = vadd.f32 %v5518, %v6074
      %v6076 = vpop.f32.mrb[0].mxu0
      %v6077 = vpop.f32.mrb[0].mxu0
      %v6078 = vadd.f32 %v5518, %v6077
      %v6079 = vpop.f32.mrb[0].mxu0
      %6080 = vmatprep.mubr.bf16.mxu0 0
      %6081 = vmatmul.mubr.bf16.gmra.mrb[0].mxu0 %v5659
      %v6082 = vpop.f32.mrb[0].mxu0
      %v6083 = vadd.f32 %v5518, %v6082
      %v6084 = vpop.f32.mrb[0].mxu0
      %v6085 = vpop.f32.mrb[0].mxu0
      %v6086 = vadd.f32 %v5518, %v6085
      %v6087 = vpop.f32.mrb[0].mxu0
      %6088 = vmatprep.mubr.bf16.mxu0 0
      %6089 = vmatmul.mubr.bf16.gmra.mrb[0].mxu0 %v5662
      %v6090 = vpop.f32.mrb[0].mxu0
      %v6091 = vadd.f32 %v5518, %v6090
      %v6092 = vpop.f32.mrb[0].mxu0
      %v6093 = vpop.f32.mrb[0].mxu0
      %v6094 = vadd.f32 %v5518, %v6093
      %v6095 = vpop.f32.mrb[0].mxu0
      %6096 = vmatprep.mubr.bf16.mxu0 0
      %6097 = vmatmul.mubr.bf16.gmra.mrb[0].mxu0 %v5665
      %v6098 = vpop.f32.mrb[0].mxu0
      %v6099 = vadd.f32 %v5518, %v6098
      %v6100 = vpop.f32.mrb[0].mxu0
      %v6101 = vpop.f32.mrb[0].mxu0
      %v6102 = vadd.f32 %v5518, %v6101
      %v6103 = vpop.f32.mrb[0].mxu0
      %6104 = vmatprep.mubr.bf16.mxu0 0
      %6105 = vmatmul.mubr.bf16.gmra.mrb[0].mxu0 %v5668
      %v6106 = vpop.f32.mrb[0].mxu0
      %v6107 = vadd.f32 %v5518, %v6106
      %v6108 = vpop.f32.mrb[0].mxu0
      %v6109 = vpop.f32.mrb[0].mxu0
      %v6110 = vadd.f32 %v5518, %v6109
      %v6111 = vpop.f32.mrb[0].mxu0
      %6112 = vmatprep.mubr.bf16.mxu0 0
      %6113 = vmatmul.mubr.bf16.gmra.mrb[0].mxu0 %v5671
      %v6114 = vpop.f32.mrb[0].mxu0
      %v6115 = vadd.f32 %v5518, %v6114
      %v6116 = vpop.f32.mrb[0].mxu0
      %v6117 = vpop.f32.mrb[0].mxu0
      %v6118 = vadd.f32 %v5518, %v6117
      %v6119 = vpop.f32.mrb[0].mxu0
      %6120 = vmatprep.mubr.bf16.mxu0 0
      %6121 = vmatmul.mubr.bf16.gmra.mrb[0].mxu0 %v5674
      %v6122 = vpop.f32.mrb[0].mxu0
      %v6123 = vadd.f32 %v5518, %v6122
      %v6124 = vpop.f32.mrb[0].mxu0
      %v6125 = vpop.f32.mrb[0].mxu0
      %v6126 = vadd.f32 %v5518, %v6125
      %v6127 = vpop.f32.mrb[0].mxu0
      %6128 = vmatprep.mubr.bf16.mxu0 0
      %6129 = vmatmul.mubr.bf16.gmra.mrb[0].mxu0 %v5677
      %v6130 = vpop.f32.mrb[0].mxu0
      %v6131 = vadd.f32 %v5518, %v6130
      %v6132 = vpop.f32.mrb[0].mxu0
      %v6133 = vpop.f32.mrb[0].mxu0
      %v6134 = vadd.f32 %v5518, %v6133
      %v6135 = vpop.f32.mrb[0].mxu0
      %6136 = vmatprep.mubr.bf16.mxu0 0
      %6137 = vmatmul.mubr.bf16.gmra.mrb[0].mxu0 %v5680
      %v6138 = vpop.f32.mrb[0].mxu0
      %v6139 = vadd.f32 %v5518, %v6138
      %v6140 = vpop.f32.mrb[0].mxu0
      %v6141 = vpop.f32.mrb[0].mxu0
      %v6142 = vadd.f32 %v5518, %v6141
      %v6143 = vpop.f32.mrb[0].mxu0
      %6144 = vmatprep.mubr.bf16.mxu0 0
      %6145 = vmatmul.mubr.bf16.gmra.mrb[0].mxu0 %v5683
      %v6146 = vpop.f32.mrb[0].mxu0
      %v6147 = vadd.f32 %v5518, %v6146
      %v6148 = vpop.f32.mrb[0].mxu0
      %v6149 = vpop.f32.mrb[0].mxu0
      %v6150 = vadd.f32 %v5518, %v6149
      %v6151 = vpop.f32.mrb[0].mxu0
      %6152 = vmatprep.mubr.bf16.mxu0 0
      %6153 = vmatmul.mubr.bf16.gmra.mrb[0].mxu0 %v5686
      %v6154 = vpop.f32.mrb[0].mxu0
      %v6155 = vadd.f32 %v5518, %v6154
      %v6156 = vpop.f32.mrb[0].mxu0
      %v6157 = vpop.f32.mrb[0].mxu0
      %v6158 = vadd.f32 %v5518, %v6157
      %v6159 = vpop.f32.mrb[0].mxu0
      %6160 = vmatprep.mubr.bf16.mxu0 0
      %6161 = vmatmul.mubr.bf16.gmra.mrb[0].mxu0 %v5689
      %v6162 = vpop.f32.mrb[0].mxu0
      %v6163 = vadd.f32 %v5518, %v6162
      %v6164 = vpop.f32.mrb[0].mxu0
      %v6165 = vpop.f32.mrb[0].mxu0
      %v6166 = vadd.f32 %v5518, %v6165
      %v6167 = vpop.f32.mrb[0].mxu0
      %6168 = vmatprep.mubr.bf16.mxu0 0
      %6169 = vmatmul.mubr.bf16.gmra.mrb[0].mxu0 %v5692
      %v6170 = vpop.f32.mrb[0].mxu0
      %v6171 = vadd.f32 %v5518, %v6170
      %v6172 = vpop.f32.mrb[0].mxu0
      %v6173 = vpop.f32.mrb[0].mxu0
      %v6174 = vadd.f32 %v5518, %v6173
      %v6175 = vpop.f32.mrb[0].mxu0
      %6176 = vmatprep.mubr.bf16.mxu0 0
      %6177 = vmatmul.mubr.bf16.gmra.mrb[0].mxu0 %v5695
      %v6178 = vpop.f32.mrb[0].mxu0
      %v6179 = vadd.f32 %v5518, %v6178
      %v6180 = vpop.f32.mrb[0].mxu0
      %v6181 = vpop.f32.mrb[0].mxu0
      %v6182 = vadd.f32 %v5518, %v6181
      %v6183 = vpop.f32.mrb[0].mxu0
      %6184 = vmatprep.mubr.bf16.mxu0 0
      %6185 = vmatmul.mubr.bf16.gmra.mrb[0].mxu0 %v5698
      %v6186 = vpop.f32.mrb[0].mxu0
      %v6187 = vadd.f32 %v5518, %v6186
      %v6188 = vpop.f32.mrb[0].mxu0
      %v6189 = vpop.f32.mrb[0].mxu0
      %v6190 = vadd.f32 %v5518, %v6189
      %v6191 = vpop.f32.mrb[0].mxu0
      %6192 = vmatprep.mubr.bf16.mxu0 0
      %6193 = vmatmul.mubr.bf16.gmra.mrb[0].mxu0 %v5701
      %v6194 = vpop.f32.mrb[0].mxu0
      %v6195 = vadd.f32 %v5518, %v6194
      %v6196 = vpop.f32.mrb[0].mxu0
      %v6197 = vpop.f32.mrb[0].mxu0
      %v6198 = vadd.f32 %v5518, %v6197
      %v6199 = vpop.f32.mrb[0].mxu0
      %6200 = vmatprep.mubr.bf16.mxu0 0
      %6201 = vmatmul.mubr.bf16.gmra.mrb[0].mxu0 %v5704
      %v6202 = vpop.f32.mrb[0].mxu0
      %v6203 = vadd.f32 %v5518, %v6202
      %v6204 = vpop.f32.mrb[0].mxu0
      %v6205 = vpop.f32.mrb[0].mxu0
      %v6206 = vadd.f32 %v5518, %v6205
      %v6207 = vpop.f32.mrb[0].mxu0
      %6208 = vmatprep.mubr.bf16.mxu0 0
      %6209 = vmatmul.mubr.bf16.gmra.mrb[0].mxu0 %v5707
      %v6210 = vpop.f32.mrb[0].mxu0
      %v6211 = vadd.f32 %v5518, %v6210
      %v6212 = vpop.f32.mrb[0].mxu0
      %v6213 = vpop.f32.mrb[0].mxu0
      %v6214 = vadd.f32 %v5518, %v6213
      %v6215 = vpop.f32.mrb[0].mxu0
      %6216 = vmatprep.mubr.bf16.mxu0 0
      %6217 = vmatmul.mubr.bf16.gmra.mrb[0].mxu0 %v5710
      %v6218 = vpop.f32.mrb[0].mxu0
      %v6219 = vadd.f32 %v5518, %v6218
      %v6220 = vpop.f32.mrb[0].mxu0
      %v6221 = vpop.f32.mrb[0].mxu0
      %v6222 = vadd.f32 %v5518, %v6221
      %v6223 = vpop.f32.mrb[0].mxu0
      %6224 = vmatprep.mubr.bf16.mxu0 0
      %6225 = vmatmul.mubr.bf16.gmra.mrb[0].mxu0 %v5713
      %v6226 = vpop.f32.mrb[0].mxu0
      %v6227 = vadd.f32 %v5518, %v6226
      %v6228 = vpop.f32.mrb[0].mxu0
      %v6229 = vpop.f32.mrb[0].mxu0
      %v6230 = vadd.f32 %v5518, %v6229
      %v6231 = vpop.f32.mrb[0].mxu0
      %6232 = vmatprep.mubr.bf16.mxu0 0
      %6233 = vmatmul.mubr.bf16.gmra.mrb[0].mxu0 %v5716
      %v6234 = vpop.f32.mrb[0].mxu0
      %v6235 = vadd.f32 %v5518, %v6234
      %v6236 = vpop.f32.mrb[0].mxu0
      %v6237 = vpop.f32.mrb[0].mxu0
      %v6238 = vadd.f32 %v5518, %v6237
      %v6239 = vpop.f32.mrb[0].mxu0
      %6240 = vmatprep.mubr.bf16.mxu0 0
      %6241 = vmatmul.mubr.bf16.gmra.mrb[0].mxu0 %v5719
      %v6242 = vpop.f32.mrb[0].mxu0
      %v6243 = vadd.f32 %v5518, %v6242
      %v6244 = vpop.f32.mrb[0].mxu0
      %v6245 = vpop.f32.mrb[0].mxu0
      %v6246 = vadd.f32 %v5518, %v6245
      %v6247 = vpop.f32.mrb[0].mxu0
      %6248 = vmatprep.mubr.bf16.mxu0 0
      %6249 = vmatmul.mubr.bf16.gmra.mrb[0].mxu0 %v5722
      %v6250 = vpop.f32.mrb[0].mxu0
      %v6251 = vadd.f32 %v5518, %v6250
      %v6252 = vpop.f32.mrb[0].mxu0
      %v6253 = vpop.f32.mrb[0].mxu0
      %v6254 = vadd.f32 %v5518, %v6253
      %v6255 = vpop.f32.mrb[0].mxu0
      %6256 = vmatprep.mubr.bf16.mxu0 0
      %6257 = vmatmul.mubr.bf16.gmra.mrb[0].mxu0 %v5725
      %v6258 = vpop.f32.mrb[0].mxu0
      %v6259 = vadd.f32 %v5518, %v6258
      %v6260 = vpop.f32.mrb[0].mxu0
      %v6261 = vpop.f32.mrb[0].mxu0
      %v6262 = vadd.f32 %v5518, %v6261
      %v6263 = vpop.f32.mrb[0].mxu0
      %6264 = vmatprep.mubr.bf16.mxu0 0
      %6265 = vmatmul.mubr.bf16.gmra.mrb[0].mxu0 %v5728
      %v6266 = vpop.f32.mrb[0].mxu0
      %v6267 = vadd.f32 %v5518, %v6266
      %v6268 = vpop.f32.mrb[0].mxu0
      %v6269 = vpop.f32.mrb[0].mxu0
      %v6270 = vadd.f32 %v5518, %v6269
      %v6271 = vpop.f32.mrb[0].mxu0
      %6272 = vmatprep.mubr.bf16.mxu0 0
      %6273 = vmatmul.mubr.bf16.gmra.mrb[0].mxu0 %v5731
      %v6274 = vpop.f32.mrb[0].mxu0
      %v6275 = vadd.f32 %v5518, %v6274
      %v6276 = vpop.f32.mrb[0].mxu0
      %v6277 = vpop.f32.mrb[0].mxu0
      %v6278 = vadd.f32 %v5518, %v6277
      %v6279 = vpop.f32.mrb[0].mxu0
      %6280 = vdwg.mxu0
      %v6281 = vmul.f32 %v5771, 0.5
      %v6282 = vmul.f32 %v5774, 0.5
      %v6283 = vmul.f32 %v5779, 0.5
      %v6284 = vmul.f32 %v5782, 0.5
      %v6285 = vmul.f32 %v5787, 0.5
      %v6286 = vmul.f32 %v5790, 0.5
      %v6287 = vmul.f32 %v5795, 0.5
      %v6288 = vmul.f32 %v5798, 0.5
      %v6289 = vmul.f32 %v5803, 0.5
      %v6290 = vmul.f32 %v5806, 0.5
      %v6291 = vmul.f32 %v5811, 0.5
      %v6292 = vmul.f32 %v5814, 0.5
      %v6293 = vmul.f32 %v5819, 0.5
      %v6294 = vmul.f32 %v5822, 0.5
      %v6295 = vmul.f32 %v5827, 0.5
      %v6296 = vmul.f32 %v5830, 0.5
      %v6297 = vmul.f32 %v5835, 0.5
      %v6298 = vmul.f32 %v5838, 0.5
      %v6299 = vmul.f32 %v5843, 0.5
      %v6300 = vmul.f32 %v5846, 0.5
      %v6301 = vmul.f32 %v5851, 0.5
      %v6302 = vmul.f32 %v5854, 0.5
      %v6303 = vmul.f32 %v5859, 0.5
      %v6304 = vmul.f32 %v5862, 0.5
      %v6305 = vmul.f32 %v5867, 0.5
      %v6306 = vmul.f32 %v5870, 0.5
      %v6307 = vmul.f32 %v5875, 0.5
      %v6308 = vmul.f32 %v5878, 0.5
      %v6309 = vmul.f32 %v5883, 0.5
      %v6310 = vmul.f32 %v5886, 0.5
      %v6311 = vmul.f32 %v5891, 0.5
      %v6312 = vmul.f32 %v5894, 0.5
      %v6313 = vmul.f32 %v5899, 0.5
      %v6314 = vmul.f32 %v5902, 0.5
      %v6315 = vmul.f32 %v5907, 0.5
      %v6316 = vmul.f32 %v5910, 0.5
      %v6317 = vmul.f32 %v5915, 0.5
      %v6318 = vmul.f32 %v5918, 0.5
      %v6319 = vmul.f32 %v5923, 0.5
      %v6320 = vmul.f32 %v5926, 0.5
      %v6321 = vmul.f32 %v5931, 0.5
      %v6322 = vmul.f32 %v5934, 0.5
      %v6323 = vmul.f32 %v5939, 0.5
      %v6324 = vmul.f32 %v5942, 0.5
      %v6325 = vmul.f32 %v5947, 0.5
      %v6326 = vmul.f32 %v5950, 0.5
      %v6327 = vmul.f32 %v5955, 0.5
      %v6328 = vmul.f32 %v5958, 0.5
      %v6329 = vmul.f32 %v5963, 0.5
      %v6330 = vmul.f32 %v5966, 0.5
      %v6331 = vmul.f32 %v5971, 0.5
      %v6332 = vmul.f32 %v5974, 0.5
      %v6333 = vmul.f32 %v5979, 0.5
      %v6334 = vmul.f32 %v5982, 0.5
      %v6335 = vmul.f32 %v5987, 0.5
      %v6336 = vmul.f32 %v5990, 0.5
      %v6337 = vmul.f32 %v5995, 0.5
      %v6338 = vmul.f32 %v5998, 0.5
      %v6339 = vmul.f32 %v6003, 0.5
      %v6340 = vmul.f32 %v6006, 0.5
      %v6341 = vmul.f32 %v6011, 0.5
      %v6342 = vmul.f32 %v6014, 0.5
      %v6343 = vmul.f32 %v6019, 0.5
      %v6344 = vmul.f32 %v6022, 0.5
      %v6345 = vmul.f32 %v6027, 0.5
      %v6346 = vmul.f32 %v6030, 0.5
      %v6347 = vmul.f32 %v6035, 0.5
      %v6348 = vmul.f32 %v6038, 0.5
      %v6349 = vmul.f32 %v6043, 0.5
      %v6350 = vmul.f32 %v6046, 0.5
      %v6351 = vmul.f32 %v6051, 0.5
      %v6352 = vmul.f32 %v6054, 0.5
      %v6353 = vmul.f32 %v6059, 0.5
      %v6354 = vmul.f32 %v6062, 0.5
      %v6355 = vmul.f32 %v6067, 0.5
      %v6356 = vmul.f32 %v6070, 0.5
      %v6357 = vmul.f32 %v6075, 0.5
      %v6358 = vmul.f32 %v6078, 0.5
      %v6359 = vmul.f32 %v6083, 0.5
      %v6360 = vmul.f32 %v6086, 0.5
      %v6361 = vmul.f32 %v6091, 0.5
      %v6362 = vmul.f32 %v6094, 0.5
      %v6363 = vmul.f32 %v6099, 0.5
      %v6364 = vmul.f32 %v6102, 0.5
      %v6365 = vmul.f32 %v6107, 0.5
      %v6366 = vmul.f32 %v6110, 0.5
      %v6367 = vmul.f32 %v6115, 0.5
      %v6368 = vmul.f32 %v6118, 0.5
      %v6369 = vmul.f32 %v6123, 0.5
      %v6370 = vmul.f32 %v6126, 0.5
      %v6371 = vmul.f32 %v6131, 0.5
      %v6372 = vmul.f32 %v6134, 0.5
      %v6373 = vmul.f32 %v6139, 0.5
      %v6374 = vmul.f32 %v6142, 0.5
      %v6375 = vmul.f32 %v6147, 0.5
      %v6376 = vmul.f32 %v6150, 0.5
      %v6377 = vmul.f32 %v6155, 0.5
      %v6378 = vmul.f32 %v6158, 0.5
      %v6379 = vmul.f32 %v6163, 0.5
      %v6380 = vmul.f32 %v6166, 0.5
      %v6381 = vmul.f32 %v6171, 0.5
      %v6382 = vmul.f32 %v6174, 0.5
      %v6383 = vmul.f32 %v6179, 0.5
      %v6384 = vmul.f32 %v6182, 0.5
      %v6385 = vmul.f32 %v6187, 0.5
      %v6386 = vmul.f32 %v6190, 0.5
      %v6387 = vmul.f32 %v6195, 0.5
      %v6388 = vmul.f32 %v6198, 0.5
      %v6389 = vmul.f32 %v6203, 0.5
      %v6390 = vmul.f32 %v6206, 0.5
      %v6391 = vmul.f32 %v6211, 0.5
      %v6392 = vmul.f32 %v6214, 0.5
      %v6393 = vmul.f32 %v6219, 0.5
      %v6394 = vmul.f32 %v6222, 0.5
      %v6395 = vmul.f32 %v6227, 0.5
      %v6396 = vmul.f32 %v6230, 0.5
      %v6397 = vmul.f32 %v6235, 0.5
      %v6398 = vmul.f32 %v6238, 0.5
      %v6399 = vmul.f32 %v6243, 0.5
      %v6400 = vmul.f32 %v6246, 0.5
      %v6401 = vmul.f32 %v6251, 0.5
      %v6402 = vmul.f32 %v6254, 0.5
      %v6403 = vmul.f32 %v6259, 0.5
      %v6404 = vmul.f32 %v6262, 0.5
      %v6405 = vmul.f32 %v6267, 0.5
      %v6406 = vmul.f32 %v6270, 0.5
      %v6407 = vmul.f32 %v6275, 0.5
      %v6408 = vmul.f32 %v6278, 0.5
      %v6409 = vtanh.pop %v6281
      %v6410 = vtanh.pop %v6282
      %v6411 = vtanh.pop %v6283
      %v6412 = vtanh.pop %v6284
      %v6413 = vtanh.pop %v6285
      %v6414 = vtanh.pop %v6286
      %v6415 = vtanh.pop %v6287
      %v6416 = vtanh.pop %v6288
      %v6417 = vtanh.pop %v6289
      %v6418 = vtanh.pop %v6290
      %v6419 = vtanh.pop %v6291
      %v6420 = vtanh.pop %v6292
      %v6421 = vtanh.pop %v6293
      %v6422 = vtanh.pop %v6294
      %v6423 = vtanh.pop %v6295
      %v6424 = vtanh.pop %v6296
      %v6425 = vtanh.pop %v6297
      %v6426 = vtanh.pop %v6298
      %v6427 = vtanh.pop %v6299
      %v6428 = vtanh.pop %v6300
      %v6429 = vtanh.pop %v6301
      %v6430 = vtanh.pop %v6302
      %v6431 = vtanh.pop %v6303
      %v6432 = vtanh.pop %v6304
      %v6433 = vtanh.pop %v6305
      %v6434 = vtanh.pop %v6306
      %v6435 = vtanh.pop %v6307
      %v6436 = vtanh.pop %v6308
      %v6437 = vtanh.pop %v6309
      %v6438 = vtanh.pop %v6310
      %v6439 = vtanh.pop %v6311
      %v6440 = vtanh.pop %v6312
      %v6441 = vtanh.pop %v6313
      %v6442 = vtanh.pop %v6314
      %v6443 = vtanh.pop %v6315
      %v6444 = vtanh.pop %v6316
      %v6445 = vtanh.pop %v6317
      %v6446 = vtanh.pop %v6318
      %v6447 = vtanh.pop %v6319
      %v6448 = vtanh.pop %v6320
      %v6449 = vtanh.pop %v6321
      %v6450 = vtanh.pop %v6322
      %v6451 = vtanh.pop %v6323
      %v6452 = vtanh.pop %v6324
      %v6453 = vtanh.pop %v6325
      %v6454 = vtanh.pop %v6326
      %v6455 = vtanh.pop %v6327
      %v6456 = vtanh.pop %v6328
      %v6457 = vtanh.pop %v6329
      %v6458 = vtanh.pop %v6330
      %v6459 = vtanh.pop %v6331
      %v6460 = vtanh.pop %v6332
      %v6461 = vtanh.pop %v6333
      %v6462 = vtanh.pop %v6334
      %v6463 = vtanh.pop %v6335
      %v6464 = vtanh.pop %v6336
      %v6465 = vtanh.pop %v6337
      %v6466 = vtanh.pop %v6338
      %v6467 = vtanh.pop %v6339
      %v6468 = vtanh.pop %v6340
      %v6469 = vtanh.pop %v6341
      %v6470 = vtanh.pop %v6342
      %v6471 = vtanh.pop %v6343
      %v6472 = vtanh.pop %v6344
      %v6473 = vtanh.pop %v6345
      %v6474 = vtanh.pop %v6346
      %v6475 = vtanh.pop %v6347
      %v6476 = vtanh.pop %v6348
      %v6477 = vtanh.pop %v6349
      %v6478 = vtanh.pop %v6350
      %v6479 = vtanh.pop %v6351
      %v6480 = vtanh.pop %v6352
      %v6481 = vtanh.pop %v6353
      %v6482 = vtanh.pop %v6354
      %v6483 = vtanh.pop %v6355
      %v6484 = vtanh.pop %v6356
      %v6485 = vtanh.pop %v6357
      %v6486 = vtanh.pop %v6358
      %v6487 = vtanh.pop %v6359
      %v6488 = vtanh.pop %v6360
      %v6489 = vtanh.pop %v6361
      %v6490 = vtanh.pop %v6362
      %v6491 = vtanh.pop %v6363
      %v6492 = vtanh.pop %v6364
      %v6493 = vtanh.pop %v6365
      %v6494 = vtanh.pop %v6366
      %v6495 = vtanh.pop %v6367
      %v6496 = vtanh.pop %v6368
      %v6497 = vtanh.pop %v6369
      %v6498 = vtanh.pop %v6370
      %v6499 = vtanh.pop %v6371
      %v6500 = vtanh.pop %v6372
      %v6501 = vtanh.pop %v6373
      %v6502 = vtanh.pop %v6374
      %v6503 = vtanh.pop %v6375
      %v6504 = vtanh.pop %v6376
      %v6505 = vtanh.pop %v6377
      %v6506 = vtanh.pop %v6378
      %v6507 = vtanh.pop %v6379
      %v6508 = vtanh.pop %v6380
      %v6509 = vtanh.pop %v6381
      %v6510 = vtanh.pop %v6382
      %v6511 = vtanh.pop %v6383
      %v6512 = vtanh.pop %v6384
      %v6513 = vtanh.pop %v6385
      %v6514 = vtanh.pop %v6386
      %v6515 = vtanh.pop %v6387
      %v6516 = vtanh.pop %v6388
      %v6517 = vtanh.pop %v6389
      %v6518 = vtanh.pop %v6390
      %v6519 = vtanh.pop %v6391
      %v6520 = vtanh.pop %v6392
      %v6521 = vtanh.pop %v6393
      %v6522 = vtanh.pop %v6394
      %v6523 = vtanh.pop %v6395
      %v6524 = vtanh.pop %v6396
      %v6525 = vtanh.pop %v6397
      %v6526 = vtanh.pop %v6398
      %v6527 = vtanh.pop %v6399
      %v6528 = vtanh.pop %v6400
      %v6529 = vtanh.pop %v6401
      %v6530 = vtanh.pop %v6402
      %v6531 = vtanh.pop %v6403
      %v6532 = vtanh.pop %v6404
      %v6533 = vtanh.pop %v6405
      %v6534 = vtanh.pop %v6406
      %v6535 = vtanh.pop %v6407
      %v6536 = vtanh.pop %v6408
      %v6537 = vadd.f32 %v6409, 1.0
      %v6538 = vadd.f32 %v6410, 1.0
      %v6539 = vadd.f32 %v6411, 1.0
      %v6540 = vadd.f32 %v6412, 1.0
      %v6541 = vadd.f32 %v6413, 1.0
      %v6542 = vadd.f32 %v6414, 1.0
      %v6543 = vadd.f32 %v6415, 1.0
      %v6544 = vadd.f32 %v6416, 1.0
      %v6545 = vadd.f32 %v6417, 1.0
      %v6546 = vadd.f32 %v6418, 1.0
      %v6547 = vadd.f32 %v6419, 1.0
      %v6548 = vadd.f32 %v6420, 1.0
      %v6549 = vadd.f32 %v6421, 1.0
      %v6550 = vadd.f32 %v6422, 1.0
      %v6551 = vadd.f32 %v6423, 1.0
      %v6552 = vadd.f32 %v6424, 1.0
      %v6553 = vadd.f32 %v6425, 1.0
      %v6554 = vadd.f32 %v6426, 1.0
      %v6555 = vadd.f32 %v6427, 1.0
      %v6556 = vadd.f32 %v6428, 1.0
      %v6557 = vadd.f32 %v6429, 1.0
      %v6558 = vadd.f32 %v6430, 1.0
      %v6559 = vadd.f32 %v6431, 1.0
      %v6560 = vadd.f32 %v6432, 1.0
      %v6561 = vadd.f32 %v6433, 1.0
      %v6562 = vadd.f32 %v6434, 1.0
      %v6563 = vadd.f32 %v6435, 1.0
      %v6564 = vadd.f32 %v6436, 1.0
      %v6565 = vadd.f32 %v6437, 1.0
      %v6566 = vadd.f32 %v6438, 1.0
      %v6567 = vadd.f32 %v6439, 1.0
      %v6568 = vadd.f32 %v6440, 1.0
      %v6569 = vadd.f32 %v6441, 1.0
      %v6570 = vadd.f32 %v6442, 1.0
      %v6571 = vadd.f32 %v6443, 1.0
      %v6572 = vadd.f32 %v6444, 1.0
      %v6573 = vadd.f32 %v6445, 1.0
      %v6574 = vadd.f32 %v6446, 1.0
      %v6575 = vadd.f32 %v6447, 1.0
      %v6576 = vadd.f32 %v6448, 1.0
      %v6577 = vadd.f32 %v6449, 1.0
      %v6578 = vadd.f32 %v6450, 1.0
      %v6579 = vadd.f32 %v6451, 1.0
      %v6580 = vadd.f32 %v6452, 1.0
      %v6581 = vadd.f32 %v6453, 1.0
      %v6582 = vadd.f32 %v6454, 1.0
      %v6583 = vadd.f32 %v6455, 1.0
      %v6584 = vadd.f32 %v6456, 1.0
      %v6585 = vadd.f32 %v6457, 1.0
      %v6586 = vadd.f32 %v6458, 1.0
      %v6587 = vadd.f32 %v6459, 1.0
      %v6588 = vadd.f32 %v6460, 1.0
      %v6589 = vadd.f32 %v6461, 1.0
      %v6590 = vadd.f32 %v6462, 1.0
      %v6591 = vadd.f32 %v6463, 1.0
      %v6592 = vadd.f32 %v6464, 1.0
      %v6593 = vadd.f32 %v6465, 1.0
      %v6594 = vadd.f32 %v6466, 1.0
      %v6595 = vadd.f32 %v6467, 1.0
      %v6596 = vadd.f32 %v6468, 1.0
      %v6597 = vadd.f32 %v6469, 1.0
      %v6598 = vadd.f32 %v6470, 1.0
      %v6599 = vadd.f32 %v6471, 1.0
      %v6600 = vadd.f32 %v6472, 1.0
      %v6601 = vadd.f32 %v6473, 1.0
      %v6602 = vadd.f32 %v6474, 1.0
      %v6603 = vadd.f32 %v6475, 1.0
      %v6604 = vadd.f32 %v6476, 1.0
      %v6605 = vadd.f32 %v6477, 1.0
      %v6606 = vadd.f32 %v6478, 1.0
      %v6607 = vadd.f32 %v6479, 1.0
      %v6608 = vadd.f32 %v6480, 1.0
      %v6609 = vadd.f32 %v6481, 1.0
      %v6610 = vadd.f32 %v6482, 1.0
      %v6611 = vadd.f32 %v6483, 1.0
      %v6612 = vadd.f32 %v6484, 1.0
      %v6613 = vadd.f32 %v6485, 1.0
      %v6614 = vadd.f32 %v6486, 1.0
      %v6615 = vadd.f32 %v6487, 1.0
      %v6616 = vadd.f32 %v6488, 1.0
      %v6617 = vadd.f32 %v6489, 1.0
      %v6618 = vadd.f32 %v6490, 1.0
      %v6619 = vadd.f32 %v6491, 1.0
      %v6620 = vadd.f32 %v6492, 1.0
      %v6621 = vadd.f32 %v6493, 1.0
      %v6622 = vadd.f32 %v6494, 1.0
      %v6623 = vadd.f32 %v6495, 1.0
      %v6624 = vadd.f32 %v6496, 1.0
      %v6625 = vadd.f32 %v6497, 1.0
      %v6626 = vadd.f32 %v6498, 1.0
      %v6627 = vadd.f32 %v6499, 1.0
      %v6628 = vadd.f32 %v6500, 1.0
      %v6629 = vadd.f32 %v6501, 1.0
      %v6630 = vadd.f32 %v6502, 1.0
      %v6631 = vadd.f32 %v6503, 1.0
      %v6632 = vadd.f32 %v6504, 1.0
      %v6633 = vadd.f32 %v6505, 1.0
      %v6634 = vadd.f32 %v6506, 1.0
      %v6635 = vadd.f32 %v6507, 1.0
      %v6636 = vadd.f32 %v6508, 1.0
      %v6637 = vadd.f32 %v6509, 1.0
      %v6638 = vadd.f32 %v6510, 1.0
      %v6639 = vadd.f32 %v6511, 1.0
      %v6640 = vadd.f32 %v6512, 1.0
      %v6641 = vadd.f32 %v6513, 1.0
      %v6642 = vadd.f32 %v6514, 1.0
      %v6643 = vadd.f32 %v6515, 1.0
      %v6644 = vadd.f32 %v6516, 1.0
      %v6645 = vadd.f32 %v6517, 1.0
      %v6646 = vadd.f32 %v6518, 1.0
      %v6647 = vadd.f32 %v6519, 1.0
      %v6648 = vadd.f32 %v6520, 1.0
      %v6649 = vadd.f32 %v6521, 1.0
      %v6650 = vadd.f32 %v6522, 1.0
      %v6651 = vadd.f32 %v6523, 1.0
      %v6652 = vadd.f32 %v6524, 1.0
      %v6653 = vadd.f32 %v6525, 1.0
      %v6654 = vadd.f32 %v6526, 1.0
      %v6655 = vadd.f32 %v6527, 1.0
      %v6656 = vadd.f32 %v6528, 1.0
      %v6657 = vadd.f32 %v6529, 1.0
      %v6658 = vadd.f32 %v6530, 1.0
      %v6659 = vadd.f32 %v6531, 1.0
      %v6660 = vadd.f32 %v6532, 1.0
      %v6661 = vadd.f32 %v6533, 1.0
      %v6662 = vadd.f32 %v6534, 1.0
      %v6663 = vadd.f32 %v6535, 1.0
      %v6664 = vadd.f32 %v6536, 1.0
      %v6665 = vmul.f32 %v6537, 0.5
      %v6666 = vmul.f32 %v6538, 0.5
      %v6667 = vmul.f32 %v6539, 0.5
      %v6668 = vmul.f32 %v6540, 0.5
      %v6669 = vmul.f32 %v6541, 0.5
      %v6670 = vmul.f32 %v6542, 0.5
      %v6671 = vmul.f32 %v6543, 0.5
      %v6672 = vmul.f32 %v6544, 0.5
      %v6673 = vmul.f32 %v6545, 0.5
      %v6674 = vmul.f32 %v6546, 0.5
      %v6675 = vmul.f32 %v6547, 0.5
      %v6676 = vmul.f32 %v6548, 0.5
      %v6677 = vmul.f32 %v6549, 0.5
      %v6678 = vmul.f32 %v6550, 0.5
      %v6679 = vmul.f32 %v6551, 0.5
      %v6680 = vmul.f32 %v6552, 0.5
      %v6681 = vmul.f32 %v6553, 0.5
      %v6682 = vmul.f32 %v6554, 0.5
      %v6683 = vmul.f32 %v6555, 0.5
      %v6684 = vmul.f32 %v6556, 0.5
      %v6685 = vmul.f32 %v6557, 0.5
      %v6686 = vmul.f32 %v6558, 0.5
      %v6687 = vmul.f32 %v6559, 0.5
      %v6688 = vmul.f32 %v6560, 0.5
      %v6689 = vmul.f32 %v6561, 0.5
      %v6690 = vmul.f32 %v6562, 0.5
      %v6691 = vmul.f32 %v6563, 0.5
      %v6692 = vmul.f32 %v6564, 0.5
      %v6693 = vmul.f32 %v6565, 0.5
      %v6694 = vmul.f32 %v6566, 0.5
      %v6695 = vmul.f32 %v6567, 0.5
      %v6696 = vmul.f32 %v6568, 0.5
      %v6697 = vmul.f32 %v6569, 0.5
      %v6698 = vmul.f32 %v6570, 0.5
      %v6699 = vmul.f32 %v6571, 0.5
      %v6700 = vmul.f32 %v6572, 0.5
      %v6701 = vmul.f32 %v6573, 0.5
      %v6702 = vmul.f32 %v6574, 0.5
      %v6703 = vmul.f32 %v6575, 0.5
      %v6704 = vmul.f32 %v6576, 0.5
      %v6705 = vmul.f32 %v6577, 0.5
      %v6706 = vmul.f32 %v6578, 0.5
      %v6707 = vmul.f32 %v6579, 0.5
      %v6708 = vmul.f32 %v6580, 0.5
      %v6709 = vmul.f32 %v6581, 0.5
      %v6710 = vmul.f32 %v6582, 0.5
      %v6711 = vmul.f32 %v6583, 0.5
      %v6712 = vmul.f32 %v6584, 0.5
      %v6713 = vmul.f32 %v6585, 0.5
      %v6714 = vmul.f32 %v6586, 0.5
      %v6715 = vmul.f32 %v6587, 0.5
      %v6716 = vmul.f32 %v6588, 0.5
      %v6717 = vmul.f32 %v6589, 0.5
      %v6718 = vmul.f32 %v6590, 0.5
      %v6719 = vmul.f32 %v6591, 0.5
      %v6720 = vmul.f32 %v6592, 0.5
      %v6721 = vmul.f32 %v6593, 0.5
      %v6722 = vmul.f32 %v6594, 0.5
      %v6723 = vmul.f32 %v6595, 0.5
      %v6724 = vmul.f32 %v6596, 0.5
      %v6725 = vmul.f32 %v6597, 0.5
      %v6726 = vmul.f32 %v6598, 0.5
      %v6727 = vmul.f32 %v6599, 0.5
      %v6728 = vmul.f32 %v6600, 0.5
      %v6729 = vmul.f32 %v6601, 0.5
      %v6730 = vmul.f32 %v6602, 0.5
      %v6731 = vmul.f32 %v6603, 0.5
      %v6732 = vmul.f32 %v6604, 0.5
      %v6733 = vmul.f32 %v6605, 0.5
      %v6734 = vmul.f32 %v6606, 0.5
      %v6735 = vmul.f32 %v6607, 0.5
      %v6736 = vmul.f32 %v6608, 0.5
      %v6737 = vmul.f32 %v6609, 0.5
      %v6738 = vmul.f32 %v6610, 0.5
      %v6739 = vmul.f32 %v6611, 0.5
      %v6740 = vmul.f32 %v6612, 0.5
      %v6741 = vmul.f32 %v6613, 0.5
      %v6742 = vmul.f32 %v6614, 0.5
      %v6743 = vmul.f32 %v6615, 0.5
      %v6744 = vmul.f32 %v6616, 0.5
      %v6745 = vmul.f32 %v6617, 0.5
      %v6746 = vmul.f32 %v6618, 0.5
      %v6747 = vmul.f32 %v6619, 0.5
      %v6748 = vmul.f32 %v6620, 0.5
      %v6749 = vmul.f32 %v6621, 0.5
      %v6750 = vmul.f32 %v6622, 0.5
      %v6751 = vmul.f32 %v6623, 0.5
      %v6752 = vmul.f32 %v6624, 0.5
      %v6753 = vmul.f32 %v6625, 0.5
      %v6754 = vmul.f32 %v6626, 0.5
      %v6755 = vmul.f32 %v6627, 0.5
      %v6756 = vmul.f32 %v6628, 0.5
      %v6757 = vmul.f32 %v6629, 0.5
      %v6758 = vmul.f32 %v6630, 0.5
      %v6759 = vmul.f32 %v6631, 0.5
      %v6760 = vmul.f32 %v6632, 0.5
      %v6761 = vmul.f32 %v6633, 0.5
      %v6762 = vmul.f32 %v6634, 0.5
      %v6763 = vmul.f32 %v6635, 0.5
      %v6764 = vmul.f32 %v6636, 0.5
      %v6765 = vmul.f32 %v6637, 0.5
      %v6766 = vmul.f32 %v6638, 0.5
      %v6767 = vmul.f32 %v6639, 0.5
      %v6768 = vmul.f32 %v6640, 0.5
      %v6769 = vmul.f32 %v6641, 0.5
      %v6770 = vmul.f32 %v6642, 0.5
      %v6771 = vmul.f32 %v6643, 0.5
      %v6772 = vmul.f32 %v6644, 0.5
      %v6773 = vmul.f32 %v6645, 0.5
      %v6774 = vmul.f32 %v6646, 0.5
      %v6775 = vmul.f32 %v6647, 0.5
      %v6776 = vmul.f32 %v6648, 0.5
      %v6777 = vmul.f32 %v6649, 0.5
      %v6778 = vmul.f32 %v6650, 0.5
      %v6779 = vmul.f32 %v6651, 0.5
      %v6780 = vmul.f32 %v6652, 0.5
      %v6781 = vmul.f32 %v6653, 0.5
      %v6782 = vmul.f32 %v6654, 0.5
      %v6783 = vmul.f32 %v6655, 0.5
      %v6784 = vmul.f32 %v6656, 0.5
      %v6785 = vmul.f32 %v6657, 0.5
      %v6786 = vmul.f32 %v6658, 0.5
      %v6787 = vmul.f32 %v6659, 0.5
      %v6788 = vmul.f32 %v6660, 0.5
      %v6789 = vmul.f32 %v6661, 0.5
      %v6790 = vmul.f32 %v6662, 0.5
      %v6791 = vmul.f32 %v6663, 0.5
      %v6792 = vmul.f32 %v6664, 0.5
      %v6793 = vpack.c.bf16 %v6666, %v6665
      %v6794 = vpack.c.bf16 %v6668, %v6667
      %v6795 = vpack.c.bf16 %v6670, %v6669
      %v6796 = vpack.c.bf16 %v6672, %v6671
      %v6797 = vpack.c.bf16 %v6674, %v6673
      %v6798 = vpack.c.bf16 %v6676, %v6675
      %v6799 = vpack.c.bf16 %v6678, %v6677
      %v6800 = vpack.c.bf16 %v6680, %v6679
      %v6801 = vpack.c.bf16 %v6682, %v6681
      %v6802 = vpack.c.bf16 %v6684, %v6683
      %v6803 = vpack.c.bf16 %v6686, %v6685
      %v6804 = vpack.c.bf16 %v6688, %v6687
      %v6805 = vpack.c.bf16 %v6690, %v6689
      %v6806 = vpack.c.bf16 %v6692, %v6691
      %v6807 = vpack.c.bf16 %v6694, %v6693
      %v6808 = vpack.c.bf16 %v6696, %v6695
      %v6809 = vpack.c.bf16 %v6698, %v6697
      %v6810 = vpack.c.bf16 %v6700, %v6699
      %v6811 = vpack.c.bf16 %v6702, %v6701
      %v6812 = vpack.c.bf16 %v6704, %v6703
      %v6813 = vpack.c.bf16 %v6706, %v6705
      %v6814 = vpack.c.bf16 %v6708, %v6707
      %v6815 = vpack.c.bf16 %v6710, %v6709
      %v6816 = vpack.c.bf16 %v6712, %v6711
      %v6817 = vpack.c.bf16 %v6714, %v6713
      %v6818 = vpack.c.bf16 %v6716, %v6715
      %v6819 = vpack.c.bf16 %v6718, %v6717
      %v6820 = vpack.c.bf16 %v6720, %v6719
      %v6821 = vpack.c.bf16 %v6722, %v6721
      %v6822 = vpack.c.bf16 %v6724, %v6723
      %v6823 = vpack.c.bf16 %v6726, %v6725
      %v6824 = vpack.c.bf16 %v6728, %v6727
      %v6825 = vpack.c.bf16 %v6730, %v6729
      %v6826 = vpack.c.bf16 %v6732, %v6731
      %v6827 = vpack.c.bf16 %v6734, %v6733
      %v6828 = vpack.c.bf16 %v6736, %v6735
      %v6829 = vpack.c.bf16 %v6738, %v6737
      %v6830 = vpack.c.bf16 %v6740, %v6739
      %v6831 = vpack.c.bf16 %v6742, %v6741
      %v6832 = vpack.c.bf16 %v6744, %v6743
      %v6833 = vpack.c.bf16 %v6746, %v6745
      %v6834 = vpack.c.bf16 %v6748, %v6747
      %v6835 = vpack.c.bf16 %v6750, %v6749
      %v6836 = vpack.c.bf16 %v6752, %v6751
      %v6837 = vpack.c.bf16 %v6754, %v6753
      %v6838 = vpack.c.bf16 %v6756, %v6755
      %v6839 = vpack.c.bf16 %v6758, %v6757
      %v6840 = vpack.c.bf16 %v6760, %v6759
      %v6841 = vpack.c.bf16 %v6762, %v6761
      %v6842 = vpack.c.bf16 %v6764, %v6763
      %v6843 = vpack.c.bf16 %v6766, %v6765
      %v6844 = vpack.c.bf16 %v6768, %v6767
      %v6845 = vpack.c.bf16 %v6770, %v6769
      %v6846 = vpack.c.bf16 %v6772, %v6771
      %v6847 = vpack.c.bf16 %v6774, %v6773
      %v6848 = vpack.c.bf16 %v6776, %v6775
      %v6849 = vpack.c.bf16 %v6778, %v6777
      %v6850 = vpack.c.bf16 %v6780, %v6779
      %v6851 = vpack.c.bf16 %v6782, %v6781
      %v6852 = vpack.c.bf16 %v6784, %v6783
      %v6853 = vpack.c.bf16 %v6786, %v6785
      %v6854 = vpack.c.bf16 %v6788, %v6787
      %v6855 = vpack.c.bf16 %v6790, %v6789
      %v6856 = vpack.c.bf16 %v6792, %v6791
      %s6857 = scalar_lea.vmem %s3, 84
      %v6858 = vld [vmem:[%s6857] sm:$0xf]
      %v6859 = vld [vmem:[%s6857 + $0x4] sm:$0xf]
      %v6860 = vld [vmem:[%s6857 + $0x8] sm:$0xf]
      %v6861 = vld [vmem:[%s6857 + $0xc] sm:$0xf]
      %v6862 = vld [vmem:[%s6857 + $0x10] sm:$0xf]
      %v6863 = vld [vmem:[%s6857 + $0x14] sm:$0xf]
      %v6864 = vld [vmem:[%s6857 + $0x18] sm:$0x1]
      %s6865 = scalar_lea.vmem %s4, 3
      %v6866 = vld [vmem:[%s6865] sm:$0x1]
      %v6868 = vlaneseq
      %v6869 = vshrl.u32 %v6868, 7
      %v6870 = vsub.s32 0, %v6869
      %v6871 = vrot.slane %v6866, %v6870
      %v6880 = vunpack.c.l.b16 %v6858
      %v6881 = vunpack.c.l.b16 %v6859
      %v6882 = vunpack.c.l.b16 %v6860
      %v6883 = vunpack.c.l.b16 %v6861
      %v6884 = vunpack.c.l.b16 %v6862
      %v6885 = vunpack.c.l.b16 %v6863
      %v6886 = vunpack.c.l.b16 %v6864
      %v6887 = vpack.c.b16 %v6881, %v6880
      %v6888 = vpack.c.b16 %v6883, %v6882
      %v6889 = vpack.c.b16 %v6885, %v6884
      %v6890 = vpack.c.b16 %v6886, %v6886
      %v6895 = vsel %vm2705, %v6793, 0
      %v6898 = vsel %vm2705, %v6794, 0
      %v6901 = vsel %vm2705, %v6795, 0
      %v6904 = vsel %vm2705, %v6796, 0
      %v6907 = vsel %vm2705, %v6797, 0
      %v6910 = vsel %vm2705, %v6798, 0
      %v6913 = vsel %vm2705, %v6799, 0
      %v6916 = vsel %vm2705, %v6800, 0
      %v6919 = vsel %vm2705, %v6801, 0
      %v6922 = vsel %vm2705, %v6802, 0
      %v6925 = vsel %vm2705, %v6803, 0
      %v6928 = vsel %vm2705, %v6804, 0
      %v6931 = vsel %vm2705, %v6805, 0
      %v6934 = vsel %vm2705, %v6806, 0
      %v6937 = vsel %vm2705, %v6807, 0
      %v6940 = vsel %vm2705, %v6808, 0
      %v6943 = vsel %vm2705, %v6809, 0
      %v6946 = vsel %vm2705, %v6810, 0
      %v6949 = vsel %vm2705, %v6811, 0
      %v6952 = vsel %vm2705, %v6812, 0
      %v6955 = vsel %vm2705, %v6813, 0
      %v6958 = vsel %vm2705, %v6814, 0
      %v6961 = vsel %vm2705, %v6815, 0
      %v6964 = vsel %vm2705, %v6816, 0
      %v6967 = vsel %vm2705, %v6817, 0
      %v6970 = vsel %vm2705, %v6818, 0
      %v6973 = vsel %vm2705, %v6819, 0
      %v6976 = vsel %vm2705, %v6820, 0
      %v6979 = vsel %vm2705, %v6821, 0
      %v6982 = vsel %vm2705, %v6822, 0
      %v6985 = vsel %vm2705, %v6823, 0
      %v6988 = vsel %vm2705, %v6824, 0
      %v6991 = vsel %vm2705, %v6825, 0
      %v6994 = vsel %vm2705, %v6826, 0
      %v6997 = vsel %vm2705, %v6827, 0
      %v7000 = vsel %vm2705, %v6828, 0
      %v7003 = vsel %vm2705, %v6829, 0
      %v7006 = vsel %vm2705, %v6830, 0
      %v7009 = vsel %vm2705, %v6831, 0
      %v7012 = vsel %vm2705, %v6832, 0
      %v7015 = vsel %vm2705, %v6833, 0
      %v7018 = vsel %vm2705, %v6834, 0
      %v7021 = vsel %vm2705, %v6835, 0
      %v7024 = vsel %vm2705, %v6836, 0
      %v7027 = vsel %vm2705, %v6837, 0
      %v7030 = vsel %vm2705, %v6838, 0
      %v7033 = vsel %vm2705, %v6839, 0
      %v7036 = vsel %vm2705, %v6840, 0
      %v7039 = vsel %vm2705, %v6841, 0
      %v7042 = vsel %vm2705, %v6842, 0
      %v7045 = vsel %vm2705, %v6843, 0
      %v7048 = vsel %vm2705, %v6844, 0
      %v7051 = vsel %vm2705, %v6845, 0
      %v7054 = vsel %vm2705, %v6846, 0
      %v7057 = vsel %vm2705, %v6847, 0
      %v7060 = vsel %vm2705, %v6848, 0
      %v7063 = vsel %vm2705, %v6849, 0
      %v7066 = vsel %vm2705, %v6850, 0
      %v7069 = vsel %vm2705, %v6851, 0
      %v7072 = vsel %vm2705, %v6852, 0
      %v7075 = vsel %vm2705, %v6853, 0
      %v7078 = vsel %vm2705, %v6854, 0
      %v7081 = vsel %vm2705, %v6855, 0
      %v7084 = vsel %vm2705, %v6856, 0
      %v7087 = vsel %vm2898, %v6890, 0
      %7089 = vmatprep.subr.bf16.mxu0 0
      %7090 = vmatpush1.bf16.msra.mxu0 %v6887
      %7091 = vmatprep.subr.bf16.mxu0 0
      %7092 = vmatpush1.bf16.msra.mxu0 %v6888
      %7093 = vmatprep.subr.bf16.mxu0 0
      %7094 = vmatpush1.bf16.msra.mxu0 %v6889
      %7095 = vmatprep.subr.bf16.mxu0 0
      %7096 = vmatpush1.bf16.msra.mxu0 %v7087
      %7097 = vmatprep.subr.bf16.mxu0 0
      %7098 = vmatpush1.bf16.msra.mxu0 0
      %7099 = vmatprep.subr.bf16.mxu0 0
      %7100 = vmatpush1.bf16.msra.mxu0 0
      %7101 = vmatprep.subr.bf16.mxu0 0
      %7102 = vmatpush1.bf16.msra.mxu0 0
      %7103 = vmatprep.subr.bf16.mxu0 0
      %7104 = vmatpush1.bf16.msra.mxu0 0
      %7105 = vmatprep.subr.bf16.mxu0 0
      %7106 = vmatpush1.bf16.msra.mxu0 0
      %7107 = vmatprep.subr.bf16.mxu0 0
      %7108 = vmatpush1.bf16.msra.mxu0 0
      %7109 = vmatprep.subr.bf16.mxu0 0
      %7110 = vmatpush1.bf16.msra.mxu0 0
      %7111 = vmatprep.subr.bf16.mxu0 0
      %7112 = vmatpush1.bf16.msra.mxu0 0
      %7113 = vmatprep.subr.bf16.mxu0 0
      %7114 = vmatpush1.bf16.msra.mxu0 0
      %7115 = vmatprep.subr.bf16.mxu0 0
      %7116 = vmatpush1.bf16.msra.mxu0 0
      %7117 = vmatprep.subr.bf16.mxu0 0
      %7118 = vmatpush1.bf16.msra.mxu0 0
      %7119 = vmatprep.subr.bf16.mxu0 0
      %7120 = vmatpush1.bf16.msra.mxu0 0
      %7121 = vmatprep.mubr.bf16.mxu0 0
      %7122 = vmatmul.mubr.bf16.gmra.mrb[0].mxu0 %v6895
      %v7123 = vpop.f32.mrb[0].mxu0
      %v7124 = vadd.f32 %v6871, %v7123
      %v7125 = vpop.f32.mrb[0].mxu0
      %v7126 = vpop.f32.mrb[0].mxu0
      %v7127 = vadd.f32 %v6871, %v7126
      %v7128 = vpop.f32.mrb[0].mxu0
      %7129 = vmatprep.mubr.bf16.mxu0 0
      %7130 = vmatmul.mubr.bf16.gmra.mrb[0].mxu0 %v6898
      %v7131 = vpop.f32.mrb[0].mxu0
      %v7132 = vadd.f32 %v6871, %v7131
      %v7133 = vpop.f32.mrb[0].mxu0
      %v7134 = vpop.f32.mrb[0].mxu0
      %v7135 = vadd.f32 %v6871, %v7134
      %v7136 = vpop.f32.mrb[0].mxu0
      %7137 = vmatprep.mubr.bf16.mxu0 0
      %7138 = vmatmul.mubr.bf16.gmra.mrb[0].mxu0 %v6901
      %v7139 = vpop.f32.mrb[0].mxu0
      %v7140 = vadd.f32 %v6871, %v7139
      %v7141 = vpop.f32.mrb[0].mxu0
      %v7142 = vpop.f32.mrb[0].mxu0
      %v7143 = vadd.f32 %v6871, %v7142
      %v7144 = vpop.f32.mrb[0].mxu0
      %7145 = vmatprep.mubr.bf16.mxu0 0
      %7146 = vmatmul.mubr.bf16.gmra.mrb[0].mxu0 %v6904
      %v7147 = vpop.f32.mrb[0].mxu0
      %v7148 = vadd.f32 %v6871, %v7147
      %v7149 = vpop.f32.mrb[0].mxu0
      %v7150 = vpop.f32.mrb[0].mxu0
      %v7151 = vadd.f32 %v6871, %v7150
      %v7152 = vpop.f32.mrb[0].mxu0
      %7153 = vmatprep.mubr.bf16.mxu0 0
      %7154 = vmatmul.mubr.bf16.gmra.mrb[0].mxu0 %v6907
      %v7155 = vpop.f32.mrb[0].mxu0
      %v7156 = vadd.f32 %v6871, %v7155
      %v7157 = vpop.f32.mrb[0].mxu0
      %v7158 = vpop.f32.mrb[0].mxu0
      %v7159 = vadd.f32 %v6871, %v7158
      %v7160 = vpop.f32.mrb[0].mxu0
      %7161 = vmatprep.mubr.bf16.mxu0 0
      %7162 = vmatmul.mubr.bf16.gmra.mrb[0].mxu0 %v6910
      %v7163 = vpop.f32.mrb[0].mxu0
      %v7164 = vadd.f32 %v6871, %v7163
      %v7165 = vpop.f32.mrb[0].mxu0
      %v7166 = vpop.f32.mrb[0].mxu0
      %v7167 = vadd.f32 %v6871, %v7166
      %v7168 = vpop.f32.mrb[0].mxu0
      %7169 = vmatprep.mubr.bf16.mxu0 0
      %7170 = vmatmul.mubr.bf16.gmra.mrb[0].mxu0 %v6913
      %v7171 = vpop.f32.mrb[0].mxu0
      %v7172 = vadd.f32 %v6871, %v7171
      %v7173 = vpop.f32.mrb[0].mxu0
      %v7174 = vpop.f32.mrb[0].mxu0
      %v7175 = vadd.f32 %v6871, %v7174
      %v7176 = vpop.f32.mrb[0].mxu0
      %7177 = vmatprep.mubr.bf16.mxu0 0
      %7178 = vmatmul.mubr.bf16.gmra.mrb[0].mxu0 %v6916
      %v7179 = vpop.f32.mrb[0].mxu0
      %v7180 = vadd.f32 %v6871, %v7179
      %v7181 = vpop.f32.mrb[0].mxu0
      %v7182 = vpop.f32.mrb[0].mxu0
      %v7183 = vadd.f32 %v6871, %v7182
      %v7184 = vpop.f32.mrb[0].mxu0
      %7185 = vmatprep.mubr.bf16.mxu0 0
      %7186 = vmatmul.mubr.bf16.gmra.mrb[0].mxu0 %v6919
      %v7187 = vpop.f32.mrb[0].mxu0
      %v7188 = vadd.f32 %v6871, %v7187
      %v7189 = vpop.f32.mrb[0].mxu0
      %v7190 = vpop.f32.mrb[0].mxu0
      %v7191 = vadd.f32 %v6871, %v7190
      %v7192 = vpop.f32.mrb[0].mxu0
      %7193 = vmatprep.mubr.bf16.mxu0 0
      %7194 = vmatmul.mubr.bf16.gmra.mrb[0].mxu0 %v6922
      %v7195 = vpop.f32.mrb[0].mxu0
      %v7196 = vadd.f32 %v6871, %v7195
      %v7197 = vpop.f32.mrb[0].mxu0
      %v7198 = vpop.f32.mrb[0].mxu0
      %v7199 = vadd.f32 %v6871, %v7198
      %v7200 = vpop.f32.mrb[0].mxu0
      %7201 = vmatprep.mubr.bf16.mxu0 0
      %7202 = vmatmul.mubr.bf16.gmra.mrb[0].mxu0 %v6925
      %v7203 = vpop.f32.mrb[0].mxu0
      %v7204 = vadd.f32 %v6871, %v7203
      %v7205 = vpop.f32.mrb[0].mxu0
      %v7206 = vpop.f32.mrb[0].mxu0
      %v7207 = vadd.f32 %v6871, %v7206
      %v7208 = vpop.f32.mrb[0].mxu0
      %7209 = vmatprep.mubr.bf16.mxu0 0
      %7210 = vmatmul.mubr.bf16.gmra.mrb[0].mxu0 %v6928
      %v7211 = vpop.f32.mrb[0].mxu0
      %v7212 = vadd.f32 %v6871, %v7211
      %v7213 = vpop.f32.mrb[0].mxu0
      %v7214 = vpop.f32.mrb[0].mxu0
      %v7215 = vadd.f32 %v6871, %v7214
      %v7216 = vpop.f32.mrb[0].mxu0
      %7217 = vmatprep.mubr.bf16.mxu0 0
      %7218 = vmatmul.mubr.bf16.gmra.mrb[0].mxu0 %v6931
      %v7219 = vpop.f32.mrb[0].mxu0
      %v7220 = vadd.f32 %v6871, %v7219
      %v7221 = vpop.f32.mrb[0].mxu0
      %v7222 = vpop.f32.mrb[0].mxu0
      %v7223 = vadd.f32 %v6871, %v7222
      %v7224 = vpop.f32.mrb[0].mxu0
      %7225 = vmatprep.mubr.bf16.mxu0 0
      %7226 = vmatmul.mubr.bf16.gmra.mrb[0].mxu0 %v6934
      %v7227 = vpop.f32.mrb[0].mxu0
      %v7228 = vadd.f32 %v6871, %v7227
      %v7229 = vpop.f32.mrb[0].mxu0
      %v7230 = vpop.f32.mrb[0].mxu0
      %v7231 = vadd.f32 %v6871, %v7230
      %v7232 = vpop.f32.mrb[0].mxu0
      %7233 = vmatprep.mubr.bf16.mxu0 0
      %7234 = vmatmul.mubr.bf16.gmra.mrb[0].mxu0 %v6937
      %v7235 = vpop.f32.mrb[0].mxu0
      %v7236 = vadd.f32 %v6871, %v7235
      %v7237 = vpop.f32.mrb[0].mxu0
      %v7238 = vpop.f32.mrb[0].mxu0
      %v7239 = vadd.f32 %v6871, %v7238
      %v7240 = vpop.f32.mrb[0].mxu0
      %7241 = vmatprep.mubr.bf16.mxu0 0
      %7242 = vmatmul.mubr.bf16.gmra.mrb[0].mxu0 %v6940
      %v7243 = vpop.f32.mrb[0].mxu0
      %v7244 = vadd.f32 %v6871, %v7243
      %v7245 = vpop.f32.mrb[0].mxu0
      %v7246 = vpop.f32.mrb[0].mxu0
      %v7247 = vadd.f32 %v6871, %v7246
      %v7248 = vpop.f32.mrb[0].mxu0
      %7249 = vmatprep.mubr.bf16.mxu0 0
      %7250 = vmatmul.mubr.bf16.gmra.mrb[0].mxu0 %v6943
      %v7251 = vpop.f32.mrb[0].mxu0
      %v7252 = vadd.f32 %v6871, %v7251
      %v7253 = vpop.f32.mrb[0].mxu0
      %v7254 = vpop.f32.mrb[0].mxu0
      %v7255 = vadd.f32 %v6871, %v7254
      %v7256 = vpop.f32.mrb[0].mxu0
      %7257 = vmatprep.mubr.bf16.mxu0 0
      %7258 = vmatmul.mubr.bf16.gmra.mrb[0].mxu0 %v6946
      %v7259 = vpop.f32.mrb[0].mxu0
      %v7260 = vadd.f32 %v6871, %v7259
      %v7261 = vpop.f32.mrb[0].mxu0
      %v7262 = vpop.f32.mrb[0].mxu0
      %v7263 = vadd.f32 %v6871, %v7262
      %v7264 = vpop.f32.mrb[0].mxu0
      %7265 = vmatprep.mubr.bf16.mxu0 0
      %7266 = vmatmul.mubr.bf16.gmra.mrb[0].mxu0 %v6949
      %v7267 = vpop.f32.mrb[0].mxu0
      %v7268 = vadd.f32 %v6871, %v7267
      %v7269 = vpop.f32.mrb[0].mxu0
      %v7270 = vpop.f32.mrb[0].mxu0
      %v7271 = vadd.f32 %v6871, %v7270
      %v7272 = vpop.f32.mrb[0].mxu0
      %7273 = vmatprep.mubr.bf16.mxu0 0
      %7274 = vmatmul.mubr.bf16.gmra.mrb[0].mxu0 %v6952
      %v7275 = vpop.f32.mrb[0].mxu0
      %v7276 = vadd.f32 %v6871, %v7275
      %v7277 = vpop.f32.mrb[0].mxu0
      %v7278 = vpop.f32.mrb[0].mxu0
      %v7279 = vadd.f32 %v6871, %v7278
      %v7280 = vpop.f32.mrb[0].mxu0
      %7281 = vmatprep.mubr.bf16.mxu0 0
      %7282 = vmatmul.mubr.bf16.gmra.mrb[0].mxu0 %v6955
      %v7283 = vpop.f32.mrb[0].mxu0
      %v7284 = vadd.f32 %v6871, %v7283
      %v7285 = vpop.f32.mrb[0].mxu0
      %v7286 = vpop.f32.mrb[0].mxu0
      %v7287 = vadd.f32 %v6871, %v7286
      %v7288 = vpop.f32.mrb[0].mxu0
      %7289 = vmatprep.mubr.bf16.mxu0 0
      %7290 = vmatmul.mubr.bf16.gmra.mrb[0].mxu0 %v6958
      %v7291 = vpop.f32.mrb[0].mxu0
      %v7292 = vadd.f32 %v6871, %v7291
      %v7293 = vpop.f32.mrb[0].mxu0
      %v7294 = vpop.f32.mrb[0].mxu0
      %v7295 = vadd.f32 %v6871, %v7294
      %v7296 = vpop.f32.mrb[0].mxu0
      %7297 = vmatprep.mubr.bf16.mxu0 0
      %7298 = vmatmul.mubr.bf16.gmra.mrb[0].mxu0 %v6961
      %v7299 = vpop.f32.mrb[0].mxu0
      %v7300 = vadd.f32 %v6871, %v7299
      %v7301 = vpop.f32.mrb[0].mxu0
      %v7302 = vpop.f32.mrb[0].mxu0
      %v7303 = vadd.f32 %v6871, %v7302
      %v7304 = vpop.f32.mrb[0].mxu0
      %7305 = vmatprep.mubr.bf16.mxu0 0
      %7306 = vmatmul.mubr.bf16.gmra.mrb[0].mxu0 %v6964
      %v7307 = vpop.f32.mrb[0].mxu0
      %v7308 = vadd.f32 %v6871, %v7307
      %v7309 = vpop.f32.mrb[0].mxu0
      %v7310 = vpop.f32.mrb[0].mxu0
      %v7311 = vadd.f32 %v6871, %v7310
      %v7312 = vpop.f32.mrb[0].mxu0
      %7313 = vmatprep.mubr.bf16.mxu0 0
      %7314 = vmatmul.mubr.bf16.gmra.mrb[0].mxu0 %v6967
      %v7315 = vpop.f32.mrb[0].mxu0
      %v7316 = vadd.f32 %v6871, %v7315
      %v7317 = vpop.f32.mrb[0].mxu0
      %v7318 = vpop.f32.mrb[0].mxu0
      %v7319 = vadd.f32 %v6871, %v7318
      %v7320 = vpop.f32.mrb[0].mxu0
      %7321 = vmatprep.mubr.bf16.mxu0 0
      %7322 = vmatmul.mubr.bf16.gmra.mrb[0].mxu0 %v6970
      %v7323 = vpop.f32.mrb[0].mxu0
      %v7324 = vadd.f32 %v6871, %v7323
      %v7325 = vpop.f32.mrb[0].mxu0
      %v7326 = vpop.f32.mrb[0].mxu0
      %v7327 = vadd.f32 %v6871, %v7326
      %v7328 = vpop.f32.mrb[0].mxu0
      %7329 = vmatprep.mubr.bf16.mxu0 0
      %7330 = vmatmul.mubr.bf16.gmra.mrb[0].mxu0 %v6973
      %v7331 = vpop.f32.mrb[0].mxu0
      %v7332 = vadd.f32 %v6871, %v7331
      %v7333 = vpop.f32.mrb[0].mxu0
      %v7334 = vpop.f32.mrb[0].mxu0
      %v7335 = vadd.f32 %v6871, %v7334
      %v7336 = vpop.f32.mrb[0].mxu0
      %7337 = vmatprep.mubr.bf16.mxu0 0
      %7338 = vmatmul.mubr.bf16.gmra.mrb[0].mxu0 %v6976
      %v7339 = vpop.f32.mrb[0].mxu0
      %v7340 = vadd.f32 %v6871, %v7339
      %v7341 = vpop.f32.mrb[0].mxu0
      %v7342 = vpop.f32.mrb[0].mxu0
      %v7343 = vadd.f32 %v6871, %v7342
      %v7344 = vpop.f32.mrb[0].mxu0
      %7345 = vmatprep.mubr.bf16.mxu0 0
      %7346 = vmatmul.mubr.bf16.gmra.mrb[0].mxu0 %v6979
      %v7347 = vpop.f32.mrb[0].mxu0
      %v7348 = vadd.f32 %v6871, %v7347
      %v7349 = vpop.f32.mrb[0].mxu0
      %v7350 = vpop.f32.mrb[0].mxu0
      %v7351 = vadd.f32 %v6871, %v7350
      %v7352 = vpop.f32.mrb[0].mxu0
      %7353 = vmatprep.mubr.bf16.mxu0 0
      %7354 = vmatmul.mubr.bf16.gmra.mrb[0].mxu0 %v6982
      %v7355 = vpop.f32.mrb[0].mxu0
      %v7356 = vadd.f32 %v6871, %v7355
      %v7357 = vpop.f32.mrb[0].mxu0
      %v7358 = vpop.f32.mrb[0].mxu0
      %v7359 = vadd.f32 %v6871, %v7358
      %v7360 = vpop.f32.mrb[0].mxu0
      %7361 = vmatprep.mubr.bf16.mxu0 0
      %7362 = vmatmul.mubr.bf16.gmra.mrb[0].mxu0 %v6985
      %v7363 = vpop.f32.mrb[0].mxu0
      %v7364 = vadd.f32 %v6871, %v7363
      %v7365 = vpop.f32.mrb[0].mxu0
      %v7366 = vpop.f32.mrb[0].mxu0
      %v7367 = vadd.f32 %v6871, %v7366
      %v7368 = vpop.f32.mrb[0].mxu0
      %7369 = vmatprep.mubr.bf16.mxu0 0
      %7370 = vmatmul.mubr.bf16.gmra.mrb[0].mxu0 %v6988
      %v7371 = vpop.f32.mrb[0].mxu0
      %v7372 = vadd.f32 %v6871, %v7371
      %v7373 = vpop.f32.mrb[0].mxu0
      %v7374 = vpop.f32.mrb[0].mxu0
      %v7375 = vadd.f32 %v6871, %v7374
      %v7376 = vpop.f32.mrb[0].mxu0
      %7377 = vmatprep.mubr.bf16.mxu0 0
      %7378 = vmatmul.mubr.bf16.gmra.mrb[0].mxu0 %v6991
      %v7379 = vpop.f32.mrb[0].mxu0
      %v7380 = vadd.f32 %v6871, %v7379
      %v7381 = vpop.f32.mrb[0].mxu0
      %v7382 = vpop.f32.mrb[0].mxu0
      %v7383 = vadd.f32 %v6871, %v7382
      %v7384 = vpop.f32.mrb[0].mxu0
      %7385 = vmatprep.mubr.bf16.mxu0 0
      %7386 = vmatmul.mubr.bf16.gmra.mrb[0].mxu0 %v6994
      %v7387 = vpop.f32.mrb[0].mxu0
      %v7388 = vadd.f32 %v6871, %v7387
      %v7389 = vpop.f32.mrb[0].mxu0
      %v7390 = vpop.f32.mrb[0].mxu0
      %v7391 = vadd.f32 %v6871, %v7390
      %v7392 = vpop.f32.mrb[0].mxu0
      %7393 = vmatprep.mubr.bf16.mxu0 0
      %7394 = vmatmul.mubr.bf16.gmra.mrb[0].mxu0 %v6997
      %v7395 = vpop.f32.mrb[0].mxu0
      %v7396 = vadd.f32 %v6871, %v7395
      %v7397 = vpop.f32.mrb[0].mxu0
      %v7398 = vpop.f32.mrb[0].mxu0
      %v7399 = vadd.f32 %v6871, %v7398
      %v7400 = vpop.f32.mrb[0].mxu0
      %7401 = vmatprep.mubr.bf16.mxu0 0
      %7402 = vmatmul.mubr.bf16.gmra.mrb[0].mxu0 %v7000
      %v7403 = vpop.f32.mrb[0].mxu0
      %v7404 = vadd.f32 %v6871, %v7403
      %v7405 = vpop.f32.mrb[0].mxu0
      %v7406 = vpop.f32.mrb[0].mxu0
      %v7407 = vadd.f32 %v6871, %v7406
      %v7408 = vpop.f32.mrb[0].mxu0
      %7409 = vmatprep.mubr.bf16.mxu0 0
      %7410 = vmatmul.mubr.bf16.gmra.mrb[0].mxu0 %v7003
      %v7411 = vpop.f32.mrb[0].mxu0
      %v7412 = vadd.f32 %v6871, %v7411
      %v7413 = vpop.f32.mrb[0].mxu0
      %v7414 = vpop.f32.mrb[0].mxu0
      %v7415 = vadd.f32 %v6871, %v7414
      %v7416 = vpop.f32.mrb[0].mxu0
      %7417 = vmatprep.mubr.bf16.mxu0 0
      %7418 = vmatmul.mubr.bf16.gmra.mrb[0].mxu0 %v7006
      %v7419 = vpop.f32.mrb[0].mxu0
      %v7420 = vadd.f32 %v6871, %v7419
      %v7421 = vpop.f32.mrb[0].mxu0
      %v7422 = vpop.f32.mrb[0].mxu0
      %v7423 = vadd.f32 %v6871, %v7422
      %v7424 = vpop.f32.mrb[0].mxu0
      %7425 = vmatprep.mubr.bf16.mxu0 0
      %7426 = vmatmul.mubr.bf16.gmra.mrb[0].mxu0 %v7009
      %v7427 = vpop.f32.mrb[0].mxu0
      %v7428 = vadd.f32 %v6871, %v7427
      %v7429 = vpop.f32.mrb[0].mxu0
      %v7430 = vpop.f32.mrb[0].mxu0
      %v7431 = vadd.f32 %v6871, %v7430
      %v7432 = vpop.f32.mrb[0].mxu0
      %7433 = vmatprep.mubr.bf16.mxu0 0
      %7434 = vmatmul.mubr.bf16.gmra.mrb[0].mxu0 %v7012
      %v7435 = vpop.f32.mrb[0].mxu0
      %v7436 = vadd.f32 %v6871, %v7435
      %v7437 = vpop.f32.mrb[0].mxu0
      %v7438 = vpop.f32.mrb[0].mxu0
      %v7439 = vadd.f32 %v6871, %v7438
      %v7440 = vpop.f32.mrb[0].mxu0
      %7441 = vmatprep.mubr.bf16.mxu0 0
      %7442 = vmatmul.mubr.bf16.gmra.mrb[0].mxu0 %v7015
      %v7443 = vpop.f32.mrb[0].mxu0
      %v7444 = vadd.f32 %v6871, %v7443
      %v7445 = vpop.f32.mrb[0].mxu0
      %v7446 = vpop.f32.mrb[0].mxu0
      %v7447 = vadd.f32 %v6871, %v7446
      %v7448 = vpop.f32.mrb[0].mxu0
      %7449 = vmatprep.mubr.bf16.mxu0 0
      %7450 = vmatmul.mubr.bf16.gmra.mrb[0].mxu0 %v7018
      %v7451 = vpop.f32.mrb[0].mxu0
      %v7452 = vadd.f32 %v6871, %v7451
      %v7453 = vpop.f32.mrb[0].mxu0
      %v7454 = vpop.f32.mrb[0].mxu0
      %v7455 = vadd.f32 %v6871, %v7454
      %v7456 = vpop.f32.mrb[0].mxu0
      %7457 = vmatprep.mubr.bf16.mxu0 0
      %7458 = vmatmul.mubr.bf16.gmra.mrb[0].mxu0 %v7021
      %v7459 = vpop.f32.mrb[0].mxu0
      %v7460 = vadd.f32 %v6871, %v7459
      %v7461 = vpop.f32.mrb[0].mxu0
      %v7462 = vpop.f32.mrb[0].mxu0
      %v7463 = vadd.f32 %v6871, %v7462
      %v7464 = vpop.f32.mrb[0].mxu0
      %7465 = vmatprep.mubr.bf16.mxu0 0
      %7466 = vmatmul.mubr.bf16.gmra.mrb[0].mxu0 %v7024
      %v7467 = vpop.f32.mrb[0].mxu0
      %v7468 = vadd.f32 %v6871, %v7467
      %v7469 = vpop.f32.mrb[0].mxu0
      %v7470 = vpop.f32.mrb[0].mxu0
      %v7471 = vadd.f32 %v6871, %v7470
      %v7472 = vpop.f32.mrb[0].mxu0
      %7473 = vmatprep.mubr.bf16.mxu0 0
      %7474 = vmatmul.mubr.bf16.gmra.mrb[0].mxu0 %v7027
      %v7475 = vpop.f32.mrb[0].mxu0
      %v7476 = vadd.f32 %v6871, %v7475
      %v7477 = vpop.f32.mrb[0].mxu0
      %v7478 = vpop.f32.mrb[0].mxu0
      %v7479 = vadd.f32 %v6871, %v7478
      %v7480 = vpop.f32.mrb[0].mxu0
      %7481 = vmatprep.mubr.bf16.mxu0 0
      %7482 = vmatmul.mubr.bf16.gmra.mrb[0].mxu0 %v7030
      %v7483 = vpop.f32.mrb[0].mxu0
      %v7484 = vadd.f32 %v6871, %v7483
      %v7485 = vpop.f32.mrb[0].mxu0
      %v7486 = vpop.f32.mrb[0].mxu0
      %v7487 = vadd.f32 %v6871, %v7486
      %v7488 = vpop.f32.mrb[0].mxu0
      %7489 = vmatprep.mubr.bf16.mxu0 0
      %7490 = vmatmul.mubr.bf16.gmra.mrb[0].mxu0 %v7033
      %v7491 = vpop.f32.mrb[0].mxu0
      %v7492 = vadd.f32 %v6871, %v7491
      %v7493 = vpop.f32.mrb[0].mxu0
      %v7494 = vpop.f32.mrb[0].mxu0
      %v7495 = vadd.f32 %v6871, %v7494
      %v7496 = vpop.f32.mrb[0].mxu0
      %7497 = vmatprep.mubr.bf16.mxu0 0
      %7498 = vmatmul.mubr.bf16.gmra.mrb[0].mxu0 %v7036
      %v7499 = vpop.f32.mrb[0].mxu0
      %v7500 = vadd.f32 %v6871, %v7499
      %v7501 = vpop.f32.mrb[0].mxu0
      %v7502 = vpop.f32.mrb[0].mxu0
      %v7503 = vadd.f32 %v6871, %v7502
      %v7504 = vpop.f32.mrb[0].mxu0
      %7505 = vmatprep.mubr.bf16.mxu0 0
      %7506 = vmatmul.mubr.bf16.gmra.mrb[0].mxu0 %v7039
      %v7507 = vpop.f32.mrb[0].mxu0
      %v7508 = vadd.f32 %v6871, %v7507
      %v7509 = vpop.f32.mrb[0].mxu0
      %v7510 = vpop.f32.mrb[0].mxu0
      %v7511 = vadd.f32 %v6871, %v7510
      %v7512 = vpop.f32.mrb[0].mxu0
      %7513 = vmatprep.mubr.bf16.mxu0 0
      %7514 = vmatmul.mubr.bf16.gmra.mrb[0].mxu0 %v7042
      %v7515 = vpop.f32.mrb[0].mxu0
      %v7516 = vadd.f32 %v6871, %v7515
      %v7517 = vpop.f32.mrb[0].mxu0
      %v7518 = vpop.f32.mrb[0].mxu0
      %v7519 = vadd.f32 %v6871, %v7518
      %v7520 = vpop.f32.mrb[0].mxu0
      %7521 = vmatprep.mubr.bf16.mxu0 0
      %7522 = vmatmul.mubr.bf16.gmra.mrb[0].mxu0 %v7045
      %v7523 = vpop.f32.mrb[0].mxu0
      %v7524 = vadd.f32 %v6871, %v7523
      %v7525 = vpop.f32.mrb[0].mxu0
      %v7526 = vpop.f32.mrb[0].mxu0
      %v7527 = vadd.f32 %v6871, %v7526
      %v7528 = vpop.f32.mrb[0].mxu0
      %7529 = vmatprep.mubr.bf16.mxu0 0
      %7530 = vmatmul.mubr.bf16.gmra.mrb[0].mxu0 %v7048
      %v7531 = vpop.f32.mrb[0].mxu0
      %v7532 = vadd.f32 %v6871, %v7531
      %v7533 = vpop.f32.mrb[0].mxu0
      %v7534 = vpop.f32.mrb[0].mxu0
      %v7535 = vadd.f32 %v6871, %v7534
      %v7536 = vpop.f32.mrb[0].mxu0
      %7537 = vmatprep.mubr.bf16.mxu0 0
      %7538 = vmatmul.mubr.bf16.gmra.mrb[0].mxu0 %v7051
      %v7539 = vpop.f32.mrb[0].mxu0
      %v7540 = vadd.f32 %v6871, %v7539
      %v7541 = vpop.f32.mrb[0].mxu0
      %v7542 = vpop.f32.mrb[0].mxu0
      %v7543 = vadd.f32 %v6871, %v7542
      %v7544 = vpop.f32.mrb[0].mxu0
      %7545 = vmatprep.mubr.bf16.mxu0 0
      %7546 = vmatmul.mubr.bf16.gmra.mrb[0].mxu0 %v7054
      %v7547 = vpop.f32.mrb[0].mxu0
      %v7548 = vadd.f32 %v6871, %v7547
      %v7549 = vpop.f32.mrb[0].mxu0
      %v7550 = vpop.f32.mrb[0].mxu0
      %v7551 = vadd.f32 %v6871, %v7550
      %v7552 = vpop.f32.mrb[0].mxu0
      %7553 = vmatprep.mubr.bf16.mxu0 0
      %7554 = vmatmul.mubr.bf16.gmra.mrb[0].mxu0 %v7057
      %v7555 = vpop.f32.mrb[0].mxu0
      %v7556 = vadd.f32 %v6871, %v7555
      %v7557 = vpop.f32.mrb[0].mxu0
      %v7558 = vpop.f32.mrb[0].mxu0
      %v7559 = vadd.f32 %v6871, %v7558
      %v7560 = vpop.f32.mrb[0].mxu0
      %7561 = vmatprep.mubr.bf16.mxu0 0
      %7562 = vmatmul.mubr.bf16.gmra.mrb[0].mxu0 %v7060
      %v7563 = vpop.f32.mrb[0].mxu0
      %v7564 = vadd.f32 %v6871, %v7563
      %v7565 = vpop.f32.mrb[0].mxu0
      %v7566 = vpop.f32.mrb[0].mxu0
      %v7567 = vadd.f32 %v6871, %v7566
      %v7568 = vpop.f32.mrb[0].mxu0
      %7569 = vmatprep.mubr.bf16.mxu0 0
      %7570 = vmatmul.mubr.bf16.gmra.mrb[0].mxu0 %v7063
      %v7571 = vpop.f32.mrb[0].mxu0
      %v7572 = vadd.f32 %v6871, %v7571
      %v7573 = vpop.f32.mrb[0].mxu0
      %v7574 = vpop.f32.mrb[0].mxu0
      %v7575 = vadd.f32 %v6871, %v7574
      %v7576 = vpop.f32.mrb[0].mxu0
      %7577 = vmatprep.mubr.bf16.mxu0 0
      %7578 = vmatmul.mubr.bf16.gmra.mrb[0].mxu0 %v7066
      %v7579 = vpop.f32.mrb[0].mxu0
      %v7580 = vadd.f32 %v6871, %v7579
      %v7581 = vpop.f32.mrb[0].mxu0
      %v7582 = vpop.f32.mrb[0].mxu0
      %v7583 = vadd.f32 %v6871, %v7582
      %v7584 = vpop.f32.mrb[0].mxu0
      %7585 = vmatprep.mubr.bf16.mxu0 0
      %7586 = vmatmul.mubr.bf16.gmra.mrb[0].mxu0 %v7069
      %v7587 = vpop.f32.mrb[0].mxu0
      %v7588 = vadd.f32 %v6871, %v7587
      %v7589 = vpop.f32.mrb[0].mxu0
      %v7590 = vpop.f32.mrb[0].mxu0
      %v7591 = vadd.f32 %v6871, %v7590
      %v7592 = vpop.f32.mrb[0].mxu0
      %7593 = vmatprep.mubr.bf16.mxu0 0
      %7594 = vmatmul.mubr.bf16.gmra.mrb[0].mxu0 %v7072
      %v7595 = vpop.f32.mrb[0].mxu0
      %v7596 = vadd.f32 %v6871, %v7595
      %v7597 = vpop.f32.mrb[0].mxu0
      %v7598 = vpop.f32.mrb[0].mxu0
      %v7599 = vadd.f32 %v6871, %v7598
      %v7600 = vpop.f32.mrb[0].mxu0
      %7601 = vmatprep.mubr.bf16.mxu0 0
      %7602 = vmatmul.mubr.bf16.gmra.mrb[0].mxu0 %v7075
      %v7603 = vpop.f32.mrb[0].mxu0
      %v7604 = vadd.f32 %v6871, %v7603
      %v7605 = vpop.f32.mrb[0].mxu0
      %v7606 = vpop.f32.mrb[0].mxu0
      %v7607 = vadd.f32 %v6871, %v7606
      %v7608 = vpop.f32.mrb[0].mxu0
      %7609 = vmatprep.mubr.bf16.mxu0 0
      %7610 = vmatmul.mubr.bf16.gmra.mrb[0].mxu0 %v7078
      %v7611 = vpop.f32.mrb[0].mxu0
      %v7612 = vadd.f32 %v6871, %v7611
      %v7613 = vpop.f32.mrb[0].mxu0
      %v7614 = vpop.f32.mrb[0].mxu0
      %v7615 = vadd.f32 %v6871, %v7614
      %v7616 = vpop.f32.mrb[0].mxu0
      %7617 = vmatprep.mubr.bf16.mxu0 0
      %7618 = vmatmul.mubr.bf16.gmra.mrb[0].mxu0 %v7081
      %v7619 = vpop.f32.mrb[0].mxu0
      %v7620 = vadd.f32 %v6871, %v7619
      %v7621 = vpop.f32.mrb[0].mxu0
      %v7622 = vpop.f32.mrb[0].mxu0
      %v7623 = vadd.f32 %v6871, %v7622
      %v7624 = vpop.f32.mrb[0].mxu0
      %7625 = vmatprep.mubr.bf16.mxu0 0
      %7626 = vmatmul.mubr.bf16.gmra.mrb[0].mxu0 %v7084
      %v7627 = vpop.f32.mrb[0].mxu0
      %v7628 = vadd.f32 %v6871, %v7627
      %v7629 = vpop.f32.mrb[0].mxu0
      %v7630 = vpop.f32.mrb[0].mxu0
      %v7631 = vadd.f32 %v6871, %v7630
      %v7632 = vpop.f32.mrb[0].mxu0
      %7633 = vdwg.mxu0
      %v7634 = vmul.f32 %v7124, 0.5
      %v7635 = vmul.f32 %v7127, 0.5
      %v7636 = vmul.f32 %v7132, 0.5
      %v7637 = vmul.f32 %v7135, 0.5
      %v7638 = vmul.f32 %v7140, 0.5
      %v7639 = vmul.f32 %v7143, 0.5
      %v7640 = vmul.f32 %v7148, 0.5
      %v7641 = vmul.f32 %v7151, 0.5
      %v7642 = vmul.f32 %v7156, 0.5
      %v7643 = vmul.f32 %v7159, 0.5
      %v7644 = vmul.f32 %v7164, 0.5
      %v7645 = vmul.f32 %v7167, 0.5
      %v7646 = vmul.f32 %v7172, 0.5
      %v7647 = vmul.f32 %v7175, 0.5
      %v7648 = vmul.f32 %v7180, 0.5
      %v7649 = vmul.f32 %v7183, 0.5
      %v7650 = vmul.f32 %v7188, 0.5
      %v7651 = vmul.f32 %v7191, 0.5
      %v7652 = vmul.f32 %v7196, 0.5
      %v7653 = vmul.f32 %v7199, 0.5
      %v7654 = vmul.f32 %v7204, 0.5
      %v7655 = vmul.f32 %v7207, 0.5
      %v7656 = vmul.f32 %v7212, 0.5
      %v7657 = vmul.f32 %v7215, 0.5
      %v7658 = vmul.f32 %v7220, 0.5
      %v7659 = vmul.f32 %v7223, 0.5
      %v7660 = vmul.f32 %v7228, 0.5
      %v7661 = vmul.f32 %v7231, 0.5
      %v7662 = vmul.f32 %v7236, 0.5
      %v7663 = vmul.f32 %v7239, 0.5
      %v7664 = vmul.f32 %v7244, 0.5
      %v7665 = vmul.f32 %v7247, 0.5
      %v7666 = vmul.f32 %v7252, 0.5
      %v7667 = vmul.f32 %v7255, 0.5
      %v7668 = vmul.f32 %v7260, 0.5
      %v7669 = vmul.f32 %v7263, 0.5
      %v7670 = vmul.f32 %v7268, 0.5
      %v7671 = vmul.f32 %v7271, 0.5
      %v7672 = vmul.f32 %v7276, 0.5
      %v7673 = vmul.f32 %v7279, 0.5
      %v7674 = vmul.f32 %v7284, 0.5
      %v7675 = vmul.f32 %v7287, 0.5
      %v7676 = vmul.f32 %v7292, 0.5
      %v7677 = vmul.f32 %v7295, 0.5
      %v7678 = vmul.f32 %v7300, 0.5
      %v7679 = vmul.f32 %v7303, 0.5
      %v7680 = vmul.f32 %v7308, 0.5
      %v7681 = vmul.f32 %v7311, 0.5
      %v7682 = vmul.f32 %v7316, 0.5
      %v7683 = vmul.f32 %v7319, 0.5
      %v7684 = vmul.f32 %v7324, 0.5
      %v7685 = vmul.f32 %v7327, 0.5
      %v7686 = vmul.f32 %v7332, 0.5
      %v7687 = vmul.f32 %v7335, 0.5
      %v7688 = vmul.f32 %v7340, 0.5
      %v7689 = vmul.f32 %v7343, 0.5
      %v7690 = vmul.f32 %v7348, 0.5
      %v7691 = vmul.f32 %v7351, 0.5
      %v7692 = vmul.f32 %v7356, 0.5
      %v7693 = vmul.f32 %v7359, 0.5
      %v7694 = vmul.f32 %v7364, 0.5
      %v7695 = vmul.f32 %v7367, 0.5
      %v7696 = vmul.f32 %v7372, 0.5
      %v7697 = vmul.f32 %v7375, 0.5
      %v7698 = vmul.f32 %v7380, 0.5
      %v7699 = vmul.f32 %v7383, 0.5
      %v7700 = vmul.f32 %v7388, 0.5
      %v7701 = vmul.f32 %v7391, 0.5
      %v7702 = vmul.f32 %v7396, 0.5
      %v7703 = vmul.f32 %v7399, 0.5
      %v7704 = vmul.f32 %v7404, 0.5
      %v7705 = vmul.f32 %v7407, 0.5
      %v7706 = vmul.f32 %v7412, 0.5
      %v7707 = vmul.f32 %v7415, 0.5
      %v7708 = vmul.f32 %v7420, 0.5
      %v7709 = vmul.f32 %v7423, 0.5
      %v7710 = vmul.f32 %v7428, 0.5
      %v7711 = vmul.f32 %v7431, 0.5
      %v7712 = vmul.f32 %v7436, 0.5
      %v7713 = vmul.f32 %v7439, 0.5
      %v7714 = vmul.f32 %v7444, 0.5
      %v7715 = vmul.f32 %v7447, 0.5
      %v7716 = vmul.f32 %v7452, 0.5
      %v7717 = vmul.f32 %v7455, 0.5
      %v7718 = vmul.f32 %v7460, 0.5
      %v7719 = vmul.f32 %v7463, 0.5
      %v7720 = vmul.f32 %v7468, 0.5
      %v7721 = vmul.f32 %v7471, 0.5
      %v7722 = vmul.f32 %v7476, 0.5
      %v7723 = vmul.f32 %v7479, 0.5
      %v7724 = vmul.f32 %v7484, 0.5
      %v7725 = vmul.f32 %v7487, 0.5
      %v7726 = vmul.f32 %v7492, 0.5
      %v7727 = vmul.f32 %v7495, 0.5
      %v7728 = vmul.f32 %v7500, 0.5
      %v7729 = vmul.f32 %v7503, 0.5
      %v7730 = vmul.f32 %v7508, 0.5
      %v7731 = vmul.f32 %v7511, 0.5
      %v7732 = vmul.f32 %v7516, 0.5
      %v7733 = vmul.f32 %v7519, 0.5
      %v7734 = vmul.f32 %v7524, 0.5
      %v7735 = vmul.f32 %v7527, 0.5
      %v7736 = vmul.f32 %v7532, 0.5
      %v7737 = vmul.f32 %v7535, 0.5
      %v7738 = vmul.f32 %v7540, 0.5
      %v7739 = vmul.f32 %v7543, 0.5
      %v7740 = vmul.f32 %v7548, 0.5
      %v7741 = vmul.f32 %v7551, 0.5
      %v7742 = vmul.f32 %v7556, 0.5
      %v7743 = vmul.f32 %v7559, 0.5
      %v7744 = vmul.f32 %v7564, 0.5
      %v7745 = vmul.f32 %v7567, 0.5
      %v7746 = vmul.f32 %v7572, 0.5
      %v7747 = vmul.f32 %v7575, 0.5
      %v7748 = vmul.f32 %v7580, 0.5
      %v7749 = vmul.f32 %v7583, 0.5
      %v7750 = vmul.f32 %v7588, 0.5
      %v7751 = vmul.f32 %v7591, 0.5
      %v7752 = vmul.f32 %v7596, 0.5
      %v7753 = vmul.f32 %v7599, 0.5
      %v7754 = vmul.f32 %v7604, 0.5
      %v7755 = vmul.f32 %v7607, 0.5
      %v7756 = vmul.f32 %v7612, 0.5
      %v7757 = vmul.f32 %v7615, 0.5
      %v7758 = vmul.f32 %v7620, 0.5
      %v7759 = vmul.f32 %v7623, 0.5
      %v7760 = vmul.f32 %v7628, 0.5
      %v7761 = vmul.f32 %v7631, 0.5
      %v7762 = vtanh.pop %v7634
      %v7763 = vtanh.pop %v7635
      %v7764 = vtanh.pop %v7636
      %v7765 = vtanh.pop %v7637
      %v7766 = vtanh.pop %v7638
      %v7767 = vtanh.pop %v7639
      %v7768 = vtanh.pop %v7640
      %v7769 = vtanh.pop %v7641
      %v7770 = vtanh.pop %v7642
      %v7771 = vtanh.pop %v7643
      %v7772 = vtanh.pop %v7644
      %v7773 = vtanh.pop %v7645
      %v7774 = vtanh.pop %v7646
      %v7775 = vtanh.pop %v7647
      %v7776 = vtanh.pop %v7648
      %v7777 = vtanh.pop %v7649
      %v7778 = vtanh.pop %v7650
      %v7779 = vtanh.pop %v7651
      %v7780 = vtanh.pop %v7652
      %v7781 = vtanh.pop %v7653
      %v7782 = vtanh.pop %v7654
      %v7783 = vtanh.pop %v7655
      %v7784 = vtanh.pop %v7656
      %v7785 = vtanh.pop %v7657
      %v7786 = vtanh.pop %v7658
      %v7787 = vtanh.pop %v7659
      %v7788 = vtanh.pop %v7660
      %v7789 = vtanh.pop %v7661
      %v7790 = vtanh.pop %v7662
      %v7791 = vtanh.pop %v7663
      %v7792 = vtanh.pop %v7664
      %v7793 = vtanh.pop %v7665
      %v7794 = vtanh.pop %v7666
      %v7795 = vtanh.pop %v7667
      %v7796 = vtanh.pop %v7668
      %v7797 = vtanh.pop %v7669
      %v7798 = vtanh.pop %v7670
      %v7799 = vtanh.pop %v7671
      %v7800 = vtanh.pop %v7672
      %v7801 = vtanh.pop %v7673
      %v7802 = vtanh.pop %v7674
      %v7803 = vtanh.pop %v7675
      %v7804 = vtanh.pop %v7676
      %v7805 = vtanh.pop %v7677
      %v7806 = vtanh.pop %v7678
      %v7807 = vtanh.pop %v7679
      %v7808 = vtanh.pop %v7680
      %v7809 = vtanh.pop %v7681
      %v7810 = vtanh.pop %v7682
      %v7811 = vtanh.pop %v7683
      %v7812 = vtanh.pop %v7684
      %v7813 = vtanh.pop %v7685
      %v7814 = vtanh.pop %v7686
      %v7815 = vtanh.pop %v7687
      %v7816 = vtanh.pop %v7688
      %v7817 = vtanh.pop %v7689
      %v7818 = vtanh.pop %v7690
      %v7819 = vtanh.pop %v7691
      %v7820 = vtanh.pop %v7692
      %v7821 = vtanh.pop %v7693
      %v7822 = vtanh.pop %v7694
      %v7823 = vtanh.pop %v7695
      %v7824 = vtanh.pop %v7696
      %v7825 = vtanh.pop %v7697
      %v7826 = vtanh.pop %v7698
      %v7827 = vtanh.pop %v7699
      %v7828 = vtanh.pop %v7700
      %v7829 = vtanh.pop %v7701
      %v7830 = vtanh.pop %v7702
      %v7831 = vtanh.pop %v7703
      %v7832 = vtanh.pop %v7704
      %v7833 = vtanh.pop %v7705
      %v7834 = vtanh.pop %v7706
      %v7835 = vtanh.pop %v7707
      %v7836 = vtanh.pop %v7708
      %v7837 = vtanh.pop %v7709
      %v7838 = vtanh.pop %v7710
      %v7839 = vtanh.pop %v7711
      %v7840 = vtanh.pop %v7712
      %v7841 = vtanh.pop %v7713
      %v7842 = vtanh.pop %v7714
      %v7843 = vtanh.pop %v7715
      %v7844 = vtanh.pop %v7716
      %v7845 = vtanh.pop %v7717
      %v7846 = vtanh.pop %v7718
      %v7847 = vtanh.pop %v7719
      %v7848 = vtanh.pop %v7720
      %v7849 = vtanh.pop %v7721
      %v7850 = vtanh.pop %v7722
      %v7851 = vtanh.pop %v7723
      %v7852 = vtanh.pop %v7724
      %v7853 = vtanh.pop %v7725
      %v7854 = vtanh.pop %v7726
      %v7855 = vtanh.pop %v7727
      %v7856 = vtanh.pop %v7728
      %v7857 = vtanh.pop %v7729
      %v7858 = vtanh.pop %v7730
      %v7859 = vtanh.pop %v7731
      %v7860 = vtanh.pop %v7732
      %v7861 = vtanh.pop %v7733
      %v7862 = vtanh.pop %v7734
      %v7863 = vtanh.pop %v7735
      %v7864 = vtanh.pop %v7736
      %v7865 = vtanh.pop %v7737
      %v7866 = vtanh.pop %v7738
      %v7867 = vtanh.pop %v7739
      %v7868 = vtanh.pop %v7740
      %v7869 = vtanh.pop %v7741
      %v7870 = vtanh.pop %v7742
      %v7871 = vtanh.pop %v7743
      %v7872 = vtanh.pop %v7744
      %v7873 = vtanh.pop %v7745
      %v7874 = vtanh.pop %v7746
      %v7875 = vtanh.pop %v7747
      %v7876 = vtanh.pop %v7748
      %v7877 = vtanh.pop %v7749
      %v7878 = vtanh.pop %v7750
      %v7879 = vtanh.pop %v7751
      %v7880 = vtanh.pop %v7752
      %v7881 = vtanh.pop %v7753
      %v7882 = vtanh.pop %v7754
      %v7883 = vtanh.pop %v7755
      %v7884 = vtanh.pop %v7756
      %v7885 = vtanh.pop %v7757
      %v7886 = vtanh.pop %v7758
      %v7887 = vtanh.pop %v7759
      %v7888 = vtanh.pop %v7760
      %v7889 = vtanh.pop %v7761
      %v7890 = vadd.f32 %v7762, 1.0
      %v7891 = vadd.f32 %v7763, 1.0
      %v7892 = vadd.f32 %v7764, 1.0
      %v7893 = vadd.f32 %v7765, 1.0
      %v7894 = vadd.f32 %v7766, 1.0
      %v7895 = vadd.f32 %v7767, 1.0
      %v7896 = vadd.f32 %v7768, 1.0
      %v7897 = vadd.f32 %v7769, 1.0
      %v7898 = vadd.f32 %v7770, 1.0
      %v7899 = vadd.f32 %v7771, 1.0
      %v7900 = vadd.f32 %v7772, 1.0
      %v7901 = vadd.f32 %v7773, 1.0
      %v7902 = vadd.f32 %v7774, 1.0
      %v7903 = vadd.f32 %v7775, 1.0
      %v7904 = vadd.f32 %v7776, 1.0
      %v7905 = vadd.f32 %v7777, 1.0
      %v7906 = vadd.f32 %v7778, 1.0
      %v7907 = vadd.f32 %v7779, 1.0
      %v7908 = vadd.f32 %v7780, 1.0
      %v7909 = vadd.f32 %v7781, 1.0
      %v7910 = vadd.f32 %v7782, 1.0
      %v7911 = vadd.f32 %v7783, 1.0
      %v7912 = vadd.f32 %v7784, 1.0
      %v7913 = vadd.f32 %v7785, 1.0
      %v7914 = vadd.f32 %v7786, 1.0
      %v7915 = vadd.f32 %v7787, 1.0
      %v7916 = vadd.f32 %v7788, 1.0
      %v7917 = vadd.f32 %v7789, 1.0
      %v7918 = vadd.f32 %v7790, 1.0
      %v7919 = vadd.f32 %v7791, 1.0
      %v7920 = vadd.f32 %v7792, 1.0
      %v7921 = vadd.f32 %v7793, 1.0
      %v7922 = vadd.f32 %v7794, 1.0
      %v7923 = vadd.f32 %v7795, 1.0
      %v7924 = vadd.f32 %v7796, 1.0
      %v7925 = vadd.f32 %v7797, 1.0
      %v7926 = vadd.f32 %v7798, 1.0
      %v7927 = vadd.f32 %v7799, 1.0
      %v7928 = vadd.f32 %v7800, 1.0
      %v7929 = vadd.f32 %v7801, 1.0
      %v7930 = vadd.f32 %v7802, 1.0
      %v7931 = vadd.f32 %v7803, 1.0
      %v7932 = vadd.f32 %v7804, 1.0
      %v7933 = vadd.f32 %v7805, 1.0
      %v7934 = vadd.f32 %v7806, 1.0
      %v7935 = vadd.f32 %v7807, 1.0
      %v7936 = vadd.f32 %v7808, 1.0
      %v7937 = vadd.f32 %v7809, 1.0
      %v7938 = vadd.f32 %v7810, 1.0
      %v7939 = vadd.f32 %v7811, 1.0
      %v7940 = vadd.f32 %v7812, 1.0
      %v7941 = vadd.f32 %v7813, 1.0
      %v7942 = vadd.f32 %v7814, 1.0
      %v7943 = vadd.f32 %v7815, 1.0
      %v7944 = vadd.f32 %v7816, 1.0
      %v7945 = vadd.f32 %v7817, 1.0
      %v7946 = vadd.f32 %v7818, 1.0
      %v7947 = vadd.f32 %v7819, 1.0
      %v7948 = vadd.f32 %v7820, 1.0
      %v7949 = vadd.f32 %v7821, 1.0
      %v7950 = vadd.f32 %v7822, 1.0
      %v7951 = vadd.f32 %v7823, 1.0
      %v7952 = vadd.f32 %v7824, 1.0
      %v7953 = vadd.f32 %v7825, 1.0
      %v7954 = vadd.f32 %v7826, 1.0
      %v7955 = vadd.f32 %v7827, 1.0
      %v7956 = vadd.f32 %v7828, 1.0
      %v7957 = vadd.f32 %v7829, 1.0
      %v7958 = vadd.f32 %v7830, 1.0
      %v7959 = vadd.f32 %v7831, 1.0
      %v7960 = vadd.f32 %v7832, 1.0
      %v7961 = vadd.f32 %v7833, 1.0
      %v7962 = vadd.f32 %v7834, 1.0
      %v7963 = vadd.f32 %v7835, 1.0
      %v7964 = vadd.f32 %v7836, 1.0
      %v7965 = vadd.f32 %v7837, 1.0
      %v7966 = vadd.f32 %v7838, 1.0
      %v7967 = vadd.f32 %v7839, 1.0
      %v7968 = vadd.f32 %v7840, 1.0
      %v7969 = vadd.f32 %v7841, 1.0
      %v7970 = vadd.f32 %v7842, 1.0
      %v7971 = vadd.f32 %v7843, 1.0
      %v7972 = vadd.f32 %v7844, 1.0
      %v7973 = vadd.f32 %v7845, 1.0
      %v7974 = vadd.f32 %v7846, 1.0
      %v7975 = vadd.f32 %v7847, 1.0
      %v7976 = vadd.f32 %v7848, 1.0
      %v7977 = vadd.f32 %v7849, 1.0
      %v7978 = vadd.f32 %v7850, 1.0
      %v7979 = vadd.f32 %v7851, 1.0
      %v7980 = vadd.f32 %v7852, 1.0
      %v7981 = vadd.f32 %v7853, 1.0
      %v7982 = vadd.f32 %v7854, 1.0
      %v7983 = vadd.f32 %v7855, 1.0
      %v7984 = vadd.f32 %v7856, 1.0
      %v7985 = vadd.f32 %v7857, 1.0
      %v7986 = vadd.f32 %v7858, 1.0
      %v7987 = vadd.f32 %v7859, 1.0
      %v7988 = vadd.f32 %v7860, 1.0
      %v7989 = vadd.f32 %v7861, 1.0
      %v7990 = vadd.f32 %v7862, 1.0
      %v7991 = vadd.f32 %v7863, 1.0
      %v7992 = vadd.f32 %v7864, 1.0
      %v7993 = vadd.f32 %v7865, 1.0
      %v7994 = vadd.f32 %v7866, 1.0
      %v7995 = vadd.f32 %v7867, 1.0
      %v7996 = vadd.f32 %v7868, 1.0
      %v7997 = vadd.f32 %v7869, 1.0
      %v7998 = vadd.f32 %v7870, 1.0
      %v7999 = vadd.f32 %v7871, 1.0
      %v8000 = vadd.f32 %v7872, 1.0
      %v8001 = vadd.f32 %v7873, 1.0
      %v8002 = vadd.f32 %v7874, 1.0
      %v8003 = vadd.f32 %v7875, 1.0
      %v8004 = vadd.f32 %v7876, 1.0
      %v8005 = vadd.f32 %v7877, 1.0
      %v8006 = vadd.f32 %v7878, 1.0
      %v8007 = vadd.f32 %v7879, 1.0
      %v8008 = vadd.f32 %v7880, 1.0
      %v8009 = vadd.f32 %v7881, 1.0
      %v8010 = vadd.f32 %v7882, 1.0
      %v8011 = vadd.f32 %v7883, 1.0
      %v8012 = vadd.f32 %v7884, 1.0
      %v8013 = vadd.f32 %v7885, 1.0
      %v8014 = vadd.f32 %v7886, 1.0
      %v8015 = vadd.f32 %v7887, 1.0
      %v8016 = vadd.f32 %v7888, 1.0
      %v8017 = vadd.f32 %v7889, 1.0
      %v8018 = vmul.f32 %v7890, 0.5
      %v8019 = vmul.f32 %v7891, 0.5
      %v8020 = vmul.f32 %v7892, 0.5
      %v8021 = vmul.f32 %v7893, 0.5
      %v8022 = vmul.f32 %v7894, 0.5
      %v8023 = vmul.f32 %v7895, 0.5
      %v8024 = vmul.f32 %v7896, 0.5
      %v8025 = vmul.f32 %v7897, 0.5
      %v8026 = vmul.f32 %v7898, 0.5
      %v8027 = vmul.f32 %v7899, 0.5
      %v8028 = vmul.f32 %v7900, 0.5
      %v8029 = vmul.f32 %v7901, 0.5
      %v8030 = vmul.f32 %v7902, 0.5
      %v8031 = vmul.f32 %v7903, 0.5
      %v8032 = vmul.f32 %v7904, 0.5
      %v8033 = vmul.f32 %v7905, 0.5
      %v8034 = vmul.f32 %v7906, 0.5
      %v8035 = vmul.f32 %v7907, 0.5
      %v8036 = vmul.f32 %v7908, 0.5
      %v8037 = vmul.f32 %v7909, 0.5
      %v8038 = vmul.f32 %v7910, 0.5
      %v8039 = vmul.f32 %v7911, 0.5
      %v8040 = vmul.f32 %v7912, 0.5
      %v8041 = vmul.f32 %v7913, 0.5
      %v8042 = vmul.f32 %v7914, 0.5
      %v8043 = vmul.f32 %v7915, 0.5
      %v8044 = vmul.f32 %v7916, 0.5
      %v8045 = vmul.f32 %v7917, 0.5
      %v8046 = vmul.f32 %v7918, 0.5
      %v8047 = vmul.f32 %v7919, 0.5
      %v8048 = vmul.f32 %v7920, 0.5
      %v8049 = vmul.f32 %v7921, 0.5
      %v8050 = vmul.f32 %v7922, 0.5
      %v8051 = vmul.f32 %v7923, 0.5
      %v8052 = vmul.f32 %v7924, 0.5
      %v8053 = vmul.f32 %v7925, 0.5
      %v8054 = vmul.f32 %v7926, 0.5
      %v8055 = vmul.f32 %v7927, 0.5
      %v8056 = vmul.f32 %v7928, 0.5
      %v8057 = vmul.f32 %v7929, 0.5
      %v8058 = vmul.f32 %v7930, 0.5
      %v8059 = vmul.f32 %v7931, 0.5
      %v8060 = vmul.f32 %v7932, 0.5
      %v8061 = vmul.f32 %v7933, 0.5
      %v8062 = vmul.f32 %v7934, 0.5
      %v8063 = vmul.f32 %v7935, 0.5
      %v8064 = vmul.f32 %v7936, 0.5
      %v8065 = vmul.f32 %v7937, 0.5
      %v8066 = vmul.f32 %v7938, 0.5
      %v8067 = vmul.f32 %v7939, 0.5
      %v8068 = vmul.f32 %v7940, 0.5
      %v8069 = vmul.f32 %v7941, 0.5
      %v8070 = vmul.f32 %v7942, 0.5
      %v8071 = vmul.f32 %v7943, 0.5
      %v8072 = vmul.f32 %v7944, 0.5
      %v8073 = vmul.f32 %v7945, 0.5
      %v8074 = vmul.f32 %v7946, 0.5
      %v8075 = vmul.f32 %v7947, 0.5
      %v8076 = vmul.f32 %v7948, 0.5
      %v8077 = vmul.f32 %v7949, 0.5
      %v8078 = vmul.f32 %v7950, 0.5
      %v8079 = vmul.f32 %v7951, 0.5
      %v8080 = vmul.f32 %v7952, 0.5
      %v8081 = vmul.f32 %v7953, 0.5
      %v8082 = vmul.f32 %v7954, 0.5
      %v8083 = vmul.f32 %v7955, 0.5
      %v8084 = vmul.f32 %v7956, 0.5
      %v8085 = vmul.f32 %v7957, 0.5
      %v8086 = vmul.f32 %v7958, 0.5
      %v8087 = vmul.f32 %v7959, 0.5
      %v8088 = vmul.f32 %v7960, 0.5
      %v8089 = vmul.f32 %v7961, 0.5
      %v8090 = vmul.f32 %v7962, 0.5
      %v8091 = vmul.f32 %v7963, 0.5
      %v8092 = vmul.f32 %v7964, 0.5
      %v8093 = vmul.f32 %v7965, 0.5
      %v8094 = vmul.f32 %v7966, 0.5
      %v8095 = vmul.f32 %v7967, 0.5
      %v8096 = vmul.f32 %v7968, 0.5
      %v8097 = vmul.f32 %v7969, 0.5
      %v8098 = vmul.f32 %v7970, 0.5
      %v8099 = vmul.f32 %v7971, 0.5
      %v8100 = vmul.f32 %v7972, 0.5
      %v8101 = vmul.f32 %v7973, 0.5
      %v8102 = vmul.f32 %v7974, 0.5
      %v8103 = vmul.f32 %v7975, 0.5
      %v8104 = vmul.f32 %v7976, 0.5
      %v8105 = vmul.f32 %v7977, 0.5
      %v8106 = vmul.f32 %v7978, 0.5
      %v8107 = vmul.f32 %v7979, 0.5
      %v8108 = vmul.f32 %v7980, 0.5
      %v8109 = vmul.f32 %v7981, 0.5
      %v8110 = vmul.f32 %v7982, 0.5
      %v8111 = vmul.f32 %v7983, 0.5
      %v8112 = vmul.f32 %v7984, 0.5
      %v8113 = vmul.f32 %v7985, 0.5
      %v8114 = vmul.f32 %v7986, 0.5
      %v8115 = vmul.f32 %v7987, 0.5
      %v8116 = vmul.f32 %v7988, 0.5
      %v8117 = vmul.f32 %v7989, 0.5
      %v8118 = vmul.f32 %v7990, 0.5
      %v8119 = vmul.f32 %v7991, 0.5
      %v8120 = vmul.f32 %v7992, 0.5
      %v8121 = vmul.f32 %v7993, 0.5
      %v8122 = vmul.f32 %v7994, 0.5
      %v8123 = vmul.f32 %v7995, 0.5
      %v8124 = vmul.f32 %v7996, 0.5
      %v8125 = vmul.f32 %v7997, 0.5
      %v8126 = vmul.f32 %v7998, 0.5
      %v8127 = vmul.f32 %v7999, 0.5
      %v8128 = vmul.f32 %v8000, 0.5
      %v8129 = vmul.f32 %v8001, 0.5
      %v8130 = vmul.f32 %v8002, 0.5
      %v8131 = vmul.f32 %v8003, 0.5
      %v8132 = vmul.f32 %v8004, 0.5
      %v8133 = vmul.f32 %v8005, 0.5
      %v8134 = vmul.f32 %v8006, 0.5
      %v8135 = vmul.f32 %v8007, 0.5
      %v8136 = vmul.f32 %v8008, 0.5
      %v8137 = vmul.f32 %v8009, 0.5
      %v8138 = vmul.f32 %v8010, 0.5
      %v8139 = vmul.f32 %v8011, 0.5
      %v8140 = vmul.f32 %v8012, 0.5
      %v8141 = vmul.f32 %v8013, 0.5
      %v8142 = vmul.f32 %v8014, 0.5
      %v8143 = vmul.f32 %v8015, 0.5
      %v8144 = vmul.f32 %v8016, 0.5
      %v8145 = vmul.f32 %v8017, 0.5
      %v8146 = vadd.f32 %v8018, %v5312
      %v8147 = vadd.f32 %v8019, %v5313
      %v8148 = vadd.f32 %v8020, %v5314
      %v8149 = vadd.f32 %v8021, %v5315
      %v8150 = vadd.f32 %v8022, %v5316
      %v8151 = vadd.f32 %v8023, %v5317
      %v8152 = vadd.f32 %v8024, %v5318
      %v8153 = vadd.f32 %v8025, %v5319
      %v8154 = vadd.f32 %v8026, %v5320
      %v8155 = vadd.f32 %v8027, %v5321
      %v8156 = vadd.f32 %v8028, %v5322
      %v8157 = vadd.f32 %v8029, %v5323
      %v8158 = vadd.f32 %v8030, %v5324
      %v8159 = vadd.f32 %v8031, %v5325
      %v8160 = vadd.f32 %v8032, %v5326
      %v8161 = vadd.f32 %v8033, %v5327
      %v8162 = vadd.f32 %v8034, %v5328
      %v8163 = vadd.f32 %v8035, %v5329
      %v8164 = vadd.f32 %v8036, %v5330
      %v8165 = vadd.f32 %v8037, %v5331
      %v8166 = vadd.f32 %v8038, %v5332
      %v8167 = vadd.f32 %v8039, %v5333
      %v8168 = vadd.f32 %v8040, %v5334
      %v8169 = vadd.f32 %v8041, %v5335
      %v8170 = vadd.f32 %v8042, %v5336
      %v8171 = vadd.f32 %v8043, %v5337
      %v8172 = vadd.f32 %v8044, %v5338
      %v8173 = vadd.f32 %v8045, %v5339
      %v8174 = vadd.f32 %v8046, %v5340
      %v8175 = vadd.f32 %v8047, %v5341
      %v8176 = vadd.f32 %v8048, %v5342
      %v8177 = vadd.f32 %v8049, %v5343
      %v8178 = vadd.f32 %v8050, %v5344
      %v8179 = vadd.f32 %v8051, %v5345
      %v8180 = vadd.f32 %v8052, %v5346
      %v8181 = vadd.f32 %v8053, %v5347
      %v8182 = vadd.f32 %v8054, %v5348
      %v8183 = vadd.f32 %v8055, %v5349
      %v8184 = vadd.f32 %v8056, %v5350
      %v8185 = vadd.f32 %v8057, %v5351
      %v8186 = vadd.f32 %v8058, %v5352
      %v8187 = vadd.f32 %v8059, %v5353
      %v8188 = vadd.f32 %v8060, %v5354
      %v8189 = vadd.f32 %v8061, %v5355
      %v8190 = vadd.f32 %v8062, %v5356
      %v8191 = vadd.f32 %v8063, %v5357
      %v8192 = vadd.f32 %v8064, %v5358
      %v8193 = vadd.f32 %v8065, %v5359
      %v8194 = vadd.f32 %v8066, %v5360
      %v8195 = vadd.f32 %v8067, %v5361
      %v8196 = vadd.f32 %v8068, %v5362
      %v8197 = vadd.f32 %v8069, %v5363
      %v8198 = vadd.f32 %v8070, %v5364
      %v8199 = vadd.f32 %v8071, %v5365
      %v8200 = vadd.f32 %v8072, %v5366
      %v8201 = vadd.f32 %v8073, %v5367
      %v8202 = vadd.f32 %v8074, %v5368
      %v8203 = vadd.f32 %v8075, %v5369
      %v8204 = vadd.f32 %v8076, %v5370
      %v8205 = vadd.f32 %v8077, %v5371
      %v8206 = vadd.f32 %v8078, %v5372
      %v8207 = vadd.f32 %v8079, %v5373
      %v8208 = vadd.f32 %v8080, %v5374
      %v8209 = vadd.f32 %v8081, %v5375
      %v8210 = vadd.f32 %v8082, %v5376
      %v8211 = vadd.f32 %v8083, %v5377
      %v8212 = vadd.f32 %v8084, %v5378
      %v8213 = vadd.f32 %v8085, %v5379
      %v8214 = vadd.f32 %v8086, %v5380
      %v8215 = vadd.f32 %v8087, %v5381
      %v8216 = vadd.f32 %v8088, %v5382
      %v8217 = vadd.f32 %v8089, %v5383
      %v8218 = vadd.f32 %v8090, %v5384
      %v8219 = vadd.f32 %v8091, %v5385
      %v8220 = vadd.f32 %v8092, %v5386
      %v8221 = vadd.f32 %v8093, %v5387
      %v8222 = vadd.f32 %v8094, %v5388
      %v8223 = vadd.f32 %v8095, %v5389
      %v8224 = vadd.f32 %v8096, %v5390
      %v8225 = vadd.f32 %v8097, %v5391
      %v8226 = vadd.f32 %v8098, %v5392
      %v8227 = vadd.f32 %v8099, %v5393
      %v8228 = vadd.f32 %v8100, %v5394
      %v8229 = vadd.f32 %v8101, %v5395
      %v8230 = vadd.f32 %v8102, %v5396
      %v8231 = vadd.f32 %v8103, %v5397
      %v8232 = vadd.f32 %v8104, %v5398
      %v8233 = vadd.f32 %v8105, %v5399
      %v8234 = vadd.f32 %v8106, %v5400
      %v8235 = vadd.f32 %v8107, %v5401
      %v8236 = vadd.f32 %v8108, %v5402
      %v8237 = vadd.f32 %v8109, %v5403
      %v8238 = vadd.f32 %v8110, %v5404
      %v8239 = vadd.f32 %v8111, %v5405
      %v8240 = vadd.f32 %v8112, %v5406
      %v8241 = vadd.f32 %v8113, %v5407
      %v8242 = vadd.f32 %v8114, %v5408
      %v8243 = vadd.f32 %v8115, %v5409
      %v8244 = vadd.f32 %v8116, %v5410
      %v8245 = vadd.f32 %v8117, %v5411
      %v8246 = vadd.f32 %v8118, %v5412
      %v8247 = vadd.f32 %v8119, %v5413
      %v8248 = vadd.f32 %v8120, %v5414
      %v8249 = vadd.f32 %v8121, %v5415
      %v8250 = vadd.f32 %v8122, %v5416
      %v8251 = vadd.f32 %v8123, %v5417
      %v8252 = vadd.f32 %v8124, %v5418
      %v8253 = vadd.f32 %v8125, %v5419
      %v8254 = vadd.f32 %v8126, %v5420
      %v8255 = vadd.f32 %v8127, %v5421
      %v8256 = vadd.f32 %v8128, %v5422
      %v8257 = vadd.f32 %v8129, %v5423
      %v8258 = vadd.f32 %v8130, %v5424
      %v8259 = vadd.f32 %v8131, %v5425
      %v8260 = vadd.f32 %v8132, %v5426
      %v8261 = vadd.f32 %v8133, %v5427
      %v8262 = vadd.f32 %v8134, %v5428
      %v8263 = vadd.f32 %v8135, %v5429
      %v8264 = vadd.f32 %v8136, %v5430
      %v8265 = vadd.f32 %v8137, %v5431
      %v8266 = vadd.f32 %v8138, %v5432
      %v8267 = vadd.f32 %v8139, %v5433
      %v8268 = vadd.f32 %v8140, %v5434
      %v8269 = vadd.f32 %v8141, %v5435
      %v8270 = vadd.f32 %v8142, %v5436
      %v8271 = vadd.f32 %v8143, %v5437
      %v8272 = vadd.f32 %v8144, %v5438
      %v8273 = vadd.f32 %v8145, %v5439
      %v8274 = vpack.c.bf16 %v8147, %v8146
      %v8275 = vpack.c.bf16 %v8149, %v8148
      %v8276 = vpack.c.bf16 %v8151, %v8150
      %v8277 = vpack.c.bf16 %v8153, %v8152
      %v8278 = vpack.c.bf16 %v8155, %v8154
      %v8279 = vpack.c.bf16 %v8157, %v8156
      %v8280 = vpack.c.bf16 %v8159, %v8158
      %v8281 = vpack.c.bf16 %v8161, %v8160
      %v8282 = vpack.c.bf16 %v8163, %v8162
      %v8283 = vpack.c.bf16 %v8165, %v8164
      %v8284 = vpack.c.bf16 %v8167, %v8166
      %v8285 = vpack.c.bf16 %v8169, %v8168
      %v8286 = vpack.c.bf16 %v8171, %v8170
      %v8287 = vpack.c.bf16 %v8173, %v8172
      %v8288 = vpack.c.bf16 %v8175, %v8174
      %v8289 = vpack.c.bf16 %v8177, %v8176
      %v8290 = vpack.c.bf16 %v8179, %v8178
      %v8291 = vpack.c.bf16 %v8181, %v8180
      %v8292 = vpack.c.bf16 %v8183, %v8182
      %v8293 = vpack.c.bf16 %v8185, %v8184
      %v8294 = vpack.c.bf16 %v8187, %v8186
      %v8295 = vpack.c.bf16 %v8189, %v8188
      %v8296 = vpack.c.bf16 %v8191, %v8190
      %v8297 = vpack.c.bf16 %v8193, %v8192
      %v8298 = vpack.c.bf16 %v8195, %v8194
      %v8299 = vpack.c.bf16 %v8197, %v8196
      %v8300 = vpack.c.bf16 %v8199, %v8198
      %v8301 = vpack.c.bf16 %v8201, %v8200
      %v8302 = vpack.c.bf16 %v8203, %v8202
      %v8303 = vpack.c.bf16 %v8205, %v8204
      %v8304 = vpack.c.bf16 %v8207, %v8206
      %v8305 = vpack.c.bf16 %v8209, %v8208
      %v8306 = vpack.c.bf16 %v8211, %v8210
      %v8307 = vpack.c.bf16 %v8213, %v8212
      %v8308 = vpack.c.bf16 %v8215, %v8214
      %v8309 = vpack.c.bf16 %v8217, %v8216
      %v8310 = vpack.c.bf16 %v8219, %v8218
      %v8311 = vpack.c.bf16 %v8221, %v8220
      %v8312 = vpack.c.bf16 %v8223, %v8222
      %v8313 = vpack.c.bf16 %v8225, %v8224
      %v8314 = vpack.c.bf16 %v8227, %v8226
      %v8315 = vpack.c.bf16 %v8229, %v8228
      %v8316 = vpack.c.bf16 %v8231, %v8230
      %v8317 = vpack.c.bf16 %v8233, %v8232
      %v8318 = vpack.c.bf16 %v8235, %v8234
      %v8319 = vpack.c.bf16 %v8237, %v8236
      %v8320 = vpack.c.bf16 %v8239, %v8238
      %v8321 = vpack.c.bf16 %v8241, %v8240
      %v8322 = vpack.c.bf16 %v8243, %v8242
      %v8323 = vpack.c.bf16 %v8245, %v8244
      %v8324 = vpack.c.bf16 %v8247, %v8246
      %v8325 = vpack.c.bf16 %v8249, %v8248
      %v8326 = vpack.c.bf16 %v8251, %v8250
      %v8327 = vpack.c.bf16 %v8253, %v8252
      %v8328 = vpack.c.bf16 %v8255, %v8254
      %v8329 = vpack.c.bf16 %v8257, %v8256
      %v8330 = vpack.c.bf16 %v8259, %v8258
      %v8331 = vpack.c.bf16 %v8261, %v8260
      %v8332 = vpack.c.bf16 %v8263, %v8262
      %v8333 = vpack.c.bf16 %v8265, %v8264
      %v8334 = vpack.c.bf16 %v8267, %v8266
      %v8335 = vpack.c.bf16 %v8269, %v8268
      %v8336 = vpack.c.bf16 %v8271, %v8270
      %v8337 = vpack.c.bf16 %v8273, %v8272
      %s8338 = scalar_lea.vmem %s3, 112
      %v8339 = vld [vmem:[%s8338] sm:$0xf]
      %v8340 = vld [vmem:[%s8338 + $0x4] sm:$0xf]
      %v8341 = vld [vmem:[%s8338 + $0x8] sm:$0xf]
      %v8342 = vld [vmem:[%s8338 + $0xc] sm:$0xf]
      %v8343 = vld [vmem:[%s8338 + $0x10] sm:$0xf]
      %v8344 = vld [vmem:[%s8338 + $0x14] sm:$0xf]
      %v8345 = vld [vmem:[%s8338 + $0x18] sm:$0x1]
      %s8346 = scalar_lea.vmem %s4, 4
      %v8347 = vld [vmem:[%s8346] sm:$0x1]
      %v8349 = vlaneseq
      %v8350 = vshrl.u32 %v8349, 7
      %v8351 = vsub.s32 0, %v8350
      %v8352 = vrot.slane %v8347, %v8351
      %v8361 = vunpack.c.l.b16 %v8339
      %v8362 = vunpack.c.l.b16 %v8340
      %v8363 = vunpack.c.l.b16 %v8341
      %v8364 = vunpack.c.l.b16 %v8342
      %v8365 = vunpack.c.l.b16 %v8343
      %v8366 = vunpack.c.l.b16 %v8344
      %v8367 = vunpack.c.l.b16 %v8345
      %v8368 = vpack.c.b16 %v8362, %v8361
      %v8369 = vpack.c.b16 %v8364, %v8363
      %v8370 = vpack.c.b16 %v8366, %v8365
      %v8371 = vpack.c.b16 %v8367, %v8367
      %v8376 = vsel %vm2705, %v8274, 0
      %v8379 = vsel %vm2705, %v8275, 0
      %v8382 = vsel %vm2705, %v8276, 0
      %v8385 = vsel %vm2705, %v8277, 0
      %v8388 = vsel %vm2705, %v8278, 0
      %v8391 = vsel %vm2705, %v8279, 0
      %v8394 = vsel %vm2705, %v8280, 0
      %v8397 = vsel %vm2705, %v8281, 0
      %v8400 = vsel %vm2705, %v8282, 0
      %v8403 = vsel %vm2705, %v8283, 0
      %v8406 = vsel %vm2705, %v8284, 0
      %v8409 = vsel %vm2705, %v8285, 0
      %v8412 = vsel %vm2705, %v8286, 0
      %v8415 = vsel %vm2705, %v8287, 0
      %v8418 = vsel %vm2705, %v8288, 0
      %v8421 = vsel %vm2705, %v8289, 0
      %v8424 = vsel %vm2705, %v8290, 0
      %v8427 = vsel %vm2705, %v8291, 0
      %v8430 = vsel %vm2705, %v8292, 0
      %v8433 = vsel %vm2705, %v8293, 0
      %v8436 = vsel %vm2705, %v8294, 0
      %v8439 = vsel %vm2705, %v8295, 0
      %v8442 = vsel %vm2705, %v8296, 0
      %v8445 = vsel %vm2705, %v8297, 0
      %v8448 = vsel %vm2705, %v8298, 0
      %v8451 = vsel %vm2705, %v8299, 0
      %v8454 = vsel %vm2705, %v8300, 0
      %v8457 = vsel %vm2705, %v8301, 0
      %v8460 = vsel %vm2705, %v8302, 0
      %v8463 = vsel %vm2705, %v8303, 0
      %v8466 = vsel %vm2705, %v8304, 0
      %v8469 = vsel %vm2705, %v8305, 0
      %v8472 = vsel %vm2705, %v8306, 0
      %v8475 = vsel %vm2705, %v8307, 0
      %v8478 = vsel %vm2705, %v8308, 0
      %v8481 = vsel %vm2705, %v8309, 0
      %v8484 = vsel %vm2705, %v8310, 0
      %v8487 = vsel %vm2705, %v8311, 0
      %v8490 = vsel %vm2705, %v8312, 0
      %v8493 = vsel %vm2705, %v8313, 0
      %v8496 = vsel %vm2705, %v8314, 0
      %v8499 = vsel %vm2705, %v8315, 0
      %v8502 = vsel %vm2705, %v8316, 0
      %v8505 = vsel %vm2705, %v8317, 0
      %v8508 = vsel %vm2705, %v8318, 0
      %v8511 = vsel %vm2705, %v8319, 0
      %v8514 = vsel %vm2705, %v8320, 0
      %v8517 = vsel %vm2705, %v8321, 0
      %v8520 = vsel %vm2705, %v8322, 0
      %v8523 = vsel %vm2705, %v8323, 0
      %v8526 = vsel %vm2705, %v8324, 0
      %v8529 = vsel %vm2705, %v8325, 0
      %v8532 = vsel %vm2705, %v8326, 0
      %v8535 = vsel %vm2705, %v8327, 0
      %v8538 = vsel %vm2705, %v8328, 0
      %v8541 = vsel %vm2705, %v8329, 0
      %v8544 = vsel %vm2705, %v8330, 0
      %v8547 = vsel %vm2705, %v8331, 0
      %v8550 = vsel %vm2705, %v8332, 0
      %v8553 = vsel %vm2705, %v8333, 0
      %v8556 = vsel %vm2705, %v8334, 0
      %v8559 = vsel %vm2705, %v8335, 0
      %v8562 = vsel %vm2705, %v8336, 0
      %v8565 = vsel %vm2705, %v8337, 0
      %v8568 = vsel %vm2898, %v8371, 0
      %8570 = vmatprep.subr.bf16.mxu0 0
      %8571 = vmatpush1.bf16.msra.mxu0 %v8368
      %8572 = vmatprep.subr.bf16.mxu0 0
      %8573 = vmatpush1.bf16.msra.mxu0 %v8369
      %8574 = vmatprep.subr.bf16.mxu0 0
      %8575 = vmatpush1.bf16.msra.mxu0 %v8370
      %8576 = vmatprep.subr.bf16.mxu0 0
      %8577 = vmatpush1.bf16.msra.mxu0 %v8568
      %8578 = vmatprep.subr.bf16.mxu0 0
      %8579 = vmatpush1.bf16.msra.mxu0 0
      %8580 = vmatprep.subr.bf16.mxu0 0
      %8581 = vmatpush1.bf16.msra.mxu0 0
      %8582 = vmatprep.subr.bf16.mxu0 0
      %8583 = vmatpush1.bf16.msra.mxu0 0
      %8584 = vmatprep.subr.bf16.mxu0 0
      %8585 = vmatpush1.bf16.msra.mxu0 0
      %8586 = vmatprep.subr.bf16.mxu0 0
      %8587 = vmatpush1.bf16.msra.mxu0 0
      %8588 = vmatprep.subr.bf16.mxu0 0
      %8589 = vmatpush1.bf16.msra.mxu0 0
      %8590 = vmatprep.subr.bf16.mxu0 0
      %8591 = vmatpush1.bf16.msra.mxu0 0
      %8592 = vmatprep.subr.bf16.mxu0 0
      %8593 = vmatpush1.bf16.msra.mxu0 0
      %8594 = vmatprep.subr.bf16.mxu0 0
      %8595 = vmatpush1.bf16.msra.mxu0 0
      %8596 = vmatprep.subr.bf16.mxu0 0
      %8597 = vmatpush1.bf16.msra.mxu0 0
      %8598 = vmatprep.subr.bf16.mxu0 0
      %8599 = vmatpush1.bf16.msra.mxu0 0
      %8600 = vmatprep.subr.bf16.mxu0 0
      %8601 = vmatpush1.bf16.msra.mxu0 0
      %8602 = vmatprep.mubr.bf16.mxu0 0
      %8603 = vmatmul.mubr.bf16.gmra.mrb[0].mxu0 %v8376
      %v8604 = vpop.f32.mrb[0].mxu0
      %v8605 = vadd.f32 %v8352, %v8604
      %v8606 = vpop.f32.mrb[0].mxu0
      %v8607 = vpop.f32.mrb[0].mxu0
      %v8608 = vadd.f32 %v8352, %v8607
      %v8609 = vpop.f32.mrb[0].mxu0
      %8610 = vmatprep.mubr.bf16.mxu0 0
      %8611 = vmatmul.mubr.bf16.gmra.mrb[0].mxu0 %v8379
      %v8612 = vpop.f32.mrb[0].mxu0
      %v8613 = vadd.f32 %v8352, %v8612
      %v8614 = vpop.f32.mrb[0].mxu0
      %v8615 = vpop.f32.mrb[0].mxu0
      %v8616 = vadd.f32 %v8352, %v8615
      %v8617 = vpop.f32.mrb[0].mxu0
      %8618 = vmatprep.mubr.bf16.mxu0 0
      %8619 = vmatmul.mubr.bf16.gmra.mrb[0].mxu0 %v8382
      %v8620 = vpop.f32.mrb[0].mxu0
      %v8621 = vadd.f32 %v8352, %v8620
      %v8622 = vpop.f32.mrb[0].mxu0
      %v8623 = vpop.f32.mrb[0].mxu0
      %v8624 = vadd.f32 %v8352, %v8623
      %v8625 = vpop.f32.mrb[0].mxu0
      %8626 = vmatprep.mubr.bf16.mxu0 0
      %8627 = vmatmul.mubr.bf16.gmra.mrb[0].mxu0 %v8385
      %v8628 = vpop.f32.mrb[0].mxu0
      %v8629 = vadd.f32 %v8352, %v8628
      %v8630 = vpop.f32.mrb[0].mxu0
      %v8631 = vpop.f32.mrb[0].mxu0
      %v8632 = vadd.f32 %v8352, %v8631
      %v8633 = vpop.f32.mrb[0].mxu0
      %8634 = vmatprep.mubr.bf16.mxu0 0
      %8635 = vmatmul.mubr.bf16.gmra.mrb[0].mxu0 %v8388
      %v8636 = vpop.f32.mrb[0].mxu0
      %v8637 = vadd.f32 %v8352, %v8636
      %v8638 = vpop.f32.mrb[0].mxu0
      %v8639 = vpop.f32.mrb[0].mxu0
      %v8640 = vadd.f32 %v8352, %v8639
      %v8641 = vpop.f32.mrb[0].mxu0
      %8642 = vmatprep.mubr.bf16.mxu0 0
      %8643 = vmatmul.mubr.bf16.gmra.mrb[0].mxu0 %v8391
      %v8644 = vpop.f32.mrb[0].mxu0
      %v8645 = vadd.f32 %v8352, %v8644
      %v8646 = vpop.f32.mrb[0].mxu0
      %v8647 = vpop.f32.mrb[0].mxu0
      %v8648 = vadd.f32 %v8352, %v8647
      %v8649 = vpop.f32.mrb[0].mxu0
      %8650 = vmatprep.mubr.bf16.mxu0 0
      %8651 = vmatmul.mubr.bf16.gmra.mrb[0].mxu0 %v8394
      %v8652 = vpop.f32.mrb[0].mxu0
      %v8653 = vadd.f32 %v8352, %v8652
      %v8654 = vpop.f32.mrb[0].mxu0
      %v8655 = vpop.f32.mrb[0].mxu0
      %v8656 = vadd.f32 %v8352, %v8655
      %v8657 = vpop.f32.mrb[0].mxu0
      %8658 = vmatprep.mubr.bf16.mxu0 0
      %8659 = vmatmul.mubr.bf16.gmra.mrb[0].mxu0 %v8397
      %v8660 = vpop.f32.mrb[0].mxu0
      %v8661 = vadd.f32 %v8352, %v8660
      %v8662 = vpop.f32.mrb[0].mxu0
      %v8663 = vpop.f32.mrb[0].mxu0
      %v8664 = vadd.f32 %v8352, %v8663
      %v8665 = vpop.f32.mrb[0].mxu0
      %8666 = vmatprep.mubr.bf16.mxu0 0
      %8667 = vmatmul.mubr.bf16.gmra.mrb[0].mxu0 %v8400
      %v8668 = vpop.f32.mrb[0].mxu0
      %v8669 = vadd.f32 %v8352, %v8668
      %v8670 = vpop.f32.mrb[0].mxu0
      %v8671 = vpop.f32.mrb[0].mxu0
      %v8672 = vadd.f32 %v8352, %v8671
      %v8673 = vpop.f32.mrb[0].mxu0
      %8674 = vmatprep.mubr.bf16.mxu0 0
      %8675 = vmatmul.mubr.bf16.gmra.mrb[0].mxu0 %v8403
      %v8676 = vpop.f32.mrb[0].mxu0
      %v8677 = vadd.f32 %v8352, %v8676
      %v8678 = vpop.f32.mrb[0].mxu0
      %v8679 = vpop.f32.mrb[0].mxu0
      %v8680 = vadd.f32 %v8352, %v8679
      %v8681 = vpop.f32.mrb[0].mxu0
      %8682 = vmatprep.mubr.bf16.mxu0 0
      %8683 = vmatmul.mubr.bf16.gmra.mrb[0].mxu0 %v8406
      %v8684 = vpop.f32.mrb[0].mxu0
      %v8685 = vadd.f32 %v8352, %v8684
      %v8686 = vpop.f32.mrb[0].mxu0
      %v8687 = vpop.f32.mrb[0].mxu0
      %v8688 = vadd.f32 %v8352, %v8687
      %v8689 = vpop.f32.mrb[0].mxu0
      %8690 = vmatprep.mubr.bf16.mxu0 0
      %8691 = vmatmul.mubr.bf16.gmra.mrb[0].mxu0 %v8409
      %v8692 = vpop.f32.mrb[0].mxu0
      %v8693 = vadd.f32 %v8352, %v8692
      %v8694 = vpop.f32.mrb[0].mxu0
      %v8695 = vpop.f32.mrb[0].mxu0
      %v8696 = vadd.f32 %v8352, %v8695
      %v8697 = vpop.f32.mrb[0].mxu0
      %8698 = vmatprep.mubr.bf16.mxu0 0
      %8699 = vmatmul.mubr.bf16.gmra.mrb[0].mxu0 %v8412
      %v8700 = vpop.f32.mrb[0].mxu0
      %v8701 = vadd.f32 %v8352, %v8700
      %v8702 = vpop.f32.mrb[0].mxu0
      %v8703 = vpop.f32.mrb[0].mxu0
      %v8704 = vadd.f32 %v8352, %v8703
      %v8705 = vpop.f32.mrb[0].mxu0
      %8706 = vmatprep.mubr.bf16.mxu0 0
      %8707 = vmatmul.mubr.bf16.gmra.mrb[0].mxu0 %v8415
      %v8708 = vpop.f32.mrb[0].mxu0
      %v8709 = vadd.f32 %v8352, %v8708
      %v8710 = vpop.f32.mrb[0].mxu0
      %v8711 = vpop.f32.mrb[0].mxu0
      %v8712 = vadd.f32 %v8352, %v8711
      %v8713 = vpop.f32.mrb[0].mxu0
      %8714 = vmatprep.mubr.bf16.mxu0 0
      %8715 = vmatmul.mubr.bf16.gmra.mrb[0].mxu0 %v8418
      %v8716 = vpop.f32.mrb[0].mxu0
      %v8717 = vadd.f32 %v8352, %v8716
      %v8718 = vpop.f32.mrb[0].mxu0
      %v8719 = vpop.f32.mrb[0].mxu0
      %v8720 = vadd.f32 %v8352, %v8719
      %v8721 = vpop.f32.mrb[0].mxu0
      %8722 = vmatprep.mubr.bf16.mxu0 0
      %8723 = vmatmul.mubr.bf16.gmra.mrb[0].mxu0 %v8421
      %v8724 = vpop.f32.mrb[0].mxu0
      %v8725 = vadd.f32 %v8352, %v8724
      %v8726 = vpop.f32.mrb[0].mxu0
      %v8727 = vpop.f32.mrb[0].mxu0
      %v8728 = vadd.f32 %v8352, %v8727
      %v8729 = vpop.f32.mrb[0].mxu0
      %8730 = vmatprep.mubr.bf16.mxu0 0
      %8731 = vmatmul.mubr.bf16.gmra.mrb[0].mxu0 %v8424
      %v8732 = vpop.f32.mrb[0].mxu0
      %v8733 = vadd.f32 %v8352, %v8732
      %v8734 = vpop.f32.mrb[0].mxu0
      %v8735 = vpop.f32.mrb[0].mxu0
      %v8736 = vadd.f32 %v8352, %v8735
      %v8737 = vpop.f32.mrb[0].mxu0
      %8738 = vmatprep.mubr.bf16.mxu0 0
      %8739 = vmatmul.mubr.bf16.gmra.mrb[0].mxu0 %v8427
      %v8740 = vpop.f32.mrb[0].mxu0
      %v8741 = vadd.f32 %v8352, %v8740
      %v8742 = vpop.f32.mrb[0].mxu0
      %v8743 = vpop.f32.mrb[0].mxu0
      %v8744 = vadd.f32 %v8352, %v8743
      %v8745 = vpop.f32.mrb[0].mxu0
      %8746 = vmatprep.mubr.bf16.mxu0 0
      %8747 = vmatmul.mubr.bf16.gmra.mrb[0].mxu0 %v8430
      %v8748 = vpop.f32.mrb[0].mxu0
      %v8749 = vadd.f32 %v8352, %v8748
      %v8750 = vpop.f32.mrb[0].mxu0
      %v8751 = vpop.f32.mrb[0].mxu0
      %v8752 = vadd.f32 %v8352, %v8751
      %v8753 = vpop.f32.mrb[0].mxu0
      %8754 = vmatprep.mubr.bf16.mxu0 0
      %8755 = vmatmul.mubr.bf16.gmra.mrb[0].mxu0 %v8433
      %v8756 = vpop.f32.mrb[0].mxu0
      %v8757 = vadd.f32 %v8352, %v8756
      %v8758 = vpop.f32.mrb[0].mxu0
      %v8759 = vpop.f32.mrb[0].mxu0
      %v8760 = vadd.f32 %v8352, %v8759
      %v8761 = vpop.f32.mrb[0].mxu0
      %8762 = vmatprep.mubr.bf16.mxu0 0
      %8763 = vmatmul.mubr.bf16.gmra.mrb[0].mxu0 %v8436
      %v8764 = vpop.f32.mrb[0].mxu0
      %v8765 = vadd.f32 %v8352, %v8764
      %v8766 = vpop.f32.mrb[0].mxu0
      %v8767 = vpop.f32.mrb[0].mxu0
      %v8768 = vadd.f32 %v8352, %v8767
      %v8769 = vpop.f32.mrb[0].mxu0
      %8770 = vmatprep.mubr.bf16.mxu0 0
      %8771 = vmatmul.mubr.bf16.gmra.mrb[0].mxu0 %v8439
      %v8772 = vpop.f32.mrb[0].mxu0
      %v8773 = vadd.f32 %v8352, %v8772
      %v8774 = vpop.f32.mrb[0].mxu0
      %v8775 = vpop.f32.mrb[0].mxu0
      %v8776 = vadd.f32 %v8352, %v8775
      %v8777 = vpop.f32.mrb[0].mxu0
      %8778 = vmatprep.mubr.bf16.mxu0 0
      %8779 = vmatmul.mubr.bf16.gmra.mrb[0].mxu0 %v8442
      %v8780 = vpop.f32.mrb[0].mxu0
      %v8781 = vadd.f32 %v8352, %v8780
      %v8782 = vpop.f32.mrb[0].mxu0
      %v8783 = vpop.f32.mrb[0].mxu0
      %v8784 = vadd.f32 %v8352, %v8783
      %v8785 = vpop.f32.mrb[0].mxu0
      %8786 = vmatprep.mubr.bf16.mxu0 0
      %8787 = vmatmul.mubr.bf16.gmra.mrb[0].mxu0 %v8445
      %v8788 = vpop.f32.mrb[0].mxu0
      %v8789 = vadd.f32 %v8352, %v8788
      %v8790 = vpop.f32.mrb[0].mxu0
      %v8791 = vpop.f32.mrb[0].mxu0
      %v8792 = vadd.f32 %v8352, %v8791
      %v8793 = vpop.f32.mrb[0].mxu0
      %8794 = vmatprep.mubr.bf16.mxu0 0
      %8795 = vmatmul.mubr.bf16.gmra.mrb[0].mxu0 %v8448
      %v8796 = vpop.f32.mrb[0].mxu0
      %v8797 = vadd.f32 %v8352, %v8796
      %v8798 = vpop.f32.mrb[0].mxu0
      %v8799 = vpop.f32.mrb[0].mxu0
      %v8800 = vadd.f32 %v8352, %v8799
      %v8801 = vpop.f32.mrb[0].mxu0
      %8802 = vmatprep.mubr.bf16.mxu0 0
      %8803 = vmatmul.mubr.bf16.gmra.mrb[0].mxu0 %v8451
      %v8804 = vpop.f32.mrb[0].mxu0
      %v8805 = vadd.f32 %v8352, %v8804
      %v8806 = vpop.f32.mrb[0].mxu0
      %v8807 = vpop.f32.mrb[0].mxu0
      %v8808 = vadd.f32 %v8352, %v8807
      %v8809 = vpop.f32.mrb[0].mxu0
      %8810 = vmatprep.mubr.bf16.mxu0 0
      %8811 = vmatmul.mubr.bf16.gmra.mrb[0].mxu0 %v8454
      %v8812 = vpop.f32.mrb[0].mxu0
      %v8813 = vadd.f32 %v8352, %v8812
      %v8814 = vpop.f32.mrb[0].mxu0
      %v8815 = vpop.f32.mrb[0].mxu0
      %v8816 = vadd.f32 %v8352, %v8815
      %v8817 = vpop.f32.mrb[0].mxu0
      %8818 = vmatprep.mubr.bf16.mxu0 0
      %8819 = vmatmul.mubr.bf16.gmra.mrb[0].mxu0 %v8457
      %v8820 = vpop.f32.mrb[0].mxu0
      %v8821 = vadd.f32 %v8352, %v8820
      %v8822 = vpop.f32.mrb[0].mxu0
      %v8823 = vpop.f32.mrb[0].mxu0
      %v8824 = vadd.f32 %v8352, %v8823
      %v8825 = vpop.f32.mrb[0].mxu0
      %8826 = vmatprep.mubr.bf16.mxu0 0
      %8827 = vmatmul.mubr.bf16.gmra.mrb[0].mxu0 %v8460
      %v8828 = vpop.f32.mrb[0].mxu0
      %v8829 = vadd.f32 %v8352, %v8828
      %v8830 = vpop.f32.mrb[0].mxu0
      %v8831 = vpop.f32.mrb[0].mxu0
      %v8832 = vadd.f32 %v8352, %v8831
      %v8833 = vpop.f32.mrb[0].mxu0
      %8834 = vmatprep.mubr.bf16.mxu0 0
      %8835 = vmatmul.mubr.bf16.gmra.mrb[0].mxu0 %v8463
      %v8836 = vpop.f32.mrb[0].mxu0
      %v8837 = vadd.f32 %v8352, %v8836
      %v8838 = vpop.f32.mrb[0].mxu0
      %v8839 = vpop.f32.mrb[0].mxu0
      %v8840 = vadd.f32 %v8352, %v8839
      %v8841 = vpop.f32.mrb[0].mxu0
      %8842 = vmatprep.mubr.bf16.mxu0 0
      %8843 = vmatmul.mubr.bf16.gmra.mrb[0].mxu0 %v8466
      %v8844 = vpop.f32.mrb[0].mxu0
      %v8845 = vadd.f32 %v8352, %v8844
      %v8846 = vpop.f32.mrb[0].mxu0
      %v8847 = vpop.f32.mrb[0].mxu0
      %v8848 = vadd.f32 %v8352, %v8847
      %v8849 = vpop.f32.mrb[0].mxu0
      %8850 = vmatprep.mubr.bf16.mxu0 0
      %8851 = vmatmul.mubr.bf16.gmra.mrb[0].mxu0 %v8469
      %v8852 = vpop.f32.mrb[0].mxu0
      %v8853 = vadd.f32 %v8352, %v8852
      %v8854 = vpop.f32.mrb[0].mxu0
      %v8855 = vpop.f32.mrb[0].mxu0
      %v8856 = vadd.f32 %v8352, %v8855
      %v8857 = vpop.f32.mrb[0].mxu0
      %8858 = vmatprep.mubr.bf16.mxu0 0
      %8859 = vmatmul.mubr.bf16.gmra.mrb[0].mxu0 %v8472
      %v8860 = vpop.f32.mrb[0].mxu0
      %v8861 = vadd.f32 %v8352, %v8860
      %v8862 = vpop.f32.mrb[0].mxu0
      %v8863 = vpop.f32.mrb[0].mxu0
      %v8864 = vadd.f32 %v8352, %v8863
      %v8865 = vpop.f32.mrb[0].mxu0
      %8866 = vmatprep.mubr.bf16.mxu0 0
      %8867 = vmatmul.mubr.bf16.gmra.mrb[0].mxu0 %v8475
      %v8868 = vpop.f32.mrb[0].mxu0
      %v8869 = vadd.f32 %v8352, %v8868
      %v8870 = vpop.f32.mrb[0].mxu0
      %v8871 = vpop.f32.mrb[0].mxu0
      %v8872 = vadd.f32 %v8352, %v8871
      %v8873 = vpop.f32.mrb[0].mxu0
      %8874 = vmatprep.mubr.bf16.mxu0 0
      %8875 = vmatmul.mubr.bf16.gmra.mrb[0].mxu0 %v8478
      %v8876 = vpop.f32.mrb[0].mxu0
      %v8877 = vadd.f32 %v8352, %v8876
      %v8878 = vpop.f32.mrb[0].mxu0
      %v8879 = vpop.f32.mrb[0].mxu0
      %v8880 = vadd.f32 %v8352, %v8879
      %v8881 = vpop.f32.mrb[0].mxu0
      %8882 = vmatprep.mubr.bf16.mxu0 0
      %8883 = vmatmul.mubr.bf16.gmra.mrb[0].mxu0 %v8481
      %v8884 = vpop.f32.mrb[0].mxu0
      %v8885 = vadd.f32 %v8352, %v8884
      %v8886 = vpop.f32.mrb[0].mxu0
      %v8887 = vpop.f32.mrb[0].mxu0
      %v8888 = vadd.f32 %v8352, %v8887
      %v8889 = vpop.f32.mrb[0].mxu0
      %8890 = vmatprep.mubr.bf16.mxu0 0
      %8891 = vmatmul.mubr.bf16.gmra.mrb[0].mxu0 %v8484
      %v8892 = vpop.f32.mrb[0].mxu0
      %v8893 = vadd.f32 %v8352, %v8892
      %v8894 = vpop.f32.mrb[0].mxu0
      %v8895 = vpop.f32.mrb[0].mxu0
      %v8896 = vadd.f32 %v8352, %v8895
      %v8897 = vpop.f32.mrb[0].mxu0
      %8898 = vmatprep.mubr.bf16.mxu0 0
      %8899 = vmatmul.mubr.bf16.gmra.mrb[0].mxu0 %v8487
      %v8900 = vpop.f32.mrb[0].mxu0
      %v8901 = vadd.f32 %v8352, %v8900
      %v8902 = vpop.f32.mrb[0].mxu0
      %v8903 = vpop.f32.mrb[0].mxu0
      %v8904 = vadd.f32 %v8352, %v8903
      %v8905 = vpop.f32.mrb[0].mxu0
      %8906 = vmatprep.mubr.bf16.mxu0 0
      %8907 = vmatmul.mubr.bf16.gmra.mrb[0].mxu0 %v8490
      %v8908 = vpop.f32.mrb[0].mxu0
      %v8909 = vadd.f32 %v8352, %v8908
      %v8910 = vpop.f32.mrb[0].mxu0
      %v8911 = vpop.f32.mrb[0].mxu0
      %v8912 = vadd.f32 %v8352, %v8911
      %v8913 = vpop.f32.mrb[0].mxu0
      %8914 = vmatprep.mubr.bf16.mxu0 0
      %8915 = vmatmul.mubr.bf16.gmra.mrb[0].mxu0 %v8493
      %v8916 = vpop.f32.mrb[0].mxu0
      %v8917 = vadd.f32 %v8352, %v8916
      %v8918 = vpop.f32.mrb[0].mxu0
      %v8919 = vpop.f32.mrb[0].mxu0
      %v8920 = vadd.f32 %v8352, %v8919
      %v8921 = vpop.f32.mrb[0].mxu0
      %8922 = vmatprep.mubr.bf16.mxu0 0
      %8923 = vmatmul.mubr.bf16.gmra.mrb[0].mxu0 %v8496
      %v8924 = vpop.f32.mrb[0].mxu0
      %v8925 = vadd.f32 %v8352, %v8924
      %v8926 = vpop.f32.mrb[0].mxu0
      %v8927 = vpop.f32.mrb[0].mxu0
      %v8928 = vadd.f32 %v8352, %v8927
      %v8929 = vpop.f32.mrb[0].mxu0
      %8930 = vmatprep.mubr.bf16.mxu0 0
      %8931 = vmatmul.mubr.bf16.gmra.mrb[0].mxu0 %v8499
      %v8932 = vpop.f32.mrb[0].mxu0
      %v8933 = vadd.f32 %v8352, %v8932
      %v8934 = vpop.f32.mrb[0].mxu0
      %v8935 = vpop.f32.mrb[0].mxu0
      %v8936 = vadd.f32 %v8352, %v8935
      %v8937 = vpop.f32.mrb[0].mxu0
      %8938 = vmatprep.mubr.bf16.mxu0 0
      %8939 = vmatmul.mubr.bf16.gmra.mrb[0].mxu0 %v8502
      %v8940 = vpop.f32.mrb[0].mxu0
      %v8941 = vadd.f32 %v8352, %v8940
      %v8942 = vpop.f32.mrb[0].mxu0
      %v8943 = vpop.f32.mrb[0].mxu0
      %v8944 = vadd.f32 %v8352, %v8943
      %v8945 = vpop.f32.mrb[0].mxu0
      %8946 = vmatprep.mubr.bf16.mxu0 0
      %8947 = vmatmul.mubr.bf16.gmra.mrb[0].mxu0 %v8505
      %v8948 = vpop.f32.mrb[0].mxu0
      %v8949 = vadd.f32 %v8352, %v8948
      %v8950 = vpop.f32.mrb[0].mxu0
      %v8951 = vpop.f32.mrb[0].mxu0
      %v8952 = vadd.f32 %v8352, %v8951
      %v8953 = vpop.f32.mrb[0].mxu0
      %8954 = vmatprep.mubr.bf16.mxu0 0
      %8955 = vmatmul.mubr.bf16.gmra.mrb[0].mxu0 %v8508
      %v8956 = vpop.f32.mrb[0].mxu0
      %v8957 = vadd.f32 %v8352, %v8956
      %v8958 = vpop.f32.mrb[0].mxu0
      %v8959 = vpop.f32.mrb[0].mxu0
      %v8960 = vadd.f32 %v8352, %v8959
      %v8961 = vpop.f32.mrb[0].mxu0
      %8962 = vmatprep.mubr.bf16.mxu0 0
      %8963 = vmatmul.mubr.bf16.gmra.mrb[0].mxu0 %v8511
      %v8964 = vpop.f32.mrb[0].mxu0
      %v8965 = vadd.f32 %v8352, %v8964
      %v8966 = vpop.f32.mrb[0].mxu0
      %v8967 = vpop.f32.mrb[0].mxu0
      %v8968 = vadd.f32 %v8352, %v8967
      %v8969 = vpop.f32.mrb[0].mxu0
      %8970 = vmatprep.mubr.bf16.mxu0 0
      %8971 = vmatmul.mubr.bf16.gmra.mrb[0].mxu0 %v8514
      %v8972 = vpop.f32.mrb[0].mxu0
      %v8973 = vadd.f32 %v8352, %v8972
      %v8974 = vpop.f32.mrb[0].mxu0
      %v8975 = vpop.f32.mrb[0].mxu0
      %v8976 = vadd.f32 %v8352, %v8975
      %v8977 = vpop.f32.mrb[0].mxu0
      %8978 = vmatprep.mubr.bf16.mxu0 0
      %8979 = vmatmul.mubr.bf16.gmra.mrb[0].mxu0 %v8517
      %v8980 = vpop.f32.mrb[0].mxu0
      %v8981 = vadd.f32 %v8352, %v8980
      %v8982 = vpop.f32.mrb[0].mxu0
      %v8983 = vpop.f32.mrb[0].mxu0
      %v8984 = vadd.f32 %v8352, %v8983
      %v8985 = vpop.f32.mrb[0].mxu0
      %8986 = vmatprep.mubr.bf16.mxu0 0
      %8987 = vmatmul.mubr.bf16.gmra.mrb[0].mxu0 %v8520
      %v8988 = vpop.f32.mrb[0].mxu0
      %v8989 = vadd.f32 %v8352, %v8988
      %v8990 = vpop.f32.mrb[0].mxu0
      %v8991 = vpop.f32.mrb[0].mxu0
      %v8992 = vadd.f32 %v8352, %v8991
      %v8993 = vpop.f32.mrb[0].mxu0
      %8994 = vmatprep.mubr.bf16.mxu0 0
      %8995 = vmatmul.mubr.bf16.gmra.mrb[0].mxu0 %v8523
      %v8996 = vpop.f32.mrb[0].mxu0
      %v8997 = vadd.f32 %v8352, %v8996
      %v8998 = vpop.f32.mrb[0].mxu0
      %v8999 = vpop.f32.mrb[0].mxu0
      %v9000 = vadd.f32 %v8352, %v8999
      %v9001 = vpop.f32.mrb[0].mxu0
      %9002 = vmatprep.mubr.bf16.mxu0 0
      %9003 = vmatmul.mubr.bf16.gmra.mrb[0].mxu0 %v8526
      %v9004 = vpop.f32.mrb[0].mxu0
      %v9005 = vadd.f32 %v8352, %v9004
      %v9006 = vpop.f32.mrb[0].mxu0
      %v9007 = vpop.f32.mrb[0].mxu0
      %v9008 = vadd.f32 %v8352, %v9007
      %v9009 = vpop.f32.mrb[0].mxu0
      %9010 = vmatprep.mubr.bf16.mxu0 0
      %9011 = vmatmul.mubr.bf16.gmra.mrb[0].mxu0 %v8529
      %v9012 = vpop.f32.mrb[0].mxu0
      %v9013 = vadd.f32 %v8352, %v9012
      %v9014 = vpop.f32.mrb[0].mxu0
      %v9015 = vpop.f32.mrb[0].mxu0
      %v9016 = vadd.f32 %v8352, %v9015
      %v9017 = vpop.f32.mrb[0].mxu0
      %9018 = vmatprep.mubr.bf16.mxu0 0
      %9019 = vmatmul.mubr.bf16.gmra.mrb[0].mxu0 %v8532
      %v9020 = vpop.f32.mrb[0].mxu0
      %v9021 = vadd.f32 %v8352, %v9020
      %v9022 = vpop.f32.mrb[0].mxu0
      %v9023 = vpop.f32.mrb[0].mxu0
      %v9024 = vadd.f32 %v8352, %v9023
      %v9025 = vpop.f32.mrb[0].mxu0
      %9026 = vmatprep.mubr.bf16.mxu0 0
      %9027 = vmatmul.mubr.bf16.gmra.mrb[0].mxu0 %v8535
      %v9028 = vpop.f32.mrb[0].mxu0
      %v9029 = vadd.f32 %v8352, %v9028
      %v9030 = vpop.f32.mrb[0].mxu0
      %v9031 = vpop.f32.mrb[0].mxu0
      %v9032 = vadd.f32 %v8352, %v9031
      %v9033 = vpop.f32.mrb[0].mxu0
      %9034 = vmatprep.mubr.bf16.mxu0 0
      %9035 = vmatmul.mubr.bf16.gmra.mrb[0].mxu0 %v8538
      %v9036 = vpop.f32.mrb[0].mxu0
      %v9037 = vadd.f32 %v8352, %v9036
      %v9038 = vpop.f32.mrb[0].mxu0
      %v9039 = vpop.f32.mrb[0].mxu0
      %v9040 = vadd.f32 %v8352, %v9039
      %v9041 = vpop.f32.mrb[0].mxu0
      %9042 = vmatprep.mubr.bf16.mxu0 0
      %9043 = vmatmul.mubr.bf16.gmra.mrb[0].mxu0 %v8541
      %v9044 = vpop.f32.mrb[0].mxu0
      %v9045 = vadd.f32 %v8352, %v9044
      %v9046 = vpop.f32.mrb[0].mxu0
      %v9047 = vpop.f32.mrb[0].mxu0
      %v9048 = vadd.f32 %v8352, %v9047
      %v9049 = vpop.f32.mrb[0].mxu0
      %9050 = vmatprep.mubr.bf16.mxu0 0
      %9051 = vmatmul.mubr.bf16.gmra.mrb[0].mxu0 %v8544
      %v9052 = vpop.f32.mrb[0].mxu0
      %v9053 = vadd.f32 %v8352, %v9052
      %v9054 = vpop.f32.mrb[0].mxu0
      %v9055 = vpop.f32.mrb[0].mxu0
      %v9056 = vadd.f32 %v8352, %v9055
      %v9057 = vpop.f32.mrb[0].mxu0
      %9058 = vmatprep.mubr.bf16.mxu0 0
      %9059 = vmatmul.mubr.bf16.gmra.mrb[0].mxu0 %v8547
      %v9060 = vpop.f32.mrb[0].mxu0
      %v9061 = vadd.f32 %v8352, %v9060
      %v9062 = vpop.f32.mrb[0].mxu0
      %v9063 = vpop.f32.mrb[0].mxu0
      %v9064 = vadd.f32 %v8352, %v9063
      %v9065 = vpop.f32.mrb[0].mxu0
      %9066 = vmatprep.mubr.bf16.mxu0 0
      %9067 = vmatmul.mubr.bf16.gmra.mrb[0].mxu0 %v8550
      %v9068 = vpop.f32.mrb[0].mxu0
      %v9069 = vadd.f32 %v8352, %v9068
      %v9070 = vpop.f32.mrb[0].mxu0
      %v9071 = vpop.f32.mrb[0].mxu0
      %v9072 = vadd.f32 %v8352, %v9071
      %v9073 = vpop.f32.mrb[0].mxu0
      %9074 = vmatprep.mubr.bf16.mxu0 0
      %9075 = vmatmul.mubr.bf16.gmra.mrb[0].mxu0 %v8553
      %v9076 = vpop.f32.mrb[0].mxu0
      %v9077 = vadd.f32 %v8352, %v9076
      %v9078 = vpop.f32.mrb[0].mxu0
      %v9079 = vpop.f32.mrb[0].mxu0
      %v9080 = vadd.f32 %v8352, %v9079
      %v9081 = vpop.f32.mrb[0].mxu0
      %9082 = vmatprep.mubr.bf16.mxu0 0
      %9083 = vmatmul.mubr.bf16.gmra.mrb[0].mxu0 %v8556
      %v9084 = vpop.f32.mrb[0].mxu0
      %v9085 = vadd.f32 %v8352, %v9084
      %v9086 = vpop.f32.mrb[0].mxu0
      %v9087 = vpop.f32.mrb[0].mxu0
      %v9088 = vadd.f32 %v8352, %v9087
      %v9089 = vpop.f32.mrb[0].mxu0
      %9090 = vmatprep.mubr.bf16.mxu0 0
      %9091 = vmatmul.mubr.bf16.gmra.mrb[0].mxu0 %v8559
      %v9092 = vpop.f32.mrb[0].mxu0
      %v9093 = vadd.f32 %v8352, %v9092
      %v9094 = vpop.f32.mrb[0].mxu0
      %v9095 = vpop.f32.mrb[0].mxu0
      %v9096 = vadd.f32 %v8352, %v9095
      %v9097 = vpop.f32.mrb[0].mxu0
      %9098 = vmatprep.mubr.bf16.mxu0 0
      %9099 = vmatmul.mubr.bf16.gmra.mrb[0].mxu0 %v8562
      %v9100 = vpop.f32.mrb[0].mxu0
      %v9101 = vadd.f32 %v8352, %v9100
      %v9102 = vpop.f32.mrb[0].mxu0
      %v9103 = vpop.f32.mrb[0].mxu0
      %v9104 = vadd.f32 %v8352, %v9103
      %v9105 = vpop.f32.mrb[0].mxu0
      %9106 = vmatprep.mubr.bf16.mxu0 0
      %9107 = vmatmul.mubr.bf16.gmra.mrb[0].mxu0 %v8565
      %v9108 = vpop.f32.mrb[0].mxu0
      %v9109 = vadd.f32 %v8352, %v9108
      %v9110 = vpop.f32.mrb[0].mxu0
      %v9111 = vpop.f32.mrb[0].mxu0
      %v9112 = vadd.f32 %v8352, %v9111
      %v9113 = vpop.f32.mrb[0].mxu0
      %9114 = vdwg.mxu0
      %v9115 = vmul.f32 %v8605, 0.5
      %v9116 = vmul.f32 %v8608, 0.5
      %v9117 = vmul.f32 %v8613, 0.5
      %v9118 = vmul.f32 %v8616, 0.5
      %v9119 = vmul.f32 %v8621, 0.5
      %v9120 = vmul.f32 %v8624, 0.5
      %v9121 = vmul.f32 %v8629, 0.5
      %v9122 = vmul.f32 %v8632, 0.5
      %v9123 = vmul.f32 %v8637, 0.5
      %v9124 = vmul.f32 %v8640, 0.5
      %v9125 = vmul.f32 %v8645, 0.5
      %v9126 = vmul.f32 %v8648, 0.5
      %v9127 = vmul.f32 %v8653, 0.5
      %v9128 = vmul.f32 %v8656, 0.5
      %v9129 = vmul.f32 %v8661, 0.5
      %v9130 = vmul.f32 %v8664, 0.5
      %v9131 = vmul.f32 %v8669, 0.5
      %v9132 = vmul.f32 %v8672, 0.5
      %v9133 = vmul.f32 %v8677, 0.5
      %v9134 = vmul.f32 %v8680, 0.5
      %v9135 = vmul.f32 %v8685, 0.5
      %v9136 = vmul.f32 %v8688, 0.5
      %v9137 = vmul.f32 %v8693, 0.5
      %v9138 = vmul.f32 %v8696, 0.5
      %v9139 = vmul.f32 %v8701, 0.5
      %v9140 = vmul.f32 %v8704, 0.5
      %v9141 = vmul.f32 %v8709, 0.5
      %v9142 = vmul.f32 %v8712, 0.5
      %v9143 = vmul.f32 %v8717, 0.5
      %v9144 = vmul.f32 %v8720, 0.5
      %v9145 = vmul.f32 %v8725, 0.5
      %v9146 = vmul.f32 %v8728, 0.5
      %v9147 = vmul.f32 %v8733, 0.5
      %v9148 = vmul.f32 %v8736, 0.5
      %v9149 = vmul.f32 %v8741, 0.5
      %v9150 = vmul.f32 %v8744, 0.5
      %v9151 = vmul.f32 %v8749, 0.5
      %v9152 = vmul.f32 %v8752, 0.5
      %v9153 = vmul.f32 %v8757, 0.5
      %v9154 = vmul.f32 %v8760, 0.5
      %v9155 = vmul.f32 %v8765, 0.5
      %v9156 = vmul.f32 %v8768, 0.5
      %v9157 = vmul.f32 %v8773, 0.5
      %v9158 = vmul.f32 %v8776, 0.5
      %v9159 = vmul.f32 %v8781, 0.5
      %v9160 = vmul.f32 %v8784, 0.5
      %v9161 = vmul.f32 %v8789, 0.5
      %v9162 = vmul.f32 %v8792, 0.5
      %v9163 = vmul.f32 %v8797, 0.5
      %v9164 = vmul.f32 %v8800, 0.5
      %v9165 = vmul.f32 %v8805, 0.5
      %v9166 = vmul.f32 %v8808, 0.5
      %v9167 = vmul.f32 %v8813, 0.5
      %v9168 = vmul.f32 %v8816, 0.5
      %v9169 = vmul.f32 %v8821, 0.5
      %v9170 = vmul.f32 %v8824, 0.5
      %v9171 = vmul.f32 %v8829, 0.5
      %v9172 = vmul.f32 %v8832, 0.5
      %v9173 = vmul.f32 %v8837, 0.5
      %v9174 = vmul.f32 %v8840, 0.5
      %v9175 = vmul.f32 %v8845, 0.5
      %v9176 = vmul.f32 %v8848, 0.5
      %v9177 = vmul.f32 %v8853, 0.5
      %v9178 = vmul.f32 %v8856, 0.5
      %v9179 = vmul.f32 %v8861, 0.5
      %v9180 = vmul.f32 %v8864, 0.5
      %v9181 = vmul.f32 %v8869, 0.5
      %v9182 = vmul.f32 %v8872, 0.5
      %v9183 = vmul.f32 %v8877, 0.5
      %v9184 = vmul.f32 %v8880, 0.5
      %v9185 = vmul.f32 %v8885, 0.5
      %v9186 = vmul.f32 %v8888, 0.5
      %v9187 = vmul.f32 %v8893, 0.5
      %v9188 = vmul.f32 %v8896, 0.5
      %v9189 = vmul.f32 %v8901, 0.5
      %v9190 = vmul.f32 %v8904, 0.5
      %v9191 = vmul.f32 %v8909, 0.5
      %v9192 = vmul.f32 %v8912, 0.5
      %v9193 = vmul.f32 %v8917, 0.5
      %v9194 = vmul.f32 %v8920, 0.5
      %v9195 = vmul.f32 %v8925, 0.5
      %v9196 = vmul.f32 %v8928, 0.5
      %v9197 = vmul.f32 %v8933, 0.5
      %v9198 = vmul.f32 %v8936, 0.5
      %v9199 = vmul.f32 %v8941, 0.5
      %v9200 = vmul.f32 %v8944, 0.5
      %v9201 = vmul.f32 %v8949, 0.5
      %v9202 = vmul.f32 %v8952, 0.5
      %v9203 = vmul.f32 %v8957, 0.5
      %v9204 = vmul.f32 %v8960, 0.5
      %v9205 = vmul.f32 %v8965, 0.5
      %v9206 = vmul.f32 %v8968, 0.5
      %v9207 = vmul.f32 %v8973, 0.5
      %v9208 = vmul.f32 %v8976, 0.5
      %v9209 = vmul.f32 %v8981, 0.5
      %v9210 = vmul.f32 %v8984, 0.5
      %v9211 = vmul.f32 %v8989, 0.5
      %v9212 = vmul.f32 %v8992, 0.5
      %v9213 = vmul.f32 %v8997, 0.5
      %v9214 = vmul.f32 %v9000, 0.5
      %v9215 = vmul.f32 %v9005, 0.5
      %v9216 = vmul.f32 %v9008, 0.5
      %v9217 = vmul.f32 %v9013, 0.5
      %v9218 = vmul.f32 %v9016, 0.5
      %v9219 = vmul.f32 %v9021, 0.5
      %v9220 = vmul.f32 %v9024, 0.5
      %v9221 = vmul.f32 %v9029, 0.5
      %v9222 = vmul.f32 %v9032, 0.5
      %v9223 = vmul.f32 %v9037, 0.5
      %v9224 = vmul.f32 %v9040, 0.5
      %v9225 = vmul.f32 %v9045, 0.5
      %v9226 = vmul.f32 %v9048, 0.5
      %v9227 = vmul.f32 %v9053, 0.5
      %v9228 = vmul.f32 %v9056, 0.5
      %v9229 = vmul.f32 %v9061, 0.5
      %v9230 = vmul.f32 %v9064, 0.5
      %v9231 = vmul.f32 %v9069, 0.5
      %v9232 = vmul.f32 %v9072, 0.5
      %v9233 = vmul.f32 %v9077, 0.5
      %v9234 = vmul.f32 %v9080, 0.5
      %v9235 = vmul.f32 %v9085, 0.5
      %v9236 = vmul.f32 %v9088, 0.5
      %v9237 = vmul.f32 %v9093, 0.5
      %v9238 = vmul.f32 %v9096, 0.5
      %v9239 = vmul.f32 %v9101, 0.5
      %v9240 = vmul.f32 %v9104, 0.5
      %v9241 = vmul.f32 %v9109, 0.5
      %v9242 = vmul.f32 %v9112, 0.5
      %v9243 = vtanh.pop %v9115
      %v9244 = vtanh.pop %v9116
      %v9245 = vtanh.pop %v9117
      %v9246 = vtanh.pop %v9118
      %v9247 = vtanh.pop %v9119
      %v9248 = vtanh.pop %v9120
      %v9249 = vtanh.pop %v9121
      %v9250 = vtanh.pop %v9122
      %v9251 = vtanh.pop %v9123
      %v9252 = vtanh.pop %v9124
      %v9253 = vtanh.pop %v9125
      %v9254 = vtanh.pop %v9126
      %v9255 = vtanh.pop %v9127
      %v9256 = vtanh.pop %v9128
      %v9257 = vtanh.pop %v9129
      %v9258 = vtanh.pop %v9130
      %v9259 = vtanh.pop %v9131
      %v9260 = vtanh.pop %v9132
      %v9261 = vtanh.pop %v9133
      %v9262 = vtanh.pop %v9134
      %v9263 = vtanh.pop %v9135
      %v9264 = vtanh.pop %v9136
      %v9265 = vtanh.pop %v9137
      %v9266 = vtanh.pop %v9138
      %v9267 = vtanh.pop %v9139
      %v9268 = vtanh.pop %v9140
      %v9269 = vtanh.pop %v9141
      %v9270 = vtanh.pop %v9142
      %v9271 = vtanh.pop %v9143
      %v9272 = vtanh.pop %v9144
      %v9273 = vtanh.pop %v9145
      %v9274 = vtanh.pop %v9146
      %v9275 = vtanh.pop %v9147
      %v9276 = vtanh.pop %v9148
      %v9277 = vtanh.pop %v9149
      %v9278 = vtanh.pop %v9150
      %v9279 = vtanh.pop %v9151
      %v9280 = vtanh.pop %v9152
      %v9281 = vtanh.pop %v9153
      %v9282 = vtanh.pop %v9154
      %v9283 = vtanh.pop %v9155
      %v9284 = vtanh.pop %v9156
      %v9285 = vtanh.pop %v9157
      %v9286 = vtanh.pop %v9158
      %v9287 = vtanh.pop %v9159
      %v9288 = vtanh.pop %v9160
      %v9289 = vtanh.pop %v9161
      %v9290 = vtanh.pop %v9162
      %v9291 = vtanh.pop %v9163
      %v9292 = vtanh.pop %v9164
      %v9293 = vtanh.pop %v9165
      %v9294 = vtanh.pop %v9166
      %v9295 = vtanh.pop %v9167
      %v9296 = vtanh.pop %v9168
      %v9297 = vtanh.pop %v9169
      %v9298 = vtanh.pop %v9170
      %v9299 = vtanh.pop %v9171
      %v9300 = vtanh.pop %v9172
      %v9301 = vtanh.pop %v9173
      %v9302 = vtanh.pop %v9174
      %v9303 = vtanh.pop %v9175
      %v9304 = vtanh.pop %v9176
      %v9305 = vtanh.pop %v9177
      %v9306 = vtanh.pop %v9178
      %v9307 = vtanh.pop %v9179
      %v9308 = vtanh.pop %v9180
      %v9309 = vtanh.pop %v9181
      %v9310 = vtanh.pop %v9182
      %v9311 = vtanh.pop %v9183
      %v9312 = vtanh.pop %v9184
      %v9313 = vtanh.pop %v9185
      %v9314 = vtanh.pop %v9186
      %v9315 = vtanh.pop %v9187
      %v9316 = vtanh.pop %v9188
      %v9317 = vtanh.pop %v9189
      %v9318 = vtanh.pop %v9190
      %v9319 = vtanh.pop %v9191
      %v9320 = vtanh.pop %v9192
      %v9321 = vtanh.pop %v9193
      %v9322 = vtanh.pop %v9194
      %v9323 = vtanh.pop %v9195
      %v9324 = vtanh.pop %v9196
      %v9325 = vtanh.pop %v9197
      %v9326 = vtanh.pop %v9198
      %v9327 = vtanh.pop %v9199
      %v9328 = vtanh.pop %v9200
      %v9329 = vtanh.pop %v9201
      %v9330 = vtanh.pop %v9202
      %v9331 = vtanh.pop %v9203
      %v9332 = vtanh.pop %v9204
      %v9333 = vtanh.pop %v9205
      %v9334 = vtanh.pop %v9206
      %v9335 = vtanh.pop %v9207
      %v9336 = vtanh.pop %v9208
      %v9337 = vtanh.pop %v9209
      %v9338 = vtanh.pop %v9210
      %v9339 = vtanh.pop %v9211
      %v9340 = vtanh.pop %v9212
      %v9341 = vtanh.pop %v9213
      %v9342 = vtanh.pop %v9214
      %v9343 = vtanh.pop %v9215
      %v9344 = vtanh.pop %v9216
      %v9345 = vtanh.pop %v9217
      %v9346 = vtanh.pop %v9218
      %v9347 = vtanh.pop %v9219
      %v9348 = vtanh.pop %v9220
      %v9349 = vtanh.pop %v9221
      %v9350 = vtanh.pop %v9222
      %v9351 = vtanh.pop %v9223
      %v9352 = vtanh.pop %v9224
      %v9353 = vtanh.pop %v9225
      %v9354 = vtanh.pop %v9226
      %v9355 = vtanh.pop %v9227
      %v9356 = vtanh.pop %v9228
      %v9357 = vtanh.pop %v9229
      %v9358 = vtanh.pop %v9230
      %v9359 = vtanh.pop %v9231
      %v9360 = vtanh.pop %v9232
      %v9361 = vtanh.pop %v9233
      %v9362 = vtanh.pop %v9234
      %v9363 = vtanh.pop %v9235
      %v9364 = vtanh.pop %v9236
      %v9365 = vtanh.pop %v9237
      %v9366 = vtanh.pop %v9238
      %v9367 = vtanh.pop %v9239
      %v9368 = vtanh.pop %v9240
      %v9369 = vtanh.pop %v9241
      %v9370 = vtanh.pop %v9242
      %v9371 = vadd.f32 %v9243, 1.0
      %v9372 = vadd.f32 %v9244, 1.0
      %v9373 = vadd.f32 %v9245, 1.0
      %v9374 = vadd.f32 %v9246, 1.0
      %v9375 = vadd.f32 %v9247, 1.0
      %v9376 = vadd.f32 %v9248, 1.0
      %v9377 = vadd.f32 %v9249, 1.0
      %v9378 = vadd.f32 %v9250, 1.0
      %v9379 = vadd.f32 %v9251, 1.0
      %v9380 = vadd.f32 %v9252, 1.0
      %v9381 = vadd.f32 %v9253, 1.0
      %v9382 = vadd.f32 %v9254, 1.0
      %v9383 = vadd.f32 %v9255, 1.0
      %v9384 = vadd.f32 %v9256, 1.0
      %v9385 = vadd.f32 %v9257, 1.0
      %v9386 = vadd.f32 %v9258, 1.0
      %v9387 = vadd.f32 %v9259, 1.0
      %v9388 = vadd.f32 %v9260, 1.0
      %v9389 = vadd.f32 %v9261, 1.0
      %v9390 = vadd.f32 %v9262, 1.0
      %v9391 = vadd.f32 %v9263, 1.0
      %v9392 = vadd.f32 %v9264, 1.0
      %v9393 = vadd.f32 %v9265, 1.0
      %v9394 = vadd.f32 %v9266, 1.0
      %v9395 = vadd.f32 %v9267, 1.0
      %v9396 = vadd.f32 %v9268, 1.0
      %v9397 = vadd.f32 %v9269, 1.0
      %v9398 = vadd.f32 %v9270, 1.0
      %v9399 = vadd.f32 %v9271, 1.0
      %v9400 = vadd.f32 %v9272, 1.0
      %v9401 = vadd.f32 %v9273, 1.0
      %v9402 = vadd.f32 %v9274, 1.0
      %v9403 = vadd.f32 %v9275, 1.0
      %v9404 = vadd.f32 %v9276, 1.0
      %v9405 = vadd.f32 %v9277, 1.0
      %v9406 = vadd.f32 %v9278, 1.0
      %v9407 = vadd.f32 %v9279, 1.0
      %v9408 = vadd.f32 %v9280, 1.0
      %v9409 = vadd.f32 %v9281, 1.0
      %v9410 = vadd.f32 %v9282, 1.0
      %v9411 = vadd.f32 %v9283, 1.0
      %v9412 = vadd.f32 %v9284, 1.0
      %v9413 = vadd.f32 %v9285, 1.0
      %v9414 = vadd.f32 %v9286, 1.0
      %v9415 = vadd.f32 %v9287, 1.0
      %v9416 = vadd.f32 %v9288, 1.0
      %v9417 = vadd.f32 %v9289, 1.0
      %v9418 = vadd.f32 %v9290, 1.0
      %v9419 = vadd.f32 %v9291, 1.0
      %v9420 = vadd.f32 %v9292, 1.0
      %v9421 = vadd.f32 %v9293, 1.0
      %v9422 = vadd.f32 %v9294, 1.0
      %v9423 = vadd.f32 %v9295, 1.0
      %v9424 = vadd.f32 %v9296, 1.0
      %v9425 = vadd.f32 %v9297, 1.0
      %v9426 = vadd.f32 %v9298, 1.0
      %v9427 = vadd.f32 %v9299, 1.0
      %v9428 = vadd.f32 %v9300, 1.0
      %v9429 = vadd.f32 %v9301, 1.0
      %v9430 = vadd.f32 %v9302, 1.0
      %v9431 = vadd.f32 %v9303, 1.0
      %v9432 = vadd.f32 %v9304, 1.0
      %v9433 = vadd.f32 %v9305, 1.0
      %v9434 = vadd.f32 %v9306, 1.0
      %v9435 = vadd.f32 %v9307, 1.0
      %v9436 = vadd.f32 %v9308, 1.0
      %v9437 = vadd.f32 %v9309, 1.0
      %v9438 = vadd.f32 %v9310, 1.0
      %v9439 = vadd.f32 %v9311, 1.0
      %v9440 = vadd.f32 %v9312, 1.0
      %v9441 = vadd.f32 %v9313, 1.0
      %v9442 = vadd.f32 %v9314, 1.0
      %v9443 = vadd.f32 %v9315, 1.0
      %v9444 = vadd.f32 %v9316, 1.0
      %v9445 = vadd.f32 %v9317, 1.0
      %v9446 = vadd.f32 %v9318, 1.0
      %v9447 = vadd.f32 %v9319, 1.0
      %v9448 = vadd.f32 %v9320, 1.0
      %v9449 = vadd.f32 %v9321, 1.0
      %v9450 = vadd.f32 %v9322, 1.0
      %v9451 = vadd.f32 %v9323, 1.0
      %v9452 = vadd.f32 %v9324, 1.0
      %v9453 = vadd.f32 %v9325, 1.0
      %v9454 = vadd.f32 %v9326, 1.0
      %v9455 = vadd.f32 %v9327, 1.0
      %v9456 = vadd.f32 %v9328, 1.0
      %v9457 = vadd.f32 %v9329, 1.0
      %v9458 = vadd.f32 %v9330, 1.0
      %v9459 = vadd.f32 %v9331, 1.0
      %v9460 = vadd.f32 %v9332, 1.0
      %v9461 = vadd.f32 %v9333, 1.0
      %v9462 = vadd.f32 %v9334, 1.0
      %v9463 = vadd.f32 %v9335, 1.0
      %v9464 = vadd.f32 %v9336, 1.0
      %v9465 = vadd.f32 %v9337, 1.0
      %v9466 = vadd.f32 %v9338, 1.0
      %v9467 = vadd.f32 %v9339, 1.0
      %v9468 = vadd.f32 %v9340, 1.0
      %v9469 = vadd.f32 %v9341, 1.0
      %v9470 = vadd.f32 %v9342, 1.0
      %v9471 = vadd.f32 %v9343, 1.0
      %v9472 = vadd.f32 %v9344, 1.0
      %v9473 = vadd.f32 %v9345, 1.0
      %v9474 = vadd.f32 %v9346, 1.0
      %v9475 = vadd.f32 %v9347, 1.0
      %v9476 = vadd.f32 %v9348, 1.0
      %v9477 = vadd.f32 %v9349, 1.0
      %v9478 = vadd.f32 %v9350, 1.0
      %v9479 = vadd.f32 %v9351, 1.0
      %v9480 = vadd.f32 %v9352, 1.0
      %v9481 = vadd.f32 %v9353, 1.0
      %v9482 = vadd.f32 %v9354, 1.0
      %v9483 = vadd.f32 %v9355, 1.0
      %v9484 = vadd.f32 %v9356, 1.0
      %v9485 = vadd.f32 %v9357, 1.0
      %v9486 = vadd.f32 %v9358, 1.0
      %v9487 = vadd.f32 %v9359, 1.0
      %v9488 = vadd.f32 %v9360, 1.0
      %v9489 = vadd.f32 %v9361, 1.0
      %v9490 = vadd.f32 %v9362, 1.0
      %v9491 = vadd.f32 %v9363, 1.0
      %v9492 = vadd.f32 %v9364, 1.0
      %v9493 = vadd.f32 %v9365, 1.0
      %v9494 = vadd.f32 %v9366, 1.0
      %v9495 = vadd.f32 %v9367, 1.0
      %v9496 = vadd.f32 %v9368, 1.0
      %v9497 = vadd.f32 %v9369, 1.0
      %v9498 = vadd.f32 %v9370, 1.0
      %v9499 = vmul.f32 %v9371, 0.5
      %v9500 = vmul.f32 %v9372, 0.5
      %v9501 = vmul.f32 %v9373, 0.5
      %v9502 = vmul.f32 %v9374, 0.5
      %v9503 = vmul.f32 %v9375, 0.5
      %v9504 = vmul.f32 %v9376, 0.5
      %v9505 = vmul.f32 %v9377, 0.5
      %v9506 = vmul.f32 %v9378, 0.5
      %v9507 = vmul.f32 %v9379, 0.5
      %v9508 = vmul.f32 %v9380, 0.5
      %v9509 = vmul.f32 %v9381, 0.5
      %v9510 = vmul.f32 %v9382, 0.5
      %v9511 = vmul.f32 %v9383, 0.5
      %v9512 = vmul.f32 %v9384, 0.5
      %v9513 = vmul.f32 %v9385, 0.5
      %v9514 = vmul.f32 %v9386, 0.5
      %v9515 = vmul.f32 %v9387, 0.5
      %v9516 = vmul.f32 %v9388, 0.5
      %v9517 = vmul.f32 %v9389, 0.5
      %v9518 = vmul.f32 %v9390, 0.5
      %v9519 = vmul.f32 %v9391, 0.5
      %v9520 = vmul.f32 %v9392, 0.5
      %v9521 = vmul.f32 %v9393, 0.5
      %v9522 = vmul.f32 %v9394, 0.5
      %v9523 = vmul.f32 %v9395, 0.5
      %v9524 = vmul.f32 %v9396, 0.5
      %v9525 = vmul.f32 %v9397, 0.5
      %v9526 = vmul.f32 %v9398, 0.5
      %v9527 = vmul.f32 %v9399, 0.5
      %v9528 = vmul.f32 %v9400, 0.5
      %v9529 = vmul.f32 %v9401, 0.5
      %v9530 = vmul.f32 %v9402, 0.5
      %v9531 = vmul.f32 %v9403, 0.5
      %v9532 = vmul.f32 %v9404, 0.5
      %v9533 = vmul.f32 %v9405, 0.5
      %v9534 = vmul.f32 %v9406, 0.5
      %v9535 = vmul.f32 %v9407, 0.5
      %v9536 = vmul.f32 %v9408, 0.5
      %v9537 = vmul.f32 %v9409, 0.5
      %v9538 = vmul.f32 %v9410, 0.5
      %v9539 = vmul.f32 %v9411, 0.5
      %v9540 = vmul.f32 %v9412, 0.5
      %v9541 = vmul.f32 %v9413, 0.5
      %v9542 = vmul.f32 %v9414, 0.5
      %v9543 = vmul.f32 %v9415, 0.5
      %v9544 = vmul.f32 %v9416, 0.5
      %v9545 = vmul.f32 %v9417, 0.5
      %v9546 = vmul.f32 %v9418, 0.5
      %v9547 = vmul.f32 %v9419, 0.5
      %v9548 = vmul.f32 %v9420, 0.5
      %v9549 = vmul.f32 %v9421, 0.5
      %v9550 = vmul.f32 %v9422, 0.5
      %v9551 = vmul.f32 %v9423, 0.5
      %v9552 = vmul.f32 %v9424, 0.5
      %v9553 = vmul.f32 %v9425, 0.5
      %v9554 = vmul.f32 %v9426, 0.5
      %v9555 = vmul.f32 %v9427, 0.5
      %v9556 = vmul.f32 %v9428, 0.5
      %v9557 = vmul.f32 %v9429, 0.5
      %v9558 = vmul.f32 %v9430, 0.5
      %v9559 = vmul.f32 %v9431, 0.5
      %v9560 = vmul.f32 %v9432, 0.5
      %v9561 = vmul.f32 %v9433, 0.5
      %v9562 = vmul.f32 %v9434, 0.5
      %v9563 = vmul.f32 %v9435, 0.5
      %v9564 = vmul.f32 %v9436, 0.5
      %v9565 = vmul.f32 %v9437, 0.5
      %v9566 = vmul.f32 %v9438, 0.5
      %v9567 = vmul.f32 %v9439, 0.5
      %v9568 = vmul.f32 %v9440, 0.5
      %v9569 = vmul.f32 %v9441, 0.5
      %v9570 = vmul.f32 %v9442, 0.5
      %v9571 = vmul.f32 %v9443, 0.5
      %v9572 = vmul.f32 %v9444, 0.5
      %v9573 = vmul.f32 %v9445, 0.5
      %v9574 = vmul.f32 %v9446, 0.5
      %v9575 = vmul.f32 %v9447, 0.5
      %v9576 = vmul.f32 %v9448, 0.5
      %v9577 = vmul.f32 %v9449, 0.5
      %v9578 = vmul.f32 %v9450, 0.5
      %v9579 = vmul.f32 %v9451, 0.5
      %v9580 = vmul.f32 %v9452, 0.5
      %v9581 = vmul.f32 %v9453, 0.5
      %v9582 = vmul.f32 %v9454, 0.5
      %v9583 = vmul.f32 %v9455, 0.5
      %v9584 = vmul.f32 %v9456, 0.5
      %v9585 = vmul.f32 %v9457, 0.5
      %v9586 = vmul.f32 %v9458, 0.5
      %v9587 = vmul.f32 %v9459, 0.5
      %v9588 = vmul.f32 %v9460, 0.5
      %v9589 = vmul.f32 %v9461, 0.5
      %v9590 = vmul.f32 %v9462, 0.5
      %v9591 = vmul.f32 %v9463, 0.5
      %v9592 = vmul.f32 %v9464, 0.5
      %v9593 = vmul.f32 %v9465, 0.5
      %v9594 = vmul.f32 %v9466, 0.5
      %v9595 = vmul.f32 %v9467, 0.5
      %v9596 = vmul.f32 %v9468, 0.5
      %v9597 = vmul.f32 %v9469, 0.5
      %v9598 = vmul.f32 %v9470, 0.5
      %v9599 = vmul.f32 %v9471, 0.5
      %v9600 = vmul.f32 %v9472, 0.5
      %v9601 = vmul.f32 %v9473, 0.5
      %v9602 = vmul.f32 %v9474, 0.5
      %v9603 = vmul.f32 %v9475, 0.5
      %v9604 = vmul.f32 %v9476, 0.5
      %v9605 = vmul.f32 %v9477, 0.5
      %v9606 = vmul.f32 %v9478, 0.5
      %v9607 = vmul.f32 %v9479, 0.5
      %v9608 = vmul.f32 %v9480, 0.5
      %v9609 = vmul.f32 %v9481, 0.5
      %v9610 = vmul.f32 %v9482, 0.5
      %v9611 = vmul.f32 %v9483, 0.5
      %v9612 = vmul.f32 %v9484, 0.5
      %v9613 = vmul.f32 %v9485, 0.5
      %v9614 = vmul.f32 %v9486, 0.5
      %v9615 = vmul.f32 %v9487, 0.5
      %v9616 = vmul.f32 %v9488, 0.5
      %v9617 = vmul.f32 %v9489, 0.5
      %v9618 = vmul.f32 %v9490, 0.5
      %v9619 = vmul.f32 %v9491, 0.5
      %v9620 = vmul.f32 %v9492, 0.5
      %v9621 = vmul.f32 %v9493, 0.5
      %v9622 = vmul.f32 %v9494, 0.5
      %v9623 = vmul.f32 %v9495, 0.5
      %v9624 = vmul.f32 %v9496, 0.5
      %v9625 = vmul.f32 %v9497, 0.5
      %v9626 = vmul.f32 %v9498, 0.5
      %v9627 = vpack.c.bf16 %v9500, %v9499
      %v9628 = vpack.c.bf16 %v9502, %v9501
      %v9629 = vpack.c.bf16 %v9504, %v9503
      %v9630 = vpack.c.bf16 %v9506, %v9505
      %v9631 = vpack.c.bf16 %v9508, %v9507
      %v9632 = vpack.c.bf16 %v9510, %v9509
      %v9633 = vpack.c.bf16 %v9512, %v9511
      %v9634 = vpack.c.bf16 %v9514, %v9513
      %v9635 = vpack.c.bf16 %v9516, %v9515
      %v9636 = vpack.c.bf16 %v9518, %v9517
      %v9637 = vpack.c.bf16 %v9520, %v9519
      %v9638 = vpack.c.bf16 %v9522, %v9521
      %v9639 = vpack.c.bf16 %v9524, %v9523
      %v9640 = vpack.c.bf16 %v9526, %v9525
      %v9641 = vpack.c.bf16 %v9528, %v9527
      %v9642 = vpack.c.bf16 %v9530, %v9529
      %v9643 = vpack.c.bf16 %v9532, %v9531
      %v9644 = vpack.c.bf16 %v9534, %v9533
      %v9645 = vpack.c.bf16 %v9536, %v9535
      %v9646 = vpack.c.bf16 %v9538, %v9537
      %v9647 = vpack.c.bf16 %v9540, %v9539
      %v9648 = vpack.c.bf16 %v9542, %v9541
      %v9649 = vpack.c.bf16 %v9544, %v9543
      %v9650 = vpack.c.bf16 %v9546, %v9545
      %v9651 = vpack.c.bf16 %v9548, %v9547
      %v9652 = vpack.c.bf16 %v9550, %v9549
      %v9653 = vpack.c.bf16 %v9552, %v9551
      %v9654 = vpack.c.bf16 %v9554, %v9553
      %v9655 = vpack.c.bf16 %v9556, %v9555
      %v9656 = vpack.c.bf16 %v9558, %v9557
      %v9657 = vpack.c.bf16 %v9560, %v9559
      %v9658 = vpack.c.bf16 %v9562, %v9561
      %v9659 = vpack.c.bf16 %v9564, %v9563
      %v9660 = vpack.c.bf16 %v9566, %v9565
      %v9661 = vpack.c.bf16 %v9568, %v9567
      %v9662 = vpack.c.bf16 %v9570, %v9569
      %v9663 = vpack.c.bf16 %v9572, %v9571
      %v9664 = vpack.c.bf16 %v9574, %v9573
      %v9665 = vpack.c.bf16 %v9576, %v9575
      %v9666 = vpack.c.bf16 %v9578, %v9577
      %v9667 = vpack.c.bf16 %v9580, %v9579
      %v9668 = vpack.c.bf16 %v9582, %v9581
      %v9669 = vpack.c.bf16 %v9584, %v9583
      %v9670 = vpack.c.bf16 %v9586, %v9585
      %v9671 = vpack.c.bf16 %v9588, %v9587
      %v9672 = vpack.c.bf16 %v9590, %v9589
      %v9673 = vpack.c.bf16 %v9592, %v9591
      %v9674 = vpack.c.bf16 %v9594, %v9593
      %v9675 = vpack.c.bf16 %v9596, %v9595
      %v9676 = vpack.c.bf16 %v9598, %v9597
      %v9677 = vpack.c.bf16 %v9600, %v9599
      %v9678 = vpack.c.bf16 %v9602, %v9601
      %v9679 = vpack.c.bf16 %v9604, %v9603
      %v9680 = vpack.c.bf16 %v9606, %v9605
      %v9681 = vpack.c.bf16 %v9608, %v9607
      %v9682 = vpack.c.bf16 %v9610, %v9609
      %v9683 = vpack.c.bf16 %v9612, %v9611
      %v9684 = vpack.c.bf16 %v9614, %v9613
      %v9685 = vpack.c.bf16 %v9616, %v9615
      %v9686 = vpack.c.bf16 %v9618, %v9617
      %v9687 = vpack.c.bf16 %v9620, %v9619
      %v9688 = vpack.c.bf16 %v9622, %v9621
      %v9689 = vpack.c.bf16 %v9624, %v9623
      %v9690 = vpack.c.bf16 %v9626, %v9625
      %s9691 = scalar_lea.vmem %s3, 140
      %v9692 = vld [vmem:[%s9691] sm:$0xf]
      %v9693 = vld [vmem:[%s9691 + $0x4] sm:$0xf]
      %v9694 = vld [vmem:[%s9691 + $0x8] sm:$0xf]
      %v9695 = vld [vmem:[%s9691 + $0xc] sm:$0xf]
      %v9696 = vld [vmem:[%s9691 + $0x10] sm:$0xf]
      %v9697 = vld [vmem:[%s9691 + $0x14] sm:$0xf]
      %v9698 = vld [vmem:[%s9691 + $0x18] sm:$0x1]
      %s9699 = scalar_lea.vmem %s4, 5
      %v9700 = vld [vmem:[%s9699] sm:$0x1]
      %v9702 = vlaneseq
      %v9703 = vshrl.u32 %v9702, 7
      %v9704 = vsub.s32 0, %v9703
      %v9705 = vrot.slane %v9700, %v9704
      %v9714 = vunpack.c.l.b16 %v9692
      %v9715 = vunpack.c.l.b16 %v9693
      %v9716 = vunpack.c.l.b16 %v9694
      %v9717 = vunpack.c.l.b16 %v9695
      %v9718 = vunpack.c.l.b16 %v9696
      %v9719 = vunpack.c.l.b16 %v9697
      %v9720 = vunpack.c.l.b16 %v9698
      %v9721 = vpack.c.b16 %v9715, %v9714
      %v9722 = vpack.c.b16 %v9717, %v9716
      %v9723 = vpack.c.b16 %v9719, %v9718
      %v9724 = vpack.c.b16 %v9720, %v9720
      %v9729 = vsel %vm2705, %v9627, 0
      %v9732 = vsel %vm2705, %v9628, 0
      %v9735 = vsel %vm2705, %v9629, 0
      %v9738 = vsel %vm2705, %v9630, 0
      %v9741 = vsel %vm2705, %v9631, 0
      %v9744 = vsel %vm2705, %v9632, 0
      %v9747 = vsel %vm2705, %v9633, 0
      %v9750 = vsel %vm2705, %v9634, 0
      %v9753 = vsel %vm2705, %v9635, 0
      %v9756 = vsel %vm2705, %v9636, 0
      %v9759 = vsel %vm2705, %v9637, 0
      %v9762 = vsel %vm2705, %v9638, 0
      %v9765 = vsel %vm2705, %v9639, 0
      %v9768 = vsel %vm2705, %v9640, 0
      %v9771 = vsel %vm2705, %v9641, 0
      %v9774 = vsel %vm2705, %v9642, 0
      %v9777 = vsel %vm2705, %v9643, 0
      %v9780 = vsel %vm2705, %v9644, 0
      %v9783 = vsel %vm2705, %v9645, 0
      %v9786 = vsel %vm2705, %v9646, 0
      %v9789 = vsel %vm2705, %v9647, 0
      %v9792 = vsel %vm2705, %v9648, 0
      %v9795 = vsel %vm2705, %v9649, 0
      %v9798 = vsel %vm2705, %v9650, 0
      %v9801 = vsel %vm2705, %v9651, 0
      %v9804 = vsel %vm2705, %v9652, 0
      %v9807 = vsel %vm2705, %v9653, 0
      %v9810 = vsel %vm2705, %v9654, 0
      %v9813 = vsel %vm2705, %v9655, 0
      %v9816 = vsel %vm2705, %v9656, 0
      %v9819 = vsel %vm2705, %v9657, 0
      %v9822 = vsel %vm2705, %v9658, 0
      %v9825 = vsel %vm2705, %v9659, 0
      %v9828 = vsel %vm2705, %v9660, 0
      %v9831 = vsel %vm2705, %v9661, 0
      %v9834 = vsel %vm2705, %v9662, 0
      %v9837 = vsel %vm2705, %v9663, 0
      %v9840 = vsel %vm2705, %v9664, 0
      %v9843 = vsel %vm2705, %v9665, 0
      %v9846 = vsel %vm2705, %v9666, 0
      %v9849 = vsel %vm2705, %v9667, 0
      %v9852 = vsel %vm2705, %v9668, 0
      %v9855 = vsel %vm2705, %v9669, 0
      %v9858 = vsel %vm2705, %v9670, 0
      %v9861 = vsel %vm2705, %v9671, 0
      %v9864 = vsel %vm2705, %v9672, 0
      %v9867 = vsel %vm2705, %v9673, 0
      %v9870 = vsel %vm2705, %v9674, 0
      %v9873 = vsel %vm2705, %v9675, 0
      %v9876 = vsel %vm2705, %v9676, 0
      %v9879 = vsel %vm2705, %v9677, 0
      %v9882 = vsel %vm2705, %v9678, 0
      %v9885 = vsel %vm2705, %v9679, 0
      %v9888 = vsel %vm2705, %v9680, 0
      %v9891 = vsel %vm2705, %v9681, 0
      %v9894 = vsel %vm2705, %v9682, 0
      %v9897 = vsel %vm2705, %v9683, 0
      %v9900 = vsel %vm2705, %v9684, 0
      %v9903 = vsel %vm2705, %v9685, 0
      %v9906 = vsel %vm2705, %v9686, 0
      %v9909 = vsel %vm2705, %v9687, 0
      %v9912 = vsel %vm2705, %v9688, 0
      %v9915 = vsel %vm2705, %v9689, 0
      %v9918 = vsel %vm2705, %v9690, 0
      %v9921 = vsel %vm2898, %v9724, 0
      %9923 = vmatprep.subr.bf16.mxu0 0
      %9924 = vmatpush1.bf16.msra.mxu0 %v9721
      %9925 = vmatprep.subr.bf16.mxu0 0
      %9926 = vmatpush1.bf16.msra.mxu0 %v9722
      %9927 = vmatprep.subr.bf16.mxu0 0
      %9928 = vmatpush1.bf16.msra.mxu0 %v9723
      %9929 = vmatprep.subr.bf16.mxu0 0
      %9930 = vmatpush1.bf16.msra.mxu0 %v9921
      %9931 = vmatprep.subr.bf16.mxu0 0
      %9932 = vmatpush1.bf16.msra.mxu0 0
      %9933 = vmatprep.subr.bf16.mxu0 0
      %9934 = vmatpush1.bf16.msra.mxu0 0
      %9935 = vmatprep.subr.bf16.mxu0 0
      %9936 = vmatpush1.bf16.msra.mxu0 0
      %9937 = vmatprep.subr.bf16.mxu0 0
      %9938 = vmatpush1.bf16.msra.mxu0 0
      %9939 = vmatprep.subr.bf16.mxu0 0
      %9940 = vmatpush1.bf16.msra.mxu0 0
      %9941 = vmatprep.subr.bf16.mxu0 0
      %9942 = vmatpush1.bf16.msra.mxu0 0
      %9943 = vmatprep.subr.bf16.mxu0 0
      %9944 = vmatpush1.bf16.msra.mxu0 0
      %9945 = vmatprep.subr.bf16.mxu0 0
      %9946 = vmatpush1.bf16.msra.mxu0 0
      %9947 = vmatprep.subr.bf16.mxu0 0
      %9948 = vmatpush1.bf16.msra.mxu0 0
      %9949 = vmatprep.subr.bf16.mxu0 0
      %9950 = vmatpush1.bf16.msra.mxu0 0
      %9951 = vmatprep.subr.bf16.mxu0 0
      %9952 = vmatpush1.bf16.msra.mxu0 0
      %9953 = vmatprep.subr.bf16.mxu0 0
      %9954 = vmatpush1.bf16.msra.mxu0 0
      %9955 = vmatprep.mubr.bf16.mxu0 0
      %9956 = vmatmul.mubr.bf16.gmra.mrb[0].mxu0 %v9729
      %v9957 = vpop.f32.mrb[0].mxu0
      %v9958 = vadd.f32 %v9705, %v9957
      %v9959 = vpop.f32.mrb[0].mxu0
      %v9960 = vpop.f32.mrb[0].mxu0
      %v9961 = vadd.f32 %v9705, %v9960
      %v9962 = vpop.f32.mrb[0].mxu0
      %9963 = vmatprep.mubr.bf16.mxu0 0
      %9964 = vmatmul.mubr.bf16.gmra.mrb[0].mxu0 %v9732
      %v9965 = vpop.f32.mrb[0].mxu0
      %v9966 = vadd.f32 %v9705, %v9965
      %v9967 = vpop.f32.mrb[0].mxu0
      %v9968 = vpop.f32.mrb[0].mxu0
      %v9969 = vadd.f32 %v9705, %v9968
      %v9970 = vpop.f32.mrb[0].mxu0
      %9971 = vmatprep.mubr.bf16.mxu0 0
      %9972 = vmatmul.mubr.bf16.gmra.mrb[0].mxu0 %v9735
      %v9973 = vpop.f32.mrb[0].mxu0
      %v9974 = vadd.f32 %v9705, %v9973
      %v9975 = vpop.f32.mrb[0].mxu0
      %v9976 = vpop.f32.mrb[0].mxu0
      %v9977 = vadd.f32 %v9705, %v9976
      %v9978 = vpop.f32.mrb[0].mxu0
      %9979 = vmatprep.mubr.bf16.mxu0 0
      %9980 = vmatmul.mubr.bf16.gmra.mrb[0].mxu0 %v9738
      %v9981 = vpop.f32.mrb[0].mxu0
      %v9982 = vadd.f32 %v9705, %v9981
      %v9983 = vpop.f32.mrb[0].mxu0
      %v9984 = vpop.f32.mrb[0].mxu0
      %v9985 = vadd.f32 %v9705, %v9984
      %v9986 = vpop.f32.mrb[0].mxu0
      %9987 = vmatprep.mubr.bf16.mxu0 0
      %9988 = vmatmul.mubr.bf16.gmra.mrb[0].mxu0 %v9741
      %v9989 = vpop.f32.mrb[0].mxu0
      %v9990 = vadd.f32 %v9705, %v9989
      %v9991 = vpop.f32.mrb[0].mxu0
      %v9992 = vpop.f32.mrb[0].mxu0
      %v9993 = vadd.f32 %v9705, %v9992
      %v9994 = vpop.f32.mrb[0].mxu0
      %9995 = vmatprep.mubr.bf16.mxu0 0
      %9996 = vmatmul.mubr.bf16.gmra.mrb[0].mxu0 %v9744
      %v9997 = vpop.f32.mrb[0].mxu0
      %v9998 = vadd.f32 %v9705, %v9997
      %v9999 = vpop.f32.mrb[0].mxu0
      %v10000 = vpop.f32.mrb[0].mxu0
      %v10001 = vadd.f32 %v9705, %v10000
      %v10002 = vpop.f32.mrb[0].mxu0
      %10003 = vmatprep.mubr.bf16.mxu0 0
      %10004 = vmatmul.mubr.bf16.gmra.mrb[0].mxu0 %v9747
      %v10005 = vpop.f32.mrb[0].mxu0
      %v10006 = vadd.f32 %v9705, %v10005
      %v10007 = vpop.f32.mrb[0].mxu0
      %v10008 = vpop.f32.mrb[0].mxu0
      %v10009 = vadd.f32 %v9705, %v10008
      %v10010 = vpop.f32.mrb[0].mxu0
      %10011 = vmatprep.mubr.bf16.mxu0 0
      %10012 = vmatmul.mubr.bf16.gmra.mrb[0].mxu0 %v9750
      %v10013 = vpop.f32.mrb[0].mxu0
      %v10014 = vadd.f32 %v9705, %v10013
      %v10015 = vpop.f32.mrb[0].mxu0
      %v10016 = vpop.f32.mrb[0].mxu0
      %v10017 = vadd.f32 %v9705, %v10016
      %v10018 = vpop.f32.mrb[0].mxu0
      %10019 = vmatprep.mubr.bf16.mxu0 0
      %10020 = vmatmul.mubr.bf16.gmra.mrb[0].mxu0 %v9753
      %v10021 = vpop.f32.mrb[0].mxu0
      %v10022 = vadd.f32 %v9705, %v10021
      %v10023 = vpop.f32.mrb[0].mxu0
      %v10024 = vpop.f32.mrb[0].mxu0
      %v10025 = vadd.f32 %v9705, %v10024
      %v10026 = vpop.f32.mrb[0].mxu0
      %10027 = vmatprep.mubr.bf16.mxu0 0
      %10028 = vmatmul.mubr.bf16.gmra.mrb[0].mxu0 %v9756
      %v10029 = vpop.f32.mrb[0].mxu0
      %v10030 = vadd.f32 %v9705, %v10029
      %v10031 = vpop.f32.mrb[0].mxu0
      %v10032 = vpop.f32.mrb[0].mxu0
      %v10033 = vadd.f32 %v9705, %v10032
      %v10034 = vpop.f32.mrb[0].mxu0
      %10035 = vmatprep.mubr.bf16.mxu0 0
      %10036 = vmatmul.mubr.bf16.gmra.mrb[0].mxu0 %v9759
      %v10037 = vpop.f32.mrb[0].mxu0
      %v10038 = vadd.f32 %v9705, %v10037
      %v10039 = vpop.f32.mrb[0].mxu0
      %v10040 = vpop.f32.mrb[0].mxu0
      %v10041 = vadd.f32 %v9705, %v10040
      %v10042 = vpop.f32.mrb[0].mxu0
      %10043 = vmatprep.mubr.bf16.mxu0 0
      %10044 = vmatmul.mubr.bf16.gmra.mrb[0].mxu0 %v9762
      %v10045 = vpop.f32.mrb[0].mxu0
      %v10046 = vadd.f32 %v9705, %v10045
      %v10047 = vpop.f32.mrb[0].mxu0
      %v10048 = vpop.f32.mrb[0].mxu0
      %v10049 = vadd.f32 %v9705, %v10048
      %v10050 = vpop.f32.mrb[0].mxu0
      %10051 = vmatprep.mubr.bf16.mxu0 0
      %10052 = vmatmul.mubr.bf16.gmra.mrb[0].mxu0 %v9765
      %v10053 = vpop.f32.mrb[0].mxu0
      %v10054 = vadd.f32 %v9705, %v10053
      %v10055 = vpop.f32.mrb[0].mxu0
      %v10056 = vpop.f32.mrb[0].mxu0
      %v10057 = vadd.f32 %v9705, %v10056
      %v10058 = vpop.f32.mrb[0].mxu0
      %10059 = vmatprep.mubr.bf16.mxu0 0
      %10060 = vmatmul.mubr.bf16.gmra.mrb[0].mxu0 %v9768
      %v10061 = vpop.f32.mrb[0].mxu0
      %v10062 = vadd.f32 %v9705, %v10061
      %v10063 = vpop.f32.mrb[0].mxu0
      %v10064 = vpop.f32.mrb[0].mxu0
      %v10065 = vadd.f32 %v9705, %v10064
      %v10066 = vpop.f32.mrb[0].mxu0
      %10067 = vmatprep.mubr.bf16.mxu0 0
      %10068 = vmatmul.mubr.bf16.gmra.mrb[0].mxu0 %v9771
      %v10069 = vpop.f32.mrb[0].mxu0
      %v10070 = vadd.f32 %v9705, %v10069
      %v10071 = vpop.f32.mrb[0].mxu0
      %v10072 = vpop.f32.mrb[0].mxu0
      %v10073 = vadd.f32 %v9705, %v10072
      %v10074 = vpop.f32.mrb[0].mxu0
      %10075 = vmatprep.mubr.bf16.mxu0 0
      %10076 = vmatmul.mubr.bf16.gmra.mrb[0].mxu0 %v9774
      %v10077 = vpop.f32.mrb[0].mxu0
      %v10078 = vadd.f32 %v9705, %v10077
      %v10079 = vpop.f32.mrb[0].mxu0
      %v10080 = vpop.f32.mrb[0].mxu0
      %v10081 = vadd.f32 %v9705, %v10080
      %v10082 = vpop.f32.mrb[0].mxu0
      %10083 = vmatprep.mubr.bf16.mxu0 0
      %10084 = vmatmul.mubr.bf16.gmra.mrb[0].mxu0 %v9777
      %v10085 = vpop.f32.mrb[0].mxu0
      %v10086 = vadd.f32 %v9705, %v10085
      %v10087 = vpop.f32.mrb[0].mxu0
      %v10088 = vpop.f32.mrb[0].mxu0
      %v10089 = vadd.f32 %v9705, %v10088
      %v10090 = vpop.f32.mrb[0].mxu0
      %10091 = vmatprep.mubr.bf16.mxu0 0
      %10092 = vmatmul.mubr.bf16.gmra.mrb[0].mxu0 %v9780
      %v10093 = vpop.f32.mrb[0].mxu0
      %v10094 = vadd.f32 %v9705, %v10093
      %v10095 = vpop.f32.mrb[0].mxu0
      %v10096 = vpop.f32.mrb[0].mxu0
      %v10097 = vadd.f32 %v9705, %v10096
      %v10098 = vpop.f32.mrb[0].mxu0
      %10099 = vmatprep.mubr.bf16.mxu0 0
      %10100 = vmatmul.mubr.bf16.gmra.mrb[0].mxu0 %v9783
      %v10101 = vpop.f32.mrb[0].mxu0
      %v10102 = vadd.f32 %v9705, %v10101
      %v10103 = vpop.f32.mrb[0].mxu0
      %v10104 = vpop.f32.mrb[0].mxu0
      %v10105 = vadd.f32 %v9705, %v10104
      %v10106 = vpop.f32.mrb[0].mxu0
      %10107 = vmatprep.mubr.bf16.mxu0 0
      %10108 = vmatmul.mubr.bf16.gmra.mrb[0].mxu0 %v9786
      %v10109 = vpop.f32.mrb[0].mxu0
      %v10110 = vadd.f32 %v9705, %v10109
      %v10111 = vpop.f32.mrb[0].mxu0
      %v10112 = vpop.f32.mrb[0].mxu0
      %v10113 = vadd.f32 %v9705, %v10112
      %v10114 = vpop.f32.mrb[0].mxu0
      %10115 = vmatprep.mubr.bf16.mxu0 0
      %10116 = vmatmul.mubr.bf16.gmra.mrb[0].mxu0 %v9789
      %v10117 = vpop.f32.mrb[0].mxu0
      %v10118 = vadd.f32 %v9705, %v10117
      %v10119 = vpop.f32.mrb[0].mxu0
      %v10120 = vpop.f32.mrb[0].mxu0
      %v10121 = vadd.f32 %v9705, %v10120
      %v10122 = vpop.f32.mrb[0].mxu0
      %10123 = vmatprep.mubr.bf16.mxu0 0
      %10124 = vmatmul.mubr.bf16.gmra.mrb[0].mxu0 %v9792
      %v10125 = vpop.f32.mrb[0].mxu0
      %v10126 = vadd.f32 %v9705, %v10125
      %v10127 = vpop.f32.mrb[0].mxu0
      %v10128 = vpop.f32.mrb[0].mxu0
      %v10129 = vadd.f32 %v9705, %v10128
      %v10130 = vpop.f32.mrb[0].mxu0
      %10131 = vmatprep.mubr.bf16.mxu0 0
      %10132 = vmatmul.mubr.bf16.gmra.mrb[0].mxu0 %v9795
      %v10133 = vpop.f32.mrb[0].mxu0
      %v10134 = vadd.f32 %v9705, %v10133
      %v10135 = vpop.f32.mrb[0].mxu0
      %v10136 = vpop.f32.mrb[0].mxu0
      %v10137 = vadd.f32 %v9705, %v10136
      %v10138 = vpop.f32.mrb[0].mxu0
      %10139 = vmatprep.mubr.bf16.mxu0 0
      %10140 = vmatmul.mubr.bf16.gmra.mrb[0].mxu0 %v9798
      %v10141 = vpop.f32.mrb[0].mxu0
      %v10142 = vadd.f32 %v9705, %v10141
      %v10143 = vpop.f32.mrb[0].mxu0
      %v10144 = vpop.f32.mrb[0].mxu0
      %v10145 = vadd.f32 %v9705, %v10144
      %v10146 = vpop.f32.mrb[0].mxu0
      %10147 = vmatprep.mubr.bf16.mxu0 0
      %10148 = vmatmul.mubr.bf16.gmra.mrb[0].mxu0 %v9801
      %v10149 = vpop.f32.mrb[0].mxu0
      %v10150 = vadd.f32 %v9705, %v10149
      %v10151 = vpop.f32.mrb[0].mxu0
      %v10152 = vpop.f32.mrb[0].mxu0
      %v10153 = vadd.f32 %v9705, %v10152
      %v10154 = vpop.f32.mrb[0].mxu0
      %10155 = vmatprep.mubr.bf16.mxu0 0
      %10156 = vmatmul.mubr.bf16.gmra.mrb[0].mxu0 %v9804
      %v10157 = vpop.f32.mrb[0].mxu0
      %v10158 = vadd.f32 %v9705, %v10157
      %v10159 = vpop.f32.mrb[0].mxu0
      %v10160 = vpop.f32.mrb[0].mxu0
      %v10161 = vadd.f32 %v9705, %v10160
      %v10162 = vpop.f32.mrb[0].mxu0
      %10163 = vmatprep.mubr.bf16.mxu0 0
      %10164 = vmatmul.mubr.bf16.gmra.mrb[0].mxu0 %v9807
      %v10165 = vpop.f32.mrb[0].mxu0
      %v10166 = vadd.f32 %v9705, %v10165
      %v10167 = vpop.f32.mrb[0].mxu0
      %v10168 = vpop.f32.mrb[0].mxu0
      %v10169 = vadd.f32 %v9705, %v10168
      %v10170 = vpop.f32.mrb[0].mxu0
      %10171 = vmatprep.mubr.bf16.mxu0 0
      %10172 = vmatmul.mubr.bf16.gmra.mrb[0].mxu0 %v9810
      %v10173 = vpop.f32.mrb[0].mxu0
      %v10174 = vadd.f32 %v9705, %v10173
      %v10175 = vpop.f32.mrb[0].mxu0
      %v10176 = vpop.f32.mrb[0].mxu0
      %v10177 = vadd.f32 %v9705, %v10176
      %v10178 = vpop.f32.mrb[0].mxu0
      %10179 = vmatprep.mubr.bf16.mxu0 0
      %10180 = vmatmul.mubr.bf16.gmra.mrb[0].mxu0 %v9813
      %v10181 = vpop.f32.mrb[0].mxu0
      %v10182 = vadd.f32 %v9705, %v10181
      %v10183 = vpop.f32.mrb[0].mxu0
      %v10184 = vpop.f32.mrb[0].mxu0
      %v10185 = vadd.f32 %v9705, %v10184
      %v10186 = vpop.f32.mrb[0].mxu0
      %10187 = vmatprep.mubr.bf16.mxu0 0
      %10188 = vmatmul.mubr.bf16.gmra.mrb[0].mxu0 %v9816
      %v10189 = vpop.f32.mrb[0].mxu0
      %v10190 = vadd.f32 %v9705, %v10189
      %v10191 = vpop.f32.mrb[0].mxu0
      %v10192 = vpop.f32.mrb[0].mxu0
      %v10193 = vadd.f32 %v9705, %v10192
      %v10194 = vpop.f32.mrb[0].mxu0
      %10195 = vmatprep.mubr.bf16.mxu0 0
      %10196 = vmatmul.mubr.bf16.gmra.mrb[0].mxu0 %v9819
      %v10197 = vpop.f32.mrb[0].mxu0
      %v10198 = vadd.f32 %v9705, %v10197
      %v10199 = vpop.f32.mrb[0].mxu0
      %v10200 = vpop.f32.mrb[0].mxu0
      %v10201 = vadd.f32 %v9705, %v10200
      %v10202 = vpop.f32.mrb[0].mxu0
      %10203 = vmatprep.mubr.bf16.mxu0 0
      %10204 = vmatmul.mubr.bf16.gmra.mrb[0].mxu0 %v9822
      %v10205 = vpop.f32.mrb[0].mxu0
      %v10206 = vadd.f32 %v9705, %v10205
      %v10207 = vpop.f32.mrb[0].mxu0
      %v10208 = vpop.f32.mrb[0].mxu0
      %v10209 = vadd.f32 %v9705, %v10208
      %v10210 = vpop.f32.mrb[0].mxu0
      %10211 = vmatprep.mubr.bf16.mxu0 0
      %10212 = vmatmul.mubr.bf16.gmra.mrb[0].mxu0 %v9825
      %v10213 = vpop.f32.mrb[0].mxu0
      %v10214 = vadd.f32 %v9705, %v10213
      %v10215 = vpop.f32.mrb[0].mxu0
      %v10216 = vpop.f32.mrb[0].mxu0
      %v10217 = vadd.f32 %v9705, %v10216
      %v10218 = vpop.f32.mrb[0].mxu0
      %10219 = vmatprep.mubr.bf16.mxu0 0
      %10220 = vmatmul.mubr.bf16.gmra.mrb[0].mxu0 %v9828
      %v10221 = vpop.f32.mrb[0].mxu0
      %v10222 = vadd.f32 %v9705, %v10221
      %v10223 = vpop.f32.mrb[0].mxu0
      %v10224 = vpop.f32.mrb[0].mxu0
      %v10225 = vadd.f32 %v9705, %v10224
      %v10226 = vpop.f32.mrb[0].mxu0
      %10227 = vmatprep.mubr.bf16.mxu0 0
      %10228 = vmatmul.mubr.bf16.gmra.mrb[0].mxu0 %v9831
      %v10229 = vpop.f32.mrb[0].mxu0
      %v10230 = vadd.f32 %v9705, %v10229
      %v10231 = vpop.f32.mrb[0].mxu0
      %v10232 = vpop.f32.mrb[0].mxu0
      %v10233 = vadd.f32 %v9705, %v10232
      %v10234 = vpop.f32.mrb[0].mxu0
      %10235 = vmatprep.mubr.bf16.mxu0 0
      %10236 = vmatmul.mubr.bf16.gmra.mrb[0].mxu0 %v9834
      %v10237 = vpop.f32.mrb[0].mxu0
      %v10238 = vadd.f32 %v9705, %v10237
      %v10239 = vpop.f32.mrb[0].mxu0
      %v10240 = vpop.f32.mrb[0].mxu0
      %v10241 = vadd.f32 %v9705, %v10240
      %v10242 = vpop.f32.mrb[0].mxu0
      %10243 = vmatprep.mubr.bf16.mxu0 0
      %10244 = vmatmul.mubr.bf16.gmra.mrb[0].mxu0 %v9837
      %v10245 = vpop.f32.mrb[0].mxu0
      %v10246 = vadd.f32 %v9705, %v10245
      %v10247 = vpop.f32.mrb[0].mxu0
      %v10248 = vpop.f32.mrb[0].mxu0
      %v10249 = vadd.f32 %v9705, %v10248
      %v10250 = vpop.f32.mrb[0].mxu0
      %10251 = vmatprep.mubr.bf16.mxu0 0
      %10252 = vmatmul.mubr.bf16.gmra.mrb[0].mxu0 %v9840
      %v10253 = vpop.f32.mrb[0].mxu0
      %v10254 = vadd.f32 %v9705, %v10253
      %v10255 = vpop.f32.mrb[0].mxu0
      %v10256 = vpop.f32.mrb[0].mxu0
      %v10257 = vadd.f32 %v9705, %v10256
      %v10258 = vpop.f32.mrb[0].mxu0
      %10259 = vmatprep.mubr.bf16.mxu0 0
      %10260 = vmatmul.mubr.bf16.gmra.mrb[0].mxu0 %v9843
      %v10261 = vpop.f32.mrb[0].mxu0
      %v10262 = vadd.f32 %v9705, %v10261
      %v10263 = vpop.f32.mrb[0].mxu0
      %v10264 = vpop.f32.mrb[0].mxu0
      %v10265 = vadd.f32 %v9705, %v10264
      %v10266 = vpop.f32.mrb[0].mxu0
      %10267 = vmatprep.mubr.bf16.mxu0 0
      %10268 = vmatmul.mubr.bf16.gmra.mrb[0].mxu0 %v9846
      %v10269 = vpop.f32.mrb[0].mxu0
      %v10270 = vadd.f32 %v9705, %v10269
      %v10271 = vpop.f32.mrb[0].mxu0
      %v10272 = vpop.f32.mrb[0].mxu0
      %v10273 = vadd.f32 %v9705, %v10272
      %v10274 = vpop.f32.mrb[0].mxu0
      %10275 = vmatprep.mubr.bf16.mxu0 0
      %10276 = vmatmul.mubr.bf16.gmra.mrb[0].mxu0 %v9849
      %v10277 = vpop.f32.mrb[0].mxu0
      %v10278 = vadd.f32 %v9705, %v10277
      %v10279 = vpop.f32.mrb[0].mxu0
      %v10280 = vpop.f32.mrb[0].mxu0
      %v10281 = vadd.f32 %v9705, %v10280
      %v10282 = vpop.f32.mrb[0].mxu0
      %10283 = vmatprep.mubr.bf16.mxu0 0
      %10284 = vmatmul.mubr.bf16.gmra.mrb[0].mxu0 %v9852
      %v10285 = vpop.f32.mrb[0].mxu0
      %v10286 = vadd.f32 %v9705, %v10285
      %v10287 = vpop.f32.mrb[0].mxu0
      %v10288 = vpop.f32.mrb[0].mxu0
      %v10289 = vadd.f32 %v9705, %v10288
      %v10290 = vpop.f32.mrb[0].mxu0
      %10291 = vmatprep.mubr.bf16.mxu0 0
      %10292 = vmatmul.mubr.bf16.gmra.mrb[0].mxu0 %v9855
      %v10293 = vpop.f32.mrb[0].mxu0
      %v10294 = vadd.f32 %v9705, %v10293
      %v10295 = vpop.f32.mrb[0].mxu0
      %v10296 = vpop.f32.mrb[0].mxu0
      %v10297 = vadd.f32 %v9705, %v10296
      %v10298 = vpop.f32.mrb[0].mxu0
      %10299 = vmatprep.mubr.bf16.mxu0 0
      %10300 = vmatmul.mubr.bf16.gmra.mrb[0].mxu0 %v9858
      %v10301 = vpop.f32.mrb[0].mxu0
      %v10302 = vadd.f32 %v9705, %v10301
      %v10303 = vpop.f32.mrb[0].mxu0
      %v10304 = vpop.f32.mrb[0].mxu0
      %v10305 = vadd.f32 %v9705, %v10304
      %v10306 = vpop.f32.mrb[0].mxu0
      %10307 = vmatprep.mubr.bf16.mxu0 0
      %10308 = vmatmul.mubr.bf16.gmra.mrb[0].mxu0 %v9861
      %v10309 = vpop.f32.mrb[0].mxu0
      %v10310 = vadd.f32 %v9705, %v10309
      %v10311 = vpop.f32.mrb[0].mxu0
      %v10312 = vpop.f32.mrb[0].mxu0
      %v10313 = vadd.f32 %v9705, %v10312
      %v10314 = vpop.f32.mrb[0].mxu0
      %10315 = vmatprep.mubr.bf16.mxu0 0
      %10316 = vmatmul.mubr.bf16.gmra.mrb[0].mxu0 %v9864
      %v10317 = vpop.f32.mrb[0].mxu0
      %v10318 = vadd.f32 %v9705, %v10317
      %v10319 = vpop.f32.mrb[0].mxu0
      %v10320 = vpop.f32.mrb[0].mxu0
      %v10321 = vadd.f32 %v9705, %v10320
      %v10322 = vpop.f32.mrb[0].mxu0
      %10323 = vmatprep.mubr.bf16.mxu0 0
      %10324 = vmatmul.mubr.bf16.gmra.mrb[0].mxu0 %v9867
      %v10325 = vpop.f32.mrb[0].mxu0
      %v10326 = vadd.f32 %v9705, %v10325
      %v10327 = vpop.f32.mrb[0].mxu0
      %v10328 = vpop.f32.mrb[0].mxu0
      %v10329 = vadd.f32 %v9705, %v10328
      %v10330 = vpop.f32.mrb[0].mxu0
      %10331 = vmatprep.mubr.bf16.mxu0 0
      %10332 = vmatmul.mubr.bf16.gmra.mrb[0].mxu0 %v9870
      %v10333 = vpop.f32.mrb[0].mxu0
      %v10334 = vadd.f32 %v9705, %v10333
      %v10335 = vpop.f32.mrb[0].mxu0
      %v10336 = vpop.f32.mrb[0].mxu0
      %v10337 = vadd.f32 %v9705, %v10336
      %v10338 = vpop.f32.mrb[0].mxu0
      %10339 = vmatprep.mubr.bf16.mxu0 0
      %10340 = vmatmul.mubr.bf16.gmra.mrb[0].mxu0 %v9873
      %v10341 = vpop.f32.mrb[0].mxu0
      %v10342 = vadd.f32 %v9705, %v10341
      %v10343 = vpop.f32.mrb[0].mxu0
      %v10344 = vpop.f32.mrb[0].mxu0
      %v10345 = vadd.f32 %v9705, %v10344
      %v10346 = vpop.f32.mrb[0].mxu0
      %10347 = vmatprep.mubr.bf16.mxu0 0
      %10348 = vmatmul.mubr.bf16.gmra.mrb[0].mxu0 %v9876
      %v10349 = vpop.f32.mrb[0].mxu0
      %v10350 = vadd.f32 %v9705, %v10349
      %v10351 = vpop.f32.mrb[0].mxu0
      %v10352 = vpop.f32.mrb[0].mxu0
      %v10353 = vadd.f32 %v9705, %v10352
      %v10354 = vpop.f32.mrb[0].mxu0
      %10355 = vmatprep.mubr.bf16.mxu0 0
      %10356 = vmatmul.mubr.bf16.gmra.mrb[0].mxu0 %v9879
      %v10357 = vpop.f32.mrb[0].mxu0
      %v10358 = vadd.f32 %v9705, %v10357
      %v10359 = vpop.f32.mrb[0].mxu0
      %v10360 = vpop.f32.mrb[0].mxu0
      %v10361 = vadd.f32 %v9705, %v10360
      %v10362 = vpop.f32.mrb[0].mxu0
      %10363 = vmatprep.mubr.bf16.mxu0 0
      %10364 = vmatmul.mubr.bf16.gmra.mrb[0].mxu0 %v9882
      %v10365 = vpop.f32.mrb[0].mxu0
      %v10366 = vadd.f32 %v9705, %v10365
      %v10367 = vpop.f32.mrb[0].mxu0
      %v10368 = vpop.f32.mrb[0].mxu0
      %v10369 = vadd.f32 %v9705, %v10368
      %v10370 = vpop.f32.mrb[0].mxu0
      %10371 = vmatprep.mubr.bf16.mxu0 0
      %10372 = vmatmul.mubr.bf16.gmra.mrb[0].mxu0 %v9885
      %v10373 = vpop.f32.mrb[0].mxu0
      %v10374 = vadd.f32 %v9705, %v10373
      %v10375 = vpop.f32.mrb[0].mxu0
      %v10376 = vpop.f32.mrb[0].mxu0
      %v10377 = vadd.f32 %v9705, %v10376
      %v10378 = vpop.f32.mrb[0].mxu0
      %10379 = vmatprep.mubr.bf16.mxu0 0
      %10380 = vmatmul.mubr.bf16.gmra.mrb[0].mxu0 %v9888
      %v10381 = vpop.f32.mrb[0].mxu0
      %v10382 = vadd.f32 %v9705, %v10381
      %v10383 = vpop.f32.mrb[0].mxu0
      %v10384 = vpop.f32.mrb[0].mxu0
      %v10385 = vadd.f32 %v9705, %v10384
      %v10386 = vpop.f32.mrb[0].mxu0
      %10387 = vmatprep.mubr.bf16.mxu0 0
      %10388 = vmatmul.mubr.bf16.gmra.mrb[0].mxu0 %v9891
      %v10389 = vpop.f32.mrb[0].mxu0
      %v10390 = vadd.f32 %v9705, %v10389
      %v10391 = vpop.f32.mrb[0].mxu0
      %v10392 = vpop.f32.mrb[0].mxu0
      %v10393 = vadd.f32 %v9705, %v10392
      %v10394 = vpop.f32.mrb[0].mxu0
      %10395 = vmatprep.mubr.bf16.mxu0 0
      %10396 = vmatmul.mubr.bf16.gmra.mrb[0].mxu0 %v9894
      %v10397 = vpop.f32.mrb[0].mxu0
      %v10398 = vadd.f32 %v9705, %v10397
      %v10399 = vpop.f32.mrb[0].mxu0
      %v10400 = vpop.f32.mrb[0].mxu0
      %v10401 = vadd.f32 %v9705, %v10400
      %v10402 = vpop.f32.mrb[0].mxu0
      %10403 = vmatprep.mubr.bf16.mxu0 0
      %10404 = vmatmul.mubr.bf16.gmra.mrb[0].mxu0 %v9897
      %v10405 = vpop.f32.mrb[0].mxu0
      %v10406 = vadd.f32 %v9705, %v10405
      %v10407 = vpop.f32.mrb[0].mxu0
      %v10408 = vpop.f32.mrb[0].mxu0
      %v10409 = vadd.f32 %v9705, %v10408
      %v10410 = vpop.f32.mrb[0].mxu0
      %10411 = vmatprep.mubr.bf16.mxu0 0
      %10412 = vmatmul.mubr.bf16.gmra.mrb[0].mxu0 %v9900
      %v10413 = vpop.f32.mrb[0].mxu0
      %v10414 = vadd.f32 %v9705, %v10413
      %v10415 = vpop.f32.mrb[0].mxu0
      %v10416 = vpop.f32.mrb[0].mxu0
      %v10417 = vadd.f32 %v9705, %v10416
      %v10418 = vpop.f32.mrb[0].mxu0
      %10419 = vmatprep.mubr.bf16.mxu0 0
      %10420 = vmatmul.mubr.bf16.gmra.mrb[0].mxu0 %v9903
      %v10421 = vpop.f32.mrb[0].mxu0
      %v10422 = vadd.f32 %v9705, %v10421
      %v10423 = vpop.f32.mrb[0].mxu0
      %v10424 = vpop.f32.mrb[0].mxu0
      %v10425 = vadd.f32 %v9705, %v10424
      %v10426 = vpop.f32.mrb[0].mxu0
      %10427 = vmatprep.mubr.bf16.mxu0 0
      %10428 = vmatmul.mubr.bf16.gmra.mrb[0].mxu0 %v9906
      %v10429 = vpop.f32.mrb[0].mxu0
      %v10430 = vadd.f32 %v9705, %v10429
      %v10431 = vpop.f32.mrb[0].mxu0
      %v10432 = vpop.f32.mrb[0].mxu0
      %v10433 = vadd.f32 %v9705, %v10432
      %v10434 = vpop.f32.mrb[0].mxu0
      %10435 = vmatprep.mubr.bf16.mxu0 0
      %10436 = vmatmul.mubr.bf16.gmra.mrb[0].mxu0 %v9909
      %v10437 = vpop.f32.mrb[0].mxu0
      %v10438 = vadd.f32 %v9705, %v10437
      %v10439 = vpop.f32.mrb[0].mxu0
      %v10440 = vpop.f32.mrb[0].mxu0
      %v10441 = vadd.f32 %v9705, %v10440
      %v10442 = vpop.f32.mrb[0].mxu0
      %10443 = vmatprep.mubr.bf16.mxu0 0
      %10444 = vmatmul.mubr.bf16.gmra.mrb[0].mxu0 %v9912
      %v10445 = vpop.f32.mrb[0].mxu0
      %v10446 = vadd.f32 %v9705, %v10445
      %v10447 = vpop.f32.mrb[0].mxu0
      %v10448 = vpop.f32.mrb[0].mxu0
      %v10449 = vadd.f32 %v9705, %v10448
      %v10450 = vpop.f32.mrb[0].mxu0
      %10451 = vmatprep.mubr.bf16.mxu0 0
      %10452 = vmatmul.mubr.bf16.gmra.mrb[0].mxu0 %v9915
      %v10453 = vpop.f32.mrb[0].mxu0
      %v10454 = vadd.f32 %v9705, %v10453
      %v10455 = vpop.f32.mrb[0].mxu0
      %v10456 = vpop.f32.mrb[0].mxu0
      %v10457 = vadd.f32 %v9705, %v10456
      %v10458 = vpop.f32.mrb[0].mxu0
      %10459 = vmatprep.mubr.bf16.mxu0 0
      %10460 = vmatmul.mubr.bf16.gmra.mrb[0].mxu0 %v9918
      %v10461 = vpop.f32.mrb[0].mxu0
      %v10462 = vadd.f32 %v9705, %v10461
      %v10463 = vpop.f32.mrb[0].mxu0
      %v10464 = vpop.f32.mrb[0].mxu0
      %v10465 = vadd.f32 %v9705, %v10464
      %v10466 = vpop.f32.mrb[0].mxu0
      %10467 = vdwg.mxu0
      %v10468 = vmul.f32 %v9958, 0.5
      %v10469 = vmul.f32 %v9961, 0.5
      %v10470 = vmul.f32 %v9966, 0.5
      %v10471 = vmul.f32 %v9969, 0.5
      %v10472 = vmul.f32 %v9974, 0.5
      %v10473 = vmul.f32 %v9977, 0.5
      %v10474 = vmul.f32 %v9982, 0.5
      %v10475 = vmul.f32 %v9985, 0.5
      %v10476 = vmul.f32 %v9990, 0.5
      %v10477 = vmul.f32 %v9993, 0.5
      %v10478 = vmul.f32 %v9998, 0.5
      %v10479 = vmul.f32 %v10001, 0.5
      %v10480 = vmul.f32 %v10006, 0.5
      %v10481 = vmul.f32 %v10009, 0.5
      %v10482 = vmul.f32 %v10014, 0.5
      %v10483 = vmul.f32 %v10017, 0.5
      %v10484 = vmul.f32 %v10022, 0.5
      %v10485 = vmul.f32 %v10025, 0.5
      %v10486 = vmul.f32 %v10030, 0.5
      %v10487 = vmul.f32 %v10033, 0.5
      %v10488 = vmul.f32 %v10038, 0.5
      %v10489 = vmul.f32 %v10041, 0.5
      %v10490 = vmul.f32 %v10046, 0.5
      %v10491 = vmul.f32 %v10049, 0.5
      %v10492 = vmul.f32 %v10054, 0.5
      %v10493 = vmul.f32 %v10057, 0.5
      %v10494 = vmul.f32 %v10062, 0.5
      %v10495 = vmul.f32 %v10065, 0.5
      %v10496 = vmul.f32 %v10070, 0.5
      %v10497 = vmul.f32 %v10073, 0.5
      %v10498 = vmul.f32 %v10078, 0.5
      %v10499 = vmul.f32 %v10081, 0.5
      %v10500 = vmul.f32 %v10086, 0.5
      %v10501 = vmul.f32 %v10089, 0.5
      %v10502 = vmul.f32 %v10094, 0.5
      %v10503 = vmul.f32 %v10097, 0.5
      %v10504 = vmul.f32 %v10102, 0.5
      %v10505 = vmul.f32 %v10105, 0.5
      %v10506 = vmul.f32 %v10110, 0.5
      %v10507 = vmul.f32 %v10113, 0.5
      %v10508 = vmul.f32 %v10118, 0.5
      %v10509 = vmul.f32 %v10121, 0.5
      %v10510 = vmul.f32 %v10126, 0.5
      %v10511 = vmul.f32 %v10129, 0.5
      %v10512 = vmul.f32 %v10134, 0.5
      %v10513 = vmul.f32 %v10137, 0.5
      %v10514 = vmul.f32 %v10142, 0.5
      %v10515 = vmul.f32 %v10145, 0.5
      %v10516 = vmul.f32 %v10150, 0.5
      %v10517 = vmul.f32 %v10153, 0.5
      %v10518 = vmul.f32 %v10158, 0.5
      %v10519 = vmul.f32 %v10161, 0.5
      %v10520 = vmul.f32 %v10166, 0.5
      %v10521 = vmul.f32 %v10169, 0.5
      %v10522 = vmul.f32 %v10174, 0.5
      %v10523 = vmul.f32 %v10177, 0.5
      %v10524 = vmul.f32 %v10182, 0.5
      %v10525 = vmul.f32 %v10185, 0.5
      %v10526 = vmul.f32 %v10190, 0.5
      %v10527 = vmul.f32 %v10193, 0.5
      %v10528 = vmul.f32 %v10198, 0.5
      %v10529 = vmul.f32 %v10201, 0.5
      %v10530 = vmul.f32 %v10206, 0.5
      %v10531 = vmul.f32 %v10209, 0.5
      %v10532 = vmul.f32 %v10214, 0.5
      %v10533 = vmul.f32 %v10217, 0.5
      %v10534 = vmul.f32 %v10222, 0.5
      %v10535 = vmul.f32 %v10225, 0.5
      %v10536 = vmul.f32 %v10230, 0.5
      %v10537 = vmul.f32 %v10233, 0.5
      %v10538 = vmul.f32 %v10238, 0.5
      %v10539 = vmul.f32 %v10241, 0.5
      %v10540 = vmul.f32 %v10246, 0.5
      %v10541 = vmul.f32 %v10249, 0.5
      %v10542 = vmul.f32 %v10254, 0.5
      %v10543 = vmul.f32 %v10257, 0.5
      %v10544 = vmul.f32 %v10262, 0.5
      %v10545 = vmul.f32 %v10265, 0.5
      %v10546 = vmul.f32 %v10270, 0.5
      %v10547 = vmul.f32 %v10273, 0.5
      %v10548 = vmul.f32 %v10278, 0.5
      %v10549 = vmul.f32 %v10281, 0.5
      %v10550 = vmul.f32 %v10286, 0.5
      %v10551 = vmul.f32 %v10289, 0.5
      %v10552 = vmul.f32 %v10294, 0.5
      %v10553 = vmul.f32 %v10297, 0.5
      %v10554 = vmul.f32 %v10302, 0.5
      %v10555 = vmul.f32 %v10305, 0.5
      %v10556 = vmul.f32 %v10310, 0.5
      %v10557 = vmul.f32 %v10313, 0.5
      %v10558 = vmul.f32 %v10318, 0.5
      %v10559 = vmul.f32 %v10321, 0.5
      %v10560 = vmul.f32 %v10326, 0.5
      %v10561 = vmul.f32 %v10329, 0.5
      %v10562 = vmul.f32 %v10334, 0.5
      %v10563 = vmul.f32 %v10337, 0.5
      %v10564 = vmul.f32 %v10342, 0.5
      %v10565 = vmul.f32 %v10345, 0.5
      %v10566 = vmul.f32 %v10350, 0.5
      %v10567 = vmul.f32 %v10353, 0.5
      %v10568 = vmul.f32 %v10358, 0.5
      %v10569 = vmul.f32 %v10361, 0.5
      %v10570 = vmul.f32 %v10366, 0.5
      %v10571 = vmul.f32 %v10369, 0.5
      %v10572 = vmul.f32 %v10374, 0.5
      %v10573 = vmul.f32 %v10377, 0.5
      %v10574 = vmul.f32 %v10382, 0.5
      %v10575 = vmul.f32 %v10385, 0.5
      %v10576 = vmul.f32 %v10390, 0.5
      %v10577 = vmul.f32 %v10393, 0.5
      %v10578 = vmul.f32 %v10398, 0.5
      %v10579 = vmul.f32 %v10401, 0.5
      %v10580 = vmul.f32 %v10406, 0.5
      %v10581 = vmul.f32 %v10409, 0.5
      %v10582 = vmul.f32 %v10414, 0.5
      %v10583 = vmul.f32 %v10417, 0.5
      %v10584 = vmul.f32 %v10422, 0.5
      %v10585 = vmul.f32 %v10425, 0.5
      %v10586 = vmul.f32 %v10430, 0.5
      %v10587 = vmul.f32 %v10433, 0.5
      %v10588 = vmul.f32 %v10438, 0.5
      %v10589 = vmul.f32 %v10441, 0.5
      %v10590 = vmul.f32 %v10446, 0.5
      %v10591 = vmul.f32 %v10449, 0.5
      %v10592 = vmul.f32 %v10454, 0.5
      %v10593 = vmul.f32 %v10457, 0.5
      %v10594 = vmul.f32 %v10462, 0.5
      %v10595 = vmul.f32 %v10465, 0.5
      %v10596 = vtanh.pop %v10468
      %v10597 = vtanh.pop %v10469
      %v10598 = vtanh.pop %v10470
      %v10599 = vtanh.pop %v10471
      %v10600 = vtanh.pop %v10472
      %v10601 = vtanh.pop %v10473
      %v10602 = vtanh.pop %v10474
      %v10603 = vtanh.pop %v10475
      %v10604 = vtanh.pop %v10476
      %v10605 = vtanh.pop %v10477
      %v10606 = vtanh.pop %v10478
      %v10607 = vtanh.pop %v10479
      %v10608 = vtanh.pop %v10480
      %v10609 = vtanh.pop %v10481
      %v10610 = vtanh.pop %v10482
      %v10611 = vtanh.pop %v10483
      %v10612 = vtanh.pop %v10484
      %v10613 = vtanh.pop %v10485
      %v10614 = vtanh.pop %v10486
      %v10615 = vtanh.pop %v10487
      %v10616 = vtanh.pop %v10488
      %v10617 = vtanh.pop %v10489
      %v10618 = vtanh.pop %v10490
      %v10619 = vtanh.pop %v10491
      %v10620 = vtanh.pop %v10492
      %v10621 = vtanh.pop %v10493
      %v10622 = vtanh.pop %v10494
      %v10623 = vtanh.pop %v10495
      %v10624 = vtanh.pop %v10496
      %v10625 = vtanh.pop %v10497
      %v10626 = vtanh.pop %v10498
      %v10627 = vtanh.pop %v10499
      %v10628 = vtanh.pop %v10500
      %v10629 = vtanh.pop %v10501
      %v10630 = vtanh.pop %v10502
      %v10631 = vtanh.pop %v10503
      %v10632 = vtanh.pop %v10504
      %v10633 = vtanh.pop %v10505
      %v10634 = vtanh.pop %v10506
      %v10635 = vtanh.pop %v10507
      %v10636 = vtanh.pop %v10508
      %v10637 = vtanh.pop %v10509
      %v10638 = vtanh.pop %v10510
      %v10639 = vtanh.pop %v10511
      %v10640 = vtanh.pop %v10512
      %v10641 = vtanh.pop %v10513
      %v10642 = vtanh.pop %v10514
      %v10643 = vtanh.pop %v10515
      %v10644 = vtanh.pop %v10516
      %v10645 = vtanh.pop %v10517
      %v10646 = vtanh.pop %v10518
      %v10647 = vtanh.pop %v10519
      %v10648 = vtanh.pop %v10520
      %v10649 = vtanh.pop %v10521
      %v10650 = vtanh.pop %v10522
      %v10651 = vtanh.pop %v10523
      %v10652 = vtanh.pop %v10524
      %v10653 = vtanh.pop %v10525
      %v10654 = vtanh.pop %v10526
      %v10655 = vtanh.pop %v10527
      %v10656 = vtanh.pop %v10528
      %v10657 = vtanh.pop %v10529
      %v10658 = vtanh.pop %v10530
      %v10659 = vtanh.pop %v10531
      %v10660 = vtanh.pop %v10532
      %v10661 = vtanh.pop %v10533
      %v10662 = vtanh.pop %v10534
      %v10663 = vtanh.pop %v10535
      %v10664 = vtanh.pop %v10536
      %v10665 = vtanh.pop %v10537
      %v10666 = vtanh.pop %v10538
      %v10667 = vtanh.pop %v10539
      %v10668 = vtanh.pop %v10540
      %v10669 = vtanh.pop %v10541
      %v10670 = vtanh.pop %v10542
      %v10671 = vtanh.pop %v10543
      %v10672 = vtanh.pop %v10544
      %v10673 = vtanh.pop %v10545
      %v10674 = vtanh.pop %v10546
      %v10675 = vtanh.pop %v10547
      %v10676 = vtanh.pop %v10548
      %v10677 = vtanh.pop %v10549
      %v10678 = vtanh.pop %v10550
      %v10679 = vtanh.pop %v10551
      %v10680 = vtanh.pop %v10552
      %v10681 = vtanh.pop %v10553
      %v10682 = vtanh.pop %v10554
      %v10683 = vtanh.pop %v10555
      %v10684 = vtanh.pop %v10556
      %v10685 = vtanh.pop %v10557
      %v10686 = vtanh.pop %v10558
      %v10687 = vtanh.pop %v10559
      %v10688 = vtanh.pop %v10560
      %v10689 = vtanh.pop %v10561
      %v10690 = vtanh.pop %v10562
      %v10691 = vtanh.pop %v10563
      %v10692 = vtanh.pop %v10564
      %v10693 = vtanh.pop %v10565
      %v10694 = vtanh.pop %v10566
      %v10695 = vtanh.pop %v10567
      %v10696 = vtanh.pop %v10568
      %v10697 = vtanh.pop %v10569
      %v10698 = vtanh.pop %v10570
      %v10699 = vtanh.pop %v10571
      %v10700 = vtanh.pop %v10572
      %v10701 = vtanh.pop %v10573
      %v10702 = vtanh.pop %v10574
      %v10703 = vtanh.pop %v10575
      %v10704 = vtanh.pop %v10576
      %v10705 = vtanh.pop %v10577
      %v10706 = vtanh.pop %v10578
      %v10707 = vtanh.pop %v10579
      %v10708 = vtanh.pop %v10580
      %v10709 = vtanh.pop %v10581
      %v10710 = vtanh.pop %v10582
      %v10711 = vtanh.pop %v10583
      %v10712 = vtanh.pop %v10584
      %v10713 = vtanh.pop %v10585
      %v10714 = vtanh.pop %v10586
      %v10715 = vtanh.pop %v10587
      %v10716 = vtanh.pop %v10588
      %v10717 = vtanh.pop %v10589
      %v10718 = vtanh.pop %v10590
      %v10719 = vtanh.pop %v10591
      %v10720 = vtanh.pop %v10592
      %v10721 = vtanh.pop %v10593
      %v10722 = vtanh.pop %v10594
      %v10723 = vtanh.pop %v10595
      %v10724 = vadd.f32 %v10596, 1.0
      %v10725 = vadd.f32 %v10597, 1.0
      %v10726 = vadd.f32 %v10598, 1.0
      %v10727 = vadd.f32 %v10599, 1.0
      %v10728 = vadd.f32 %v10600, 1.0
      %v10729 = vadd.f32 %v10601, 1.0
      %v10730 = vadd.f32 %v10602, 1.0
      %v10731 = vadd.f32 %v10603, 1.0
      %v10732 = vadd.f32 %v10604, 1.0
      %v10733 = vadd.f32 %v10605, 1.0
      %v10734 = vadd.f32 %v10606, 1.0
      %v10735 = vadd.f32 %v10607, 1.0
      %v10736 = vadd.f32 %v10608, 1.0
      %v10737 = vadd.f32 %v10609, 1.0
      %v10738 = vadd.f32 %v10610, 1.0
      %v10739 = vadd.f32 %v10611, 1.0
      %v10740 = vadd.f32 %v10612, 1.0
      %v10741 = vadd.f32 %v10613, 1.0
      %v10742 = vadd.f32 %v10614, 1.0
      %v10743 = vadd.f32 %v10615, 1.0
      %v10744 = vadd.f32 %v10616, 1.0
      %v10745 = vadd.f32 %v10617, 1.0
      %v10746 = vadd.f32 %v10618, 1.0
      %v10747 = vadd.f32 %v10619, 1.0
      %v10748 = vadd.f32 %v10620, 1.0
      %v10749 = vadd.f32 %v10621, 1.0
      %v10750 = vadd.f32 %v10622, 1.0
      %v10751 = vadd.f32 %v10623, 1.0
      %v10752 = vadd.f32 %v10624, 1.0
      %v10753 = vadd.f32 %v10625, 1.0
      %v10754 = vadd.f32 %v10626, 1.0
      %v10755 = vadd.f32 %v10627, 1.0
      %v10756 = vadd.f32 %v10628, 1.0
      %v10757 = vadd.f32 %v10629, 1.0
      %v10758 = vadd.f32 %v10630, 1.0
      %v10759 = vadd.f32 %v10631, 1.0
      %v10760 = vadd.f32 %v10632, 1.0
      %v10761 = vadd.f32 %v10633, 1.0
      %v10762 = vadd.f32 %v10634, 1.0
      %v10763 = vadd.f32 %v10635, 1.0
      %v10764 = vadd.f32 %v10636, 1.0
      %v10765 = vadd.f32 %v10637, 1.0
      %v10766 = vadd.f32 %v10638, 1.0
      %v10767 = vadd.f32 %v10639, 1.0
      %v10768 = vadd.f32 %v10640, 1.0
      %v10769 = vadd.f32 %v10641, 1.0
      %v10770 = vadd.f32 %v10642, 1.0
      %v10771 = vadd.f32 %v10643, 1.0
      %v10772 = vadd.f32 %v10644, 1.0
      %v10773 = vadd.f32 %v10645, 1.0
      %v10774 = vadd.f32 %v10646, 1.0
      %v10775 = vadd.f32 %v10647, 1.0
      %v10776 = vadd.f32 %v10648, 1.0
      %v10777 = vadd.f32 %v10649, 1.0
      %v10778 = vadd.f32 %v10650, 1.0
      %v10779 = vadd.f32 %v10651, 1.0
      %v10780 = vadd.f32 %v10652, 1.0
      %v10781 = vadd.f32 %v10653, 1.0
      %v10782 = vadd.f32 %v10654, 1.0
      %v10783 = vadd.f32 %v10655, 1.0
      %v10784 = vadd.f32 %v10656, 1.0
      %v10785 = vadd.f32 %v10657, 1.0
      %v10786 = vadd.f32 %v10658, 1.0
      %v10787 = vadd.f32 %v10659, 1.0
      %v10788 = vadd.f32 %v10660, 1.0
      %v10789 = vadd.f32 %v10661, 1.0
      %v10790 = vadd.f32 %v10662, 1.0
      %v10791 = vadd.f32 %v10663, 1.0
      %v10792 = vadd.f32 %v10664, 1.0
      %v10793 = vadd.f32 %v10665, 1.0
      %v10794 = vadd.f32 %v10666, 1.0
      %v10795 = vadd.f32 %v10667, 1.0
      %v10796 = vadd.f32 %v10668, 1.0
      %v10797 = vadd.f32 %v10669, 1.0
      %v10798 = vadd.f32 %v10670, 1.0
      %v10799 = vadd.f32 %v10671, 1.0
      %v10800 = vadd.f32 %v10672, 1.0
      %v10801 = vadd.f32 %v10673, 1.0
      %v10802 = vadd.f32 %v10674, 1.0
      %v10803 = vadd.f32 %v10675, 1.0
      %v10804 = vadd.f32 %v10676, 1.0
      %v10805 = vadd.f32 %v10677, 1.0
      %v10806 = vadd.f32 %v10678, 1.0
      %v10807 = vadd.f32 %v10679, 1.0
      %v10808 = vadd.f32 %v10680, 1.0
      %v10809 = vadd.f32 %v10681, 1.0
      %v10810 = vadd.f32 %v10682, 1.0
      %v10811 = vadd.f32 %v10683, 1.0
      %v10812 = vadd.f32 %v10684, 1.0
      %v10813 = vadd.f32 %v10685, 1.0
      %v10814 = vadd.f32 %v10686, 1.0
      %v10815 = vadd.f32 %v10687, 1.0
      %v10816 = vadd.f32 %v10688, 1.0
      %v10817 = vadd.f32 %v10689, 1.0
      %v10818 = vadd.f32 %v10690, 1.0
      %v10819 = vadd.f32 %v10691, 1.0
      %v10820 = vadd.f32 %v10692, 1.0
      %v10821 = vadd.f32 %v10693, 1.0
      %v10822 = vadd.f32 %v10694, 1.0
      %v10823 = vadd.f32 %v10695, 1.0
      %v10824 = vadd.f32 %v10696, 1.0
      %v10825 = vadd.f32 %v10697, 1.0
      %v10826 = vadd.f32 %v10698, 1.0
      %v10827 = vadd.f32 %v10699, 1.0
      %v10828 = vadd.f32 %v10700, 1.0
      %v10829 = vadd.f32 %v10701, 1.0
      %v10830 = vadd.f32 %v10702, 1.0
      %v10831 = vadd.f32 %v10703, 1.0
      %v10832 = vadd.f32 %v10704, 1.0
      %v10833 = vadd.f32 %v10705, 1.0
      %v10834 = vadd.f32 %v10706, 1.0
      %v10835 = vadd.f32 %v10707, 1.0
      %v10836 = vadd.f32 %v10708, 1.0
      %v10837 = vadd.f32 %v10709, 1.0
      %v10838 = vadd.f32 %v10710, 1.0
      %v10839 = vadd.f32 %v10711, 1.0
      %v10840 = vadd.f32 %v10712, 1.0
      %v10841 = vadd.f32 %v10713, 1.0
      %v10842 = vadd.f32 %v10714, 1.0
      %v10843 = vadd.f32 %v10715, 1.0
      %v10844 = vadd.f32 %v10716, 1.0
      %v10845 = vadd.f32 %v10717, 1.0
      %v10846 = vadd.f32 %v10718, 1.0
      %v10847 = vadd.f32 %v10719, 1.0
      %v10848 = vadd.f32 %v10720, 1.0
      %v10849 = vadd.f32 %v10721, 1.0
      %v10850 = vadd.f32 %v10722, 1.0
      %v10851 = vadd.f32 %v10723, 1.0
      %v10852 = vmul.f32 %v10724, 0.5
      %v10853 = vmul.f32 %v10725, 0.5
      %v10854 = vmul.f32 %v10726, 0.5
      %v10855 = vmul.f32 %v10727, 0.5
      %v10856 = vmul.f32 %v10728, 0.5
      %v10857 = vmul.f32 %v10729, 0.5
      %v10858 = vmul.f32 %v10730, 0.5
      %v10859 = vmul.f32 %v10731, 0.5
      %v10860 = vmul.f32 %v10732, 0.5
      %v10861 = vmul.f32 %v10733, 0.5
      %v10862 = vmul.f32 %v10734, 0.5
      %v10863 = vmul.f32 %v10735, 0.5
      %v10864 = vmul.f32 %v10736, 0.5
      %v10865 = vmul.f32 %v10737, 0.5
      %v10866 = vmul.f32 %v10738, 0.5
      %v10867 = vmul.f32 %v10739, 0.5
      %v10868 = vmul.f32 %v10740, 0.5
      %v10869 = vmul.f32 %v10741, 0.5
      %v10870 = vmul.f32 %v10742, 0.5
      %v10871 = vmul.f32 %v10743, 0.5
      %v10872 = vmul.f32 %v10744, 0.5
      %v10873 = vmul.f32 %v10745, 0.5
      %v10874 = vmul.f32 %v10746, 0.5
      %v10875 = vmul.f32 %v10747, 0.5
      %v10876 = vmul.f32 %v10748, 0.5
      %v10877 = vmul.f32 %v10749, 0.5
      %v10878 = vmul.f32 %v10750, 0.5
      %v10879 = vmul.f32 %v10751, 0.5
      %v10880 = vmul.f32 %v10752, 0.5
      %v10881 = vmul.f32 %v10753, 0.5
      %v10882 = vmul.f32 %v10754, 0.5
      %v10883 = vmul.f32 %v10755, 0.5
      %v10884 = vmul.f32 %v10756, 0.5
      %v10885 = vmul.f32 %v10757, 0.5
      %v10886 = vmul.f32 %v10758, 0.5
      %v10887 = vmul.f32 %v10759, 0.5
      %v10888 = vmul.f32 %v10760, 0.5
      %v10889 = vmul.f32 %v10761, 0.5
      %v10890 = vmul.f32 %v10762, 0.5
      %v10891 = vmul.f32 %v10763, 0.5
      %v10892 = vmul.f32 %v10764, 0.5
      %v10893 = vmul.f32 %v10765, 0.5
      %v10894 = vmul.f32 %v10766, 0.5
      %v10895 = vmul.f32 %v10767, 0.5
      %v10896 = vmul.f32 %v10768, 0.5
      %v10897 = vmul.f32 %v10769, 0.5
      %v10898 = vmul.f32 %v10770, 0.5
      %v10899 = vmul.f32 %v10771, 0.5
      %v10900 = vmul.f32 %v10772, 0.5
      %v10901 = vmul.f32 %v10773, 0.5
      %v10902 = vmul.f32 %v10774, 0.5
      %v10903 = vmul.f32 %v10775, 0.5
      %v10904 = vmul.f32 %v10776, 0.5
      %v10905 = vmul.f32 %v10777, 0.5
      %v10906 = vmul.f32 %v10778, 0.5
      %v10907 = vmul.f32 %v10779, 0.5
      %v10908 = vmul.f32 %v10780, 0.5
      %v10909 = vmul.f32 %v10781, 0.5
      %v10910 = vmul.f32 %v10782, 0.5
      %v10911 = vmul.f32 %v10783, 0.5
      %v10912 = vmul.f32 %v10784, 0.5
      %v10913 = vmul.f32 %v10785, 0.5
      %v10914 = vmul.f32 %v10786, 0.5
      %v10915 = vmul.f32 %v10787, 0.5
      %v10916 = vmul.f32 %v10788, 0.5
      %v10917 = vmul.f32 %v10789, 0.5
      %v10918 = vmul.f32 %v10790, 0.5
      %v10919 = vmul.f32 %v10791, 0.5
      %v10920 = vmul.f32 %v10792, 0.5
      %v10921 = vmul.f32 %v10793, 0.5
      %v10922 = vmul.f32 %v10794, 0.5
      %v10923 = vmul.f32 %v10795, 0.5
      %v10924 = vmul.f32 %v10796, 0.5
      %v10925 = vmul.f32 %v10797, 0.5
      %v10926 = vmul.f32 %v10798, 0.5
      %v10927 = vmul.f32 %v10799, 0.5
      %v10928 = vmul.f32 %v10800, 0.5
      %v10929 = vmul.f32 %v10801, 0.5
      %v10930 = vmul.f32 %v10802, 0.5
      %v10931 = vmul.f32 %v10803, 0.5
      %v10932 = vmul.f32 %v10804, 0.5
      %v10933 = vmul.f32 %v10805, 0.5
      %v10934 = vmul.f32 %v10806, 0.5
      %v10935 = vmul.f32 %v10807, 0.5
      %v10936 = vmul.f32 %v10808, 0.5
      %v10937 = vmul.f32 %v10809, 0.5
      %v10938 = vmul.f32 %v10810, 0.5
      %v10939 = vmul.f32 %v10811, 0.5
      %v10940 = vmul.f32 %v10812, 0.5
      %v10941 = vmul.f32 %v10813, 0.5
      %v10942 = vmul.f32 %v10814, 0.5
      %v10943 = vmul.f32 %v10815, 0.5
      %v10944 = vmul.f32 %v10816, 0.5
      %v10945 = vmul.f32 %v10817, 0.5
      %v10946 = vmul.f32 %v10818, 0.5
      %v10947 = vmul.f32 %v10819, 0.5
      %v10948 = vmul.f32 %v10820, 0.5
      %v10949 = vmul.f32 %v10821, 0.5
      %v10950 = vmul.f32 %v10822, 0.5
      %v10951 = vmul.f32 %v10823, 0.5
      %v10952 = vmul.f32 %v10824, 0.5
      %v10953 = vmul.f32 %v10825, 0.5
      %v10954 = vmul.f32 %v10826, 0.5
      %v10955 = vmul.f32 %v10827, 0.5
      %v10956 = vmul.f32 %v10828, 0.5
      %v10957 = vmul.f32 %v10829, 0.5
      %v10958 = vmul.f32 %v10830, 0.5
      %v10959 = vmul.f32 %v10831, 0.5
      %v10960 = vmul.f32 %v10832, 0.5
      %v10961 = vmul.f32 %v10833, 0.5
      %v10962 = vmul.f32 %v10834, 0.5
      %v10963 = vmul.f32 %v10835, 0.5
      %v10964 = vmul.f32 %v10836, 0.5
      %v10965 = vmul.f32 %v10837, 0.5
      %v10966 = vmul.f32 %v10838, 0.5
      %v10967 = vmul.f32 %v10839, 0.5
      %v10968 = vmul.f32 %v10840, 0.5
      %v10969 = vmul.f32 %v10841, 0.5
      %v10970 = vmul.f32 %v10842, 0.5
      %v10971 = vmul.f32 %v10843, 0.5
      %v10972 = vmul.f32 %v10844, 0.5
      %v10973 = vmul.f32 %v10845, 0.5
      %v10974 = vmul.f32 %v10846, 0.5
      %v10975 = vmul.f32 %v10847, 0.5
      %v10976 = vmul.f32 %v10848, 0.5
      %v10977 = vmul.f32 %v10849, 0.5
      %v10978 = vmul.f32 %v10850, 0.5
      %v10979 = vmul.f32 %v10851, 0.5
      %v10980 = vadd.f32 %v10852, %v8146
      %v10981 = vadd.f32 %v10853, %v8147
      %v10982 = vadd.f32 %v10854, %v8148
      %v10983 = vadd.f32 %v10855, %v8149
      %v10984 = vadd.f32 %v10856, %v8150
      %v10985 = vadd.f32 %v10857, %v8151
      %v10986 = vadd.f32 %v10858, %v8152
      %v10987 = vadd.f32 %v10859, %v8153
      %v10988 = vadd.f32 %v10860, %v8154
      %v10989 = vadd.f32 %v10861, %v8155
      %v10990 = vadd.f32 %v10862, %v8156
      %v10991 = vadd.f32 %v10863, %v8157
      %v10992 = vadd.f32 %v10864, %v8158
      %v10993 = vadd.f32 %v10865, %v8159
      %v10994 = vadd.f32 %v10866, %v8160
      %v10995 = vadd.f32 %v10867, %v8161
      %v10996 = vadd.f32 %v10868, %v8162
      %v10997 = vadd.f32 %v10869, %v8163
      %v10998 = vadd.f32 %v10870, %v8164
      %v10999 = vadd.f32 %v10871, %v8165
      %v11000 = vadd.f32 %v10872, %v8166
      %v11001 = vadd.f32 %v10873, %v8167
      %v11002 = vadd.f32 %v10874, %v8168
      %v11003 = vadd.f32 %v10875, %v8169
      %v11004 = vadd.f32 %v10876, %v8170
      %v11005 = vadd.f32 %v10877, %v8171
      %v11006 = vadd.f32 %v10878, %v8172
      %v11007 = vadd.f32 %v10879, %v8173
      %v11008 = vadd.f32 %v10880, %v8174
      %v11009 = vadd.f32 %v10881, %v8175
      %v11010 = vadd.f32 %v10882, %v8176
      %v11011 = vadd.f32 %v10883, %v8177
      %v11012 = vadd.f32 %v10884, %v8178
      %v11013 = vadd.f32 %v10885, %v8179
      %v11014 = vadd.f32 %v10886, %v8180
      %v11015 = vadd.f32 %v10887, %v8181
      %v11016 = vadd.f32 %v10888, %v8182
      %v11017 = vadd.f32 %v10889, %v8183
      %v11018 = vadd.f32 %v10890, %v8184
      %v11019 = vadd.f32 %v10891, %v8185
      %v11020 = vadd.f32 %v10892, %v8186
      %v11021 = vadd.f32 %v10893, %v8187
      %v11022 = vadd.f32 %v10894, %v8188
      %v11023 = vadd.f32 %v10895, %v8189
      %v11024 = vadd.f32 %v10896, %v8190
      %v11025 = vadd.f32 %v10897, %v8191
      %v11026 = vadd.f32 %v10898, %v8192
      %v11027 = vadd.f32 %v10899, %v8193
      %v11028 = vadd.f32 %v10900, %v8194
      %v11029 = vadd.f32 %v10901, %v8195
      %v11030 = vadd.f32 %v10902, %v8196
      %v11031 = vadd.f32 %v10903, %v8197
      %v11032 = vadd.f32 %v10904, %v8198
      %v11033 = vadd.f32 %v10905, %v8199
      %v11034 = vadd.f32 %v10906, %v8200
      %v11035 = vadd.f32 %v10907, %v8201
      %v11036 = vadd.f32 %v10908, %v8202
      %v11037 = vadd.f32 %v10909, %v8203
      %v11038 = vadd.f32 %v10910, %v8204
      %v11039 = vadd.f32 %v10911, %v8205
      %v11040 = vadd.f32 %v10912, %v8206
      %v11041 = vadd.f32 %v10913, %v8207
      %v11042 = vadd.f32 %v10914, %v8208
      %v11043 = vadd.f32 %v10915, %v8209
      %v11044 = vadd.f32 %v10916, %v8210
      %v11045 = vadd.f32 %v10917, %v8211
      %v11046 = vadd.f32 %v10918, %v8212
      %v11047 = vadd.f32 %v10919, %v8213
      %v11048 = vadd.f32 %v10920, %v8214
      %v11049 = vadd.f32 %v10921, %v8215
      %v11050 = vadd.f32 %v10922, %v8216
      %v11051 = vadd.f32 %v10923, %v8217
      %v11052 = vadd.f32 %v10924, %v8218
      %v11053 = vadd.f32 %v10925, %v8219
      %v11054 = vadd.f32 %v10926, %v8220
      %v11055 = vadd.f32 %v10927, %v8221
      %v11056 = vadd.f32 %v10928, %v8222
      %v11057 = vadd.f32 %v10929, %v8223
      %v11058 = vadd.f32 %v10930, %v8224
      %v11059 = vadd.f32 %v10931, %v8225
      %v11060 = vadd.f32 %v10932, %v8226
      %v11061 = vadd.f32 %v10933, %v8227
      %v11062 = vadd.f32 %v10934, %v8228
      %v11063 = vadd.f32 %v10935, %v8229
      %v11064 = vadd.f32 %v10936, %v8230
      %v11065 = vadd.f32 %v10937, %v8231
      %v11066 = vadd.f32 %v10938, %v8232
      %v11067 = vadd.f32 %v10939, %v8233
      %v11068 = vadd.f32 %v10940, %v8234
      %v11069 = vadd.f32 %v10941, %v8235
      %v11070 = vadd.f32 %v10942, %v8236
      %v11071 = vadd.f32 %v10943, %v8237
      %v11072 = vadd.f32 %v10944, %v8238
      %v11073 = vadd.f32 %v10945, %v8239
      %v11074 = vadd.f32 %v10946, %v8240
      %v11075 = vadd.f32 %v10947, %v8241
      %v11076 = vadd.f32 %v10948, %v8242
      %v11077 = vadd.f32 %v10949, %v8243
      %v11078 = vadd.f32 %v10950, %v8244
      %v11079 = vadd.f32 %v10951, %v8245
      %v11080 = vadd.f32 %v10952, %v8246
      %v11081 = vadd.f32 %v10953, %v8247
      %v11082 = vadd.f32 %v10954, %v8248
      %v11083 = vadd.f32 %v10955, %v8249
      %v11084 = vadd.f32 %v10956, %v8250
      %v11085 = vadd.f32 %v10957, %v8251
      %v11086 = vadd.f32 %v10958, %v8252
      %v11087 = vadd.f32 %v10959, %v8253
      %v11088 = vadd.f32 %v10960, %v8254
      %v11089 = vadd.f32 %v10961, %v8255
      %v11090 = vadd.f32 %v10962, %v8256
      %v11091 = vadd.f32 %v10963, %v8257
      %v11092 = vadd.f32 %v10964, %v8258
      %v11093 = vadd.f32 %v10965, %v8259
      %v11094 = vadd.f32 %v10966, %v8260
      %v11095 = vadd.f32 %v10967, %v8261
      %v11096 = vadd.f32 %v10968, %v8262
      %v11097 = vadd.f32 %v10969, %v8263
      %v11098 = vadd.f32 %v10970, %v8264
      %v11099 = vadd.f32 %v10971, %v8265
      %v11100 = vadd.f32 %v10972, %v8266
      %v11101 = vadd.f32 %v10973, %v8267
      %v11102 = vadd.f32 %v10974, %v8268
      %v11103 = vadd.f32 %v10975, %v8269
      %v11104 = vadd.f32 %v10976, %v8270
      %v11105 = vadd.f32 %v10977, %v8271
      %v11106 = vadd.f32 %v10978, %v8272
      %v11107 = vadd.f32 %v10979, %v8273
      %v11108 = vld [vmem:[%s5] sm:$0x1]
      %v11110 = vlaneseq
      %v11111 = vshrl.u32 %v11110, 7
      %v11112 = vsub.s32 0, %v11111
      %v11113 = vrot.slane %v11108, %v11112
      %v11115 = vmul.f32 %v10980, %v11113
      %v11116 = vmul.f32 %v10981, %v11113
      %v11117 = vmul.f32 %v10982, %v11113
      %v11118 = vmul.f32 %v10983, %v11113
      %v11119 = vmul.f32 %v10984, %v11113
      %v11120 = vmul.f32 %v10985, %v11113
      %v11121 = vmul.f32 %v10986, %v11113
      %v11122 = vmul.f32 %v10987, %v11113
      %v11123 = vmul.f32 %v10988, %v11113
      %v11124 = vmul.f32 %v10989, %v11113
      %v11125 = vmul.f32 %v10990, %v11113
      %v11126 = vmul.f32 %v10991, %v11113
      %v11127 = vmul.f32 %v10992, %v11113
      %v11128 = vmul.f32 %v10993, %v11113
      %v11129 = vmul.f32 %v10994, %v11113
      %v11130 = vmul.f32 %v10995, %v11113
      %v11131 = vmul.f32 %v10996, %v11113
      %v11132 = vmul.f32 %v10997, %v11113
      %v11133 = vmul.f32 %v10998, %v11113
      %v11134 = vmul.f32 %v10999, %v11113
      %v11135 = vmul.f32 %v11000, %v11113
      %v11136 = vmul.f32 %v11001, %v11113
      %v11137 = vmul.f32 %v11002, %v11113
      %v11138 = vmul.f32 %v11003, %v11113
      %v11139 = vmul.f32 %v11004, %v11113
      %v11140 = vmul.f32 %v11005, %v11113
      %v11141 = vmul.f32 %v11006, %v11113
      %v11142 = vmul.f32 %v11007, %v11113
      %v11143 = vmul.f32 %v11008, %v11113
      %v11144 = vmul.f32 %v11009, %v11113
      %v11145 = vmul.f32 %v11010, %v11113
      %v11146 = vmul.f32 %v11011, %v11113
      %v11147 = vmul.f32 %v11012, %v11113
      %v11148 = vmul.f32 %v11013, %v11113
      %v11149 = vmul.f32 %v11014, %v11113
      %v11150 = vmul.f32 %v11015, %v11113
      %v11151 = vmul.f32 %v11016, %v11113
      %v11152 = vmul.f32 %v11017, %v11113
      %v11153 = vmul.f32 %v11018, %v11113
      %v11154 = vmul.f32 %v11019, %v11113
      %v11155 = vmul.f32 %v11020, %v11113
      %v11156 = vmul.f32 %v11021, %v11113
      %v11157 = vmul.f32 %v11022, %v11113
      %v11158 = vmul.f32 %v11023, %v11113
      %v11159 = vmul.f32 %v11024, %v11113
      %v11160 = vmul.f32 %v11025, %v11113
      %v11161 = vmul.f32 %v11026, %v11113
      %v11162 = vmul.f32 %v11027, %v11113
      %v11163 = vmul.f32 %v11028, %v11113
      %v11164 = vmul.f32 %v11029, %v11113
      %v11165 = vmul.f32 %v11030, %v11113
      %v11166 = vmul.f32 %v11031, %v11113
      %v11167 = vmul.f32 %v11032, %v11113
      %v11168 = vmul.f32 %v11033, %v11113
      %v11169 = vmul.f32 %v11034, %v11113
      %v11170 = vmul.f32 %v11035, %v11113
      %v11171 = vmul.f32 %v11036, %v11113
      %v11172 = vmul.f32 %v11037, %v11113
      %v11173 = vmul.f32 %v11038, %v11113
      %v11174 = vmul.f32 %v11039, %v11113
      %v11175 = vmul.f32 %v11040, %v11113
      %v11176 = vmul.f32 %v11041, %v11113
      %v11177 = vmul.f32 %v11042, %v11113
      %v11178 = vmul.f32 %v11043, %v11113
      %v11179 = vmul.f32 %v11044, %v11113
      %v11180 = vmul.f32 %v11045, %v11113
      %v11181 = vmul.f32 %v11046, %v11113
      %v11182 = vmul.f32 %v11047, %v11113
      %v11183 = vmul.f32 %v11048, %v11113
      %v11184 = vmul.f32 %v11049, %v11113
      %v11185 = vmul.f32 %v11050, %v11113
      %v11186 = vmul.f32 %v11051, %v11113
      %v11187 = vmul.f32 %v11052, %v11113
      %v11188 = vmul.f32 %v11053, %v11113
      %v11189 = vmul.f32 %v11054, %v11113
      %v11190 = vmul.f32 %v11055, %v11113
      %v11191 = vmul.f32 %v11056, %v11113
      %v11192 = vmul.f32 %v11057, %v11113
      %v11193 = vmul.f32 %v11058, %v11113
      %v11194 = vmul.f32 %v11059, %v11113
      %v11195 = vmul.f32 %v11060, %v11113
      %v11196 = vmul.f32 %v11061, %v11113
      %v11197 = vmul.f32 %v11062, %v11113
      %v11198 = vmul.f32 %v11063, %v11113
      %v11199 = vmul.f32 %v11064, %v11113
      %v11200 = vmul.f32 %v11065, %v11113
      %v11201 = vmul.f32 %v11066, %v11113
      %v11202 = vmul.f32 %v11067, %v11113
      %v11203 = vmul.f32 %v11068, %v11113
      %v11204 = vmul.f32 %v11069, %v11113
      %v11205 = vmul.f32 %v11070, %v11113
      %v11206 = vmul.f32 %v11071, %v11113
      %v11207 = vmul.f32 %v11072, %v11113
      %v11208 = vmul.f32 %v11073, %v11113
      %v11209 = vmul.f32 %v11074, %v11113
      %v11210 = vmul.f32 %v11075, %v11113
      %v11211 = vmul.f32 %v11076, %v11113
      %v11212 = vmul.f32 %v11077, %v11113
      %v11213 = vmul.f32 %v11078, %v11113
      %v11214 = vmul.f32 %v11079, %v11113
      %v11215 = vmul.f32 %v11080, %v11113
      %v11216 = vmul.f32 %v11081, %v11113
      %v11217 = vmul.f32 %v11082, %v11113
      %v11218 = vmul.f32 %v11083, %v11113
      %v11219 = vmul.f32 %v11084, %v11113
      %v11220 = vmul.f32 %v11085, %v11113
      %v11221 = vmul.f32 %v11086, %v11113
      %v11222 = vmul.f32 %v11087, %v11113
      %v11223 = vmul.f32 %v11088, %v11113
      %v11224 = vmul.f32 %v11089, %v11113
      %v11225 = vmul.f32 %v11090, %v11113
      %v11226 = vmul.f32 %v11091, %v11113
      %v11227 = vmul.f32 %v11092, %v11113
      %v11228 = vmul.f32 %v11093, %v11113
      %v11229 = vmul.f32 %v11094, %v11113
      %v11230 = vmul.f32 %v11095, %v11113
      %v11231 = vmul.f32 %v11096, %v11113
      %v11232 = vmul.f32 %v11097, %v11113
      %v11233 = vmul.f32 %v11098, %v11113
      %v11234 = vmul.f32 %v11099, %v11113
      %v11235 = vmul.f32 %v11100, %v11113
      %v11236 = vmul.f32 %v11101, %v11113
      %v11237 = vmul.f32 %v11102, %v11113
      %v11238 = vmul.f32 %v11103, %v11113
      %v11239 = vmul.f32 %v11104, %v11113
      %v11240 = vmul.f32 %v11105, %v11113
      %v11241 = vmul.f32 %v11106, %v11113
      %v11242 = vmul.f32 %v11107, %v11113
      %v11243 = vsel %vm2705, %v11115, 0.0
      %11244 = vadd.xlane.f32.xlu0 %v11243
      %v11245 = vpop.xlane.xlu0 %11244
      %v11246 = vsel %vm2705, %v11116, 0.0
      %11247 = vadd.xlane.f32.xlu0 %v11246
      %v11248 = vpop.xlane.xlu0 %11247
      %v11249 = vsel %vm2705, %v11117, 0.0
      %11250 = vadd.xlane.f32.xlu0 %v11249
      %v11251 = vpop.xlane.xlu0 %11250
      %v11252 = vsel %vm2705, %v11118, 0.0
      %11253 = vadd.xlane.f32.xlu0 %v11252
      %v11254 = vpop.xlane.xlu0 %11253
      %v11255 = vsel %vm2705, %v11119, 0.0
      %11256 = vadd.xlane.f32.xlu0 %v11255
      %v11257 = vpop.xlane.xlu0 %11256
      %v11258 = vsel %vm2705, %v11120, 0.0
      %11259 = vadd.xlane.f32.xlu0 %v11258
      %v11260 = vpop.xlane.xlu0 %11259
      %v11261 = vsel %vm2705, %v11121, 0.0
      %11262 = vadd.xlane.f32.xlu0 %v11261
      %v11263 = vpop.xlane.xlu0 %11262
      %v11264 = vsel %vm2705, %v11122, 0.0
      %11265 = vadd.xlane.f32.xlu0 %v11264
      %v11266 = vpop.xlane.xlu0 %11265
      %v11267 = vsel %vm2705, %v11123, 0.0
      %11268 = vadd.xlane.f32.xlu0 %v11267
      %v11269 = vpop.xlane.xlu0 %11268
      %v11270 = vsel %vm2705, %v11124, 0.0
      %11271 = vadd.xlane.f32.xlu0 %v11270
      %v11272 = vpop.xlane.xlu0 %11271
      %v11273 = vsel %vm2705, %v11125, 0.0
      %11274 = vadd.xlane.f32.xlu0 %v11273
      %v11275 = vpop.xlane.xlu0 %11274
      %v11276 = vsel %vm2705, %v11126, 0.0
      %11277 = vadd.xlane.f32.xlu0 %v11276
      %v11278 = vpop.xlane.xlu0 %11277
      %v11279 = vsel %vm2705, %v11127, 0.0
      %11280 = vadd.xlane.f32.xlu0 %v11279
      %v11281 = vpop.xlane.xlu0 %11280
      %v11282 = vsel %vm2705, %v11128, 0.0
      %11283 = vadd.xlane.f32.xlu0 %v11282
      %v11284 = vpop.xlane.xlu0 %11283
      %v11285 = vsel %vm2705, %v11129, 0.0
      %11286 = vadd.xlane.f32.xlu0 %v11285
      %v11287 = vpop.xlane.xlu0 %11286
      %v11288 = vsel %vm2705, %v11130, 0.0
      %11289 = vadd.xlane.f32.xlu0 %v11288
      %v11290 = vpop.xlane.xlu0 %11289
      %v11291 = vsel %vm2705, %v11131, 0.0
      %11292 = vadd.xlane.f32.xlu0 %v11291
      %v11293 = vpop.xlane.xlu0 %11292
      %v11294 = vsel %vm2705, %v11132, 0.0
      %11295 = vadd.xlane.f32.xlu0 %v11294
      %v11296 = vpop.xlane.xlu0 %11295
      %v11297 = vsel %vm2705, %v11133, 0.0
      %11298 = vadd.xlane.f32.xlu0 %v11297
      %v11299 = vpop.xlane.xlu0 %11298
      %v11300 = vsel %vm2705, %v11134, 0.0
      %11301 = vadd.xlane.f32.xlu0 %v11300
      %v11302 = vpop.xlane.xlu0 %11301
      %v11303 = vsel %vm2705, %v11135, 0.0
      %11304 = vadd.xlane.f32.xlu0 %v11303
      %v11305 = vpop.xlane.xlu0 %11304
      %v11306 = vsel %vm2705, %v11136, 0.0
      %11307 = vadd.xlane.f32.xlu0 %v11306
      %v11308 = vpop.xlane.xlu0 %11307
      %v11309 = vsel %vm2705, %v11137, 0.0
      %11310 = vadd.xlane.f32.xlu0 %v11309
      %v11311 = vpop.xlane.xlu0 %11310
      %v11312 = vsel %vm2705, %v11138, 0.0
      %11313 = vadd.xlane.f32.xlu0 %v11312
      %v11314 = vpop.xlane.xlu0 %11313
      %v11315 = vsel %vm2705, %v11139, 0.0
      %11316 = vadd.xlane.f32.xlu0 %v11315
      %v11317 = vpop.xlane.xlu0 %11316
      %v11318 = vsel %vm2705, %v11140, 0.0
      %11319 = vadd.xlane.f32.xlu0 %v11318
      %v11320 = vpop.xlane.xlu0 %11319
      %v11321 = vsel %vm2705, %v11141, 0.0
      %11322 = vadd.xlane.f32.xlu0 %v11321
      %v11323 = vpop.xlane.xlu0 %11322
      %v11324 = vsel %vm2705, %v11142, 0.0
      %11325 = vadd.xlane.f32.xlu0 %v11324
      %v11326 = vpop.xlane.xlu0 %11325
      %v11327 = vsel %vm2705, %v11143, 0.0
      %11328 = vadd.xlane.f32.xlu0 %v11327
      %v11329 = vpop.xlane.xlu0 %11328
      %v11330 = vsel %vm2705, %v11144, 0.0
      %11331 = vadd.xlane.f32.xlu0 %v11330
      %v11332 = vpop.xlane.xlu0 %11331
      %v11333 = vsel %vm2705, %v11145, 0.0
      %11334 = vadd.xlane.f32.xlu0 %v11333
      %v11335 = vpop.xlane.xlu0 %11334
      %v11336 = vsel %vm2705, %v11146, 0.0
      %11337 = vadd.xlane.f32.xlu0 %v11336
      %v11338 = vpop.xlane.xlu0 %11337
      %v11339 = vsel %vm2705, %v11147, 0.0
      %11340 = vadd.xlane.f32.xlu0 %v11339
      %v11341 = vpop.xlane.xlu0 %11340
      %v11342 = vsel %vm2705, %v11148, 0.0
      %11343 = vadd.xlane.f32.xlu0 %v11342
      %v11344 = vpop.xlane.xlu0 %11343
      %v11345 = vsel %vm2705, %v11149, 0.0
      %11346 = vadd.xlane.f32.xlu0 %v11345
      %v11347 = vpop.xlane.xlu0 %11346
      %v11348 = vsel %vm2705, %v11150, 0.0
      %11349 = vadd.xlane.f32.xlu0 %v11348
      %v11350 = vpop.xlane.xlu0 %11349
      %v11351 = vsel %vm2705, %v11151, 0.0
      %11352 = vadd.xlane.f32.xlu0 %v11351
      %v11353 = vpop.xlane.xlu0 %11352
      %v11354 = vsel %vm2705, %v11152, 0.0
      %11355 = vadd.xlane.f32.xlu0 %v11354
      %v11356 = vpop.xlane.xlu0 %11355
      %v11357 = vsel %vm2705, %v11153, 0.0
      %11358 = vadd.xlane.f32.xlu0 %v11357
      %v11359 = vpop.xlane.xlu0 %11358
      %v11360 = vsel %vm2705, %v11154, 0.0
      %11361 = vadd.xlane.f32.xlu0 %v11360
      %v11362 = vpop.xlane.xlu0 %11361
      %v11363 = vsel %vm2705, %v11155, 0.0
      %11364 = vadd.xlane.f32.xlu0 %v11363
      %v11365 = vpop.xlane.xlu0 %11364
      %v11366 = vsel %vm2705, %v11156, 0.0
      %11367 = vadd.xlane.f32.xlu0 %v11366
      %v11368 = vpop.xlane.xlu0 %11367
      %v11369 = vsel %vm2705, %v11157, 0.0
      %11370 = vadd.xlane.f32.xlu0 %v11369
      %v11371 = vpop.xlane.xlu0 %11370
      %v11372 = vsel %vm2705, %v11158, 0.0
      %11373 = vadd.xlane.f32.xlu0 %v11372
      %v11374 = vpop.xlane.xlu0 %11373
      %v11375 = vsel %vm2705, %v11159, 0.0
      %11376 = vadd.xlane.f32.xlu0 %v11375
      %v11377 = vpop.xlane.xlu0 %11376
      %v11378 = vsel %vm2705, %v11160, 0.0
      %11379 = vadd.xlane.f32.xlu0 %v11378
      %v11380 = vpop.xlane.xlu0 %11379
      %v11381 = vsel %vm2705, %v11161, 0.0
      %11382 = vadd.xlane.f32.xlu0 %v11381
      %v11383 = vpop.xlane.xlu0 %11382
      %v11384 = vsel %vm2705, %v11162, 0.0
      %11385 = vadd.xlane.f32.xlu0 %v11384
      %v11386 = vpop.xlane.xlu0 %11385
      %v11387 = vsel %vm2705, %v11163, 0.0
      %11388 = vadd.xlane.f32.xlu0 %v11387
      %v11389 = vpop.xlane.xlu0 %11388
      %v11390 = vsel %vm2705, %v11164, 0.0
      %11391 = vadd.xlane.f32.xlu0 %v11390
      %v11392 = vpop.xlane.xlu0 %11391
      %v11393 = vsel %vm2705, %v11165, 0.0
      %11394 = vadd.xlane.f32.xlu0 %v11393
      %v11395 = vpop.xlane.xlu0 %11394
      %v11396 = vsel %vm2705, %v11166, 0.0
      %11397 = vadd.xlane.f32.xlu0 %v11396
      %v11398 = vpop.xlane.xlu0 %11397
      %v11399 = vsel %vm2705, %v11167, 0.0
      %11400 = vadd.xlane.f32.xlu0 %v11399
      %v11401 = vpop.xlane.xlu0 %11400
      %v11402 = vsel %vm2705, %v11168, 0.0
      %11403 = vadd.xlane.f32.xlu0 %v11402
      %v11404 = vpop.xlane.xlu0 %11403
      %v11405 = vsel %vm2705, %v11169, 0.0
      %11406 = vadd.xlane.f32.xlu0 %v11405
      %v11407 = vpop.xlane.xlu0 %11406
      %v11408 = vsel %vm2705, %v11170, 0.0
      %11409 = vadd.xlane.f32.xlu0 %v11408
      %v11410 = vpop.xlane.xlu0 %11409
      %v11411 = vsel %vm2705, %v11171, 0.0
      %11412 = vadd.xlane.f32.xlu0 %v11411
      %v11413 = vpop.xlane.xlu0 %11412
      %v11414 = vsel %vm2705, %v11172, 0.0
      %11415 = vadd.xlane.f32.xlu0 %v11414
      %v11416 = vpop.xlane.xlu0 %11415
      %v11417 = vsel %vm2705, %v11173, 0.0
      %11418 = vadd.xlane.f32.xlu0 %v11417
      %v11419 = vpop.xlane.xlu0 %11418
      %v11420 = vsel %vm2705, %v11174, 0.0
      %11421 = vadd.xlane.f32.xlu0 %v11420
      %v11422 = vpop.xlane.xlu0 %11421
      %v11423 = vsel %vm2705, %v11175, 0.0
      %11424 = vadd.xlane.f32.xlu0 %v11423
      %v11425 = vpop.xlane.xlu0 %11424
      %v11426 = vsel %vm2705, %v11176, 0.0
      %11427 = vadd.xlane.f32.xlu0 %v11426
      %v11428 = vpop.xlane.xlu0 %11427
      %v11429 = vsel %vm2705, %v11177, 0.0
      %11430 = vadd.xlane.f32.xlu0 %v11429
      %v11431 = vpop.xlane.xlu0 %11430
      %v11432 = vsel %vm2705, %v11178, 0.0
      %11433 = vadd.xlane.f32.xlu0 %v11432
      %v11434 = vpop.xlane.xlu0 %11433
      %v11435 = vsel %vm2705, %v11179, 0.0
      %11436 = vadd.xlane.f32.xlu0 %v11435
      %v11437 = vpop.xlane.xlu0 %11436
      %v11438 = vsel %vm2705, %v11180, 0.0
      %11439 = vadd.xlane.f32.xlu0 %v11438
      %v11440 = vpop.xlane.xlu0 %11439
      %v11441 = vsel %vm2705, %v11181, 0.0
      %11442 = vadd.xlane.f32.xlu0 %v11441
      %v11443 = vpop.xlane.xlu0 %11442
      %v11444 = vsel %vm2705, %v11182, 0.0
      %11445 = vadd.xlane.f32.xlu0 %v11444
      %v11446 = vpop.xlane.xlu0 %11445
      %v11447 = vsel %vm2705, %v11183, 0.0
      %11448 = vadd.xlane.f32.xlu0 %v11447
      %v11449 = vpop.xlane.xlu0 %11448
      %v11450 = vsel %vm2705, %v11184, 0.0
      %11451 = vadd.xlane.f32.xlu0 %v11450
      %v11452 = vpop.xlane.xlu0 %11451
      %v11453 = vsel %vm2705, %v11185, 0.0
      %11454 = vadd.xlane.f32.xlu0 %v11453
      %v11455 = vpop.xlane.xlu0 %11454
      %v11456 = vsel %vm2705, %v11186, 0.0
      %11457 = vadd.xlane.f32.xlu0 %v11456
      %v11458 = vpop.xlane.xlu0 %11457
      %v11459 = vsel %vm2705, %v11187, 0.0
      %11460 = vadd.xlane.f32.xlu0 %v11459
      %v11461 = vpop.xlane.xlu0 %11460
      %v11462 = vsel %vm2705, %v11188, 0.0
      %11463 = vadd.xlane.f32.xlu0 %v11462
      %v11464 = vpop.xlane.xlu0 %11463
      %v11465 = vsel %vm2705, %v11189, 0.0
      %11466 = vadd.xlane.f32.xlu0 %v11465
      %v11467 = vpop.xlane.xlu0 %11466
      %v11468 = vsel %vm2705, %v11190, 0.0
      %11469 = vadd.xlane.f32.xlu0 %v11468
      %v11470 = vpop.xlane.xlu0 %11469
      %v11471 = vsel %vm2705, %v11191, 0.0
      %11472 = vadd.xlane.f32.xlu0 %v11471
      %v11473 = vpop.xlane.xlu0 %11472
      %v11474 = vsel %vm2705, %v11192, 0.0
      %11475 = vadd.xlane.f32.xlu0 %v11474
      %v11476 = vpop.xlane.xlu0 %11475
      %v11477 = vsel %vm2705, %v11193, 0.0
      %11478 = vadd.xlane.f32.xlu0 %v11477
      %v11479 = vpop.xlane.xlu0 %11478
      %v11480 = vsel %vm2705, %v11194, 0.0
      %11481 = vadd.xlane.f32.xlu0 %v11480
      %v11482 = vpop.xlane.xlu0 %11481
      %v11483 = vsel %vm2705, %v11195, 0.0
      %11484 = vadd.xlane.f32.xlu0 %v11483
      %v11485 = vpop.xlane.xlu0 %11484
      %v11486 = vsel %vm2705, %v11196, 0.0
      %11487 = vadd.xlane.f32.xlu0 %v11486
      %v11488 = vpop.xlane.xlu0 %11487
      %v11489 = vsel %vm2705, %v11197, 0.0
      %11490 = vadd.xlane.f32.xlu0 %v11489
      %v11491 = vpop.xlane.xlu0 %11490
      %v11492 = vsel %vm2705, %v11198, 0.0
      %11493 = vadd.xlane.f32.xlu0 %v11492
      %v11494 = vpop.xlane.xlu0 %11493
      %v11495 = vsel %vm2705, %v11199, 0.0
      %11496 = vadd.xlane.f32.xlu0 %v11495
      %v11497 = vpop.xlane.xlu0 %11496
      %v11498 = vsel %vm2705, %v11200, 0.0
      %11499 = vadd.xlane.f32.xlu0 %v11498
      %v11500 = vpop.xlane.xlu0 %11499
      %v11501 = vsel %vm2705, %v11201, 0.0
      %11502 = vadd.xlane.f32.xlu0 %v11501
      %v11503 = vpop.xlane.xlu0 %11502
      %v11504 = vsel %vm2705, %v11202, 0.0
      %11505 = vadd.xlane.f32.xlu0 %v11504
      %v11506 = vpop.xlane.xlu0 %11505
      %v11507 = vsel %vm2705, %v11203, 0.0
      %11508 = vadd.xlane.f32.xlu0 %v11507
      %v11509 = vpop.xlane.xlu0 %11508
      %v11510 = vsel %vm2705, %v11204, 0.0
      %11511 = vadd.xlane.f32.xlu0 %v11510
      %v11512 = vpop.xlane.xlu0 %11511
      %v11513 = vsel %vm2705, %v11205, 0.0
      %11514 = vadd.xlane.f32.xlu0 %v11513
      %v11515 = vpop.xlane.xlu0 %11514
      %v11516 = vsel %vm2705, %v11206, 0.0
      %11517 = vadd.xlane.f32.xlu0 %v11516
      %v11518 = vpop.xlane.xlu0 %11517
      %v11519 = vsel %vm2705, %v11207, 0.0
      %11520 = vadd.xlane.f32.xlu0 %v11519
      %v11521 = vpop.xlane.xlu0 %11520
      %v11522 = vsel %vm2705, %v11208, 0.0
      %11523 = vadd.xlane.f32.xlu0 %v11522
      %v11524 = vpop.xlane.xlu0 %11523
      %v11525 = vsel %vm2705, %v11209, 0.0
      %11526 = vadd.xlane.f32.xlu0 %v11525
      %v11527 = vpop.xlane.xlu0 %11526
      %v11528 = vsel %vm2705, %v11210, 0.0
      %11529 = vadd.xlane.f32.xlu0 %v11528
      %v11530 = vpop.xlane.xlu0 %11529
      %v11531 = vsel %vm2705, %v11211, 0.0
      %11532 = vadd.xlane.f32.xlu0 %v11531
      %v11533 = vpop.xlane.xlu0 %11532
      %v11534 = vsel %vm2705, %v11212, 0.0
      %11535 = vadd.xlane.f32.xlu0 %v11534
      %v11536 = vpop.xlane.xlu0 %11535
      %v11537 = vsel %vm2705, %v11213, 0.0
      %11538 = vadd.xlane.f32.xlu0 %v11537
      %v11539 = vpop.xlane.xlu0 %11538
      %v11540 = vsel %vm2705, %v11214, 0.0
      %11541 = vadd.xlane.f32.xlu0 %v11540
      %v11542 = vpop.xlane.xlu0 %11541
      %v11543 = vsel %vm2705, %v11215, 0.0
      %11544 = vadd.xlane.f32.xlu0 %v11543
      %v11545 = vpop.xlane.xlu0 %11544
      %v11546 = vsel %vm2705, %v11216, 0.0
      %11547 = vadd.xlane.f32.xlu0 %v11546
      %v11548 = vpop.xlane.xlu0 %11547
      %v11549 = vsel %vm2705, %v11217, 0.0
      %11550 = vadd.xlane.f32.xlu0 %v11549
      %v11551 = vpop.xlane.xlu0 %11550
      %v11552 = vsel %vm2705, %v11218, 0.0
      %11553 = vadd.xlane.f32.xlu0 %v11552
      %v11554 = vpop.xlane.xlu0 %11553
      %v11555 = vsel %vm2705, %v11219, 0.0
      %11556 = vadd.xlane.f32.xlu0 %v11555
      %v11557 = vpop.xlane.xlu0 %11556
      %v11558 = vsel %vm2705, %v11220, 0.0
      %11559 = vadd.xlane.f32.xlu0 %v11558
      %v11560 = vpop.xlane.xlu0 %11559
      %v11561 = vsel %vm2705, %v11221, 0.0
      %11562 = vadd.xlane.f32.xlu0 %v11561
      %v11563 = vpop.xlane.xlu0 %11562
      %v11564 = vsel %vm2705, %v11222, 0.0
      %11565 = vadd.xlane.f32.xlu0 %v11564
      %v11566 = vpop.xlane.xlu0 %11565
      %v11567 = vsel %vm2705, %v11223, 0.0
      %11568 = vadd.xlane.f32.xlu0 %v11567
      %v11569 = vpop.xlane.xlu0 %11568
      %v11570 = vsel %vm2705, %v11224, 0.0
      %11571 = vadd.xlane.f32.xlu0 %v11570
      %v11572 = vpop.xlane.xlu0 %11571
      %v11573 = vsel %vm2705, %v11225, 0.0
      %11574 = vadd.xlane.f32.xlu0 %v11573
      %v11575 = vpop.xlane.xlu0 %11574
      %v11576 = vsel %vm2705, %v11226, 0.0
      %11577 = vadd.xlane.f32.xlu0 %v11576
      %v11578 = vpop.xlane.xlu0 %11577
      %v11579 = vsel %vm2705, %v11227, 0.0
      %11580 = vadd.xlane.f32.xlu0 %v11579
      %v11581 = vpop.xlane.xlu0 %11580
      %v11582 = vsel %vm2705, %v11228, 0.0
      %11583 = vadd.xlane.f32.xlu0 %v11582
      %v11584 = vpop.xlane.xlu0 %11583
      %v11585 = vsel %vm2705, %v11229, 0.0
      %11586 = vadd.xlane.f32.xlu0 %v11585
      %v11587 = vpop.xlane.xlu0 %11586
      %v11588 = vsel %vm2705, %v11230, 0.0
      %11589 = vadd.xlane.f32.xlu0 %v11588
      %v11590 = vpop.xlane.xlu0 %11589
      %v11591 = vsel %vm2705, %v11231, 0.0
      %11592 = vadd.xlane.f32.xlu0 %v11591
      %v11593 = vpop.xlane.xlu0 %11592
      %v11594 = vsel %vm2705, %v11232, 0.0
      %11595 = vadd.xlane.f32.xlu0 %v11594
      %v11596 = vpop.xlane.xlu0 %11595
      %v11597 = vsel %vm2705, %v11233, 0.0
      %11598 = vadd.xlane.f32.xlu0 %v11597
      %v11599 = vpop.xlane.xlu0 %11598
      %v11600 = vsel %vm2705, %v11234, 0.0
      %11601 = vadd.xlane.f32.xlu0 %v11600
      %v11602 = vpop.xlane.xlu0 %11601
      %v11603 = vsel %vm2705, %v11235, 0.0
      %11604 = vadd.xlane.f32.xlu0 %v11603
      %v11605 = vpop.xlane.xlu0 %11604
      %v11606 = vsel %vm2705, %v11236, 0.0
      %11607 = vadd.xlane.f32.xlu0 %v11606
      %v11608 = vpop.xlane.xlu0 %11607
      %v11609 = vsel %vm2705, %v11237, 0.0
      %11610 = vadd.xlane.f32.xlu0 %v11609
      %v11611 = vpop.xlane.xlu0 %11610
      %v11612 = vsel %vm2705, %v11238, 0.0
      %11613 = vadd.xlane.f32.xlu0 %v11612
      %v11614 = vpop.xlane.xlu0 %11613
      %v11615 = vsel %vm2705, %v11239, 0.0
      %11616 = vadd.xlane.f32.xlu0 %v11615
      %v11617 = vpop.xlane.xlu0 %11616
      %v11618 = vsel %vm2705, %v11240, 0.0
      %11619 = vadd.xlane.f32.xlu0 %v11618
      %v11620 = vpop.xlane.xlu0 %11619
      %v11621 = vsel %vm2705, %v11241, 0.0
      %11622 = vadd.xlane.f32.xlu0 %v11621
      %v11623 = vpop.xlane.xlu0 %11622
      %v11624 = vsel %vm2705, %v11242, 0.0
      %11625 = vadd.xlane.f32.xlu0 %v11624
      %v11626 = vpop.xlane.xlu0 %11625
      %v11627 = vld [vmem:[#allocation2] sm:$0x1]
      %v11629 = vlaneseq
      %v11630 = vshrl.u32 %v11629, 7
      %v11631 = vsub.s32 0, %v11630
      %v11632 = vrot.slane %v11627, %v11631
      %v11634 = vadd.f32 %v11245, %v11632
      %v11635 = vadd.f32 %v11248, %v11632
      %v11636 = vadd.f32 %v11251, %v11632
      %v11637 = vadd.f32 %v11254, %v11632
      %v11638 = vadd.f32 %v11257, %v11632
      %v11639 = vadd.f32 %v11260, %v11632
      %v11640 = vadd.f32 %v11263, %v11632
      %v11641 = vadd.f32 %v11266, %v11632
      %v11642 = vadd.f32 %v11269, %v11632
      %v11643 = vadd.f32 %v11272, %v11632
      %v11644 = vadd.f32 %v11275, %v11632
      %v11645 = vadd.f32 %v11278, %v11632
      %v11646 = vadd.f32 %v11281, %v11632
      %v11647 = vadd.f32 %v11284, %v11632
      %v11648 = vadd.f32 %v11287, %v11632
      %v11649 = vadd.f32 %v11290, %v11632
      %v11650 = vadd.f32 %v11293, %v11632
      %v11651 = vadd.f32 %v11296, %v11632
      %v11652 = vadd.f32 %v11299, %v11632
      %v11653 = vadd.f32 %v11302, %v11632
      %v11654 = vadd.f32 %v11305, %v11632
      %v11655 = vadd.f32 %v11308, %v11632
      %v11656 = vadd.f32 %v11311, %v11632
      %v11657 = vadd.f32 %v11314, %v11632
      %v11658 = vadd.f32 %v11317, %v11632
      %v11659 = vadd.f32 %v11320, %v11632
      %v11660 = vadd.f32 %v11323, %v11632
      %v11661 = vadd.f32 %v11326, %v11632
      %v11662 = vadd.f32 %v11329, %v11632
      %v11663 = vadd.f32 %v11332, %v11632
      %v11664 = vadd.f32 %v11335, %v11632
      %v11665 = vadd.f32 %v11338, %v11632
      %v11666 = vadd.f32 %v11341, %v11632
      %v11667 = vadd.f32 %v11344, %v11632
      %v11668 = vadd.f32 %v11347, %v11632
      %v11669 = vadd.f32 %v11350, %v11632
      %v11670 = vadd.f32 %v11353, %v11632
      %v11671 = vadd.f32 %v11356, %v11632
      %v11672 = vadd.f32 %v11359, %v11632
      %v11673 = vadd.f32 %v11362, %v11632
      %v11674 = vadd.f32 %v11365, %v11632
      %v11675 = vadd.f32 %v11368, %v11632
      %v11676 = vadd.f32 %v11371, %v11632
      %v11677 = vadd.f32 %v11374, %v11632
      %v11678 = vadd.f32 %v11377, %v11632
      %v11679 = vadd.f32 %v11380, %v11632
      %v11680 = vadd.f32 %v11383, %v11632
      %v11681 = vadd.f32 %v11386, %v11632
      %v11682 = vadd.f32 %v11389, %v11632
      %v11683 = vadd.f32 %v11392, %v11632
      %v11684 = vadd.f32 %v11395, %v11632
      %v11685 = vadd.f32 %v11398, %v11632
      %v11686 = vadd.f32 %v11401, %v11632
      %v11687 = vadd.f32 %v11404, %v11632
      %v11688 = vadd.f32 %v11407, %v11632
      %v11689 = vadd.f32 %v11410, %v11632
      %v11690 = vadd.f32 %v11413, %v11632
      %v11691 = vadd.f32 %v11416, %v11632
      %v11692 = vadd.f32 %v11419, %v11632
      %v11693 = vadd.f32 %v11422, %v11632
      %v11694 = vadd.f32 %v11425, %v11632
      %v11695 = vadd.f32 %v11428, %v11632
      %v11696 = vadd.f32 %v11431, %v11632
      %v11697 = vadd.f32 %v11434, %v11632
      %v11698 = vadd.f32 %v11437, %v11632
      %v11699 = vadd.f32 %v11440, %v11632
      %v11700 = vadd.f32 %v11443, %v11632
      %v11701 = vadd.f32 %v11446, %v11632
      %v11702 = vadd.f32 %v11449, %v11632
      %v11703 = vadd.f32 %v11452, %v11632
      %v11704 = vadd.f32 %v11455, %v11632
      %v11705 = vadd.f32 %v11458, %v11632
      %v11706 = vadd.f32 %v11461, %v11632
      %v11707 = vadd.f32 %v11464, %v11632
      %v11708 = vadd.f32 %v11467, %v11632
      %v11709 = vadd.f32 %v11470, %v11632
      %v11710 = vadd.f32 %v11473, %v11632
      %v11711 = vadd.f32 %v11476, %v11632
      %v11712 = vadd.f32 %v11479, %v11632
      %v11713 = vadd.f32 %v11482, %v11632
      %v11714 = vadd.f32 %v11485, %v11632
      %v11715 = vadd.f32 %v11488, %v11632
      %v11716 = vadd.f32 %v11491, %v11632
      %v11717 = vadd.f32 %v11494, %v11632
      %v11718 = vadd.f32 %v11497, %v11632
      %v11719 = vadd.f32 %v11500, %v11632
      %v11720 = vadd.f32 %v11503, %v11632
      %v11721 = vadd.f32 %v11506, %v11632
      %v11722 = vadd.f32 %v11509, %v11632
      %v11723 = vadd.f32 %v11512, %v11632
      %v11724 = vadd.f32 %v11515, %v11632
      %v11725 = vadd.f32 %v11518, %v11632
      %v11726 = vadd.f32 %v11521, %v11632
      %v11727 = vadd.f32 %v11524, %v11632
      %v11728 = vadd.f32 %v11527, %v11632
      %v11729 = vadd.f32 %v11530, %v11632
      %v11730 = vadd.f32 %v11533, %v11632
      %v11731 = vadd.f32 %v11536, %v11632
      %v11732 = vadd.f32 %v11539, %v11632
      %v11733 = vadd.f32 %v11542, %v11632
      %v11734 = vadd.f32 %v11545, %v11632
      %v11735 = vadd.f32 %v11548, %v11632
      %v11736 = vadd.f32 %v11551, %v11632
      %v11737 = vadd.f32 %v11554, %v11632
      %v11738 = vadd.f32 %v11557, %v11632
      %v11739 = vadd.f32 %v11560, %v11632
      %v11740 = vadd.f32 %v11563, %v11632
      %v11741 = vadd.f32 %v11566, %v11632
      %v11742 = vadd.f32 %v11569, %v11632
      %v11743 = vadd.f32 %v11572, %v11632
      %v11744 = vadd.f32 %v11575, %v11632
      %v11745 = vadd.f32 %v11578, %v11632
      %v11746 = vadd.f32 %v11581, %v11632
      %v11747 = vadd.f32 %v11584, %v11632
      %v11748 = vadd.f32 %v11587, %v11632
      %v11749 = vadd.f32 %v11590, %v11632
      %v11750 = vadd.f32 %v11593, %v11632
      %v11751 = vadd.f32 %v11596, %v11632
      %v11752 = vadd.f32 %v11599, %v11632
      %v11753 = vadd.f32 %v11602, %v11632
      %v11754 = vadd.f32 %v11605, %v11632
      %v11755 = vadd.f32 %v11608, %v11632
      %v11756 = vadd.f32 %v11611, %v11632
      %v11757 = vadd.f32 %v11614, %v11632
      %v11758 = vadd.f32 %v11617, %v11632
      %v11759 = vadd.f32 %v11620, %v11632
      %v11760 = vadd.f32 %v11623, %v11632
      %v11761 = vadd.f32 %v11626, %v11632
      %vm11762 = vcmask 7168
      %11763 = vst.msk [vmem:[%s282] sm:$0xff] %vm11762, %v11634
      %11764 = vst.msk [vmem:[%s282 + $0x8] sm:$0xff] %vm11762, %v11635
      %11765 = vst.msk [vmem:[%s282 + $0x10] sm:$0xff] %vm11762, %v11636
      %11766 = vst.msk [vmem:[%s282 + $0x18] sm:$0xff] %vm11762, %v11637
      %11767 = vst.msk [vmem:[%s282 + $0x20] sm:$0xff] %vm11762, %v11638
      %11768 = vst.msk [vmem:[%s282 + $0x28] sm:$0xff] %vm11762, %v11639
      %11769 = vst.msk [vmem:[%s282 + $0x30] sm:$0xff] %vm11762, %v11640
      %11770 = vst.msk [vmem:[%s282 + $0x38] sm:$0xff] %vm11762, %v11641
      %11771 = vst.msk [vmem:[%s282 + $0x40] sm:$0xff] %vm11762, %v11642
      %11772 = vst.msk [vmem:[%s282 + $0x48] sm:$0xff] %vm11762, %v11643
      %11773 = vst.msk [vmem:[%s282 + $0x50] sm:$0xff] %vm11762, %v11644
      %11774 = vst.msk [vmem:[%s282 + $0x58] sm:$0xff] %vm11762, %v11645
      %11775 = vst.msk [vmem:[%s282 + $0x60] sm:$0xff] %vm11762, %v11646
      %11776 = vst.msk [vmem:[%s282 + $0x68] sm:$0xff] %vm11762, %v11647
      %11777 = vst.msk [vmem:[%s282 + $0x70] sm:$0xff] %vm11762, %v11648
      %11778 = vst.msk [vmem:[%s282 + $0x78] sm:$0xff] %vm11762, %v11649
      %11779 = vst.msk [vmem:[%s282 + $0x80] sm:$0xff] %vm11762, %v11650
      %11780 = vst.msk [vmem:[%s282 + $0x88] sm:$0xff] %vm11762, %v11651
      %11781 = vst.msk [vmem:[%s282 + $0x90] sm:$0xff] %vm11762, %v11652
      %11782 = vst.msk [vmem:[%s282 + $0x98] sm:$0xff] %vm11762, %v11653
      %11783 = vst.msk [vmem:[%s282 + $0xa0] sm:$0xff] %vm11762, %v11654
      %11784 = vst.msk [vmem:[%s282 + $0xa8] sm:$0xff] %vm11762, %v11655
      %11785 = vst.msk [vmem:[%s282 + $0xb0] sm:$0xff] %vm11762, %v11656
      %11786 = vst.msk [vmem:[%s282 + $0xb8] sm:$0xff] %vm11762, %v11657
      %11787 = vst.msk [vmem:[%s282 + $0xc0] sm:$0xff] %vm11762, %v11658
      %11788 = vst.msk [vmem:[%s282 + $0xc8] sm:$0xff] %vm11762, %v11659
      %11789 = vst.msk [vmem:[%s282 + $0xd0] sm:$0xff] %vm11762, %v11660
      %11790 = vst.msk [vmem:[%s282 + $0xd8] sm:$0xff] %vm11762, %v11661
      %11791 = vst.msk [vmem:[%s282 + $0xe0] sm:$0xff] %vm11762, %v11662
      %11792 = vst.msk [vmem:[%s282 + $0xe8] sm:$0xff] %vm11762, %v11663
      %11793 = vst.msk [vmem:[%s282 + $0xf0] sm:$0xff] %vm11762, %v11664
      %11794 = vst.msk [vmem:[%s282 + $0xf8] sm:$0xff] %vm11762, %v11665
      %11795 = vst.msk [vmem:[%s282 + $0x100] sm:$0xff] %vm11762, %v11666
      %11796 = vst.msk [vmem:[%s282 + $0x108] sm:$0xff] %vm11762, %v11667
      %11797 = vst.msk [vmem:[%s282 + $0x110] sm:$0xff] %vm11762, %v11668
      %11798 = vst.msk [vmem:[%s282 + $0x118] sm:$0xff] %vm11762, %v11669
      %11799 = vst.msk [vmem:[%s282 + $0x120] sm:$0xff] %vm11762, %v11670
      %11800 = vst.msk [vmem:[%s282 + $0x128] sm:$0xff] %vm11762, %v11671
      %11801 = vst.msk [vmem:[%s282 + $0x130] sm:$0xff] %vm11762, %v11672
      %11802 = vst.msk [vmem:[%s282 + $0x138] sm:$0xff] %vm11762, %v11673
      %11803 = vst.msk [vmem:[%s282 + $0x140] sm:$0xff] %vm11762, %v11674
      %11804 = vst.msk [vmem:[%s282 + $0x148] sm:$0xff] %vm11762, %v11675
      %11805 = vst.msk [vmem:[%s282 + $0x150] sm:$0xff] %vm11762, %v11676
      %11806 = vst.msk [vmem:[%s282 + $0x158] sm:$0xff] %vm11762, %v11677
      %11807 = vst.msk [vmem:[%s282 + $0x160] sm:$0xff] %vm11762, %v11678
      %11808 = vst.msk [vmem:[%s282 + $0x168] sm:$0xff] %vm11762, %v11679
      %11809 = vst.msk [vmem:[%s282 + $0x170] sm:$0xff] %vm11762, %v11680
      %11810 = vst.msk [vmem:[%s282 + $0x178] sm:$0xff] %vm11762, %v11681
      %11811 = vst.msk [vmem:[%s282 + $0x180] sm:$0xff] %vm11762, %v11682
      %11812 = vst.msk [vmem:[%s282 + $0x188] sm:$0xff] %vm11762, %v11683
      %11813 = vst.msk [vmem:[%s282 + $0x190] sm:$0xff] %vm11762, %v11684
      %11814 = vst.msk [vmem:[%s282 + $0x198] sm:$0xff] %vm11762, %v11685
      %11815 = vst.msk [vmem:[%s282 + $0x1a0] sm:$0xff] %vm11762, %v11686
      %11816 = vst.msk [vmem:[%s282 + $0x1a8] sm:$0xff] %vm11762, %v11687
      %11817 = vst.msk [vmem:[%s282 + $0x1b0] sm:$0xff] %vm11762, %v11688
      %11818 = vst.msk [vmem:[%s282 + $0x1b8] sm:$0xff] %vm11762, %v11689
      %11819 = vst.msk [vmem:[%s282 + $0x1c0] sm:$0xff] %vm11762, %v11690
      %11820 = vst.msk [vmem:[%s282 + $0x1c8] sm:$0xff] %vm11762, %v11691
      %11821 = vst.msk [vmem:[%s282 + $0x1d0] sm:$0xff] %vm11762, %v11692
      %11822 = vst.msk [vmem:[%s282 + $0x1d8] sm:$0xff] %vm11762, %v11693
      %11823 = vst.msk [vmem:[%s282 + $0x1e0] sm:$0xff] %vm11762, %v11694
      %11824 = vst.msk [vmem:[%s282 + $0x1e8] sm:$0xff] %vm11762, %v11695
      %11825 = vst.msk [vmem:[%s282 + $0x1f0] sm:$0xff] %vm11762, %v11696
      %11826 = vst.msk [vmem:[%s282 + $0x1f8] sm:$0xff] %vm11762, %v11697
      %11827 = vst.msk [vmem:[%s282 + $0x200] sm:$0xff] %vm11762, %v11698
      %11828 = vst.msk [vmem:[%s282 + $0x208] sm:$0xff] %vm11762, %v11699
      %11829 = vst.msk [vmem:[%s282 + $0x210] sm:$0xff] %vm11762, %v11700
      %11830 = vst.msk [vmem:[%s282 + $0x218] sm:$0xff] %vm11762, %v11701
      %11831 = vst.msk [vmem:[%s282 + $0x220] sm:$0xff] %vm11762, %v11702
      %11832 = vst.msk [vmem:[%s282 + $0x228] sm:$0xff] %vm11762, %v11703
      %11833 = vst.msk [vmem:[%s282 + $0x230] sm:$0xff] %vm11762, %v11704
      %11834 = vst.msk [vmem:[%s282 + $0x238] sm:$0xff] %vm11762, %v11705
      %11835 = vst.msk [vmem:[%s282 + $0x240] sm:$0xff] %vm11762, %v11706
      %11836 = vst.msk [vmem:[%s282 + $0x248] sm:$0xff] %vm11762, %v11707
      %11837 = vst.msk [vmem:[%s282 + $0x250] sm:$0xff] %vm11762, %v11708
      %11838 = vst.msk [vmem:[%s282 + $0x258] sm:$0xff] %vm11762, %v11709
      %11839 = vst.msk [vmem:[%s282 + $0x260] sm:$0xff] %vm11762, %v11710
      %11840 = vst.msk [vmem:[%s282 + $0x268] sm:$0xff] %vm11762, %v11711
      %11841 = vst.msk [vmem:[%s282 + $0x270] sm:$0xff] %vm11762, %v11712
      %11842 = vst.msk [vmem:[%s282 + $0x278] sm:$0xff] %vm11762, %v11713
      %11843 = vst.msk [vmem:[%s282 + $0x280] sm:$0xff] %vm11762, %v11714
      %11844 = vst.msk [vmem:[%s282 + $0x288] sm:$0xff] %vm11762, %v11715
      %11845 = vst.msk [vmem:[%s282 + $0x290] sm:$0xff] %vm11762, %v11716
      %11846 = vst.msk [vmem:[%s282 + $0x298] sm:$0xff] %vm11762, %v11717
      %11847 = vst.msk [vmem:[%s282 + $0x2a0] sm:$0xff] %vm11762, %v11718
      %11848 = vst.msk [vmem:[%s282 + $0x2a8] sm:$0xff] %vm11762, %v11719
      %11849 = vst.msk [vmem:[%s282 + $0x2b0] sm:$0xff] %vm11762, %v11720
      %11850 = vst.msk [vmem:[%s282 + $0x2b8] sm:$0xff] %vm11762, %v11721
      %11851 = vst.msk [vmem:[%s282 + $0x2c0] sm:$0xff] %vm11762, %v11722
      %11852 = vst.msk [vmem:[%s282 + $0x2c8] sm:$0xff] %vm11762, %v11723
      %11853 = vst.msk [vmem:[%s282 + $0x2d0] sm:$0xff] %vm11762, %v11724
      %11854 = vst.msk [vmem:[%s282 + $0x2d8] sm:$0xff] %vm11762, %v11725
      %11855 = vst.msk [vmem:[%s282 + $0x2e0] sm:$0xff] %vm11762, %v11726
      %11856 = vst.msk [vmem:[%s282 + $0x2e8] sm:$0xff] %vm11762, %v11727
      %11857 = vst.msk [vmem:[%s282 + $0x2f0] sm:$0xff] %vm11762, %v11728
      %11858 = vst.msk [vmem:[%s282 + $0x2f8] sm:$0xff] %vm11762, %v11729
      %11859 = vst.msk [vmem:[%s282 + $0x300] sm:$0xff] %vm11762, %v11730
      %11860 = vst.msk [vmem:[%s282 + $0x308] sm:$0xff] %vm11762, %v11731
      %11861 = vst.msk [vmem:[%s282 + $0x310] sm:$0xff] %vm11762, %v11732
      %11862 = vst.msk [vmem:[%s282 + $0x318] sm:$0xff] %vm11762, %v11733
      %11863 = vst.msk [vmem:[%s282 + $0x320] sm:$0xff] %vm11762, %v11734
      %11864 = vst.msk [vmem:[%s282 + $0x328] sm:$0xff] %vm11762, %v11735
      %11865 = vst.msk [vmem:[%s282 + $0x330] sm:$0xff] %vm11762, %v11736
      %11866 = vst.msk [vmem:[%s282 + $0x338] sm:$0xff] %vm11762, %v11737
      %11867 = vst.msk [vmem:[%s282 + $0x340] sm:$0xff] %vm11762, %v11738
      %11868 = vst.msk [vmem:[%s282 + $0x348] sm:$0xff] %vm11762, %v11739
      %11869 = vst.msk [vmem:[%s282 + $0x350] sm:$0xff] %vm11762, %v11740
      %11870 = vst.msk [vmem:[%s282 + $0x358] sm:$0xff] %vm11762, %v11741
      %11871 = vst.msk [vmem:[%s282 + $0x360] sm:$0xff] %vm11762, %v11742
      %11872 = vst.msk [vmem:[%s282 + $0x368] sm:$0xff] %vm11762, %v11743
      %11873 = vst.msk [vmem:[%s282 + $0x370] sm:$0xff] %vm11762, %v11744
      %11874 = vst.msk [vmem:[%s282 + $0x378] sm:$0xff] %vm11762, %v11745
      %11875 = vst.msk [vmem:[%s282 + $0x380] sm:$0xff] %vm11762, %v11746
      %11876 = vst.msk [vmem:[%s282 + $0x388] sm:$0xff] %vm11762, %v11747
      %11877 = vst.msk [vmem:[%s282 + $0x390] sm:$0xff] %vm11762, %v11748
      %11878 = vst.msk [vmem:[%s282 + $0x398] sm:$0xff] %vm11762, %v11749
      %11879 = vst.msk [vmem:[%s282 + $0x3a0] sm:$0xff] %vm11762, %v11750
      %11880 = vst.msk [vmem:[%s282 + $0x3a8] sm:$0xff] %vm11762, %v11751
      %11881 = vst.msk [vmem:[%s282 + $0x3b0] sm:$0xff] %vm11762, %v11752
      %11882 = vst.msk [vmem:[%s282 + $0x3b8] sm:$0xff] %vm11762, %v11753
      %11883 = vst.msk [vmem:[%s282 + $0x3c0] sm:$0xff] %vm11762, %v11754
      %11884 = vst.msk [vmem:[%s282 + $0x3c8] sm:$0xff] %vm11762, %v11755
      %11885 = vst.msk [vmem:[%s282 + $0x3d0] sm:$0xff] %vm11762, %v11756
      %11886 = vst.msk [vmem:[%s282 + $0x3d8] sm:$0xff] %vm11762, %v11757
      %11887 = vst.msk [vmem:[%s282 + $0x3e0] sm:$0xff] %vm11762, %v11758
      %11888 = vst.msk [vmem:[%s282 + $0x3e8] sm:$0xff] %vm11762, %v11759
      %11889 = vst.msk [vmem:[%s282 + $0x3f0] sm:$0xff] %vm11762, %v11760
      %11890 = vst.msk [vmem:[%s282 + $0x3f8] sm:$0xff] %vm11762, %v11761
      %s11891 = smul.u32 128, %s20
      %p11892 = scmp.lt.s32.totalorder %s11891, 255
      %s11893 = scalar_select %p11892, %s11891, 255
      %s11894 = smul.addr %s11893, 8
      %s11895 = scalar_lea.vmem %s7, %s11894
      // Predicated region
      $region49: #{tpu_custom_call.1} parent=47 // pred_check
        %p11896 = pneg %p190
      $region50: #{tpu_custom_call.1} parent=47 // pred_check_branch
        %11898 = sbr.rel (%p11896) target = $region52
      $region51: #{tpu_custom_call.1} parent=47 // pred_region
        %s11899 = smul.u32 128, %s20
      $region52: #{tpu_custom_call.1} parent=47 // pred_fallthru
        _
    $region48: #{tpu_custom_call.1} parent=5 // pred_fallthru
      _
    %p11900 = scmp.le.s32.totalorder 2, %s15
    // Predicated region
    $region53: #{tpu_custom_call.1} parent=5 // pred_check
      %p11901 = pneg %p11900
    $region54: #{tpu_custom_call.1} parent=5 // pred_check_branch
      %11903 = sbr.rel (%p11901) target = $region56
    $region55: #{tpu_custom_call.1} parent=5 // pred_region
      %s11904 = ssub.s32 %s15, 2
      // Predicated region
      $region57: #{tpu_custom_call.1} parent=55 // pred_check
        %p11905 = pneg %p196
      $region58: #{tpu_custom_call.1} parent=55 // pred_check_branch
        %11907 = sbr.rel (%p11905) target = $region60
      $region59: #{tpu_custom_call.1} parent=55 // pred_region
        %s11908 = smul.u32 128, %s21
        %p11909 = scmp.lt.s32.totalorder %s11908, 255
        %s11910 = scalar_select %p11909, %s11908, 255
        %s11911 = smul.addr %s11910, 8
        %s11912 = scalar_lea.vmem %s7, %s11911
      $region60: #{tpu_custom_call.1} parent=55 // pred_fallthru
        _
    $region56: #{tpu_custom_call.1} parent=5 // pred_fallthru
      _
  $region6: #{tpu_custom_call.1} parent=0 // loop_footer
    %s19 = sadd.s32 1, %s15
  $region7: #{tpu_custom_call.1} parent=0 // loop_footer_branch
    %14 = sbr.rel target = $region3
  $region8: #{tpu_custom_call.1} parent=0 // loop_exit
    _

</llo_original>
